<compile_context>
chip_gen: v7x
topology: tpu7x:2x2x1
jax: 0.10.0
libtpu: 0.0.40
codegen_flags: <defaults>
</compile_context>

<pallas_src>
import jax
import jax.numpy as jnp
from jax import lax
from jax.experimental import pallas as pl
from jax.experimental.pallas import tpu as pltpu


# ---------------------------------------------------------------------------
# Kernel 1: fused stride-1 conv + bias + ReLU (shift-and-matmul over offsets)
# ---------------------------------------------------------------------------
def _make_conv_kernel(offsets, m_z):
    offsets = tuple(int(o) for o in offsets)

    def kernel(x_ref, w_ref, b_ref, o_ref):
        # x_ref: (1, M_x, Cin) f32   -- one image, spatially flattened (row-major)
        # w_ref: (K, Cin, Cout) bf16 -- one (Cin, Cout) slab per kernel offset
        # b_ref: (1, Cout) f32
        # o_ref: (1, m_z, Cout) f32  -- full-width output rows
        acc = jnp.dot(x_ref[0, pl.ds(offsets[0], m_z), :].astype(jnp.bfloat16),
                      w_ref[0], preferred_element_type=jnp.float32)
        for k in range(1, len(offsets)):
            acc = acc + jnp.dot(
                x_ref[0, pl.ds(offsets[k], m_z), :].astype(jnp.bfloat16),
                w_ref[k], preferred_element_type=jnp.float32)
        o_ref[0] = jnp.maximum(acc + b_ref[...], 0.0)

    return kernel


def conv_relu_flat(x_flat, w, b, *, m_z, offsets):
    """x_flat: (B, M_x, Cin) f32, w: (K, Cin, Cout) bf16, b: (Cout,) f32."""
    B, M_x, Cin = x_flat.shape
    K, Cin2, Cout = w.shape
    assert Cin == Cin2, (Cin, Cin2)
    b2 = b.reshape(1, Cout).astype(jnp.float32)
    return pl.pallas_call(
        _make_conv_kernel(offsets, m_z),
        out_shape=jax.ShapeDtypeStruct((B, m_z, Cout), jnp.float32),
        grid_spec=pltpu.PrefetchScalarGridSpec(
            num_scalar_prefetch=0,
            grid=(B,),                                         # one image per step
            in_specs=[
                pl.BlockSpec((1, M_x, Cin), lambda i: (i, 0, 0)),
                pl.BlockSpec((K, Cin, Cout), lambda i: (0, 0, 0)),   # resident
                pl.BlockSpec((1, Cout), lambda i: (0, 0)),           # resident
            ],
            out_specs=pl.BlockSpec((1, m_z, Cout), lambda i: (i, 0, 0)),
        ),
        compiler_params=pltpu.CompilerParams(dimension_semantics=("parallel",)),
    )(x_flat, w, b2)


# ---------------------------------------------------------------------------
# Kernel 2: TWO stacked stride-1 convs fused (conv2 + conv3); the intermediate
# activation stays in VMEM and is consumed via static contiguous slices.
# ---------------------------------------------------------------------------
def _make_conv_conv_kernel(offs_a, m_a, offs_b, m_b):
    offs_a = tuple(int(o) for o in offs_a)
    offs_b = tuple(int(o) for o in offs_b)

    def kernel(x_ref, wa_ref, ba_ref, wb_ref, bb_ref, o_ref):
        # conv A (2x2 on s2d'd input) -> h (m_a, Ca), never written to HBM
        acc = jnp.dot(x_ref[0, pl.ds(offs_a[0], m_a), :].astype(jnp.bfloat16),
                      wa_ref[0], preferred_element_type=jnp.float32)
        for k in range(1, len(offs_a)):
            acc = acc + jnp.dot(
                x_ref[0, pl.ds(offs_a[k], m_a), :].astype(jnp.bfloat16),
                wa_ref[k], preferred_element_type=jnp.float32)
        h = jnp.maximum(acc + ba_ref[...], 0.0).astype(jnp.bfloat16)  # (m_a, Ca)

        # conv B (3x3) on h, full-width rows -> all slices are contiguous
        acc2 = jnp.dot(h[offs_b[0]:offs_b[0] + m_b, :], wb_ref[0],
                       preferred_element_type=jnp.float32)
        for k in range(1, len(offs_b)):
            acc2 = acc2 + jnp.dot(h[offs_b[k]:offs_b[k] + m_b, :], wb_ref[k],
                                  preferred_element_type=jnp.float32)
        o_ref[0] = jnp.maximum(acc2 + bb_ref[...], 0.0)

    return kernel


def conv_conv_relu_flat(x_flat, wa, ba, wb, bb, *, m_a, offs_a, m_b, offs_b):
    B, M_x, Cin = x_flat.shape
    Ka, Cin2, Ca = wa.shape
    Kb, Ca2, Cb = wb.shape
    assert Cin == Cin2 and Ca == Ca2
    ba2 = ba.reshape(1, Ca).astype(jnp.float32)
    bb2 = bb.reshape(1, Cb).astype(jnp.float32)
    return pl.pallas_call(
        _make_conv_conv_kernel(offs_a, m_a, offs_b, m_b),
        out_shape=jax.ShapeDtypeStruct((B, m_b, Cb), jnp.float32),
        grid_spec=pltpu.PrefetchScalarGridSpec(
            num_scalar_prefetch=0,
            grid=(B,),
            in_specs=[
                pl.BlockSpec((1, M_x, Cin), lambda i: (i, 0, 0)),
                pl.BlockSpec((Ka, Cin, Ca), lambda i: (0, 0, 0)),
                pl.BlockSpec((1, Ca), lambda i: (0, 0)),
                pl.BlockSpec((Kb, Ca, Cb), lambda i: (0, 0, 0)),
                pl.BlockSpec((1, Cb), lambda i: (0, 0)),
            ],
            out_specs=pl.BlockSpec((1, m_b, Cb), lambda i: (i, 0, 0)),
        ),
        compiler_params=pltpu.CompilerParams(dimension_semantics=("parallel",)),
    )(x_flat, wa, ba2, wb, bb2)


# ---------------------------------------------------------------------------
# Kernel 3: fused Linear + bias + ReLU (N-streamed, lane-dense output)
# ---------------------------------------------------------------------------
def _fc_kernel(x_ref, w_ref, b_ref, o_ref):
    acc = jnp.dot(x_ref[...].astype(jnp.bfloat16), w_ref[...],
                  preferred_element_type=jnp.float32)
    o_ref[...] = jnp.maximum(acc + b_ref[...], 0.0)


def linear_relu(x, w, b, *, tn=256):
    """relu(x @ w + b), x:(M,K) f32, w:(K,N) bf16, b:(N,) f32."""
    M, K = x.shape
    K2, N = w.shape
    assert K == K2 and N % tn == 0, (K, K2, N, tn)
    b2 = b.reshape(1, N).astype(jnp.float32)
    return pl.pallas_call(
        _fc_kernel,
        out_shape=jax.ShapeDtypeStruct((M, N), jnp.float32),
        grid_spec=pltpu.PrefetchScalarGridSpec(
            num_scalar_prefetch=0,
            grid=(N // tn,),                 # stream weight in lane-dense N chunks
            in_specs=[
                pl.BlockSpec((M, K), lambda j: (0, 0)),      # activations resident
                pl.BlockSpec((K, tn), lambda j: (0, j)),
                pl.BlockSpec((1, tn), lambda j: (0, j)),
            ],
            out_specs=pl.BlockSpec((M, tn), lambda j: (0, j)),
        ),
        compiler_params=pltpu.CompilerParams(dimension_semantics=("parallel",)),
    )(x, w, b2)


# ---------------------------------------------------------------------------
# Parameter init (PyTorch layout / uniform(-1/sqrt(fan_in), 1/sqrt(fan_in)))
# ---------------------------------------------------------------------------
def init_conv(key, cout, cin, kh, kw):
    fan_in = cin * kh * kw
    bound = 1.0 / (fan_in ** 0.5)
    wk, bk = jax.random.split(key)
    w = jax.random.uniform(wk, (cout, cin, kh, kw), jnp.float32, -bound, bound)
    b = jax.random.uniform(bk, (cout,), jnp.float32, -bound, bound)
    return w, b


def init_linear(key, in_f, out_f):
    bound = 1.0 / (in_f ** 0.5)
    wk, bk = jax.random.split(key)
    w = jax.random.uniform(wk, (out_f, in_f), jnp.float32, -bound, bound)
    b = jax.random.uniform(bk, (out_f,), jnp.float32, -bound, bound)
    return w, b


def init_params(key):
    k1, k2, k3, k4 = jax.random.split(key, 4)
    return {
        "conv1": init_conv(k1, 32, 4, 8, 8),
        "conv2": init_conv(k2, 64, 32, 4, 4),
        "conv3": init_conv(k3, 64, 64, 3, 3),
        "fc":    init_linear(k4, 3136, 512),
    }


def prepare_params(params):
    """One-time weight layout prep (hoisted out of the forward pass)."""
    def s2d_weight(w, s):
        # (Cout, Cin, KH, KW) -> (khp*kwp, s*s*Cin, Cout), feature order (r, s, cin)
        co, ci, kh, kw = w.shape
        khp, kwp = kh // s, kw // s
        w = w.reshape(co, ci, khp, s, kwp, s)          # (co, ci, a, r, b, s)
        w = w.transpose(2, 4, 3, 5, 1, 0)              # (a, b, r, s, ci, co)
        return w.reshape(khp * kwp, s * s * ci, co)

    w1, b1 = params["conv1"]
    w2, b2 = params["conv2"]
    w3, b3 = params["conv3"]
    wf, bf = params["fc"]

    w1p = s2d_weight(w1, 4).astype(jnp.bfloat16)                       # (4, 64, 32)
    w2p = s2d_weight(w2, 2).astype(jnp.bfloat16)                       # (4, 128, 64)
    w3p = w3.transpose(2, 3, 1, 0).reshape(9, 64, 64).astype(jnp.bfloat16)
    # FC weight: torch flatten order is (c, h, w); our NHWC flatten is (h, w, c).
    wfp = wf.reshape(512, 64, 7, 7).transpose(0, 2, 3, 1).reshape(512, 3136)
    wfp = wfp.T.astype(jnp.bfloat16)                                   # (3136, 512)
    return {"conv1": (w1p, b1), "conv2": (w2p, b2),
            "conv3": (w3p, b3), "fc": (wfp, bf)}


# ---------------------------------------------------------------------------
# Forward pass (semantics of AtariBackbone.forward)
# ---------------------------------------------------------------------------
def atari_backbone(prep, x):
    # x: (B, 4, 84, 84) float32, NCHW (PyTorch input layout)
    B = x.shape[0]
    w1, b1 = prep["conv1"]
    w2, b2 = prep["conv2"]
    w3, b3 = prep["conv3"]
    wf, bf = prep["fc"]

    # conv1 (k8, s4) -> stride-1 2x2 conv on space-to-depth(4) input (B,21,21,64).
    y = x.reshape(B, 4, 21, 4, 21, 4).transpose(0, 2, 4, 3, 5, 1).reshape(B, 441, 64)
    y = jnp.pad(y, ((0, 0), (0, 1), (0, 0)))              # 1 guard row -> (B, 442, 64)
    h1 = conv_relu_flat(y, w1, b1, m_z=420, offsets=(0, 1, 21, 22))
    # h1: (B, 420, 32) = full-width rows of a (20 x 21) grid, valid cols 0..19.

    # conv2 (k4, s2) + conv3 (k3, s1) fused: slice valid cols, space-to-depth(2).
    h1 = h1.reshape(B, 20, 21, 32)[:, :, :20, :]
    y2 = h1.reshape(B, 10, 2, 10, 2, 32).transpose(0, 1, 3, 2, 4, 5).reshape(B, 100, 128)
    y2 = jnp.pad(y2, ((0, 0), (0, 3), (0, 0)))            # 3 guard rows -> (B, 103, 128)
    offs3 = tuple(p * 10 + q for p in range(3) for q in range(3))
    h3 = conv_conv_relu_flat(y2, w2, b2, w3, b3,
                             m_a=92, offs_a=(0, 1, 10, 11),   # conv2: full-width 9x10 grid
                             m_b=70, offs_b=offs3)            # conv3: full-width 7x10 grid
    # h3: (B, 70, 64), valid cols 0..6 of each group of 10.

    flat = h3.reshape(B, 7, 10, 64)[:, :, :7, :].reshape(B, 7 * 7 * 64)  # (h, w, c) order
    return linear_relu(flat, wf, bf)                      # (B, 512)


# ---------------------------------------------------------------------------
# Pure-JAX reference with the ORIGINAL PyTorch layouts (checks all permutations).
# Mirrors the kernel's bf16-weight / bf16-activation-input, f32-accumulate math.
# ---------------------------------------------------------------------------
def torch_reference(params, x):
    def conv(a, w, b, stride):
        out = lax.conv_general_dilated(
            a.astype(jnp.bfloat16), w.astype(jnp.bfloat16),
            window_strides=(stride, stride), padding="VALID",
            dimension_numbers=("NCHW", "OIHW", "NCHW"),
            preferred_element_type=jnp.float32)
        return jnp.maximum(out + b[None, :, None, None], 0.0)

    w1, b1 = params["conv1"]
    w2, b2 = params["conv2"]
    w3, b3 = params["conv3"]
    wf, bf = params["fc"]
    a = conv(x, w1, b1, 4)
    a = conv(a, w2, b2, 2)
    a = conv(a, w3, b3, 1)
    flat = a.reshape(a.shape[0], -1)                      # torch flatten: (c, h, w)
    y = jnp.dot(flat.astype(jnp.bfloat16), wf.astype(jnp.bfloat16).T,
                preferred_element_type=jnp.float32) + bf
    return jnp.maximum(y, 0.0)


if __name__ == "__main__":
    key = jax.random.PRNGKey(0)
    pkey, xkey = jax.random.split(key)
    params = init_params(pkey)          # PyTorch-layout parameters
    prep = prepare_params(params)       # layout prep done once, outside the jit

    x = jax.random.normal(xkey, (2, 4, 84, 84), dtype=jnp.float32)

    fwd = jax.jit(atari_backbone)
    y = fwd(prep, x)
    jax.block_until_ready(y)

    assert y.shape == (2, 512), y.shape
    assert bool(jnp.all(y >= 0.0))                      # ReLU output
    y_ref = torch_reference(params, x)
    err = float(jnp.max(jnp.abs(y - y_ref)))
    scale = float(jnp.max(jnp.abs(y_ref))) + 1e-3
    assert err <= 0.03 * scale + 1e-3, (err, scale)     # layout bugs -> err ~ scale
    print("KERNEL_OK")
</pallas_src>

<mosaic_0001>
module attributes {stable_mosaic.version = 11 : i64} {
  func.func @kernel(%arg0: i32, %arg1: memref<1x442x64xf32, #tpu.memory_space<vmem>>, %arg2: memref<4x64x32xbf16, #tpu.memory_space<vmem>>, %arg3: memref<1x32xf32, #tpu.memory_space<vmem>>, %arg4: memref<1x420x32xf32, #tpu.memory_space<vmem>>) attributes {dimension_semantics = [#tpu.dimension_semantics<parallel>], iteration_bounds = array<i64: 2>, scalar_prefetch = 0 : i64, scratch_operands = 0 : i64, tpu.core_type = #tpu.core_type<tc>, window_params = [{transform_indices = @transform_0, window_bounds = array<i64: 1, 442, 64>}, {pipeline_mode = #tpu.pipeline_mode<synchronous>, transform_indices = @transform_1, window_bounds = array<i64: 4, 64, 32>}, {pipeline_mode = #tpu.pipeline_mode<synchronous>, transform_indices = @transform_2, window_bounds = array<i64: 1, 32>}, {transform_indices = @transform_3, window_bounds = array<i64: 1, 420, 32>}]} {
    %c0 = arith.constant 0 : index
    %c0_0 = arith.constant 0 : index
    %c0_1 = arith.constant 0 : index
    %0 = vector.load %arg1[%c0, %c0_0, %c0_1] : memref<1x442x64xf32, #tpu.memory_space<vmem>>, vector<1x420x64xf32>
    %1 = vector.shape_cast %0 : vector<1x420x64xf32> to vector<420x64xf32>
    %2 = arith.truncf %1 : vector<420x64xf32> to vector<420x64xbf16>
    %c0_2 = arith.constant 0 : index
    %c0_3 = arith.constant 0 : index
    %c0_4 = arith.constant 0 : index
    %3 = vector.load %arg2[%c0_2, %c0_3, %c0_4] : memref<4x64x32xbf16, #tpu.memory_space<vmem>>, vector<1x64x32xbf16>
    %4 = vector.shape_cast %3 : vector<1x64x32xbf16> to vector<64x32xbf16>
    %cst = arith.constant dense<0.000000e+00> : vector<420x32xf32>
    %5 = tpu.matmul %2, %4, %cst {dimension_numbers = #tpu.dot_dimension_numbers<[1], [0], [0], [1], [0, 0, 1, 1], [], []>} : vector<420x64xbf16>, vector<64x32xbf16>, vector<420x32xf32> -> vector<420x32xf32>
    %c0_5 = arith.constant 0 : index
    %c1 = arith.constant 1 : index
    %c0_6 = arith.constant 0 : index
    %6 = vector.load %arg1[%c0_5, %c1, %c0_6] : memref<1x442x64xf32, #tpu.memory_space<vmem>>, vector<1x420x64xf32>
    %7 = vector.shape_cast %6 : vector<1x420x64xf32> to vector<420x64xf32>
    %8 = arith.truncf %7 : vector<420x64xf32> to vector<420x64xbf16>
    %c1_7 = arith.constant 1 : index
    %c0_8 = arith.constant 0 : index
    %c0_9 = arith.constant 0 : index
    %9 = vector.load %arg2[%c1_7, %c0_8, %c0_9] : memref<4x64x32xbf16, #tpu.memory_space<vmem>>, vector<1x64x32xbf16>
    %10 = vector.shape_cast %9 : vector<1x64x32xbf16> to vector<64x32xbf16>
    %cst_10 = arith.constant dense<0.000000e+00> : vector<420x32xf32>
    %11 = tpu.matmul %8, %10, %cst_10 {dimension_numbers = #tpu.dot_dimension_numbers<[1], [0], [0], [1], [0, 0, 1, 1], [], []>} : vector<420x64xbf16>, vector<64x32xbf16>, vector<420x32xf32> -> vector<420x32xf32>
    %12 = arith.addf %5, %11 : vector<420x32xf32>
    %c0_11 = arith.constant 0 : index
    %c21 = arith.constant 21 : index
    %c0_12 = arith.constant 0 : index
    %13 = vector.load %arg1[%c0_11, %c21, %c0_12] : memref<1x442x64xf32, #tpu.memory_space<vmem>>, vector<1x420x64xf32>
    %14 = vector.shape_cast %13 : vector<1x420x64xf32> to vector<420x64xf32>
    %15 = arith.truncf %14 : vector<420x64xf32> to vector<420x64xbf16>
    %c2 = arith.constant 2 : index
    %c0_13 = arith.constant 0 : index
    %c0_14 = arith.constant 0 : index
    %16 = vector.load %arg2[%c2, %c0_13, %c0_14] : memref<4x64x32xbf16, #tpu.memory_space<vmem>>, vector<1x64x32xbf16>
    %17 = vector.shape_cast %16 : vector<1x64x32xbf16> to vector<64x32xbf16>
    %cst_15 = arith.constant dense<0.000000e+00> : vector<420x32xf32>
    %18 = tpu.matmul %15, %17, %cst_15 {dimension_numbers = #tpu.dot_dimension_numbers<[1], [0], [0], [1], [0, 0, 1, 1], [], []>} : vector<420x64xbf16>, vector<64x32xbf16>, vector<420x32xf32> -> vector<420x32xf32>
    %19 = arith.addf %12, %18 : vector<420x32xf32>
    %c0_16 = arith.constant 0 : index
    %c22 = arith.constant 22 : index
    %c0_17 = arith.constant 0 : index
    %20 = vector.load %arg1[%c0_16, %c22, %c0_17] : memref<1x442x64xf32, #tpu.memory_space<vmem>>, vector<1x420x64xf32>
    %21 = vector.shape_cast %20 : vector<1x420x64xf32> to vector<420x64xf32>
    %22 = arith.truncf %21 : vector<420x64xf32> to vector<420x64xbf16>
    %c3 = arith.constant 3 : index
    %c0_18 = arith.constant 0 : index
    %c0_19 = arith.constant 0 : index
    %23 = vector.load %arg2[%c3, %c0_18, %c0_19] : memref<4x64x32xbf16, #tpu.memory_space<vmem>>, vector<1x64x32xbf16>
    %24 = vector.shape_cast %23 : vector<1x64x32xbf16> to vector<64x32xbf16>
    %cst_20 = arith.constant dense<0.000000e+00> : vector<420x32xf32>
    %25 = tpu.matmul %22, %24, %cst_20 {dimension_numbers = #tpu.dot_dimension_numbers<[1], [0], [0], [1], [0, 0, 1, 1], [], []>} : vector<420x64xbf16>, vector<64x32xbf16>, vector<420x32xf32> -> vector<420x32xf32>
    %26 = arith.addf %19, %25 : vector<420x32xf32>
    %c0_21 = arith.constant 0 : index
    %c0_22 = arith.constant 0 : index
    %27 = vector.load %arg3[%c0_21, %c0_22] : memref<1x32xf32, #tpu.memory_space<vmem>>, vector<1x32xf32>
    %28 = vector.broadcast %27 : vector<1x32xf32> to vector<420x32xf32>
    %29 = arith.addf %26, %28 : vector<420x32xf32>
    %cst_23 = arith.constant 0.000000e+00 : f32
    %30 = vector.broadcast %cst_23 : f32 to vector<420x32xf32>
    %31 = arith.maximumf %29, %30 : vector<420x32xf32>
    %c0_24 = arith.constant 0 : index
    %c0_25 = arith.constant 0 : index
    %c0_26 = arith.constant 0 : index
    %32 = vector.load %arg4[%c0_24, %c0_25, %c0_26] : memref<1x420x32xf32, #tpu.memory_space<vmem>>, vector<1x420x32xf32>
    %33 = vector.shape_cast %32 : vector<1x420x32xf32> to vector<420x32xf32>
    %34 = vector.shape_cast %31 : vector<420x32xf32> to vector<1x420x32xf32>
    tpu.vector_store %arg4[%c0_24, %c0_25, %c0_26], %34 {strides = array<i32>} : memref<1x420x32xf32, #tpu.memory_space<vmem>>, vector<1x420x32xf32>,
    return
  }
  func.func @transform_0(%arg0: i32) -> (i32, i32, i32) {
    %c0_i32 = arith.constant 0 : i32
    %c0_i32_0 = arith.constant 0 : i32
    %c0_i32_1 = arith.constant 0 : i32
    return %arg0, %c0_i32, %c0_i32_0 : i32, i32, i32
  }
  func.func @transform_1(%arg0: i32) -> (i32, i32, i32) {
    %c0_i32 = arith.constant 0 : i32
    %c0_i32_0 = arith.constant 0 : i32
    %c0_i32_1 = arith.constant 0 : i32
    %c0_i32_2 = arith.constant 0 : i32
    return %c0_i32, %c0_i32_0, %c0_i32_1 : i32, i32, i32
  }
  func.func @transform_2(%arg0: i32) -> (i32, i32) {
    %c0_i32 = arith.constant 0 : i32
    %c0_i32_0 = arith.constant 0 : i32
    %c0_i32_1 = arith.constant 0 : i32
    return %c0_i32, %c0_i32_0 : i32, i32
  }
  func.func @transform_3(%arg0: i32) -> (i32, i32, i32) {
    %c0_i32 = arith.constant 0 : i32
    %c0_i32_0 = arith.constant 0 : i32
    %c0_i32_1 = arith.constant 0 : i32
    return %arg0, %c0_i32, %c0_i32_0 : i32, i32, i32
  }
}

module attributes {stable_mosaic.version = 11 : i64} {
  func.func @kernel(%arg0: i32, %arg1: memref<1x103x128xf32, #tpu.memory_space<vmem>>, %arg2: memref<4x128x64xbf16, #tpu.memory_space<vmem>>, %arg3: memref<1x64xf32, #tpu.memory_space<vmem>>, %arg4: memref<9x64x64xbf16, #tpu.memory_space<vmem>>, %arg5: memref<1x64xf32, #tpu.memory_space<vmem>>, %arg6: memref<1x70x64xf32, #tpu.memory_space<vmem>>) attributes {dimension_semantics = [#tpu.dimension_semantics<parallel>], iteration_bounds = array<i64: 2>, scalar_prefetch = 0 : i64, scratch_operands = 0 : i64, tpu.core_type = #tpu.core_type<tc>, window_params = [{transform_indices = @transform_0, window_bounds = array<i64: 1, 103, 128>}, {pipeline_mode = #tpu.pipeline_mode<synchronous>, transform_indices = @transform_1, window_bounds = array<i64: 4, 128, 64>}, {pipeline_mode = #tpu.pipeline_mode<synchronous>, transform_indices = @transform_2, window_bounds = array<i64: 1, 64>}, {pipeline_mode = #tpu.pipeline_mode<synchronous>, transform_indices = @transform_3, window_bounds = array<i64: 9, 64, 64>}, {pipeline_mode = #tpu.pipeline_mode<synchronous>, transform_indices = @transform_4, window_bounds = array<i64: 1, 64>}, {transform_indices = @transform_5, window_bounds = array<i64: 1, 70, 64>}]} {
    %c0 = arith.constant 0 : index
    %c0_0 = arith.constant 0 : index
    %c0_1 = arith.constant 0 : index
    %0 = vector.load %arg1[%c0, %c0_0, %c0_1] : memref<1x103x128xf32, #tpu.memory_space<vmem>>, vector<1x92x128xf32>
    %1 = vector.shape_cast %0 : vector<1x92x128xf32> to vector<92x128xf32>
    %2 = arith.truncf %1 : vector<92x128xf32> to vector<92x128xbf16>
    %c0_2 = arith.constant 0 : index
    %c0_3 = arith.constant 0 : index
    %c0_4 = arith.constant 0 : index
    %3 = vector.load %arg2[%c0_2, %c0_3, %c0_4] : memref<4x128x64xbf16, #tpu.memory_space<vmem>>, vector<1x128x64xbf16>
    %4 = vector.shape_cast %3 : vector<1x128x64xbf16> to vector<128x64xbf16>
    %cst = arith.constant dense<0.000000e+00> : vector<92x64xf32>
    %5 = tpu.matmul %2, %4, %cst {dimension_numbers = #tpu.dot_dimension_numbers<[1], [0], [0], [1], [0, 0, 1, 1], [], []>} : vector<92x128xbf16>, vector<128x64xbf16>, vector<92x64xf32> -> vector<92x64xf32>
    %c0_5 = arith.constant 0 : index
    %c1 = arith.constant 1 : index
    %c0_6 = arith.constant 0 : index
    %6 = vector.load %arg1[%c0_5, %c1, %c0_6] : memref<1x103x128xf32, #tpu.memory_space<vmem>>, vector<1x92x128xf32>
    %7 = vector.shape_cast %6 : vector<1x92x128xf32> to vector<92x128xf32>
    %8 = arith.truncf %7 : vector<92x128xf32> to vector<92x128xbf16>
    %c1_7 = arith.constant 1 : index
    %c0_8 = arith.constant 0 : index
    %c0_9 = arith.constant 0 : index
    %9 = vector.load %arg2[%c1_7, %c0_8, %c0_9] : memref<4x128x64xbf16, #tpu.memory_space<vmem>>, vector<1x128x64xbf16>
    %10 = vector.shape_cast %9 : vector<1x128x64xbf16> to vector<128x64xbf16>
    %cst_10 = arith.constant dense<0.000000e+00> : vector<92x64xf32>
    %11 = tpu.matmul %8, %10, %cst_10 {dimension_numbers = #tpu.dot_dimension_numbers<[1], [0], [0], [1], [0, 0, 1, 1], [], []>} : vector<92x128xbf16>, vector<128x64xbf16>, vector<92x64xf32> -> vector<92x64xf32>
    %12 = arith.addf %5, %11 : vector<92x64xf32>
    %c0_11 = arith.constant 0 : index
    %c10 = arith.constant 10 : index
    %c0_12 = arith.constant 0 : index
    %13 = vector.load %arg1[%c0_11, %c10, %c0_12] : memref<1x103x128xf32, #tpu.memory_space<vmem>>, vector<1x92x128xf32>
    %14 = vector.shape_cast %13 : vector<1x92x128xf32> to vector<92x128xf32>
    %15 = arith.truncf %14 : vector<92x128xf32> to vector<92x128xbf16>
    %c2 = arith.constant 2 : index
    %c0_13 = arith.constant 0 : index
    %c0_14 = arith.constant 0 : index
    %16 = vector.load %arg2[%c2, %c0_13, %c0_14] : memref<4x128x64xbf16, #tpu.memory_space<vmem>>, vector<1x128x64xbf16>
    %17 = vector.shape_cast %16 : vector<1x128x64xbf16> to vector<128x64xbf16>
    %cst_15 = arith.constant dense<0.000000e+00> : vector<92x64xf32>
    %18 = tpu.matmul %15, %17, %cst_15 {dimension_numbers = #tpu.dot_dimension_numbers<[1], [0], [0], [1], [0, 0, 1, 1], [], []>} : vector<92x128xbf16>, vector<128x64xbf16>, vector<92x64xf32> -> vector<92x64xf32>
    %19 = arith.addf %12, %18 : vector<92x64xf32>
    %c0_16 = arith.constant 0 : index
    %c11 = arith.constant 11 : index
    %c0_17 = arith.constant 0 : index
    %20 = vector.load %arg1[%c0_16, %c11, %c0_17] : memref<1x103x128xf32, #tpu.memory_space<vmem>>, vector<1x92x128xf32>
    %21 = vector.shape_cast %20 : vector<1x92x128xf32> to vector<92x128xf32>
    %22 = arith.truncf %21 : vector<92x128xf32> to vector<92x128xbf16>
    %c3 = arith.constant 3 : index
    %c0_18 = arith.constant 0 : index
    %c0_19 = arith.constant 0 : index
    %23 = vector.load %arg2[%c3, %c0_18, %c0_19] : memref<4x128x64xbf16, #tpu.memory_space<vmem>>, vector<1x128x64xbf16>
    %24 = vector.shape_cast %23 : vector<1x128x64xbf16> to vector<128x64xbf16>
    %cst_20 = arith.constant dense<0.000000e+00> : vector<92x64xf32>
    %25 = tpu.matmul %22, %24, %cst_20 {dimension_numbers = #tpu.dot_dimension_numbers<[1], [0], [0], [1], [0, 0, 1, 1], [], []>} : vector<92x128xbf16>, vector<128x64xbf16>, vector<92x64xf32> -> vector<92x64xf32>
    %26 = arith.addf %19, %25 : vector<92x64xf32>
    %c0_21 = arith.constant 0 : index
    %c0_22 = arith.constant 0 : index
    %27 = vector.load %arg3[%c0_21, %c0_22] : memref<1x64xf32, #tpu.memory_space<vmem>>, vector<1x64xf32>
    %28 = vector.broadcast %27 : vector<1x64xf32> to vector<92x64xf32>
    %29 = arith.addf %26, %28 : vector<92x64xf32>
    %cst_23 = arith.constant 0.000000e+00 : f32
    %30 = vector.broadcast %cst_23 : f32 to vector<92x64xf32>
    %31 = arith.maximumf %29, %30 : vector<92x64xf32>
    %32 = arith.truncf %31 : vector<92x64xf32> to vector<92x64xbf16>
    %33 = vector.extract_strided_slice %32 {offsets = [0, 0], sizes = [70, 64], strides = [1, 1]} : vector<92x64xbf16> to vector<70x64xbf16>
    %c0_24 = arith.constant 0 : index
    %c0_25 = arith.constant 0 : index
    %c0_26 = arith.constant 0 : index
    %34 = vector.load %arg4[%c0_24, %c0_25, %c0_26] : memref<9x64x64xbf16, #tpu.memory_space<vmem>>, vector<1x64x64xbf16>
    %35 = vector.shape_cast %34 : vector<1x64x64xbf16> to vector<64x64xbf16>
    %cst_27 = arith.constant dense<0.000000e+00> : vector<70x64xf32>
    %36 = tpu.matmul %33, %35, %cst_27 {dimension_numbers = #tpu.dot_dimension_numbers<[1], [0], [0], [1], [0, 0, 1, 1], [], []>} : vector<70x64xbf16>, vector<64x64xbf16>, vector<70x64xf32> -> vector<70x64xf32>
    %37 = vector.extract_strided_slice %32 {offsets = [1, 0], sizes = [70, 64], strides = [1, 1]} : vector<92x64xbf16> to vector<70x64xbf16>
    %c1_28 = arith.constant 1 : index
    %c0_29 = arith.constant 0 : index
    %c0_30 = arith.constant 0 : index
    %38 = vector.load %arg4[%c1_28, %c0_29, %c0_30] : memref<9x64x64xbf16, #tpu.memory_space<vmem>>, vector<1x64x64xbf16>
    %39 = vector.shape_cast %38 : vector<1x64x64xbf16> to vector<64x64xbf16>
    %cst_31 = arith.constant dense<0.000000e+00> : vector<70x64xf32>
    %40 = tpu.matmul %37, %39, %cst_31 {dimension_numbers = #tpu.dot_dimension_numbers<[1], [0], [0], [1], [0, 0, 1, 1], [], []>} : vector<70x64xbf16>, vector<64x64xbf16>, vector<70x64xf32> -> vector<70x64xf32>
    %41 = arith.addf %36, %40 : vector<70x64xf32>
    %42 = vector.extract_strided_slice %32 {offsets = [2, 0], sizes = [70, 64], strides = [1, 1]} : vector<92x64xbf16> to vector<70x64xbf16>
    %c2_32 = arith.constant 2 : index
    %c0_33 = arith.constant 0 : index
    %c0_34 = arith.constant 0 : index
    %43 = vector.load %arg4[%c2_32, %c0_33, %c0_34] : memref<9x64x64xbf16, #tpu.memory_space<vmem>>, vector<1x64x64xbf16>
    %44 = vector.shape_cast %43 : vector<1x64x64xbf16> to vector<64x64xbf16>
    %cst_35 = arith.constant dense<0.000000e+00> : vector<70x64xf32>
    %45 = tpu.matmul %42, %44, %cst_35 {dimension_numbers = #tpu.dot_dimension_numbers<[1], [0], [0], [1], [0, 0, 1, 1], [], []>} : vector<70x64xbf16>, vector<64x64xbf16>, vector<70x64xf32> -> vector<70x64xf32>
    %46 = arith.addf %41, %45 : vector<70x64xf32>
    %47 = vector.extract_strided_slice %32 {offsets = [10, 0], sizes = [70, 64], strides = [1, 1]} : vector<92x64xbf16> to vector<70x64xbf16>
    %c3_36 = arith.constant 3 : index
    %c0_37 = arith.constant 0 : index
    %c0_38 = arith.constant 0 : index
    %48 = vector.load %arg4[%c3_36, %c0_37, %c0_38] : memref<9x64x64xbf16, #tpu.memory_space<vmem>>, vector<1x64x64xbf16>
    %49 = vector.shape_cast %48 : vector<1x64x64xbf16> to vector<64x64xbf16>
    %cst_39 = arith.constant dense<0.000000e+00> : vector<70x64xf32>
    %50 = tpu.matmul %47, %49, %cst_39 {dimension_numbers = #tpu.dot_dimension_numbers<[1], [0], [0], [1], [0, 0, 1, 1], [], []>} : vector<70x64xbf16>, vector<64x64xbf16>, vector<70x64xf32> -> vector<70x64xf32>
    %51 = arith.addf %46, %50 : vector<70x64xf32>
    %52 = vector.extract_strided_slice %32 {offsets = [11, 0], sizes = [70, 64], strides = [1, 1]} : vector<92x64xbf16> to vector<70x64xbf16>
    %c4 = arith.constant 4 : index
    %c0_40 = arith.constant 0 : index
    %c0_41 = arith.constant 0 : index
    %53 = vector.load %arg4[%c4, %c0_40, %c0_41] : memref<9x64x64xbf16, #tpu.memory_space<vmem>>, vector<1x64x64xbf16>
    %54 = vector.shape_cast %53 : vector<1x64x64xbf16> to vector<64x64xbf16>
    %cst_42 = arith.constant dense<0.000000e+00> : vector<70x64xf32>
    %55 = tpu.matmul %52, %54, %cst_42 {dimension_numbers = #tpu.dot_dimension_numbers<[1], [0], [0], [1], [0, 0, 1, 1], [], []>} : vector<70x64xbf16>, vector<64x64xbf16>, vector<70x64xf32> -> vector<70x64xf32>
    %56 = arith.addf %51, %55 : vector<70x64xf32>
    %57 = vector.extract_strided_slice %32 {offsets = [12, 0], sizes = [70, 64], strides = [1, 1]} : vector<92x64xbf16> to vector<70x64xbf16>
    %c5 = arith.constant 5 : index
    %c0_43 = arith.constant 0 : index
    %c0_44 = arith.constant 0 : index
    %58 = vector.load %arg4[%c5, %c0_43, %c0_44] : memref<9x64x64xbf16, #tpu.memory_space<vmem>>, vector<1x64x64xbf16>
    %59 = vector.shape_cast %58 : vector<1x64x64xbf16> to vector<64x64xbf16>
    %cst_45 = arith.constant dense<0.000000e+00> : vector<70x64xf32>
    %60 = tpu.matmul %57, %59, %cst_45 {dimension_numbers = #tpu.dot_dimension_numbers<[1], [0], [0], [1], [0, 0, 1, 1], [], []>} : vector<70x64xbf16>, vector<64x64xbf16>, vector<70x64xf32> -> vector<70x64xf32>
    %61 = arith.addf %56, %60 : vector<70x64xf32>
    %62 = vector.extract_strided_slice %32 {offsets = [20, 0], sizes = [70, 64], strides = [1, 1]} : vector<92x64xbf16> to vector<70x64xbf16>
    %c6 = arith.constant 6 : index
    %c0_46 = arith.constant 0 : index
    %c0_47 = arith.constant 0 : index
    %63 = vector.load %arg4[%c6, %c0_46, %c0_47] : memref<9x64x64xbf16, #tpu.memory_space<vmem>>, vector<1x64x64xbf16>
    %64 = vector.shape_cast %63 : vector<1x64x64xbf16> to vector<64x64xbf16>
    %cst_48 = arith.constant dense<0.000000e+00> : vector<70x64xf32>
    %65 = tpu.matmul %62, %64, %cst_48 {dimension_numbers = #tpu.dot_dimension_numbers<[1], [0], [0], [1], [0, 0, 1, 1], [], []>} : vector<70x64xbf16>, vector<64x64xbf16>, vector<70x64xf32> -> vector<70x64xf32>
    %66 = arith.addf %61, %65 : vector<70x64xf32>
    %67 = vector.extract_strided_slice %32 {offsets = [21, 0], sizes = [70, 64], strides = [1, 1]} : vector<92x64xbf16> to vector<70x64xbf16>
    %c7 = arith.constant 7 : index
    %c0_49 = arith.constant 0 : index
    %c0_50 = arith.constant 0 : index
    %68 = vector.load %arg4[%c7, %c0_49, %c0_50] : memref<9x64x64xbf16, #tpu.memory_space<vmem>>, vector<1x64x64xbf16>
    %69 = vector.shape_cast %68 : vector<1x64x64xbf16> to vector<64x64xbf16>
    %cst_51 = arith.constant dense<0.000000e+00> : vector<70x64xf32>
    %70 = tpu.matmul %67, %69, %cst_51 {dimension_numbers = #tpu.dot_dimension_numbers<[1], [0], [0], [1], [0, 0, 1, 1], [], []>} : vector<70x64xbf16>, vector<64x64xbf16>, vector<70x64xf32> -> vector<70x64xf32>
    %71 = arith.addf %66, %70 : vector<70x64xf32>
    %72 = vector.extract_strided_slice %32 {offsets = [22, 0], sizes = [70, 64], strides = [1, 1]} : vector<92x64xbf16> to vector<70x64xbf16>
    %c8 = arith.constant 8 : index
    %c0_52 = arith.constant 0 : index
    %c0_53 = arith.constant 0 : index
    %73 = vector.load %arg4[%c8, %c0_52, %c0_53] : memref<9x64x64xbf16, #tpu.memory_space<vmem>>, vector<1x64x64xbf16>
    %74 = vector.shape_cast %73 : vector<1x64x64xbf16> to vector<64x64xbf16>
    %cst_54 = arith.constant dense<0.000000e+00> : vector<70x64xf32>
    %75 = tpu.matmul %72, %74, %cst_54 {dimension_numbers = #tpu.dot_dimension_numbers<[1], [0], [0], [1], [0, 0, 1, 1], [], []>} : vector<70x64xbf16>, vector<64x64xbf16>, vector<70x64xf32> -> vector<70x64xf32>
    %76 = arith.addf %71, %75 : vector<70x64xf32>
    %c0_55 = arith.constant 0 : index
    %c0_56 = arith.constant 0 : index
    %77 = vector.load %arg5[%c0_55, %c0_56] : memref<1x64xf32, #tpu.memory_space<vmem>>, vector<1x64xf32>
    %78 = vector.broadcast %77 : vector<1x64xf32> to vector<70x64xf32>
    %79 = arith.addf %76, %78 : vector<70x64xf32>
    %cst_57 = arith.constant 0.000000e+00 : f32
    %80 = vector.broadcast %cst_57 : f32 to vector<70x64xf32>
    %81 = arith.maximumf %79, %80 : vector<70x64xf32>
    %c0_58 = arith.constant 0 : index
    %c0_59 = arith.constant 0 : index
    %c0_60 = arith.constant 0 : index
    %82 = vector.load %arg6[%c0_58, %c0_59, %c0_60] : memref<1x70x64xf32, #tpu.memory_space<vmem>>, vector<1x70x64xf32>
    %83 = vector.shape_cast %82 : vector<1x70x64xf32> to vector<70x64xf32>
    %84 = vector.shape_cast %81 : vector<70x64xf32> to vector<1x70x64xf32>
    tpu.vector_store %arg6[%c0_58, %c0_59, %c0_60], %84 {strides = array<i32>} : memref<1x70x64xf32, #tpu.memory_space<vmem>>, vector<1x70x64xf32>,
    return
  }
  func.func @transform_0(%arg0: i32) -> (i32, i32, i32) {
    %c0_i32 = arith.constant 0 : i32
    %c0_i32_0 = arith.constant 0 : i32
    %c0_i32_1 = arith.constant 0 : i32
    return %arg0, %c0_i32, %c0_i32_0 : i32, i32, i32
  }
  func.func @transform_1(%arg0: i32) -> (i32, i32, i32) {
    %c0_i32 = arith.constant 0 : i32
    %c0_i32_0 = arith.constant 0 : i32
    %c0_i32_1 = arith.constant 0 : i32
    %c0_i32_2 = arith.constant 0 : i32
    return %c0_i32, %c0_i32_0, %c0_i32_1 : i32, i32, i32
  }
  func.func @transform_2(%arg0: i32) -> (i32, i32) {
    %c0_i32 = arith.constant 0 : i32
    %c0_i32_0 = arith.constant 0 : i32
    %c0_i32_1 = arith.constant 0 : i32
    return %c0_i32, %c0_i32_0 : i32, i32
  }
  func.func @transform_3(%arg0: i32) -> (i32, i32, i32) {
    %c0_i32 = arith.constant 0 : i32
    %c0_i32_0 = arith.constant 0 : i32
    %c0_i32_1 = arith.constant 0 : i32
    %c0_i32_2 = arith.constant 0 : i32
    return %c0_i32, %c0_i32_0, %c0_i32_1 : i32, i32, i32
  }
  func.func @transform_4(%arg0: i32) -> (i32, i32) {
    %c0_i32 = arith.constant 0 : i32
    %c0_i32_0 = arith.constant 0 : i32
    %c0_i32_1 = arith.constant 0 : i32
    return %c0_i32, %c0_i32_0 : i32, i32
  }
  func.func @transform_5(%arg0: i32) -> (i32, i32, i32) {
    %c0_i32 = arith.constant 0 : i32
    %c0_i32_0 = arith.constant 0 : i32
    %c0_i32_1 = arith.constant 0 : i32
    return %arg0, %c0_i32, %c0_i32_0 : i32, i32, i32
  }
}

module attributes {stable_mosaic.version = 11 : i64} {
  func.func @_fc_kernel(%arg0: i32, %arg1: memref<2x3136xf32, #tpu.memory_space<vmem>>, %arg2: memref<3136x256xbf16, #tpu.memory_space<vmem>>, %arg3: memref<1x256xf32, #tpu.memory_space<vmem>>, %arg4: memref<2x256xf32, #tpu.memory_space<vmem>>) attributes {dimension_semantics = [#tpu.dimension_semantics<parallel>], iteration_bounds = array<i64: 2>, scalar_prefetch = 0 : i64, scratch_operands = 0 : i64, tpu.core_type = #tpu.core_type<tc>, window_params = [{pipeline_mode = #tpu.pipeline_mode<synchronous>, transform_indices = @transform_0, window_bounds = array<i64: 2, 3136>}, {transform_indices = @transform_1, window_bounds = array<i64: 3136, 256>}, {transform_indices = @transform_2, window_bounds = array<i64: 1, 256>}, {transform_indices = @transform_3, window_bounds = array<i64: 2, 256>}]} {
    %c0 = arith.constant 0 : index
    %c0_0 = arith.constant 0 : index
    %0 = vector.load %arg1[%c0, %c0_0] : memref<2x3136xf32, #tpu.memory_space<vmem>>, vector<2x3136xf32>
    %1 = arith.truncf %0 : vector<2x3136xf32> to vector<2x3136xbf16>
    %c0_1 = arith.constant 0 : index
    %c0_2 = arith.constant 0 : index
    %2 = vector.load %arg2[%c0_1, %c0_2] : memref<3136x256xbf16, #tpu.memory_space<vmem>>, vector<3136x256xbf16>
    %cst = arith.constant dense<0.000000e+00> : vector<2x256xf32>
    %3 = tpu.matmul %1, %2, %cst {dimension_numbers = #tpu.dot_dimension_numbers<[1], [0], [0], [1], [0, 0, 1, 1], [], []>} : vector<2x3136xbf16>, vector<3136x256xbf16>, vector<2x256xf32> -> vector<2x256xf32>
    %c0_3 = arith.constant 0 : index
    %c0_4 = arith.constant 0 : index
    %4 = vector.load %arg3[%c0_3, %c0_4] : memref<1x256xf32, #tpu.memory_space<vmem>>, vector<1x256xf32>
    %5 = vector.broadcast %4 : vector<1x256xf32> to vector<2x256xf32>
    %6 = arith.addf %3, %5 : vector<2x256xf32>
    %cst_5 = arith.constant 0.000000e+00 : f32
    %7 = vector.broadcast %cst_5 : f32 to vector<2x256xf32>
    %8 = arith.maximumf %6, %7 : vector<2x256xf32>
    %c0_6 = arith.constant 0 : index
    %c0_7 = arith.constant 0 : index
    %9 = vector.load %arg4[%c0_6, %c0_7] : memref<2x256xf32, #tpu.memory_space<vmem>>, vector<2x256xf32>
    tpu.vector_store %arg4[%c0_6, %c0_7], %8 {strides = array<i32>} : memref<2x256xf32, #tpu.memory_space<vmem>>, vector<2x256xf32>,
    return
  }
  func.func @transform_0(%arg0: i32) -> (i32, i32) {
    %c0_i32 = arith.constant 0 : i32
    %c0_i32_0 = arith.constant 0 : i32
    %c0_i32_1 = arith.constant 0 : i32
    return %c0_i32, %c0_i32_0 : i32, i32
  }
  func.func @transform_1(%arg0: i32) -> (i32, i32) {
    %c0_i32 = arith.constant 0 : i32
    %c0_i32_0 = arith.constant 0 : i32
    return %c0_i32, %arg0 : i32, i32
  }
  func.func @transform_2(%arg0: i32) -> (i32, i32) {
    %c0_i32 = arith.constant 0 : i32
    %c0_i32_0 = arith.constant 0 : i32
    return %c0_i32, %arg0 : i32, i32
  }
  func.func @transform_3(%arg0: i32) -> (i32, i32) {
    %c0_i32 = arith.constant 0 : i32
    %c0_i32_0 = arith.constant 0 : i32
    return %c0_i32, %arg0 : i32, i32
  }
}

</mosaic_0001>

<llo_original>
// kernel: atari_backbone.3
$region0: #{atari_backbone.3}
  #allocation0 [shape = 'u32[]', space=smem, size = 0x4, offset = 0x4, fixed_abs, tag = 'smem constant byte address 0x4 - core index']
  #allocation1 [shape = 'u32[144,128]{1,0:T(1,128)}', space=vmem, size = 0x12000, scoped, tag = 'internal scratch']
  %s0 = inlined_call_operand.vmem [shape: f32[2,442,64], index: 0, kind: input, shape index: {}]
  %s1 = inlined_call_operand.vmem [shape: bf16[4,64,32], index: 1, kind: input, shape index: {}]
  %s2 = inlined_call_operand.vmem [shape: f32[1,32], index: 2, kind: input, shape index: {}]
  %s3 = inlined_call_operand.vmem [shape: f32[2,420,32], index: 3, kind: output, shape index: {}]
  %s4 = sld [smem:[#allocation0]]
  $region45: #{atari_backbone.3} parent=0
    _
  %s6 = ssub.s32 1, %s4
  %s7 = scalar_select 0, %s6, %s4
  loop: start=0, step=1, limit=4
  $region2: #{atari_backbone.3} parent=0 // loop_pre_header
    _
  $region3: #{atari_backbone.3} parent=0 // loop_header
    %s9 = sphi 0, %s13
    %p10 = scmp.ge.s32.totalorder %s9, 4
    %s19 = sphi 0, %s21
    %s22 = sphi 0, %s19
    %s23 = sphi 0, %s22
    %s39 = sphi 0, %s23
    %s43 = sphi 0, %s43
    %s45 = sphi 0, %s43
    %s46 = sphi 0, %s45
    %s60 = sphi 0, %s46
    %s64 = sphi 0, %s64
    %s66 = sphi 0, %s64
    %s67 = sphi 0, %s66
    %s81 = sphi 0, %s67
    %s87 = sphi 0, %s89
    %s90 = sphi 0, %s87
    %s91 = sphi 0, %s90
    %s107 = sphi 0, %s91
  $region4: #{atari_backbone.3} parent=0 // loop_header_branch
    %12 = sbr.rel (%p10) target = $region8
  $region5: #{atari_backbone.3} parent=0 // loop_body
    %s14 = ssub.s32 %s9, 1
    %s15 = ssub.s32 %s9, 2
    %s16 = sadd.s32 %s9, 1
    %s17 = ssub.s32 %s9, %s16
    %p18 = scmp.eq.s32.totalorder %s17, 0
    %s20 = sadd.s32 %s19, 1
    %s21 = scalar_select %p18, %s19, %s20
    %p24 = pneg %p18
    %p25 = scmp.eq.s32.totalorder %s9, 1
    %p26 = por %p24, %p25
    %p27 = scmp.ne.s32.totalorder %s19, %s22
    %p28 = scmp.eq.s32.totalorder %s9, 0
    %p29 = por %p27, %p28
    %p30 = scmp.ne.s32.totalorder %s19, %s22
    %p31 = scmp.eq.s32.totalorder %s14, 1
    %p32 = por %p30, %p31
    %p33 = scmp.ne.s32.totalorder %s22, %s23
    %p34 = scmp.eq.s32.totalorder %s14, 0
    %p35 = por %p33, %p34
    %p36 = scmp.ne.s32.totalorder %s22, %s23
    %p37 = scmp.eq.s32.totalorder %s15, 1
    %p38 = por %p36, %p37
    %p40 = scmp.ne.s32.totalorder %s23, %s39
    %p41 = scmp.eq.s32.totalorder %s15, 0
    %p42 = por %p40, %p41
    %s44 = sadd.s32 %s43, 1
    %p47 = scmp.eq.s32.totalorder %s9, 1
    %p48 = scmp.ne.s32.totalorder %s43, %s45
    %p49 = scmp.eq.s32.totalorder %s9, 0
    %p50 = por %p48, %p49
    %p51 = scmp.ne.s32.totalorder %s43, %s45
    %p52 = scmp.eq.s32.totalorder %s14, 1
    %p53 = por %p51, %p52
    %p54 = scmp.ne.s32.totalorder %s45, %s46
    %p55 = scmp.eq.s32.totalorder %s14, 0
    %p56 = por %p54, %p55
    %p57 = scmp.ne.s32.totalorder %s45, %s46
    %p58 = scmp.eq.s32.totalorder %s15, 1
    %p59 = por %p57, %p58
    %p61 = scmp.ne.s32.totalorder %s46, %s60
    %p62 = scmp.eq.s32.totalorder %s15, 0
    %p63 = por %p61, %p62
    %s65 = sadd.s32 %s64, 1
    %p68 = scmp.eq.s32.totalorder %s9, 1
    %p69 = scmp.ne.s32.totalorder %s64, %s66
    %p70 = scmp.eq.s32.totalorder %s9, 0
    %p71 = por %p69, %p70
    %p72 = scmp.ne.s32.totalorder %s64, %s66
    %p73 = scmp.eq.s32.totalorder %s14, 1
    %p74 = por %p72, %p73
    %p75 = scmp.ne.s32.totalorder %s66, %s67
    %p76 = scmp.eq.s32.totalorder %s14, 0
    %p77 = por %p75, %p76
    %p78 = scmp.ne.s32.totalorder %s66, %s67
    %p79 = scmp.eq.s32.totalorder %s15, 1
    %p80 = por %p78, %p79
    %p82 = scmp.ne.s32.totalorder %s67, %s81
    %p83 = scmp.eq.s32.totalorder %s15, 0
    %p84 = por %p82, %p83
    %s85 = ssub.s32 %s9, %s16
    %p86 = scmp.eq.s32.totalorder %s85, 0
    %s88 = sadd.s32 %s87, 1
    %s89 = scalar_select %p86, %s87, %s88
    %p92 = pneg %p86
    %p93 = scmp.eq.s32.totalorder %s9, 1
    %p94 = por %p92, %p93
    %p95 = scmp.ne.s32.totalorder %s87, %s90
    %p96 = scmp.eq.s32.totalorder %s9, 0
    %p97 = por %p95, %p96
    %p98 = scmp.ne.s32.totalorder %s87, %s90
    %p99 = scmp.eq.s32.totalorder %s14, 1
    %p100 = por %p98, %p99
    %p101 = scmp.ne.s32.totalorder %s90, %s91
    %p102 = scmp.eq.s32.totalorder %s14, 0
    %p103 = por %p101, %p102
    %p104 = scmp.ne.s32.totalorder %s90, %s91
    %p105 = scmp.eq.s32.totalorder %s15, 1
    %p106 = por %p104, %p105
    %p108 = scmp.ne.s32.totalorder %s91, %s107
    %p109 = scmp.eq.s32.totalorder %s15, 0
    %p110 = por %p108, %p109
    %p111 = scmp.le.s32.totalorder 1, %s9
    %p112 = scmp.lt.s32.totalorder %s9, 3
    %p113 = pnand %p111, %p112
    %p114 = pneg %p113
    // Predicated region
    $region9: #{atari_backbone.3} parent=5 // pred_check
      _
    $region10: #{atari_backbone.3} parent=5 // pred_check_branch
      %116 = sbr.rel (%p113) target = $region12
    $region11: #{atari_backbone.3} parent=5 // pred_region
      %s117 = ssub.s32 %s9, 1
      // Predicated region
      $region13: #{atari_backbone.3} parent=11 // pred_check
        %p118 = pneg %p56
      $region14: #{atari_backbone.3} parent=11 // pred_check_branch
        %120 = sbr.rel (%p118) target = $region16
      $region15: #{atari_backbone.3} parent=11 // pred_region
        _
      $region16: #{atari_backbone.3} parent=11 // pred_fallthru
        _
      // Predicated region
      $region17: #{atari_backbone.3} parent=11 // pred_check
        %p121 = pneg %p77
      $region18: #{atari_backbone.3} parent=11 // pred_check_branch
        %123 = sbr.rel (%p121) target = $region20
      $region19: #{atari_backbone.3} parent=11 // pred_region
        _
      $region20: #{atari_backbone.3} parent=11 // pred_fallthru
        _
    $region12: #{atari_backbone.3} parent=5 // pred_fallthru
      _
    %p124 = scmp.lt.s32.totalorder %s9, 2
    // Predicated region
    $region21: #{atari_backbone.3} parent=5 // pred_check
      %p125 = pneg %p124
    $region22: #{atari_backbone.3} parent=5 // pred_check_branch
      %127 = sbr.rel (%p125) target = $region24
    $region23: #{atari_backbone.3} parent=5 // pred_region
      // Predicated region
      $region25: #{atari_backbone.3} parent=23 // pred_check
        %p128 = pneg %p29
      $region26: #{atari_backbone.3} parent=23 // pred_check_branch
        %130 = sbr.rel (%p128) target = $region28
      $region27: #{atari_backbone.3} parent=23 // pred_region
        %p131 = scmp.lt.s32.totalorder %s9, 1
        %s132 = scalar_select %p131, %s9, 1
        %s133 = smul.addr %s132, 56
        %s134 = smul.addr %s133, 8
        %s135 = scalar_lea.vmem %s0, %s134
      $region28: #{atari_backbone.3} parent=23 // pred_fallthru
        _
    $region24: #{atari_backbone.3} parent=5 // pred_fallthru
      _
    %p136 = scmp.le.s32.totalorder 1, %s9
    %p137 = scmp.lt.s32.totalorder %s9, 3
    %p138 = pnand %p136, %p137
    %p139 = pneg %p138
    // Predicated region
    $region29: #{atari_backbone.3} parent=5 // pred_check
      _
    $region30: #{atari_backbone.3} parent=5 // pred_check_branch
      %141 = sbr.rel (%p138) target = $region32
    $region31: #{atari_backbone.3} parent=5 // pred_region
      %s142 = ssub.s32 %s9, 1
      %p143 = scmp.lt.s32.totalorder %s14, 1
      %s144 = scalar_select %p143, %s14, 1
      %s145 = smul.addr %s144, 56
      %s146 = smul.addr %s145, 8
      %s147 = scalar_lea.vmem %s0, %s146
      %p148 = pneg %p35
      %p149 = pneg %p32
      %p150 = pneg %p56
      %p151 = pneg %p53
      %p152 = pneg %p77
      %p153 = pneg %p74
      %p154 = pneg %p103
      %p155 = pneg %p100
      %p156 = scmp.lt.s32.totalorder %s14, 1
      %s157 = scalar_select %p156, %s14, 1
      %s158 = smul.addr %s157, 53
      %s159 = smul.addr %s158, 8
      %s160 = scalar_lea.vmem %s3, %s159
      %p161 = scmp.lt.s32.totalorder %s14, 1
      %s162 = scalar_select %p161, %s14, 1
      %s163 = smul.addr %s162, 56
      %s164 = smul.addr %s163, 8
      %s165 = scalar_lea.vmem %s0, %s164
      %p166 = scmp.lt.s32.totalorder %s14, 1
      %s167 = scalar_select %p166, %s14, 1
      %s168 = smul.addr %s167, 53
      %s169 = smul.addr %s168, 8
      %s170 = scalar_lea.vmem %s3, %s169
      %v172 = vld [vmem:[%s165] sm:$0xff]
      %v173 = vld [vmem:[%s165 + $0x8] sm:$0xff]
      %v174 = vld [vmem:[%s165 + $0x10] sm:$0xff]
      %v175 = vld [vmem:[%s165 + $0x18] sm:$0xff]
      %v176 = vld [vmem:[%s165 + $0x20] sm:$0xff]
      %v177 = vld [vmem:[%s165 + $0x28] sm:$0xff]
      %v178 = vld [vmem:[%s165 + $0x30] sm:$0xff]
      %v179 = vld [vmem:[%s165 + $0x38] sm:$0xff]
      %v180 = vld [vmem:[%s165 + $0x40] sm:$0xff]
      %v181 = vld [vmem:[%s165 + $0x48] sm:$0xff]
      %v182 = vld [vmem:[%s165 + $0x50] sm:$0xff]
      %v183 = vld [vmem:[%s165 + $0x58] sm:$0xff]
      %v184 = vld [vmem:[%s165 + $0x60] sm:$0xff]
      %v185 = vld [vmem:[%s165 + $0x68] sm:$0xff]
      %v186 = vld [vmem:[%s165 + $0x70] sm:$0xff]
      %v187 = vld [vmem:[%s165 + $0x78] sm:$0xff]
      %v188 = vld [vmem:[%s165 + $0x80] sm:$0xff]
      %v189 = vld [vmem:[%s165 + $0x88] sm:$0xff]
      %v190 = vld [vmem:[%s165 + $0x90] sm:$0xff]
      %v191 = vld [vmem:[%s165 + $0x98] sm:$0xff]
      %v192 = vld [vmem:[%s165 + $0xa0] sm:$0xff]
      %v193 = vld [vmem:[%s165 + $0xa8] sm:$0xff]
      %v194 = vld [vmem:[%s165 + $0xb0] sm:$0xff]
      %v195 = vld [vmem:[%s165 + $0xb8] sm:$0xff]
      %v196 = vld [vmem:[%s165 + $0xc0] sm:$0xff]
      %v197 = vld [vmem:[%s165 + $0xc8] sm:$0xff]
      %v198 = vld [vmem:[%s165 + $0xd0] sm:$0xff]
      %v199 = vld [vmem:[%s165 + $0xd8] sm:$0xff]
      %v200 = vld [vmem:[%s165 + $0xe0] sm:$0xff]
      %v201 = vld [vmem:[%s165 + $0xe8] sm:$0xff]
      %v202 = vld [vmem:[%s165 + $0xf0] sm:$0xff]
      %v203 = vld [vmem:[%s165 + $0xf8] sm:$0xff]
      %v204 = vld [vmem:[%s165 + $0x100] sm:$0xff]
      %v205 = vld [vmem:[%s165 + $0x108] sm:$0xff]
      %v206 = vld [vmem:[%s165 + $0x110] sm:$0xff]
      %v207 = vld [vmem:[%s165 + $0x118] sm:$0xff]
      %v208 = vld [vmem:[%s165 + $0x120] sm:$0xff]
      %v209 = vld [vmem:[%s165 + $0x128] sm:$0xff]
      %v210 = vld [vmem:[%s165 + $0x130] sm:$0xff]
      %v211 = vld [vmem:[%s165 + $0x138] sm:$0xff]
      %v212 = vld [vmem:[%s165 + $0x140] sm:$0xff]
      %v213 = vld [vmem:[%s165 + $0x148] sm:$0xff]
      %v214 = vld [vmem:[%s165 + $0x150] sm:$0xff]
      %v215 = vld [vmem:[%s165 + $0x158] sm:$0xff]
      %v216 = vld [vmem:[%s165 + $0x160] sm:$0xff]
      %v217 = vld [vmem:[%s165 + $0x168] sm:$0xff]
      %v218 = vld [vmem:[%s165 + $0x170] sm:$0xff]
      %v219 = vld [vmem:[%s165 + $0x178] sm:$0xff]
      %v220 = vld [vmem:[%s165 + $0x180] sm:$0xff]
      %v221 = vld [vmem:[%s165 + $0x188] sm:$0xff]
      %v222 = vld [vmem:[%s165 + $0x190] sm:$0xff]
      %v223 = vld [vmem:[%s165 + $0x198] sm:$0xff]
      %v224 = vld [vmem:[%s165 + $0x1a0] sm:$0xf]
      %v225 = vpack.c.bf16 %v173, %v172
      %v226 = vpack.c.bf16 %v175, %v174
      %v227 = vpack.c.bf16 %v177, %v176
      %v228 = vpack.c.bf16 %v179, %v178
      %v229 = vpack.c.bf16 %v181, %v180
      %v230 = vpack.c.bf16 %v183, %v182
      %v231 = vpack.c.bf16 %v185, %v184
      %v232 = vpack.c.bf16 %v187, %v186
      %v233 = vpack.c.bf16 %v189, %v188
      %v234 = vpack.c.bf16 %v191, %v190
      %v235 = vpack.c.bf16 %v193, %v192
      %v236 = vpack.c.bf16 %v195, %v194
      %v237 = vpack.c.bf16 %v197, %v196
      %v238 = vpack.c.bf16 %v199, %v198
      %v239 = vpack.c.bf16 %v201, %v200
      %v240 = vpack.c.bf16 %v203, %v202
      %v241 = vpack.c.bf16 %v205, %v204
      %v242 = vpack.c.bf16 %v207, %v206
      %v243 = vpack.c.bf16 %v209, %v208
      %v244 = vpack.c.bf16 %v211, %v210
      %v245 = vpack.c.bf16 %v213, %v212
      %v246 = vpack.c.bf16 %v215, %v214
      %v247 = vpack.c.bf16 %v217, %v216
      %v248 = vpack.c.bf16 %v219, %v218
      %v249 = vpack.c.bf16 %v221, %v220
      %v250 = vpack.c.bf16 %v223, %v222
      %v251 = vpack.c.bf16 %v224, %v224
      %v252 = vld [vmem:[%s1] sm:$0xf]
      %v253 = vld [vmem:[%s1 + $0x4] sm:$0xf]
      %v254 = vld [vmem:[%s1 + $0x8] sm:$0xf]
      %v255 = vld [vmem:[%s1 + $0xc] sm:$0xf]
      %v256 = vld [vmem:[%s1 + $0x10] sm:$0xf]
      %v257 = vld [vmem:[%s1 + $0x14] sm:$0xf]
      %v258 = vld [vmem:[%s1 + $0x18] sm:$0xf]
      %v259 = vld [vmem:[%s1 + $0x1c] sm:$0xf]
      %v260 = vld [vmem:[%s165 + $0x1] sm:$0xff]
      %v261 = vld [vmem:[%s165 + $0x9] sm:$0xff]
      %v262 = vld [vmem:[%s165 + $0x11] sm:$0xff]
      %v263 = vld [vmem:[%s165 + $0x19] sm:$0xff]
      %v264 = vld [vmem:[%s165 + $0x21] sm:$0xff]
      %v265 = vld [vmem:[%s165 + $0x29] sm:$0xff]
      %v266 = vld [vmem:[%s165 + $0x31] sm:$0xff]
      %v267 = vld [vmem:[%s165 + $0x39] sm:$0xff]
      %v268 = vld [vmem:[%s165 + $0x41] sm:$0xff]
      %v269 = vld [vmem:[%s165 + $0x49] sm:$0xff]
      %v270 = vld [vmem:[%s165 + $0x51] sm:$0xff]
      %v271 = vld [vmem:[%s165 + $0x59] sm:$0xff]
      %v272 = vld [vmem:[%s165 + $0x61] sm:$0xff]
      %v273 = vld [vmem:[%s165 + $0x69] sm:$0xff]
      %v274 = vld [vmem:[%s165 + $0x71] sm:$0xff]
      %v275 = vld [vmem:[%s165 + $0x79] sm:$0xff]
      %v276 = vld [vmem:[%s165 + $0x81] sm:$0xff]
      %v277 = vld [vmem:[%s165 + $0x89] sm:$0xff]
      %v278 = vld [vmem:[%s165 + $0x91] sm:$0xff]
      %v279 = vld [vmem:[%s165 + $0x99] sm:$0xff]
      %v280 = vld [vmem:[%s165 + $0xa1] sm:$0xff]
      %v281 = vld [vmem:[%s165 + $0xa9] sm:$0xff]
      %v282 = vld [vmem:[%s165 + $0xb1] sm:$0xff]
      %v283 = vld [vmem:[%s165 + $0xb9] sm:$0xff]
      %v284 = vld [vmem:[%s165 + $0xc1] sm:$0xff]
      %v285 = vld [vmem:[%s165 + $0xc9] sm:$0xff]
      %v286 = vld [vmem:[%s165 + $0xd1] sm:$0xff]
      %v287 = vld [vmem:[%s165 + $0xd9] sm:$0xff]
      %v288 = vld [vmem:[%s165 + $0xe1] sm:$0xff]
      %v289 = vld [vmem:[%s165 + $0xe9] sm:$0xff]
      %v290 = vld [vmem:[%s165 + $0xf1] sm:$0xff]
      %v291 = vld [vmem:[%s165 + $0xf9] sm:$0xff]
      %v292 = vld [vmem:[%s165 + $0x101] sm:$0xff]
      %v293 = vld [vmem:[%s165 + $0x109] sm:$0xff]
      %v294 = vld [vmem:[%s165 + $0x111] sm:$0xff]
      %v295 = vld [vmem:[%s165 + $0x119] sm:$0xff]
      %v296 = vld [vmem:[%s165 + $0x121] sm:$0xff]
      %v297 = vld [vmem:[%s165 + $0x129] sm:$0xff]
      %v298 = vld [vmem:[%s165 + $0x131] sm:$0xff]
      %v299 = vld [vmem:[%s165 + $0x139] sm:$0xff]
      %v300 = vld [vmem:[%s165 + $0x141] sm:$0xff]
      %v301 = vld [vmem:[%s165 + $0x149] sm:$0xff]
      %v302 = vld [vmem:[%s165 + $0x151] sm:$0xff]
      %v303 = vld [vmem:[%s165 + $0x159] sm:$0xff]
      %v304 = vld [vmem:[%s165 + $0x161] sm:$0xff]
      %v305 = vld [vmem:[%s165 + $0x169] sm:$0xff]
      %v306 = vld [vmem:[%s165 + $0x171] sm:$0xff]
      %v307 = vld [vmem:[%s165 + $0x179] sm:$0xff]
      %v308 = vld [vmem:[%s165 + $0x181] sm:$0xff]
      %v309 = vld [vmem:[%s165 + $0x189] sm:$0xff]
      %v310 = vld [vmem:[%s165 + $0x191] sm:$0xff]
      %v311 = vld [vmem:[%s165 + $0x199] sm:$0xff]
      %v312 = vld [vmem:[%s165 + $0x1a1] sm:$0xf]
      %v313 = vpack.c.bf16 %v261, %v260
      %v314 = vpack.c.bf16 %v263, %v262
      %v315 = vpack.c.bf16 %v265, %v264
      %v316 = vpack.c.bf16 %v267, %v266
      %v317 = vpack.c.bf16 %v269, %v268
      %v318 = vpack.c.bf16 %v271, %v270
      %v319 = vpack.c.bf16 %v273, %v272
      %v320 = vpack.c.bf16 %v275, %v274
      %v321 = vpack.c.bf16 %v277, %v276
      %v322 = vpack.c.bf16 %v279, %v278
      %v323 = vpack.c.bf16 %v281, %v280
      %v324 = vpack.c.bf16 %v283, %v282
      %v325 = vpack.c.bf16 %v285, %v284
      %v326 = vpack.c.bf16 %v287, %v286
      %v327 = vpack.c.bf16 %v289, %v288
      %v328 = vpack.c.bf16 %v291, %v290
      %v329 = vpack.c.bf16 %v293, %v292
      %v330 = vpack.c.bf16 %v295, %v294
      %v331 = vpack.c.bf16 %v297, %v296
      %v332 = vpack.c.bf16 %v299, %v298
      %v333 = vpack.c.bf16 %v301, %v300
      %v334 = vpack.c.bf16 %v303, %v302
      %v335 = vpack.c.bf16 %v305, %v304
      %v336 = vpack.c.bf16 %v307, %v306
      %v337 = vpack.c.bf16 %v309, %v308
      %v338 = vpack.c.bf16 %v311, %v310
      %v339 = vpack.c.bf16 %v312, %v312
      %s340 = scalar_lea.vmem %s1, 32
      %v341 = vld [vmem:[%s340] sm:$0xf]
      %v342 = vld [vmem:[%s340 + $0x4] sm:$0xf]
      %v343 = vld [vmem:[%s340 + $0x8] sm:$0xf]
      %v344 = vld [vmem:[%s340 + $0xc] sm:$0xf]
      %v345 = vld [vmem:[%s340 + $0x10] sm:$0xf]
      %v346 = vld [vmem:[%s340 + $0x14] sm:$0xf]
      %v347 = vld [vmem:[%s340 + $0x18] sm:$0xf]
      %v348 = vld [vmem:[%s340 + $0x1c] sm:$0xf]
      %v357 = vunpack.c.l.b16 %v341
      %v358 = vunpack.c.l.b16 %v342
      %v359 = vunpack.c.l.b16 %v343
      %v360 = vunpack.c.l.b16 %v344
      %v361 = vunpack.c.l.b16 %v345
      %v362 = vunpack.c.l.b16 %v346
      %v363 = vunpack.c.l.b16 %v347
      %v364 = vunpack.c.l.b16 %v348
      %v365 = vpack.c.b16 %v358, %v357
      %v366 = vpack.c.b16 %v360, %v359
      %v367 = vpack.c.b16 %v362, %v361
      %v368 = vpack.c.b16 %v364, %v363
      %vm373 = vcmask 523264
      %v375 = vsel %vm373, %v313, 0
      %v378 = vsel %vm373, %v314, 0
      %v381 = vsel %vm373, %v315, 0
      %v384 = vsel %vm373, %v316, 0
      %v387 = vsel %vm373, %v317, 0
      %v390 = vsel %vm373, %v318, 0
      %v393 = vsel %vm373, %v319, 0
      %v396 = vsel %vm373, %v320, 0
      %v399 = vsel %vm373, %v321, 0
      %v402 = vsel %vm373, %v322, 0
      %v405 = vsel %vm373, %v323, 0
      %v408 = vsel %vm373, %v324, 0
      %v411 = vsel %vm373, %v325, 0
      %v414 = vsel %vm373, %v326, 0
      %v417 = vsel %vm373, %v327, 0
      %v420 = vsel %vm373, %v328, 0
      %v423 = vsel %vm373, %v329, 0
      %v426 = vsel %vm373, %v330, 0
      %v429 = vsel %vm373, %v331, 0
      %v432 = vsel %vm373, %v332, 0
      %v435 = vsel %vm373, %v333, 0
      %v438 = vsel %vm373, %v334, 0
      %v441 = vsel %vm373, %v335, 0
      %v444 = vsel %vm373, %v336, 0
      %v447 = vsel %vm373, %v337, 0
      %v450 = vsel %vm373, %v338, 0
      %v453 = vsel %vm373, %v339, 0
      %455 = vmatprep.subr.bf16.mxu0 0
      %456 = vmatpush1.bf16.msra.mxu0 %v365
      %457 = vmatprep.subr.bf16.mxu0 0
      %458 = vmatpush1.bf16.msra.mxu0 %v366
      %459 = vmatprep.subr.bf16.mxu0 0
      %460 = vmatpush1.bf16.msra.mxu0 %v367
      %461 = vmatprep.subr.bf16.mxu0 0
      %462 = vmatpush1.bf16.msra.mxu0 %v368
      %463 = vmatprep.subr.bf16.mxu0 0
      %464 = vmatpush1.bf16.msra.mxu0 0
      %465 = vmatprep.subr.bf16.mxu0 0
      %466 = vmatpush1.bf16.msra.mxu0 0
      %467 = vmatprep.subr.bf16.mxu0 0
      %468 = vmatpush1.bf16.msra.mxu0 0
      %469 = vmatprep.subr.bf16.mxu0 0
      %470 = vmatpush1.bf16.msra.mxu0 0
      %471 = vmatprep.subr.bf16.mxu0 0
      %472 = vmatpush1.bf16.msra.mxu0 0
      %473 = vmatprep.subr.bf16.mxu0 0
      %474 = vmatpush1.bf16.msra.mxu0 0
      %475 = vmatprep.subr.bf16.mxu0 0
      %476 = vmatpush1.bf16.msra.mxu0 0
      %477 = vmatprep.subr.bf16.mxu0 0
      %478 = vmatpush1.bf16.msra.mxu0 0
      %479 = vmatprep.subr.bf16.mxu0 0
      %480 = vmatpush1.bf16.msra.mxu0 0
      %481 = vmatprep.subr.bf16.mxu0 0
      %482 = vmatpush1.bf16.msra.mxu0 0
      %483 = vmatprep.subr.bf16.mxu0 0
      %484 = vmatpush1.bf16.msra.mxu0 0
      %485 = vmatprep.subr.bf16.mxu0 0
      %486 = vmatpush1.bf16.msra.mxu0 0
      %487 = vmatprep.mubr.bf16.mxu0 0
      %488 = vmatmul.mubr.bf16.gmra.mrb[0].mxu0 %v375
      %v489 = vpop.f32.mrb[0].mxu0
      %v490 = vadd.f32 0.0, %v489
      %v491 = vpop.f32.mrb[0].mxu0
      %v492 = vpop.f32.mrb[0].mxu0
      %v493 = vadd.f32 0.0, %v492
      %v494 = vpop.f32.mrb[0].mxu0
      %495 = vmatprep.mubr.bf16.mxu0 0
      %496 = vmatmul.mubr.bf16.gmra.mrb[0].mxu0 %v378
      %v497 = vpop.f32.mrb[0].mxu0
      %v498 = vadd.f32 0.0, %v497
      %v499 = vpop.f32.mrb[0].mxu0
      %v500 = vpop.f32.mrb[0].mxu0
      %v501 = vadd.f32 0.0, %v500
      %v502 = vpop.f32.mrb[0].mxu0
      %503 = vmatprep.mubr.bf16.mxu0 0
      %504 = vmatmul.mubr.bf16.gmra.mrb[0].mxu0 %v381
      %v505 = vpop.f32.mrb[0].mxu0
      %v506 = vadd.f32 0.0, %v505
      %v507 = vpop.f32.mrb[0].mxu0
      %v508 = vpop.f32.mrb[0].mxu0
      %v509 = vadd.f32 0.0, %v508
      %v510 = vpop.f32.mrb[0].mxu0
      %511 = vmatprep.mubr.bf16.mxu0 0
      %512 = vmatmul.mubr.bf16.gmra.mrb[0].mxu0 %v384
      %v513 = vpop.f32.mrb[0].mxu0
      %v514 = vadd.f32 0.0, %v513
      %v515 = vpop.f32.mrb[0].mxu0
      %v516 = vpop.f32.mrb[0].mxu0
      %v517 = vadd.f32 0.0, %v516
      %v518 = vpop.f32.mrb[0].mxu0
      %519 = vmatprep.mubr.bf16.mxu0 0
      %520 = vmatmul.mubr.bf16.gmra.mrb[0].mxu0 %v387
      %v521 = vpop.f32.mrb[0].mxu0
      %v522 = vadd.f32 0.0, %v521
      %v523 = vpop.f32.mrb[0].mxu0
      %v524 = vpop.f32.mrb[0].mxu0
      %v525 = vadd.f32 0.0, %v524
      %v526 = vpop.f32.mrb[0].mxu0
      %527 = vmatprep.mubr.bf16.mxu0 0
      %528 = vmatmul.mubr.bf16.gmra.mrb[0].mxu0 %v390
      %v529 = vpop.f32.mrb[0].mxu0
      %v530 = vadd.f32 0.0, %v529
      %v531 = vpop.f32.mrb[0].mxu0
      %v532 = vpop.f32.mrb[0].mxu0
      %v533 = vadd.f32 0.0, %v532
      %v534 = vpop.f32.mrb[0].mxu0
      %535 = vmatprep.mubr.bf16.mxu0 0
      %536 = vmatmul.mubr.bf16.gmra.mrb[0].mxu0 %v393
      %v537 = vpop.f32.mrb[0].mxu0
      %v538 = vadd.f32 0.0, %v537
      %v539 = vpop.f32.mrb[0].mxu0
      %v540 = vpop.f32.mrb[0].mxu0
      %v541 = vadd.f32 0.0, %v540
      %v542 = vpop.f32.mrb[0].mxu0
      %543 = vmatprep.mubr.bf16.mxu0 0
      %544 = vmatmul.mubr.bf16.gmra.mrb[0].mxu0 %v396
      %v545 = vpop.f32.mrb[0].mxu0
      %v546 = vadd.f32 0.0, %v545
      %v547 = vpop.f32.mrb[0].mxu0
      %v548 = vpop.f32.mrb[0].mxu0
      %v549 = vadd.f32 0.0, %v548
      %v550 = vpop.f32.mrb[0].mxu0
      %551 = vmatprep.mubr.bf16.mxu0 0
      %552 = vmatmul.mubr.bf16.gmra.mrb[0].mxu0 %v399
      %v553 = vpop.f32.mrb[0].mxu0
      %v554 = vadd.f32 0.0, %v553
      %v555 = vpop.f32.mrb[0].mxu0
      %v556 = vpop.f32.mrb[0].mxu0
      %v557 = vadd.f32 0.0, %v556
      %v558 = vpop.f32.mrb[0].mxu0
      %559 = vmatprep.mubr.bf16.mxu0 0
      %560 = vmatmul.mubr.bf16.gmra.mrb[0].mxu0 %v402
      %v561 = vpop.f32.mrb[0].mxu0
      %v562 = vadd.f32 0.0, %v561
      %v563 = vpop.f32.mrb[0].mxu0
      %v564 = vpop.f32.mrb[0].mxu0
      %v565 = vadd.f32 0.0, %v564
      %v566 = vpop.f32.mrb[0].mxu0
      %567 = vmatprep.mubr.bf16.mxu0 0
      %568 = vmatmul.mubr.bf16.gmra.mrb[0].mxu0 %v405
      %v569 = vpop.f32.mrb[0].mxu0
      %v570 = vadd.f32 0.0, %v569
      %v571 = vpop.f32.mrb[0].mxu0
      %v572 = vpop.f32.mrb[0].mxu0
      %v573 = vadd.f32 0.0, %v572
      %v574 = vpop.f32.mrb[0].mxu0
      %575 = vmatprep.mubr.bf16.mxu0 0
      %576 = vmatmul.mubr.bf16.gmra.mrb[0].mxu0 %v408
      %v577 = vpop.f32.mrb[0].mxu0
      %v578 = vadd.f32 0.0, %v577
      %v579 = vpop.f32.mrb[0].mxu0
      %v580 = vpop.f32.mrb[0].mxu0
      %v581 = vadd.f32 0.0, %v580
      %v582 = vpop.f32.mrb[0].mxu0
      %583 = vmatprep.mubr.bf16.mxu0 0
      %584 = vmatmul.mubr.bf16.gmra.mrb[0].mxu0 %v411
      %v585 = vpop.f32.mrb[0].mxu0
      %v586 = vadd.f32 0.0, %v585
      %v587 = vpop.f32.mrb[0].mxu0
      %v588 = vpop.f32.mrb[0].mxu0
      %v589 = vadd.f32 0.0, %v588
      %v590 = vpop.f32.mrb[0].mxu0
      %591 = vmatprep.mubr.bf16.mxu0 0
      %592 = vmatmul.mubr.bf16.gmra.mrb[0].mxu0 %v414
      %v593 = vpop.f32.mrb[0].mxu0
      %v594 = vadd.f32 0.0, %v593
      %v595 = vpop.f32.mrb[0].mxu0
      %v596 = vpop.f32.mrb[0].mxu0
      %v597 = vadd.f32 0.0, %v596
      %v598 = vpop.f32.mrb[0].mxu0
      %599 = vmatprep.mubr.bf16.mxu0 0
      %600 = vmatmul.mubr.bf16.gmra.mrb[0].mxu0 %v417
      %v601 = vpop.f32.mrb[0].mxu0
      %v602 = vadd.f32 0.0, %v601
      %v603 = vpop.f32.mrb[0].mxu0
      %v604 = vpop.f32.mrb[0].mxu0
      %v605 = vadd.f32 0.0, %v604
      %v606 = vpop.f32.mrb[0].mxu0
      %607 = vmatprep.mubr.bf16.mxu0 0
      %608 = vmatmul.mubr.bf16.gmra.mrb[0].mxu0 %v420
      %v609 = vpop.f32.mrb[0].mxu0
      %v610 = vadd.f32 0.0, %v609
      %v611 = vpop.f32.mrb[0].mxu0
      %v612 = vpop.f32.mrb[0].mxu0
      %v613 = vadd.f32 0.0, %v612
      %v614 = vpop.f32.mrb[0].mxu0
      %615 = vmatprep.mubr.bf16.mxu0 0
      %616 = vmatmul.mubr.bf16.gmra.mrb[0].mxu0 %v423
      %v617 = vpop.f32.mrb[0].mxu0
      %v618 = vadd.f32 0.0, %v617
      %v619 = vpop.f32.mrb[0].mxu0
      %v620 = vpop.f32.mrb[0].mxu0
      %v621 = vadd.f32 0.0, %v620
      %v622 = vpop.f32.mrb[0].mxu0
      %623 = vmatprep.mubr.bf16.mxu0 0
      %624 = vmatmul.mubr.bf16.gmra.mrb[0].mxu0 %v426
      %v625 = vpop.f32.mrb[0].mxu0
      %v626 = vadd.f32 0.0, %v625
      %v627 = vpop.f32.mrb[0].mxu0
      %v628 = vpop.f32.mrb[0].mxu0
      %v629 = vadd.f32 0.0, %v628
      %v630 = vpop.f32.mrb[0].mxu0
      %631 = vmatprep.mubr.bf16.mxu0 0
      %632 = vmatmul.mubr.bf16.gmra.mrb[0].mxu0 %v429
      %v633 = vpop.f32.mrb[0].mxu0
      %v634 = vadd.f32 0.0, %v633
      %v635 = vpop.f32.mrb[0].mxu0
      %v636 = vpop.f32.mrb[0].mxu0
      %v637 = vadd.f32 0.0, %v636
      %v638 = vpop.f32.mrb[0].mxu0
      %639 = vmatprep.mubr.bf16.mxu0 0
      %640 = vmatmul.mubr.bf16.gmra.mrb[0].mxu0 %v432
      %v641 = vpop.f32.mrb[0].mxu0
      %v642 = vadd.f32 0.0, %v641
      %v643 = vpop.f32.mrb[0].mxu0
      %v644 = vpop.f32.mrb[0].mxu0
      %v645 = vadd.f32 0.0, %v644
      %v646 = vpop.f32.mrb[0].mxu0
      %647 = vmatprep.mubr.bf16.mxu0 0
      %648 = vmatmul.mubr.bf16.gmra.mrb[0].mxu0 %v435
      %v649 = vpop.f32.mrb[0].mxu0
      %v650 = vadd.f32 0.0, %v649
      %v651 = vpop.f32.mrb[0].mxu0
      %v652 = vpop.f32.mrb[0].mxu0
      %v653 = vadd.f32 0.0, %v652
      %v654 = vpop.f32.mrb[0].mxu0
      %655 = vmatprep.mubr.bf16.mxu0 0
      %656 = vmatmul.mubr.bf16.gmra.mrb[0].mxu0 %v438
      %v657 = vpop.f32.mrb[0].mxu0
      %v658 = vadd.f32 0.0, %v657
      %v659 = vpop.f32.mrb[0].mxu0
      %v660 = vpop.f32.mrb[0].mxu0
      %v661 = vadd.f32 0.0, %v660
      %v662 = vpop.f32.mrb[0].mxu0
      %663 = vmatprep.mubr.bf16.mxu0 0
      %664 = vmatmul.mubr.bf16.gmra.mrb[0].mxu0 %v441
      %v665 = vpop.f32.mrb[0].mxu0
      %v666 = vadd.f32 0.0, %v665
      %v667 = vpop.f32.mrb[0].mxu0
      %v668 = vpop.f32.mrb[0].mxu0
      %v669 = vadd.f32 0.0, %v668
      %v670 = vpop.f32.mrb[0].mxu0
      %671 = vmatprep.mubr.bf16.mxu0 0
      %672 = vmatmul.mubr.bf16.gmra.mrb[0].mxu0 %v444
      %v673 = vpop.f32.mrb[0].mxu0
      %v674 = vadd.f32 0.0, %v673
      %v675 = vpop.f32.mrb[0].mxu0
      %v676 = vpop.f32.mrb[0].mxu0
      %v677 = vadd.f32 0.0, %v676
      %v678 = vpop.f32.mrb[0].mxu0
      %679 = vmatprep.mubr.bf16.mxu0 0
      %680 = vmatmul.mubr.bf16.gmra.mrb[0].mxu0 %v447
      %v681 = vpop.f32.mrb[0].mxu0
      %v682 = vadd.f32 0.0, %v681
      %v683 = vpop.f32.mrb[0].mxu0
      %v684 = vpop.f32.mrb[0].mxu0
      %v685 = vadd.f32 0.0, %v684
      %v686 = vpop.f32.mrb[0].mxu0
      %687 = vmatprep.mubr.bf16.mxu0 0
      %688 = vmatmul.mubr.bf16.gmra.mrb[0].mxu0 %v450
      %v689 = vpop.f32.mrb[0].mxu0
      %v690 = vadd.f32 0.0, %v689
      %v691 = vpop.f32.mrb[0].mxu0
      %v692 = vpop.f32.mrb[0].mxu0
      %v693 = vadd.f32 0.0, %v692
      %v694 = vpop.f32.mrb[0].mxu0
      %695 = vmatprep.mubr.bf16.mxu0 0
      %696 = vmatmul.mubr.bf16.gmra.mrb[0].mxu0 %v453
      %v697 = vpop.f32.mrb[0].mxu0
      %v698 = vadd.f32 0.0, %v697
      %v699 = vpop.f32.mrb[0].mxu0
      %v700 = vpop.f32.mrb[0].mxu0
      %v701 = vpop.f32.mrb[0].mxu0
      %702 = vdwg.mxu0
      %v711 = vunpack.c.l.b16 %v252
      %v712 = vunpack.c.l.b16 %v253
      %v713 = vunpack.c.l.b16 %v254
      %v714 = vunpack.c.l.b16 %v255
      %v715 = vunpack.c.l.b16 %v256
      %v716 = vunpack.c.l.b16 %v257
      %v717 = vunpack.c.l.b16 %v258
      %v718 = vunpack.c.l.b16 %v259
      %v719 = vpack.c.b16 %v712, %v711
      %v720 = vpack.c.b16 %v714, %v713
      %v721 = vpack.c.b16 %v716, %v715
      %v722 = vpack.c.b16 %v718, %v717
      %v728 = vsel %vm373, %v225, 0
      %v731 = vsel %vm373, %v226, 0
      %v734 = vsel %vm373, %v227, 0
      %v737 = vsel %vm373, %v228, 0
      %v740 = vsel %vm373, %v229, 0
      %v743 = vsel %vm373, %v230, 0
      %v746 = vsel %vm373, %v231, 0
      %v749 = vsel %vm373, %v232, 0
      %v752 = vsel %vm373, %v233, 0
      %v755 = vsel %vm373, %v234, 0
      %v758 = vsel %vm373, %v235, 0
      %v761 = vsel %vm373, %v236, 0
      %v764 = vsel %vm373, %v237, 0
      %v767 = vsel %vm373, %v238, 0
      %v770 = vsel %vm373, %v239, 0
      %v773 = vsel %vm373, %v240, 0
      %v776 = vsel %vm373, %v241, 0
      %v779 = vsel %vm373, %v242, 0
      %v782 = vsel %vm373, %v243, 0
      %v785 = vsel %vm373, %v244, 0
      %v788 = vsel %vm373, %v245, 0
      %v791 = vsel %vm373, %v246, 0
      %v794 = vsel %vm373, %v247, 0
      %v797 = vsel %vm373, %v248, 0
      %v800 = vsel %vm373, %v249, 0
      %v803 = vsel %vm373, %v250, 0
      %v806 = vsel %vm373, %v251, 0
      %808 = vmatprep.subr.bf16.mxu0 0
      %809 = vmatpush1.bf16.msra.mxu0 %v719
      %810 = vmatprep.subr.bf16.mxu0 0
      %811 = vmatpush1.bf16.msra.mxu0 %v720
      %812 = vmatprep.subr.bf16.mxu0 0
      %813 = vmatpush1.bf16.msra.mxu0 %v721
      %814 = vmatprep.subr.bf16.mxu0 0
      %815 = vmatpush1.bf16.msra.mxu0 %v722
      %816 = vmatprep.subr.bf16.mxu0 0
      %817 = vmatpush1.bf16.msra.mxu0 0
      %818 = vmatprep.subr.bf16.mxu0 0
      %819 = vmatpush1.bf16.msra.mxu0 0
      %820 = vmatprep.subr.bf16.mxu0 0
      %821 = vmatpush1.bf16.msra.mxu0 0
      %822 = vmatprep.subr.bf16.mxu0 0
      %823 = vmatpush1.bf16.msra.mxu0 0
      %824 = vmatprep.subr.bf16.mxu0 0
      %825 = vmatpush1.bf16.msra.mxu0 0
      %826 = vmatprep.subr.bf16.mxu0 0
      %827 = vmatpush1.bf16.msra.mxu0 0
      %828 = vmatprep.subr.bf16.mxu0 0
      %829 = vmatpush1.bf16.msra.mxu0 0
      %830 = vmatprep.subr.bf16.mxu0 0
      %831 = vmatpush1.bf16.msra.mxu0 0
      %832 = vmatprep.subr.bf16.mxu0 0
      %833 = vmatpush1.bf16.msra.mxu0 0
      %834 = vmatprep.subr.bf16.mxu0 0
      %835 = vmatpush1.bf16.msra.mxu0 0
      %836 = vmatprep.subr.bf16.mxu0 0
      %837 = vmatpush1.bf16.msra.mxu0 0
      %838 = vmatprep.subr.bf16.mxu0 0
      %839 = vmatpush1.bf16.msra.mxu0 0
      %840 = vmatprep.mubr.bf16.mxu0 0
      %841 = vmatmul.mubr.bf16.gmra.mrb[0].mxu0 %v728
      %v842 = vpop.f32.mrb[0].mxu0
      %v843 = vadd.f32 %v490, %v842
      %v844 = vpop.f32.mrb[0].mxu0
      %v845 = vpop.f32.mrb[0].mxu0
      %v846 = vadd.f32 %v493, %v845
      %v847 = vpop.f32.mrb[0].mxu0
      %848 = vmatprep.mubr.bf16.mxu0 0
      %849 = vmatmul.mubr.bf16.gmra.mrb[0].mxu0 %v731
      %v850 = vpop.f32.mrb[0].mxu0
      %v851 = vadd.f32 %v498, %v850
      %v852 = vpop.f32.mrb[0].mxu0
      %v853 = vpop.f32.mrb[0].mxu0
      %v854 = vadd.f32 %v501, %v853
      %v855 = vpop.f32.mrb[0].mxu0
      %856 = vmatprep.mubr.bf16.mxu0 0
      %857 = vmatmul.mubr.bf16.gmra.mrb[0].mxu0 %v734
      %v858 = vpop.f32.mrb[0].mxu0
      %v859 = vadd.f32 %v506, %v858
      %v860 = vpop.f32.mrb[0].mxu0
      %v861 = vpop.f32.mrb[0].mxu0
      %v862 = vadd.f32 %v509, %v861
      %v863 = vpop.f32.mrb[0].mxu0
      %864 = vmatprep.mubr.bf16.mxu0 0
      %865 = vmatmul.mubr.bf16.gmra.mrb[0].mxu0 %v737
      %v866 = vpop.f32.mrb[0].mxu0
      %v867 = vadd.f32 %v514, %v866
      %v868 = vpop.f32.mrb[0].mxu0
      %v869 = vpop.f32.mrb[0].mxu0
      %v870 = vadd.f32 %v517, %v869
      %v871 = vpop.f32.mrb[0].mxu0
      %872 = vmatprep.mubr.bf16.mxu0 0
      %873 = vmatmul.mubr.bf16.gmra.mrb[0].mxu0 %v740
      %v874 = vpop.f32.mrb[0].mxu0
      %v875 = vadd.f32 %v522, %v874
      %v876 = vpop.f32.mrb[0].mxu0
      %v877 = vpop.f32.mrb[0].mxu0
      %v878 = vadd.f32 %v525, %v877
      %v879 = vpop.f32.mrb[0].mxu0
      %880 = vmatprep.mubr.bf16.mxu0 0
      %881 = vmatmul.mubr.bf16.gmra.mrb[0].mxu0 %v743
      %v882 = vpop.f32.mrb[0].mxu0
      %v883 = vadd.f32 %v530, %v882
      %v884 = vpop.f32.mrb[0].mxu0
      %v885 = vpop.f32.mrb[0].mxu0
      %v886 = vadd.f32 %v533, %v885
      %v887 = vpop.f32.mrb[0].mxu0
      %888 = vmatprep.mubr.bf16.mxu0 0
      %889 = vmatmul.mubr.bf16.gmra.mrb[0].mxu0 %v746
      %v890 = vpop.f32.mrb[0].mxu0
      %v891 = vadd.f32 %v538, %v890
      %v892 = vpop.f32.mrb[0].mxu0
      %v893 = vpop.f32.mrb[0].mxu0
      %v894 = vadd.f32 %v541, %v893
      %v895 = vpop.f32.mrb[0].mxu0
      %896 = vmatprep.mubr.bf16.mxu0 0
      %897 = vmatmul.mubr.bf16.gmra.mrb[0].mxu0 %v749
      %v898 = vpop.f32.mrb[0].mxu0
      %v899 = vadd.f32 %v546, %v898
      %v900 = vpop.f32.mrb[0].mxu0
      %v901 = vpop.f32.mrb[0].mxu0
      %v902 = vadd.f32 %v549, %v901
      %v903 = vpop.f32.mrb[0].mxu0
      %904 = vmatprep.mubr.bf16.mxu0 0
      %905 = vmatmul.mubr.bf16.gmra.mrb[0].mxu0 %v752
      %v906 = vpop.f32.mrb[0].mxu0
      %v907 = vadd.f32 %v554, %v906
      %v908 = vpop.f32.mrb[0].mxu0
      %v909 = vpop.f32.mrb[0].mxu0
      %v910 = vadd.f32 %v557, %v909
      %v911 = vpop.f32.mrb[0].mxu0
      %912 = vmatprep.mubr.bf16.mxu0 0
      %913 = vmatmul.mubr.bf16.gmra.mrb[0].mxu0 %v755
      %v914 = vpop.f32.mrb[0].mxu0
      %v915 = vadd.f32 %v562, %v914
      %v916 = vpop.f32.mrb[0].mxu0
      %v917 = vpop.f32.mrb[0].mxu0
      %v918 = vadd.f32 %v565, %v917
      %v919 = vpop.f32.mrb[0].mxu0
      %920 = vmatprep.mubr.bf16.mxu0 0
      %921 = vmatmul.mubr.bf16.gmra.mrb[0].mxu0 %v758
      %v922 = vpop.f32.mrb[0].mxu0
      %v923 = vadd.f32 %v570, %v922
      %v924 = vpop.f32.mrb[0].mxu0
      %v925 = vpop.f32.mrb[0].mxu0
      %v926 = vadd.f32 %v573, %v925
      %v927 = vpop.f32.mrb[0].mxu0
      %928 = vmatprep.mubr.bf16.mxu0 0
      %929 = vmatmul.mubr.bf16.gmra.mrb[0].mxu0 %v761
      %v930 = vpop.f32.mrb[0].mxu0
      %v931 = vadd.f32 %v578, %v930
      %v932 = vpop.f32.mrb[0].mxu0
      %v933 = vpop.f32.mrb[0].mxu0
      %v934 = vadd.f32 %v581, %v933
      %v935 = vpop.f32.mrb[0].mxu0
      %936 = vmatprep.mubr.bf16.mxu0 0
      %937 = vmatmul.mubr.bf16.gmra.mrb[0].mxu0 %v764
      %v938 = vpop.f32.mrb[0].mxu0
      %v939 = vadd.f32 %v586, %v938
      %v940 = vpop.f32.mrb[0].mxu0
      %v941 = vpop.f32.mrb[0].mxu0
      %v942 = vadd.f32 %v589, %v941
      %v943 = vpop.f32.mrb[0].mxu0
      %944 = vmatprep.mubr.bf16.mxu0 0
      %945 = vmatmul.mubr.bf16.gmra.mrb[0].mxu0 %v767
      %v946 = vpop.f32.mrb[0].mxu0
      %v947 = vadd.f32 %v594, %v946
      %v948 = vpop.f32.mrb[0].mxu0
      %v949 = vpop.f32.mrb[0].mxu0
      %v950 = vadd.f32 %v597, %v949
      %v951 = vpop.f32.mrb[0].mxu0
      %952 = vmatprep.mubr.bf16.mxu0 0
      %953 = vmatmul.mubr.bf16.gmra.mrb[0].mxu0 %v770
      %v954 = vpop.f32.mrb[0].mxu0
      %v955 = vadd.f32 %v602, %v954
      %v956 = vpop.f32.mrb[0].mxu0
      %v957 = vpop.f32.mrb[0].mxu0
      %v958 = vadd.f32 %v605, %v957
      %v959 = vpop.f32.mrb[0].mxu0
      %960 = vmatprep.mubr.bf16.mxu0 0
      %961 = vmatmul.mubr.bf16.gmra.mrb[0].mxu0 %v773
      %v962 = vpop.f32.mrb[0].mxu0
      %v963 = vadd.f32 %v610, %v962
      %v964 = vpop.f32.mrb[0].mxu0
      %v965 = vpop.f32.mrb[0].mxu0
      %v966 = vadd.f32 %v613, %v965
      %v967 = vpop.f32.mrb[0].mxu0
      %968 = vmatprep.mubr.bf16.mxu0 0
      %969 = vmatmul.mubr.bf16.gmra.mrb[0].mxu0 %v776
      %v970 = vpop.f32.mrb[0].mxu0
      %v971 = vadd.f32 %v618, %v970
      %v972 = vpop.f32.mrb[0].mxu0
      %v973 = vpop.f32.mrb[0].mxu0
      %v974 = vadd.f32 %v621, %v973
      %v975 = vpop.f32.mrb[0].mxu0
      %976 = vmatprep.mubr.bf16.mxu0 0
      %977 = vmatmul.mubr.bf16.gmra.mrb[0].mxu0 %v779
      %v978 = vpop.f32.mrb[0].mxu0
      %v979 = vadd.f32 %v626, %v978
      %v980 = vpop.f32.mrb[0].mxu0
      %v981 = vpop.f32.mrb[0].mxu0
      %v982 = vadd.f32 %v629, %v981
      %v983 = vpop.f32.mrb[0].mxu0
      %984 = vmatprep.mubr.bf16.mxu0 0
      %985 = vmatmul.mubr.bf16.gmra.mrb[0].mxu0 %v782
      %v986 = vpop.f32.mrb[0].mxu0
      %v987 = vadd.f32 %v634, %v986
      %v988 = vpop.f32.mrb[0].mxu0
      %v989 = vpop.f32.mrb[0].mxu0
      %v990 = vadd.f32 %v637, %v989
      %v991 = vpop.f32.mrb[0].mxu0
      %992 = vmatprep.mubr.bf16.mxu0 0
      %993 = vmatmul.mubr.bf16.gmra.mrb[0].mxu0 %v785
      %v994 = vpop.f32.mrb[0].mxu0
      %v995 = vadd.f32 %v642, %v994
      %v996 = vpop.f32.mrb[0].mxu0
      %v997 = vpop.f32.mrb[0].mxu0
      %v998 = vadd.f32 %v645, %v997
      %v999 = vpop.f32.mrb[0].mxu0
      %1000 = vmatprep.mubr.bf16.mxu0 0
      %1001 = vmatmul.mubr.bf16.gmra.mrb[0].mxu0 %v788
      %v1002 = vpop.f32.mrb[0].mxu0
      %v1003 = vadd.f32 %v650, %v1002
      %v1004 = vpop.f32.mrb[0].mxu0
      %v1005 = vpop.f32.mrb[0].mxu0
      %v1006 = vadd.f32 %v653, %v1005
      %v1007 = vpop.f32.mrb[0].mxu0
      %1008 = vmatprep.mubr.bf16.mxu0 0
      %1009 = vmatmul.mubr.bf16.gmra.mrb[0].mxu0 %v791
      %v1010 = vpop.f32.mrb[0].mxu0
      %v1011 = vadd.f32 %v658, %v1010
      %v1012 = vpop.f32.mrb[0].mxu0
      %v1013 = vpop.f32.mrb[0].mxu0
      %v1014 = vadd.f32 %v661, %v1013
      %v1015 = vpop.f32.mrb[0].mxu0
      %1016 = vmatprep.mubr.bf16.mxu0 0
      %1017 = vmatmul.mubr.bf16.gmra.mrb[0].mxu0 %v794
      %v1018 = vpop.f32.mrb[0].mxu0
      %v1019 = vadd.f32 %v666, %v1018
      %v1020 = vpop.f32.mrb[0].mxu0
      %v1021 = vpop.f32.mrb[0].mxu0
      %v1022 = vadd.f32 %v669, %v1021
      %v1023 = vpop.f32.mrb[0].mxu0
      %1024 = vmatprep.mubr.bf16.mxu0 0
      %1025 = vmatmul.mubr.bf16.gmra.mrb[0].mxu0 %v797
      %v1026 = vpop.f32.mrb[0].mxu0
      %v1027 = vadd.f32 %v674, %v1026
      %v1028 = vpop.f32.mrb[0].mxu0
      %v1029 = vpop.f32.mrb[0].mxu0
      %v1030 = vadd.f32 %v677, %v1029
      %v1031 = vpop.f32.mrb[0].mxu0
      %1032 = vmatprep.mubr.bf16.mxu0 0
      %1033 = vmatmul.mubr.bf16.gmra.mrb[0].mxu0 %v800
      %v1034 = vpop.f32.mrb[0].mxu0
      %v1035 = vadd.f32 %v682, %v1034
      %v1036 = vpop.f32.mrb[0].mxu0
      %v1037 = vpop.f32.mrb[0].mxu0
      %v1038 = vadd.f32 %v685, %v1037
      %v1039 = vpop.f32.mrb[0].mxu0
      %1040 = vmatprep.mubr.bf16.mxu0 0
      %1041 = vmatmul.mubr.bf16.gmra.mrb[0].mxu0 %v803
      %v1042 = vpop.f32.mrb[0].mxu0
      %v1043 = vadd.f32 %v690, %v1042
      %v1044 = vpop.f32.mrb[0].mxu0
      %v1045 = vpop.f32.mrb[0].mxu0
      %v1046 = vadd.f32 %v693, %v1045
      %v1047 = vpop.f32.mrb[0].mxu0
      %1048 = vmatprep.mubr.bf16.mxu0 0
      %1049 = vmatmul.mubr.bf16.gmra.mrb[0].mxu0 %v806
      %v1050 = vpop.f32.mrb[0].mxu0
      %v1051 = vadd.f32 %v698, %v1050
      %v1052 = vpop.f32.mrb[0].mxu0
      %v1053 = vpop.f32.mrb[0].mxu0
      %v1054 = vpop.f32.mrb[0].mxu0
      %1055 = vdwg.mxu0
      %v1056 = vld [vmem:[%s165 + $0x15] sm:$0xff]
      %v1057 = vld [vmem:[%s165 + $0x1d] sm:$0xff]
      %v1058 = vld [vmem:[%s165 + $0x25] sm:$0xff]
      %v1059 = vld [vmem:[%s165 + $0x2d] sm:$0xff]
      %v1060 = vld [vmem:[%s165 + $0x35] sm:$0xff]
      %v1061 = vld [vmem:[%s165 + $0x3d] sm:$0xff]
      %v1062 = vld [vmem:[%s165 + $0x45] sm:$0xff]
      %v1063 = vld [vmem:[%s165 + $0x4d] sm:$0xff]
      %v1064 = vld [vmem:[%s165 + $0x55] sm:$0xff]
      %v1065 = vld [vmem:[%s165 + $0x5d] sm:$0xff]
      %v1066 = vld [vmem:[%s165 + $0x65] sm:$0xff]
      %v1067 = vld [vmem:[%s165 + $0x6d] sm:$0xff]
      %v1068 = vld [vmem:[%s165 + $0x75] sm:$0xff]
      %v1069 = vld [vmem:[%s165 + $0x7d] sm:$0xff]
      %v1070 = vld [vmem:[%s165 + $0x85] sm:$0xff]
      %v1071 = vld [vmem:[%s165 + $0x8d] sm:$0xff]
      %v1072 = vld [vmem:[%s165 + $0x95] sm:$0xff]
      %v1073 = vld [vmem:[%s165 + $0x9d] sm:$0xff]
      %v1074 = vld [vmem:[%s165 + $0xa5] sm:$0xff]
      %v1075 = vld [vmem:[%s165 + $0xad] sm:$0xff]
      %v1076 = vld [vmem:[%s165 + $0xb5] sm:$0xff]
      %v1077 = vld [vmem:[%s165 + $0xbd] sm:$0xff]
      %v1078 = vld [vmem:[%s165 + $0xc5] sm:$0xff]
      %v1079 = vld [vmem:[%s165 + $0xcd] sm:$0xff]
      %v1080 = vld [vmem:[%s165 + $0xd5] sm:$0xff]
      %v1081 = vld [vmem:[%s165 + $0xdd] sm:$0xff]
      %v1082 = vld [vmem:[%s165 + $0xe5] sm:$0xff]
      %v1083 = vld [vmem:[%s165 + $0xed] sm:$0xff]
      %v1084 = vld [vmem:[%s165 + $0xf5] sm:$0xff]
      %v1085 = vld [vmem:[%s165 + $0xfd] sm:$0xff]
      %v1086 = vld [vmem:[%s165 + $0x105] sm:$0xff]
      %v1087 = vld [vmem:[%s165 + $0x10d] sm:$0xff]
      %v1088 = vld [vmem:[%s165 + $0x115] sm:$0xff]
      %v1089 = vld [vmem:[%s165 + $0x11d] sm:$0xff]
      %v1090 = vld [vmem:[%s165 + $0x125] sm:$0xff]
      %v1091 = vld [vmem:[%s165 + $0x12d] sm:$0xff]
      %v1092 = vld [vmem:[%s165 + $0x135] sm:$0xff]
      %v1093 = vld [vmem:[%s165 + $0x13d] sm:$0xff]
      %v1094 = vld [vmem:[%s165 + $0x145] sm:$0xff]
      %v1095 = vld [vmem:[%s165 + $0x14d] sm:$0xff]
      %v1096 = vld [vmem:[%s165 + $0x155] sm:$0xff]
      %v1097 = vld [vmem:[%s165 + $0x15d] sm:$0xff]
      %v1098 = vld [vmem:[%s165 + $0x165] sm:$0xff]
      %v1099 = vld [vmem:[%s165 + $0x16d] sm:$0xff]
      %v1100 = vld [vmem:[%s165 + $0x175] sm:$0xff]
      %v1101 = vld [vmem:[%s165 + $0x17d] sm:$0xff]
      %v1102 = vld [vmem:[%s165 + $0x185] sm:$0xff]
      %v1103 = vld [vmem:[%s165 + $0x18d] sm:$0xff]
      %v1104 = vld [vmem:[%s165 + $0x195] sm:$0xff]
      %v1105 = vld [vmem:[%s165 + $0x19d] sm:$0xff]
      %v1106 = vld [vmem:[%s165 + $0x1a5] sm:$0xff]
      %v1107 = vld [vmem:[%s165 + $0x1ad] sm:$0xff]
      %v1108 = vld [vmem:[%s165 + $0x1b5] sm:$0xf]
      %v1109 = vpack.c.bf16 %v1057, %v1056
      %v1110 = vpack.c.bf16 %v1059, %v1058
      %v1111 = vpack.c.bf16 %v1061, %v1060
      %v1112 = vpack.c.bf16 %v1063, %v1062
      %v1113 = vpack.c.bf16 %v1065, %v1064
      %v1114 = vpack.c.bf16 %v1067, %v1066
      %v1115 = vpack.c.bf16 %v1069, %v1068
      %v1116 = vpack.c.bf16 %v1071, %v1070
      %v1117 = vpack.c.bf16 %v1073, %v1072
      %v1118 = vpack.c.bf16 %v1075, %v1074
      %v1119 = vpack.c.bf16 %v1077, %v1076
      %v1120 = vpack.c.bf16 %v1079, %v1078
      %v1121 = vpack.c.bf16 %v1081, %v1080
      %v1122 = vpack.c.bf16 %v1083, %v1082
      %v1123 = vpack.c.bf16 %v1085, %v1084
      %v1124 = vpack.c.bf16 %v1087, %v1086
      %v1125 = vpack.c.bf16 %v1089, %v1088
      %v1126 = vpack.c.bf16 %v1091, %v1090
      %v1127 = vpack.c.bf16 %v1093, %v1092
      %v1128 = vpack.c.bf16 %v1095, %v1094
      %v1129 = vpack.c.bf16 %v1097, %v1096
      %v1130 = vpack.c.bf16 %v1099, %v1098
      %v1131 = vpack.c.bf16 %v1101, %v1100
      %v1132 = vpack.c.bf16 %v1103, %v1102
      %v1133 = vpack.c.bf16 %v1105, %v1104
      %v1134 = vpack.c.bf16 %v1107, %v1106
      %v1135 = vpack.c.bf16 %v1108, %v1108
      %s1136 = scalar_lea.vmem %s1, 64
      %v1137 = vld [vmem:[%s1136] sm:$0xf]
      %v1138 = vld [vmem:[%s1136 + $0x4] sm:$0xf]
      %v1139 = vld [vmem:[%s1136 + $0x8] sm:$0xf]
      %v1140 = vld [vmem:[%s1136 + $0xc] sm:$0xf]
      %v1141 = vld [vmem:[%s1136 + $0x10] sm:$0xf]
      %v1142 = vld [vmem:[%s1136 + $0x14] sm:$0xf]
      %v1143 = vld [vmem:[%s1136 + $0x18] sm:$0xf]
      %v1144 = vld [vmem:[%s1136 + $0x1c] sm:$0xf]
      %v1153 = vunpack.c.l.b16 %v1137
      %v1154 = vunpack.c.l.b16 %v1138
      %v1155 = vunpack.c.l.b16 %v1139
      %v1156 = vunpack.c.l.b16 %v1140
      %v1157 = vunpack.c.l.b16 %v1141
      %v1158 = vunpack.c.l.b16 %v1142
      %v1159 = vunpack.c.l.b16 %v1143
      %v1160 = vunpack.c.l.b16 %v1144
      %v1161 = vpack.c.b16 %v1154, %v1153
      %v1162 = vpack.c.b16 %v1156, %v1155
      %v1163 = vpack.c.b16 %v1158, %v1157
      %v1164 = vpack.c.b16 %v1160, %v1159
      %v1170 = vsel %vm373, %v1109, 0
      %v1173 = vsel %vm373, %v1110, 0
      %v1176 = vsel %vm373, %v1111, 0
      %v1179 = vsel %vm373, %v1112, 0
      %v1182 = vsel %vm373, %v1113, 0
      %v1185 = vsel %vm373, %v1114, 0
      %v1188 = vsel %vm373, %v1115, 0
      %v1191 = vsel %vm373, %v1116, 0
      %v1194 = vsel %vm373, %v1117, 0
      %v1197 = vsel %vm373, %v1118, 0
      %v1200 = vsel %vm373, %v1119, 0
      %v1203 = vsel %vm373, %v1120, 0
      %v1206 = vsel %vm373, %v1121, 0
      %v1209 = vsel %vm373, %v1122, 0
      %v1212 = vsel %vm373, %v1123, 0
      %v1215 = vsel %vm373, %v1124, 0
      %v1218 = vsel %vm373, %v1125, 0
      %v1221 = vsel %vm373, %v1126, 0
      %v1224 = vsel %vm373, %v1127, 0
      %v1227 = vsel %vm373, %v1128, 0
      %v1230 = vsel %vm373, %v1129, 0
      %v1233 = vsel %vm373, %v1130, 0
      %v1236 = vsel %vm373, %v1131, 0
      %v1239 = vsel %vm373, %v1132, 0
      %v1242 = vsel %vm373, %v1133, 0
      %v1245 = vsel %vm373, %v1134, 0
      %v1248 = vsel %vm373, %v1135, 0
      %1250 = vmatprep.subr.bf16.mxu0 0
      %1251 = vmatpush1.bf16.msra.mxu0 %v1161
      %1252 = vmatprep.subr.bf16.mxu0 0
      %1253 = vmatpush1.bf16.msra.mxu0 %v1162
      %1254 = vmatprep.subr.bf16.mxu0 0
      %1255 = vmatpush1.bf16.msra.mxu0 %v1163
      %1256 = vmatprep.subr.bf16.mxu0 0
      %1257 = vmatpush1.bf16.msra.mxu0 %v1164
      %1258 = vmatprep.subr.bf16.mxu0 0
      %1259 = vmatpush1.bf16.msra.mxu0 0
      %1260 = vmatprep.subr.bf16.mxu0 0
      %1261 = vmatpush1.bf16.msra.mxu0 0
      %1262 = vmatprep.subr.bf16.mxu0 0
      %1263 = vmatpush1.bf16.msra.mxu0 0
      %1264 = vmatprep.subr.bf16.mxu0 0
      %1265 = vmatpush1.bf16.msra.mxu0 0
      %1266 = vmatprep.subr.bf16.mxu0 0
      %1267 = vmatpush1.bf16.msra.mxu0 0
      %1268 = vmatprep.subr.bf16.mxu0 0
      %1269 = vmatpush1.bf16.msra.mxu0 0
      %1270 = vmatprep.subr.bf16.mxu0 0
      %1271 = vmatpush1.bf16.msra.mxu0 0
      %1272 = vmatprep.subr.bf16.mxu0 0
      %1273 = vmatpush1.bf16.msra.mxu0 0
      %1274 = vmatprep.subr.bf16.mxu0 0
      %1275 = vmatpush1.bf16.msra.mxu0 0
      %1276 = vmatprep.subr.bf16.mxu0 0
      %1277 = vmatpush1.bf16.msra.mxu0 0
      %1278 = vmatprep.subr.bf16.mxu0 0
      %1279 = vmatpush1.bf16.msra.mxu0 0
      %1280 = vmatprep.subr.bf16.mxu0 0
      %1281 = vmatpush1.bf16.msra.mxu0 0
      %1282 = vmatprep.mubr.bf16.mxu0 0
      %1283 = vmatmul.mubr.bf16.gmra.mrb[0].mxu0 %v1170
      %v1284 = vpop.f32.mrb[0].mxu0
      %v1285 = vadd.f32 0.0, %v1284
      %v1286 = vpop.f32.mrb[0].mxu0
      %v1287 = vpop.f32.mrb[0].mxu0
      %v1288 = vadd.f32 0.0, %v1287
      %v1289 = vpop.f32.mrb[0].mxu0
      %1290 = vmatprep.mubr.bf16.mxu0 0
      %1291 = vmatmul.mubr.bf16.gmra.mrb[0].mxu0 %v1173
      %v1292 = vpop.f32.mrb[0].mxu0
      %v1293 = vadd.f32 0.0, %v1292
      %v1294 = vpop.f32.mrb[0].mxu0
      %v1295 = vpop.f32.mrb[0].mxu0
      %v1296 = vadd.f32 0.0, %v1295
      %v1297 = vpop.f32.mrb[0].mxu0
      %1298 = vmatprep.mubr.bf16.mxu0 0
      %1299 = vmatmul.mubr.bf16.gmra.mrb[0].mxu0 %v1176
      %v1300 = vpop.f32.mrb[0].mxu0
      %v1301 = vadd.f32 0.0, %v1300
      %v1302 = vpop.f32.mrb[0].mxu0
      %v1303 = vpop.f32.mrb[0].mxu0
      %v1304 = vadd.f32 0.0, %v1303
      %v1305 = vpop.f32.mrb[0].mxu0
      %1306 = vmatprep.mubr.bf16.mxu0 0
      %1307 = vmatmul.mubr.bf16.gmra.mrb[0].mxu0 %v1179
      %v1308 = vpop.f32.mrb[0].mxu0
      %v1309 = vadd.f32 0.0, %v1308
      %v1310 = vpop.f32.mrb[0].mxu0
      %v1311 = vpop.f32.mrb[0].mxu0
      %v1312 = vadd.f32 0.0, %v1311
      %v1313 = vpop.f32.mrb[0].mxu0
      %1314 = vmatprep.mubr.bf16.mxu0 0
      %1315 = vmatmul.mubr.bf16.gmra.mrb[0].mxu0 %v1182
      %v1316 = vpop.f32.mrb[0].mxu0
      %v1317 = vadd.f32 0.0, %v1316
      %v1318 = vpop.f32.mrb[0].mxu0
      %v1319 = vpop.f32.mrb[0].mxu0
      %v1320 = vadd.f32 0.0, %v1319
      %v1321 = vpop.f32.mrb[0].mxu0
      %1322 = vmatprep.mubr.bf16.mxu0 0
      %1323 = vmatmul.mubr.bf16.gmra.mrb[0].mxu0 %v1185
      %v1324 = vpop.f32.mrb[0].mxu0
      %v1325 = vadd.f32 0.0, %v1324
      %v1326 = vpop.f32.mrb[0].mxu0
      %v1327 = vpop.f32.mrb[0].mxu0
      %v1328 = vadd.f32 0.0, %v1327
      %v1329 = vpop.f32.mrb[0].mxu0
      %1330 = vmatprep.mubr.bf16.mxu0 0
      %1331 = vmatmul.mubr.bf16.gmra.mrb[0].mxu0 %v1188
      %v1332 = vpop.f32.mrb[0].mxu0
      %v1333 = vadd.f32 0.0, %v1332
      %v1334 = vpop.f32.mrb[0].mxu0
      %v1335 = vpop.f32.mrb[0].mxu0
      %v1336 = vadd.f32 0.0, %v1335
      %v1337 = vpop.f32.mrb[0].mxu0
      %1338 = vmatprep.mubr.bf16.mxu0 0
      %1339 = vmatmul.mubr.bf16.gmra.mrb[0].mxu0 %v1191
      %v1340 = vpop.f32.mrb[0].mxu0
      %v1341 = vadd.f32 0.0, %v1340
      %v1342 = vpop.f32.mrb[0].mxu0
      %v1343 = vpop.f32.mrb[0].mxu0
      %v1344 = vadd.f32 0.0, %v1343
      %v1345 = vpop.f32.mrb[0].mxu0
      %1346 = vmatprep.mubr.bf16.mxu0 0
      %1347 = vmatmul.mubr.bf16.gmra.mrb[0].mxu0 %v1194
      %v1348 = vpop.f32.mrb[0].mxu0
      %v1349 = vadd.f32 0.0, %v1348
      %v1350 = vpop.f32.mrb[0].mxu0
      %v1351 = vpop.f32.mrb[0].mxu0
      %v1352 = vadd.f32 0.0, %v1351
      %v1353 = vpop.f32.mrb[0].mxu0
      %1354 = vmatprep.mubr.bf16.mxu0 0
      %1355 = vmatmul.mubr.bf16.gmra.mrb[0].mxu0 %v1197
      %v1356 = vpop.f32.mrb[0].mxu0
      %v1357 = vadd.f32 0.0, %v1356
      %v1358 = vpop.f32.mrb[0].mxu0
      %v1359 = vpop.f32.mrb[0].mxu0
      %v1360 = vadd.f32 0.0, %v1359
      %v1361 = vpop.f32.mrb[0].mxu0
      %1362 = vmatprep.mubr.bf16.mxu0 0
      %1363 = vmatmul.mubr.bf16.gmra.mrb[0].mxu0 %v1200
      %v1364 = vpop.f32.mrb[0].mxu0
      %v1365 = vadd.f32 0.0, %v1364
      %v1366 = vpop.f32.mrb[0].mxu0
      %v1367 = vpop.f32.mrb[0].mxu0
      %v1368 = vadd.f32 0.0, %v1367
      %v1369 = vpop.f32.mrb[0].mxu0
      %1370 = vmatprep.mubr.bf16.mxu0 0
      %1371 = vmatmul.mubr.bf16.gmra.mrb[0].mxu0 %v1203
      %v1372 = vpop.f32.mrb[0].mxu0
      %v1373 = vadd.f32 0.0, %v1372
      %v1374 = vpop.f32.mrb[0].mxu0
      %v1375 = vpop.f32.mrb[0].mxu0
      %v1376 = vadd.f32 0.0, %v1375
      %v1377 = vpop.f32.mrb[0].mxu0
      %1378 = vmatprep.mubr.bf16.mxu0 0
      %1379 = vmatmul.mubr.bf16.gmra.mrb[0].mxu0 %v1206
      %v1380 = vpop.f32.mrb[0].mxu0
      %v1381 = vadd.f32 0.0, %v1380
      %v1382 = vpop.f32.mrb[0].mxu0
      %v1383 = vpop.f32.mrb[0].mxu0
      %v1384 = vadd.f32 0.0, %v1383
      %v1385 = vpop.f32.mrb[0].mxu0
      %1386 = vmatprep.mubr.bf16.mxu0 0
      %1387 = vmatmul.mubr.bf16.gmra.mrb[0].mxu0 %v1209
      %v1388 = vpop.f32.mrb[0].mxu0
      %v1389 = vadd.f32 0.0, %v1388
      %v1390 = vpop.f32.mrb[0].mxu0
      %v1391 = vpop.f32.mrb[0].mxu0
      %v1392 = vadd.f32 0.0, %v1391
      %v1393 = vpop.f32.mrb[0].mxu0
      %1394 = vmatprep.mubr.bf16.mxu0 0
      %1395 = vmatmul.mubr.bf16.gmra.mrb[0].mxu0 %v1212
      %v1396 = vpop.f32.mrb[0].mxu0
      %v1397 = vadd.f32 0.0, %v1396
      %v1398 = vpop.f32.mrb[0].mxu0
      %v1399 = vpop.f32.mrb[0].mxu0
      %v1400 = vadd.f32 0.0, %v1399
      %v1401 = vpop.f32.mrb[0].mxu0
      %1402 = vmatprep.mubr.bf16.mxu0 0
      %1403 = vmatmul.mubr.bf16.gmra.mrb[0].mxu0 %v1215
      %v1404 = vpop.f32.mrb[0].mxu0
      %v1405 = vadd.f32 0.0, %v1404
      %v1406 = vpop.f32.mrb[0].mxu0
      %v1407 = vpop.f32.mrb[0].mxu0
      %v1408 = vadd.f32 0.0, %v1407
      %v1409 = vpop.f32.mrb[0].mxu0
      %1410 = vmatprep.mubr.bf16.mxu0 0
      %1411 = vmatmul.mubr.bf16.gmra.mrb[0].mxu0 %v1218
      %v1412 = vpop.f32.mrb[0].mxu0
      %v1413 = vadd.f32 0.0, %v1412
      %v1414 = vpop.f32.mrb[0].mxu0
      %v1415 = vpop.f32.mrb[0].mxu0
      %v1416 = vadd.f32 0.0, %v1415
      %v1417 = vpop.f32.mrb[0].mxu0
      %1418 = vmatprep.mubr.bf16.mxu0 0
      %1419 = vmatmul.mubr.bf16.gmra.mrb[0].mxu0 %v1221
      %v1420 = vpop.f32.mrb[0].mxu0
      %v1421 = vadd.f32 0.0, %v1420
      %v1422 = vpop.f32.mrb[0].mxu0
      %v1423 = vpop.f32.mrb[0].mxu0
      %v1424 = vadd.f32 0.0, %v1423
      %v1425 = vpop.f32.mrb[0].mxu0
      %1426 = vmatprep.mubr.bf16.mxu0 0
      %1427 = vmatmul.mubr.bf16.gmra.mrb[0].mxu0 %v1224
      %v1428 = vpop.f32.mrb[0].mxu0
      %v1429 = vadd.f32 0.0, %v1428
      %v1430 = vpop.f32.mrb[0].mxu0
      %v1431 = vpop.f32.mrb[0].mxu0
      %v1432 = vadd.f32 0.0, %v1431
      %v1433 = vpop.f32.mrb[0].mxu0
      %1434 = vmatprep.mubr.bf16.mxu0 0
      %1435 = vmatmul.mubr.bf16.gmra.mrb[0].mxu0 %v1227
      %v1436 = vpop.f32.mrb[0].mxu0
      %v1437 = vadd.f32 0.0, %v1436
      %v1438 = vpop.f32.mrb[0].mxu0
      %v1439 = vpop.f32.mrb[0].mxu0
      %v1440 = vadd.f32 0.0, %v1439
      %v1441 = vpop.f32.mrb[0].mxu0
      %1442 = vmatprep.mubr.bf16.mxu0 0
      %1443 = vmatmul.mubr.bf16.gmra.mrb[0].mxu0 %v1230
      %v1444 = vpop.f32.mrb[0].mxu0
      %v1445 = vadd.f32 0.0, %v1444
      %v1446 = vpop.f32.mrb[0].mxu0
      %v1447 = vpop.f32.mrb[0].mxu0
      %v1448 = vadd.f32 0.0, %v1447
      %v1449 = vpop.f32.mrb[0].mxu0
      %1450 = vmatprep.mubr.bf16.mxu0 0
      %1451 = vmatmul.mubr.bf16.gmra.mrb[0].mxu0 %v1233
      %v1452 = vpop.f32.mrb[0].mxu0
      %v1453 = vadd.f32 0.0, %v1452
      %v1454 = vpop.f32.mrb[0].mxu0
      %v1455 = vpop.f32.mrb[0].mxu0
      %v1456 = vadd.f32 0.0, %v1455
      %v1457 = vpop.f32.mrb[0].mxu0
      %1458 = vmatprep.mubr.bf16.mxu0 0
      %1459 = vmatmul.mubr.bf16.gmra.mrb[0].mxu0 %v1236
      %v1460 = vpop.f32.mrb[0].mxu0
      %v1461 = vadd.f32 0.0, %v1460
      %v1462 = vpop.f32.mrb[0].mxu0
      %v1463 = vpop.f32.mrb[0].mxu0
      %v1464 = vadd.f32 0.0, %v1463
      %v1465 = vpop.f32.mrb[0].mxu0
      %1466 = vmatprep.mubr.bf16.mxu0 0
      %1467 = vmatmul.mubr.bf16.gmra.mrb[0].mxu0 %v1239
      %v1468 = vpop.f32.mrb[0].mxu0
      %v1469 = vadd.f32 0.0, %v1468
      %v1470 = vpop.f32.mrb[0].mxu0
      %v1471 = vpop.f32.mrb[0].mxu0
      %v1472 = vadd.f32 0.0, %v1471
      %v1473 = vpop.f32.mrb[0].mxu0
      %1474 = vmatprep.mubr.bf16.mxu0 0
      %1475 = vmatmul.mubr.bf16.gmra.mrb[0].mxu0 %v1242
      %v1476 = vpop.f32.mrb[0].mxu0
      %v1477 = vadd.f32 0.0, %v1476
      %v1478 = vpop.f32.mrb[0].mxu0
      %v1479 = vpop.f32.mrb[0].mxu0
      %v1480 = vadd.f32 0.0, %v1479
      %v1481 = vpop.f32.mrb[0].mxu0
      %1482 = vmatprep.mubr.bf16.mxu0 0
      %1483 = vmatmul.mubr.bf16.gmra.mrb[0].mxu0 %v1245
      %v1484 = vpop.f32.mrb[0].mxu0
      %v1485 = vadd.f32 0.0, %v1484
      %v1486 = vpop.f32.mrb[0].mxu0
      %v1487 = vpop.f32.mrb[0].mxu0
      %v1488 = vadd.f32 0.0, %v1487
      %v1489 = vpop.f32.mrb[0].mxu0
      %1490 = vmatprep.mubr.bf16.mxu0 0
      %1491 = vmatmul.mubr.bf16.gmra.mrb[0].mxu0 %v1248
      %v1492 = vpop.f32.mrb[0].mxu0
      %v1493 = vadd.f32 0.0, %v1492
      %v1494 = vpop.f32.mrb[0].mxu0
      %v1495 = vpop.f32.mrb[0].mxu0
      %v1496 = vpop.f32.mrb[0].mxu0
      %1497 = vdwg.mxu0
      %v1498 = vadd.f32 %v843, %v1285
      %v1499 = vadd.f32 %v846, %v1288
      %v1500 = vadd.f32 %v851, %v1293
      %v1501 = vadd.f32 %v854, %v1296
      %v1502 = vadd.f32 %v859, %v1301
      %v1503 = vadd.f32 %v862, %v1304
      %v1504 = vadd.f32 %v867, %v1309
      %v1505 = vadd.f32 %v870, %v1312
      %v1506 = vadd.f32 %v875, %v1317
      %v1507 = vadd.f32 %v878, %v1320
      %v1508 = vadd.f32 %v883, %v1325
      %v1509 = vadd.f32 %v886, %v1328
      %v1510 = vadd.f32 %v891, %v1333
      %v1511 = vadd.f32 %v894, %v1336
      %v1512 = vadd.f32 %v899, %v1341
      %v1513 = vadd.f32 %v902, %v1344
      %v1514 = vadd.f32 %v907, %v1349
      %v1515 = vadd.f32 %v910, %v1352
      %v1516 = vadd.f32 %v915, %v1357
      %v1517 = vadd.f32 %v918, %v1360
      %v1518 = vadd.f32 %v923, %v1365
      %v1519 = vadd.f32 %v926, %v1368
      %v1520 = vadd.f32 %v931, %v1373
      %v1521 = vadd.f32 %v934, %v1376
      %v1522 = vadd.f32 %v939, %v1381
      %v1523 = vadd.f32 %v942, %v1384
      %v1524 = vadd.f32 %v947, %v1389
      %v1525 = vadd.f32 %v950, %v1392
      %v1526 = vadd.f32 %v955, %v1397
      %v1527 = vadd.f32 %v958, %v1400
      %v1528 = vadd.f32 %v963, %v1405
      %v1529 = vadd.f32 %v966, %v1408
      %v1530 = vadd.f32 %v971, %v1413
      %v1531 = vadd.f32 %v974, %v1416
      %v1532 = vadd.f32 %v979, %v1421
      %v1533 = vadd.f32 %v982, %v1424
      %v1534 = vadd.f32 %v987, %v1429
      %v1535 = vadd.f32 %v990, %v1432
      %v1536 = vadd.f32 %v995, %v1437
      %v1537 = vadd.f32 %v998, %v1440
      %v1538 = vadd.f32 %v1003, %v1445
      %v1539 = vadd.f32 %v1006, %v1448
      %v1540 = vadd.f32 %v1011, %v1453
      %v1541 = vadd.f32 %v1014, %v1456
      %v1542 = vadd.f32 %v1019, %v1461
      %v1543 = vadd.f32 %v1022, %v1464
      %v1544 = vadd.f32 %v1027, %v1469
      %v1545 = vadd.f32 %v1030, %v1472
      %v1546 = vadd.f32 %v1035, %v1477
      %v1547 = vadd.f32 %v1038, %v1480
      %v1548 = vadd.f32 %v1043, %v1485
      %v1549 = vadd.f32 %v1046, %v1488
      %v1550 = vadd.f32 %v1051, %v1493
      %v1551 = vld [vmem:[%s165 + $0x16] sm:$0xff]
      %v1552 = vld [vmem:[%s165 + $0x1e] sm:$0xff]
      %v1553 = vld [vmem:[%s165 + $0x26] sm:$0xff]
      %v1554 = vld [vmem:[%s165 + $0x2e] sm:$0xff]
      %v1555 = vld [vmem:[%s165 + $0x36] sm:$0xff]
      %v1556 = vld [vmem:[%s165 + $0x3e] sm:$0xff]
      %v1557 = vld [vmem:[%s165 + $0x46] sm:$0xff]
      %v1558 = vld [vmem:[%s165 + $0x4e] sm:$0xff]
      %v1559 = vld [vmem:[%s165 + $0x56] sm:$0xff]
      %v1560 = vld [vmem:[%s165 + $0x5e] sm:$0xff]
      %v1561 = vld [vmem:[%s165 + $0x66] sm:$0xff]
      %v1562 = vld [vmem:[%s165 + $0x6e] sm:$0xff]
      %v1563 = vld [vmem:[%s165 + $0x76] sm:$0xff]
      %v1564 = vld [vmem:[%s165 + $0x7e] sm:$0xff]
      %v1565 = vld [vmem:[%s165 + $0x86] sm:$0xff]
      %v1566 = vld [vmem:[%s165 + $0x8e] sm:$0xff]
      %v1567 = vld [vmem:[%s165 + $0x96] sm:$0xff]
      %v1568 = vld [vmem:[%s165 + $0x9e] sm:$0xff]
      %v1569 = vld [vmem:[%s165 + $0xa6] sm:$0xff]
      %v1570 = vld [vmem:[%s165 + $0xae] sm:$0xff]
      %v1571 = vld [vmem:[%s165 + $0xb6] sm:$0xff]
      %v1572 = vld [vmem:[%s165 + $0xbe] sm:$0xff]
      %v1573 = vld [vmem:[%s165 + $0xc6] sm:$0xff]
      %v1574 = vld [vmem:[%s165 + $0xce] sm:$0xff]
      %v1575 = vld [vmem:[%s165 + $0xd6] sm:$0xff]
      %v1576 = vld [vmem:[%s165 + $0xde] sm:$0xff]
      %v1577 = vld [vmem:[%s165 + $0xe6] sm:$0xff]
      %v1578 = vld [vmem:[%s165 + $0xee] sm:$0xff]
      %v1579 = vld [vmem:[%s165 + $0xf6] sm:$0xff]
      %v1580 = vld [vmem:[%s165 + $0xfe] sm:$0xff]
      %v1581 = vld [vmem:[%s165 + $0x106] sm:$0xff]
      %v1582 = vld [vmem:[%s165 + $0x10e] sm:$0xff]
      %v1583 = vld [vmem:[%s165 + $0x116] sm:$0xff]
      %v1584 = vld [vmem:[%s165 + $0x11e] sm:$0xff]
      %v1585 = vld [vmem:[%s165 + $0x126] sm:$0xff]
      %v1586 = vld [vmem:[%s165 + $0x12e] sm:$0xff]
      %v1587 = vld [vmem:[%s165 + $0x136] sm:$0xff]
      %v1588 = vld [vmem:[%s165 + $0x13e] sm:$0xff]
      %v1589 = vld [vmem:[%s165 + $0x146] sm:$0xff]
      %v1590 = vld [vmem:[%s165 + $0x14e] sm:$0xff]
      %v1591 = vld [vmem:[%s165 + $0x156] sm:$0xff]
      %v1592 = vld [vmem:[%s165 + $0x15e] sm:$0xff]
      %v1593 = vld [vmem:[%s165 + $0x166] sm:$0xff]
      %v1594 = vld [vmem:[%s165 + $0x16e] sm:$0xff]
      %v1595 = vld [vmem:[%s165 + $0x176] sm:$0xff]
      %v1596 = vld [vmem:[%s165 + $0x17e] sm:$0xff]
      %v1597 = vld [vmem:[%s165 + $0x186] sm:$0xff]
      %v1598 = vld [vmem:[%s165 + $0x18e] sm:$0xff]
      %v1599 = vld [vmem:[%s165 + $0x196] sm:$0xff]
      %v1600 = vld [vmem:[%s165 + $0x19e] sm:$0xff]
      %v1601 = vld [vmem:[%s165 + $0x1a6] sm:$0xff]
      %v1602 = vld [vmem:[%s165 + $0x1ae] sm:$0xff]
      %v1603 = vld [vmem:[%s165 + $0x1b6] sm:$0xf]
      %v1604 = vpack.c.bf16 %v1552, %v1551
      %v1605 = vpack.c.bf16 %v1554, %v1553
      %v1606 = vpack.c.bf16 %v1556, %v1555
      %v1607 = vpack.c.bf16 %v1558, %v1557
      %v1608 = vpack.c.bf16 %v1560, %v1559
      %v1609 = vpack.c.bf16 %v1562, %v1561
      %v1610 = vpack.c.bf16 %v1564, %v1563
      %v1611 = vpack.c.bf16 %v1566, %v1565
      %v1612 = vpack.c.bf16 %v1568, %v1567
      %v1613 = vpack.c.bf16 %v1570, %v1569
      %v1614 = vpack.c.bf16 %v1572, %v1571
      %v1615 = vpack.c.bf16 %v1574, %v1573
      %v1616 = vpack.c.bf16 %v1576, %v1575
      %v1617 = vpack.c.bf16 %v1578, %v1577
      %v1618 = vpack.c.bf16 %v1580, %v1579
      %v1619 = vpack.c.bf16 %v1582, %v1581
      %v1620 = vpack.c.bf16 %v1584, %v1583
      %v1621 = vpack.c.bf16 %v1586, %v1585
      %v1622 = vpack.c.bf16 %v1588, %v1587
      %v1623 = vpack.c.bf16 %v1590, %v1589
      %v1624 = vpack.c.bf16 %v1592, %v1591
      %v1625 = vpack.c.bf16 %v1594, %v1593
      %v1626 = vpack.c.bf16 %v1596, %v1595
      %v1627 = vpack.c.bf16 %v1598, %v1597
      %v1628 = vpack.c.bf16 %v1600, %v1599
      %v1629 = vpack.c.bf16 %v1602, %v1601
      %v1630 = vpack.c.bf16 %v1603, %v1603
      %s1631 = scalar_lea.vmem %s1, 96
      %v1632 = vld [vmem:[%s1631] sm:$0xf]
      %v1633 = vld [vmem:[%s1631 + $0x4] sm:$0xf]
      %v1634 = vld [vmem:[%s1631 + $0x8] sm:$0xf]
      %v1635 = vld [vmem:[%s1631 + $0xc] sm:$0xf]
      %v1636 = vld [vmem:[%s1631 + $0x10] sm:$0xf]
      %v1637 = vld [vmem:[%s1631 + $0x14] sm:$0xf]
      %v1638 = vld [vmem:[%s1631 + $0x18] sm:$0xf]
      %v1639 = vld [vmem:[%s1631 + $0x1c] sm:$0xf]
      %v1648 = vunpack.c.l.b16 %v1632
      %v1649 = vunpack.c.l.b16 %v1633
      %v1650 = vunpack.c.l.b16 %v1634
      %v1651 = vunpack.c.l.b16 %v1635
      %v1652 = vunpack.c.l.b16 %v1636
      %v1653 = vunpack.c.l.b16 %v1637
      %v1654 = vunpack.c.l.b16 %v1638
      %v1655 = vunpack.c.l.b16 %v1639
      %v1656 = vpack.c.b16 %v1649, %v1648
      %v1657 = vpack.c.b16 %v1651, %v1650
      %v1658 = vpack.c.b16 %v1653, %v1652
      %v1659 = vpack.c.b16 %v1655, %v1654
      %v1665 = vsel %vm373, %v1604, 0
      %v1668 = vsel %vm373, %v1605, 0
      %v1671 = vsel %vm373, %v1606, 0
      %v1674 = vsel %vm373, %v1607, 0
      %v1677 = vsel %vm373, %v1608, 0
      %v1680 = vsel %vm373, %v1609, 0
      %v1683 = vsel %vm373, %v1610, 0
      %v1686 = vsel %vm373, %v1611, 0
      %v1689 = vsel %vm373, %v1612, 0
      %v1692 = vsel %vm373, %v1613, 0
      %v1695 = vsel %vm373, %v1614, 0
      %v1698 = vsel %vm373, %v1615, 0
      %v1701 = vsel %vm373, %v1616, 0
      %v1704 = vsel %vm373, %v1617, 0
      %v1707 = vsel %vm373, %v1618, 0
      %v1710 = vsel %vm373, %v1619, 0
      %v1713 = vsel %vm373, %v1620, 0
      %v1716 = vsel %vm373, %v1621, 0
      %v1719 = vsel %vm373, %v1622, 0
      %v1722 = vsel %vm373, %v1623, 0
      %v1725 = vsel %vm373, %v1624, 0
      %v1728 = vsel %vm373, %v1625, 0
      %v1731 = vsel %vm373, %v1626, 0
      %v1734 = vsel %vm373, %v1627, 0
      %v1737 = vsel %vm373, %v1628, 0
      %v1740 = vsel %vm373, %v1629, 0
      %v1743 = vsel %vm373, %v1630, 0
      %1745 = vmatprep.subr.bf16.mxu0 0
      %1746 = vmatpush1.bf16.msra.mxu0 %v1656
      %1747 = vmatprep.subr.bf16.mxu0 0
      %1748 = vmatpush1.bf16.msra.mxu0 %v1657
      %1749 = vmatprep.subr.bf16.mxu0 0
      %1750 = vmatpush1.bf16.msra.mxu0 %v1658
      %1751 = vmatprep.subr.bf16.mxu0 0
      %1752 = vmatpush1.bf16.msra.mxu0 %v1659
      %1753 = vmatprep.subr.bf16.mxu0 0
      %1754 = vmatpush1.bf16.msra.mxu0 0
      %1755 = vmatprep.subr.bf16.mxu0 0
      %1756 = vmatpush1.bf16.msra.mxu0 0
      %1757 = vmatprep.subr.bf16.mxu0 0
      %1758 = vmatpush1.bf16.msra.mxu0 0
      %1759 = vmatprep.subr.bf16.mxu0 0
      %1760 = vmatpush1.bf16.msra.mxu0 0
      %1761 = vmatprep.subr.bf16.mxu0 0
      %1762 = vmatpush1.bf16.msra.mxu0 0
      %1763 = vmatprep.subr.bf16.mxu0 0
      %1764 = vmatpush1.bf16.msra.mxu0 0
      %1765 = vmatprep.subr.bf16.mxu0 0
      %1766 = vmatpush1.bf16.msra.mxu0 0
      %1767 = vmatprep.subr.bf16.mxu0 0
      %1768 = vmatpush1.bf16.msra.mxu0 0
      %1769 = vmatprep.subr.bf16.mxu0 0
      %1770 = vmatpush1.bf16.msra.mxu0 0
      %1771 = vmatprep.subr.bf16.mxu0 0
      %1772 = vmatpush1.bf16.msra.mxu0 0
      %1773 = vmatprep.subr.bf16.mxu0 0
      %1774 = vmatpush1.bf16.msra.mxu0 0
      %1775 = vmatprep.subr.bf16.mxu0 0
      %1776 = vmatpush1.bf16.msra.mxu0 0
      %1777 = vmatprep.mubr.bf16.mxu0 0
      %1778 = vmatmul.mubr.bf16.gmra.mrb[0].mxu0 %v1665
      %v1779 = vpop.f32.mrb[0].mxu0
      %v1780 = vadd.f32 0.0, %v1779
      %v1781 = vpop.f32.mrb[0].mxu0
      %v1782 = vpop.f32.mrb[0].mxu0
      %v1783 = vadd.f32 0.0, %v1782
      %v1784 = vpop.f32.mrb[0].mxu0
      %1785 = vmatprep.mubr.bf16.mxu0 0
      %1786 = vmatmul.mubr.bf16.gmra.mrb[0].mxu0 %v1668
      %v1787 = vpop.f32.mrb[0].mxu0
      %v1788 = vadd.f32 0.0, %v1787
      %v1789 = vpop.f32.mrb[0].mxu0
      %v1790 = vpop.f32.mrb[0].mxu0
      %v1791 = vadd.f32 0.0, %v1790
      %v1792 = vpop.f32.mrb[0].mxu0
      %1793 = vmatprep.mubr.bf16.mxu0 0
      %1794 = vmatmul.mubr.bf16.gmra.mrb[0].mxu0 %v1671
      %v1795 = vpop.f32.mrb[0].mxu0
      %v1796 = vadd.f32 0.0, %v1795
      %v1797 = vpop.f32.mrb[0].mxu0
      %v1798 = vpop.f32.mrb[0].mxu0
      %v1799 = vadd.f32 0.0, %v1798
      %v1800 = vpop.f32.mrb[0].mxu0
      %1801 = vmatprep.mubr.bf16.mxu0 0
      %1802 = vmatmul.mubr.bf16.gmra.mrb[0].mxu0 %v1674
      %v1803 = vpop.f32.mrb[0].mxu0
      %v1804 = vadd.f32 0.0, %v1803
      %v1805 = vpop.f32.mrb[0].mxu0
      %v1806 = vpop.f32.mrb[0].mxu0
      %v1807 = vadd.f32 0.0, %v1806
      %v1808 = vpop.f32.mrb[0].mxu0
      %1809 = vmatprep.mubr.bf16.mxu0 0
      %1810 = vmatmul.mubr.bf16.gmra.mrb[0].mxu0 %v1677
      %v1811 = vpop.f32.mrb[0].mxu0
      %v1812 = vadd.f32 0.0, %v1811
      %v1813 = vpop.f32.mrb[0].mxu0
      %v1814 = vpop.f32.mrb[0].mxu0
      %v1815 = vadd.f32 0.0, %v1814
      %v1816 = vpop.f32.mrb[0].mxu0
      %1817 = vmatprep.mubr.bf16.mxu0 0
      %1818 = vmatmul.mubr.bf16.gmra.mrb[0].mxu0 %v1680
      %v1819 = vpop.f32.mrb[0].mxu0
      %v1820 = vadd.f32 0.0, %v1819
      %v1821 = vpop.f32.mrb[0].mxu0
      %v1822 = vpop.f32.mrb[0].mxu0
      %v1823 = vadd.f32 0.0, %v1822
      %v1824 = vpop.f32.mrb[0].mxu0
      %1825 = vmatprep.mubr.bf16.mxu0 0
      %1826 = vmatmul.mubr.bf16.gmra.mrb[0].mxu0 %v1683
      %v1827 = vpop.f32.mrb[0].mxu0
      %v1828 = vadd.f32 0.0, %v1827
      %v1829 = vpop.f32.mrb[0].mxu0
      %v1830 = vpop.f32.mrb[0].mxu0
      %v1831 = vadd.f32 0.0, %v1830
      %v1832 = vpop.f32.mrb[0].mxu0
      %1833 = vmatprep.mubr.bf16.mxu0 0
      %1834 = vmatmul.mubr.bf16.gmra.mrb[0].mxu0 %v1686
      %v1835 = vpop.f32.mrb[0].mxu0
      %v1836 = vadd.f32 0.0, %v1835
      %v1837 = vpop.f32.mrb[0].mxu0
      %v1838 = vpop.f32.mrb[0].mxu0
      %v1839 = vadd.f32 0.0, %v1838
      %v1840 = vpop.f32.mrb[0].mxu0
      %1841 = vmatprep.mubr.bf16.mxu0 0
      %1842 = vmatmul.mubr.bf16.gmra.mrb[0].mxu0 %v1689
      %v1843 = vpop.f32.mrb[0].mxu0
      %v1844 = vadd.f32 0.0, %v1843
      %v1845 = vpop.f32.mrb[0].mxu0
      %v1846 = vpop.f32.mrb[0].mxu0
      %v1847 = vadd.f32 0.0, %v1846
      %v1848 = vpop.f32.mrb[0].mxu0
      %1849 = vmatprep.mubr.bf16.mxu0 0
      %1850 = vmatmul.mubr.bf16.gmra.mrb[0].mxu0 %v1692
      %v1851 = vpop.f32.mrb[0].mxu0
      %v1852 = vadd.f32 0.0, %v1851
      %v1853 = vpop.f32.mrb[0].mxu0
      %v1854 = vpop.f32.mrb[0].mxu0
      %v1855 = vadd.f32 0.0, %v1854
      %v1856 = vpop.f32.mrb[0].mxu0
      %1857 = vmatprep.mubr.bf16.mxu0 0
      %1858 = vmatmul.mubr.bf16.gmra.mrb[0].mxu0 %v1695
      %v1859 = vpop.f32.mrb[0].mxu0
      %v1860 = vadd.f32 0.0, %v1859
      %v1861 = vpop.f32.mrb[0].mxu0
      %v1862 = vpop.f32.mrb[0].mxu0
      %v1863 = vadd.f32 0.0, %v1862
      %v1864 = vpop.f32.mrb[0].mxu0
      %1865 = vmatprep.mubr.bf16.mxu0 0
      %1866 = vmatmul.mubr.bf16.gmra.mrb[0].mxu0 %v1698
      %v1867 = vpop.f32.mrb[0].mxu0
      %v1868 = vadd.f32 0.0, %v1867
      %v1869 = vpop.f32.mrb[0].mxu0
      %v1870 = vpop.f32.mrb[0].mxu0
      %v1871 = vadd.f32 0.0, %v1870
      %v1872 = vpop.f32.mrb[0].mxu0
      %1873 = vmatprep.mubr.bf16.mxu0 0
      %1874 = vmatmul.mubr.bf16.gmra.mrb[0].mxu0 %v1701
      %v1875 = vpop.f32.mrb[0].mxu0
      %v1876 = vadd.f32 0.0, %v1875
      %v1877 = vpop.f32.mrb[0].mxu0
      %v1878 = vpop.f32.mrb[0].mxu0
      %v1879 = vadd.f32 0.0, %v1878
      %v1880 = vpop.f32.mrb[0].mxu0
      %1881 = vmatprep.mubr.bf16.mxu0 0
      %1882 = vmatmul.mubr.bf16.gmra.mrb[0].mxu0 %v1704
      %v1883 = vpop.f32.mrb[0].mxu0
      %v1884 = vadd.f32 0.0, %v1883
      %v1885 = vpop.f32.mrb[0].mxu0
      %v1886 = vpop.f32.mrb[0].mxu0
      %v1887 = vadd.f32 0.0, %v1886
      %v1888 = vpop.f32.mrb[0].mxu0
      %1889 = vmatprep.mubr.bf16.mxu0 0
      %1890 = vmatmul.mubr.bf16.gmra.mrb[0].mxu0 %v1707
      %v1891 = vpop.f32.mrb[0].mxu0
      %v1892 = vadd.f32 0.0, %v1891
      %v1893 = vpop.f32.mrb[0].mxu0
      %v1894 = vpop.f32.mrb[0].mxu0
      %v1895 = vadd.f32 0.0, %v1894
      %v1896 = vpop.f32.mrb[0].mxu0
      %1897 = vmatprep.mubr.bf16.mxu0 0
      %1898 = vmatmul.mubr.bf16.gmra.mrb[0].mxu0 %v1710
      %v1899 = vpop.f32.mrb[0].mxu0
      %v1900 = vadd.f32 0.0, %v1899
      %v1901 = vpop.f32.mrb[0].mxu0
      %v1902 = vpop.f32.mrb[0].mxu0
      %v1903 = vadd.f32 0.0, %v1902
      %v1904 = vpop.f32.mrb[0].mxu0
      %1905 = vmatprep.mubr.bf16.mxu0 0
      %1906 = vmatmul.mubr.bf16.gmra.mrb[0].mxu0 %v1713
      %v1907 = vpop.f32.mrb[0].mxu0
      %v1908 = vadd.f32 0.0, %v1907
      %v1909 = vpop.f32.mrb[0].mxu0
      %v1910 = vpop.f32.mrb[0].mxu0
      %v1911 = vadd.f32 0.0, %v1910
      %v1912 = vpop.f32.mrb[0].mxu0
      %1913 = vmatprep.mubr.bf16.mxu0 0
      %1914 = vmatmul.mubr.bf16.gmra.mrb[0].mxu0 %v1716
      %v1915 = vpop.f32.mrb[0].mxu0
      %v1916 = vadd.f32 0.0, %v1915
      %v1917 = vpop.f32.mrb[0].mxu0
      %v1918 = vpop.f32.mrb[0].mxu0
      %v1919 = vadd.f32 0.0, %v1918
      %v1920 = vpop.f32.mrb[0].mxu0
      %1921 = vmatprep.mubr.bf16.mxu0 0
      %1922 = vmatmul.mubr.bf16.gmra.mrb[0].mxu0 %v1719
      %v1923 = vpop.f32.mrb[0].mxu0
      %v1924 = vadd.f32 0.0, %v1923
      %v1925 = vpop.f32.mrb[0].mxu0
      %v1926 = vpop.f32.mrb[0].mxu0
      %v1927 = vadd.f32 0.0, %v1926
      %v1928 = vpop.f32.mrb[0].mxu0
      %1929 = vmatprep.mubr.bf16.mxu0 0
      %1930 = vmatmul.mubr.bf16.gmra.mrb[0].mxu0 %v1722
      %v1931 = vpop.f32.mrb[0].mxu0
      %v1932 = vadd.f32 0.0, %v1931
      %v1933 = vpop.f32.mrb[0].mxu0
      %v1934 = vpop.f32.mrb[0].mxu0
      %v1935 = vadd.f32 0.0, %v1934
      %v1936 = vpop.f32.mrb[0].mxu0
      %1937 = vmatprep.mubr.bf16.mxu0 0
      %1938 = vmatmul.mubr.bf16.gmra.mrb[0].mxu0 %v1725
      %v1939 = vpop.f32.mrb[0].mxu0
      %v1940 = vadd.f32 0.0, %v1939
      %v1941 = vpop.f32.mrb[0].mxu0
      %v1942 = vpop.f32.mrb[0].mxu0
      %v1943 = vadd.f32 0.0, %v1942
      %v1944 = vpop.f32.mrb[0].mxu0
      %1945 = vmatprep.mubr.bf16.mxu0 0
      %1946 = vmatmul.mubr.bf16.gmra.mrb[0].mxu0 %v1728
      %v1947 = vpop.f32.mrb[0].mxu0
      %v1948 = vadd.f32 0.0, %v1947
      %v1949 = vpop.f32.mrb[0].mxu0
      %v1950 = vpop.f32.mrb[0].mxu0
      %v1951 = vadd.f32 0.0, %v1950
      %v1952 = vpop.f32.mrb[0].mxu0
      %1953 = vmatprep.mubr.bf16.mxu0 0
      %1954 = vmatmul.mubr.bf16.gmra.mrb[0].mxu0 %v1731
      %v1955 = vpop.f32.mrb[0].mxu0
      %v1956 = vadd.f32 0.0, %v1955
      %v1957 = vpop.f32.mrb[0].mxu0
      %v1958 = vpop.f32.mrb[0].mxu0
      %v1959 = vadd.f32 0.0, %v1958
      %v1960 = vpop.f32.mrb[0].mxu0
      %1961 = vmatprep.mubr.bf16.mxu0 0
      %1962 = vmatmul.mubr.bf16.gmra.mrb[0].mxu0 %v1734
      %v1963 = vpop.f32.mrb[0].mxu0
      %v1964 = vadd.f32 0.0, %v1963
      %v1965 = vpop.f32.mrb[0].mxu0
      %v1966 = vpop.f32.mrb[0].mxu0
      %v1967 = vadd.f32 0.0, %v1966
      %v1968 = vpop.f32.mrb[0].mxu0
      %1969 = vmatprep.mubr.bf16.mxu0 0
      %1970 = vmatmul.mubr.bf16.gmra.mrb[0].mxu0 %v1737
      %v1971 = vpop.f32.mrb[0].mxu0
      %v1972 = vadd.f32 0.0, %v1971
      %v1973 = vpop.f32.mrb[0].mxu0
      %v1974 = vpop.f32.mrb[0].mxu0
      %v1975 = vadd.f32 0.0, %v1974
      %v1976 = vpop.f32.mrb[0].mxu0
      %1977 = vmatprep.mubr.bf16.mxu0 0
      %1978 = vmatmul.mubr.bf16.gmra.mrb[0].mxu0 %v1740
      %v1979 = vpop.f32.mrb[0].mxu0
      %v1980 = vadd.f32 0.0, %v1979
      %v1981 = vpop.f32.mrb[0].mxu0
      %v1982 = vpop.f32.mrb[0].mxu0
      %v1983 = vadd.f32 0.0, %v1982
      %v1984 = vpop.f32.mrb[0].mxu0
      %1985 = vmatprep.mubr.bf16.mxu0 0
      %1986 = vmatmul.mubr.bf16.gmra.mrb[0].mxu0 %v1743
      %v1987 = vpop.f32.mrb[0].mxu0
      %v1988 = vadd.f32 0.0, %v1987
      %v1989 = vpop.f32.mrb[0].mxu0
      %v1990 = vpop.f32.mrb[0].mxu0
      %v1991 = vpop.f32.mrb[0].mxu0
      %1992 = vdwg.mxu0
      %v1993 = vadd.f32 %v1498, %v1780
      %v1994 = vadd.f32 %v1499, %v1783
      %v1995 = vadd.f32 %v1500, %v1788
      %v1996 = vadd.f32 %v1501, %v1791
      %v1997 = vadd.f32 %v1502, %v1796
      %v1998 = vadd.f32 %v1503, %v1799
      %v1999 = vadd.f32 %v1504, %v1804
      %v2000 = vadd.f32 %v1505, %v1807
      %v2001 = vadd.f32 %v1506, %v1812
      %v2002 = vadd.f32 %v1507, %v1815
      %v2003 = vadd.f32 %v1508, %v1820
      %v2004 = vadd.f32 %v1509, %v1823
      %v2005 = vadd.f32 %v1510, %v1828
      %v2006 = vadd.f32 %v1511, %v1831
      %v2007 = vadd.f32 %v1512, %v1836
      %v2008 = vadd.f32 %v1513, %v1839
      %v2009 = vadd.f32 %v1514, %v1844
      %v2010 = vadd.f32 %v1515, %v1847
      %v2011 = vadd.f32 %v1516, %v1852
      %v2012 = vadd.f32 %v1517, %v1855
      %v2013 = vadd.f32 %v1518, %v1860
      %v2014 = vadd.f32 %v1519, %v1863
      %v2015 = vadd.f32 %v1520, %v1868
      %v2016 = vadd.f32 %v1521, %v1871
      %v2017 = vadd.f32 %v1522, %v1876
      %v2018 = vadd.f32 %v1523, %v1879
      %v2019 = vadd.f32 %v1524, %v1884
      %v2020 = vadd.f32 %v1525, %v1887
      %v2021 = vadd.f32 %v1526, %v1892
      %v2022 = vadd.f32 %v1527, %v1895
      %v2023 = vadd.f32 %v1528, %v1900
      %v2024 = vadd.f32 %v1529, %v1903
      %v2025 = vadd.f32 %v1530, %v1908
      %v2026 = vadd.f32 %v1531, %v1911
      %v2027 = vadd.f32 %v1532, %v1916
      %v2028 = vadd.f32 %v1533, %v1919
      %v2029 = vadd.f32 %v1534, %v1924
      %v2030 = vadd.f32 %v1535, %v1927
      %v2031 = vadd.f32 %v1536, %v1932
      %v2032 = vadd.f32 %v1537, %v1935
      %v2033 = vadd.f32 %v1538, %v1940
      %v2034 = vadd.f32 %v1539, %v1943
      %v2035 = vadd.f32 %v1540, %v1948
      %v2036 = vadd.f32 %v1541, %v1951
      %v2037 = vadd.f32 %v1542, %v1956
      %v2038 = vadd.f32 %v1543, %v1959
      %v2039 = vadd.f32 %v1544, %v1964
      %v2040 = vadd.f32 %v1545, %v1967
      %v2041 = vadd.f32 %v1546, %v1972
      %v2042 = vadd.f32 %v1547, %v1975
      %v2043 = vadd.f32 %v1548, %v1980
      %v2044 = vadd.f32 %v1549, %v1983
      %v2045 = vadd.f32 %v1550, %v1988
      %v2046 = vld [vmem:[%s2] sm:$0x1]
      %v2048 = vlaneseq
      %v2049 = vshrl.u32 %v2048, 7
      %v2050 = vsub.s32 0, %v2049
      %v2051 = vrot.slane %v2046, %v2050
      %v2053 = vadd.f32 %v1993, %v2051
      %v2054 = vadd.f32 %v1994, %v2051
      %v2055 = vadd.f32 %v1995, %v2051
      %v2056 = vadd.f32 %v1996, %v2051
      %v2057 = vadd.f32 %v1997, %v2051
      %v2058 = vadd.f32 %v1998, %v2051
      %v2059 = vadd.f32 %v1999, %v2051
      %v2060 = vadd.f32 %v2000, %v2051
      %v2061 = vadd.f32 %v2001, %v2051
      %v2062 = vadd.f32 %v2002, %v2051
      %v2063 = vadd.f32 %v2003, %v2051
      %v2064 = vadd.f32 %v2004, %v2051
      %v2065 = vadd.f32 %v2005, %v2051
      %v2066 = vadd.f32 %v2006, %v2051
      %v2067 = vadd.f32 %v2007, %v2051
      %v2068 = vadd.f32 %v2008, %v2051
      %v2069 = vadd.f32 %v2009, %v2051
      %v2070 = vadd.f32 %v2010, %v2051
      %v2071 = vadd.f32 %v2011, %v2051
      %v2072 = vadd.f32 %v2012, %v2051
      %v2073 = vadd.f32 %v2013, %v2051
      %v2074 = vadd.f32 %v2014, %v2051
      %v2075 = vadd.f32 %v2015, %v2051
      %v2076 = vadd.f32 %v2016, %v2051
      %v2077 = vadd.f32 %v2017, %v2051
      %v2078 = vadd.f32 %v2018, %v2051
      %v2079 = vadd.f32 %v2019, %v2051
      %v2080 = vadd.f32 %v2020, %v2051
      %v2081 = vadd.f32 %v2021, %v2051
      %v2082 = vadd.f32 %v2022, %v2051
      %v2083 = vadd.f32 %v2023, %v2051
      %v2084 = vadd.f32 %v2024, %v2051
      %v2085 = vadd.f32 %v2025, %v2051
      %v2086 = vadd.f32 %v2026, %v2051
      %v2087 = vadd.f32 %v2027, %v2051
      %v2088 = vadd.f32 %v2028, %v2051
      %v2089 = vadd.f32 %v2029, %v2051
      %v2090 = vadd.f32 %v2030, %v2051
      %v2091 = vadd.f32 %v2031, %v2051
      %v2092 = vadd.f32 %v2032, %v2051
      %v2093 = vadd.f32 %v2033, %v2051
      %v2094 = vadd.f32 %v2034, %v2051
      %v2095 = vadd.f32 %v2035, %v2051
      %v2096 = vadd.f32 %v2036, %v2051
      %v2097 = vadd.f32 %v2037, %v2051
      %v2098 = vadd.f32 %v2038, %v2051
      %v2099 = vadd.f32 %v2039, %v2051
      %v2100 = vadd.f32 %v2040, %v2051
      %v2101 = vadd.f32 %v2041, %v2051
      %v2102 = vadd.f32 %v2042, %v2051
      %v2103 = vadd.f32 %v2043, %v2051
      %v2104 = vadd.f32 %v2044, %v2051
      %v2105 = vadd.f32 %v2045, %v2051
      %v2106 = vmax.f32 %v2053, 0.0
      %v2107 = vmax.f32 %v2054, 0.0
      %v2108 = vmax.f32 %v2055, 0.0
      %v2109 = vmax.f32 %v2056, 0.0
      %v2110 = vmax.f32 %v2057, 0.0
      %v2111 = vmax.f32 %v2058, 0.0
      %v2112 = vmax.f32 %v2059, 0.0
      %v2113 = vmax.f32 %v2060, 0.0
      %v2114 = vmax.f32 %v2061, 0.0
      %v2115 = vmax.f32 %v2062, 0.0
      %v2116 = vmax.f32 %v2063, 0.0
      %v2117 = vmax.f32 %v2064, 0.0
      %v2118 = vmax.f32 %v2065, 0.0
      %v2119 = vmax.f32 %v2066, 0.0
      %v2120 = vmax.f32 %v2067, 0.0
      %v2121 = vmax.f32 %v2068, 0.0
      %v2122 = vmax.f32 %v2069, 0.0
      %v2123 = vmax.f32 %v2070, 0.0
      %v2124 = vmax.f32 %v2071, 0.0
      %v2125 = vmax.f32 %v2072, 0.0
      %v2126 = vmax.f32 %v2073, 0.0
      %v2127 = vmax.f32 %v2074, 0.0
      %v2128 = vmax.f32 %v2075, 0.0
      %v2129 = vmax.f32 %v2076, 0.0
      %v2130 = vmax.f32 %v2077, 0.0
      %v2131 = vmax.f32 %v2078, 0.0
      %v2132 = vmax.f32 %v2079, 0.0
      %v2133 = vmax.f32 %v2080, 0.0
      %v2134 = vmax.f32 %v2081, 0.0
      %v2135 = vmax.f32 %v2082, 0.0
      %v2136 = vmax.f32 %v2083, 0.0
      %v2137 = vmax.f32 %v2084, 0.0
      %v2138 = vmax.f32 %v2085, 0.0
      %v2139 = vmax.f32 %v2086, 0.0
      %v2140 = vmax.f32 %v2087, 0.0
      %v2141 = vmax.f32 %v2088, 0.0
      %v2142 = vmax.f32 %v2089, 0.0
      %v2143 = vmax.f32 %v2090, 0.0
      %v2144 = vmax.f32 %v2091, 0.0
      %v2145 = vmax.f32 %v2092, 0.0
      %v2146 = vmax.f32 %v2093, 0.0
      %v2147 = vmax.f32 %v2094, 0.0
      %v2148 = vmax.f32 %v2095, 0.0
      %v2149 = vmax.f32 %v2096, 0.0
      %v2150 = vmax.f32 %v2097, 0.0
      %v2151 = vmax.f32 %v2098, 0.0
      %v2152 = vmax.f32 %v2099, 0.0
      %v2153 = vmax.f32 %v2100, 0.0
      %v2154 = vmax.f32 %v2101, 0.0
      %v2155 = vmax.f32 %v2102, 0.0
      %v2156 = vmax.f32 %v2103, 0.0
      %v2157 = vmax.f32 %v2104, 0.0
      %v2158 = vmax.f32 %v2105, 0.0
      %vm2159 = vcmask 261120
      %2160 = vst.msk [vmem:[%s170] sm:$0xff] %vm2159, %v2106
      %2161 = vst.msk [vmem:[%s170 + $0x8] sm:$0xff] %vm2159, %v2107
      %2162 = vst.msk [vmem:[%s170 + $0x10] sm:$0xff] %vm2159, %v2108
      %2163 = vst.msk [vmem:[%s170 + $0x18] sm:$0xff] %vm2159, %v2109
      %2164 = vst.msk [vmem:[%s170 + $0x20] sm:$0xff] %vm2159, %v2110
      %2165 = vst.msk [vmem:[%s170 + $0x28] sm:$0xff] %vm2159, %v2111
      %2166 = vst.msk [vmem:[%s170 + $0x30] sm:$0xff] %vm2159, %v2112
      %2167 = vst.msk [vmem:[%s170 + $0x38] sm:$0xff] %vm2159, %v2113
      %2168 = vst.msk [vmem:[%s170 + $0x40] sm:$0xff] %vm2159, %v2114
      %2169 = vst.msk [vmem:[%s170 + $0x48] sm:$0xff] %vm2159, %v2115
      %2170 = vst.msk [vmem:[%s170 + $0x50] sm:$0xff] %vm2159, %v2116
      %2171 = vst.msk [vmem:[%s170 + $0x58] sm:$0xff] %vm2159, %v2117
      %2172 = vst.msk [vmem:[%s170 + $0x60] sm:$0xff] %vm2159, %v2118
      %2173 = vst.msk [vmem:[%s170 + $0x68] sm:$0xff] %vm2159, %v2119
      %2174 = vst.msk [vmem:[%s170 + $0x70] sm:$0xff] %vm2159, %v2120
      %2175 = vst.msk [vmem:[%s170 + $0x78] sm:$0xff] %vm2159, %v2121
      %2176 = vst.msk [vmem:[%s170 + $0x80] sm:$0xff] %vm2159, %v2122
      %2177 = vst.msk [vmem:[%s170 + $0x88] sm:$0xff] %vm2159, %v2123
      %2178 = vst.msk [vmem:[%s170 + $0x90] sm:$0xff] %vm2159, %v2124
      %2179 = vst.msk [vmem:[%s170 + $0x98] sm:$0xff] %vm2159, %v2125
      %2180 = vst.msk [vmem:[%s170 + $0xa0] sm:$0xff] %vm2159, %v2126
      %2181 = vst.msk [vmem:[%s170 + $0xa8] sm:$0xff] %vm2159, %v2127
      %2182 = vst.msk [vmem:[%s170 + $0xb0] sm:$0xff] %vm2159, %v2128
      %2183 = vst.msk [vmem:[%s170 + $0xb8] sm:$0xff] %vm2159, %v2129
      %2184 = vst.msk [vmem:[%s170 + $0xc0] sm:$0xff] %vm2159, %v2130
      %2185 = vst.msk [vmem:[%s170 + $0xc8] sm:$0xff] %vm2159, %v2131
      %2186 = vst.msk [vmem:[%s170 + $0xd0] sm:$0xff] %vm2159, %v2132
      %2187 = vst.msk [vmem:[%s170 + $0xd8] sm:$0xff] %vm2159, %v2133
      %2188 = vst.msk [vmem:[%s170 + $0xe0] sm:$0xff] %vm2159, %v2134
      %2189 = vst.msk [vmem:[%s170 + $0xe8] sm:$0xff] %vm2159, %v2135
      %2190 = vst.msk [vmem:[%s170 + $0xf0] sm:$0xff] %vm2159, %v2136
      %2191 = vst.msk [vmem:[%s170 + $0xf8] sm:$0xff] %vm2159, %v2137
      %2192 = vst.msk [vmem:[%s170 + $0x100] sm:$0xff] %vm2159, %v2138
      %2193 = vst.msk [vmem:[%s170 + $0x108] sm:$0xff] %vm2159, %v2139
      %2194 = vst.msk [vmem:[%s170 + $0x110] sm:$0xff] %vm2159, %v2140
      %2195 = vst.msk [vmem:[%s170 + $0x118] sm:$0xff] %vm2159, %v2141
      %2196 = vst.msk [vmem:[%s170 + $0x120] sm:$0xff] %vm2159, %v2142
      %2197 = vst.msk [vmem:[%s170 + $0x128] sm:$0xff] %vm2159, %v2143
      %2198 = vst.msk [vmem:[%s170 + $0x130] sm:$0xff] %vm2159, %v2144
      %2199 = vst.msk [vmem:[%s170 + $0x138] sm:$0xff] %vm2159, %v2145
      %2200 = vst.msk [vmem:[%s170 + $0x140] sm:$0xff] %vm2159, %v2146
      %2201 = vst.msk [vmem:[%s170 + $0x148] sm:$0xff] %vm2159, %v2147
      %2202 = vst.msk [vmem:[%s170 + $0x150] sm:$0xff] %vm2159, %v2148
      %2203 = vst.msk [vmem:[%s170 + $0x158] sm:$0xff] %vm2159, %v2149
      %2204 = vst.msk [vmem:[%s170 + $0x160] sm:$0xff] %vm2159, %v2150
      %2205 = vst.msk [vmem:[%s170 + $0x168] sm:$0xff] %vm2159, %v2151
      %2206 = vst.msk [vmem:[%s170 + $0x170] sm:$0xff] %vm2159, %v2152
      %2207 = vst.msk [vmem:[%s170 + $0x178] sm:$0xff] %vm2159, %v2153
      %2208 = vst.msk [vmem:[%s170 + $0x180] sm:$0xff] %vm2159, %v2154
      %2209 = vst.msk [vmem:[%s170 + $0x188] sm:$0xff] %vm2159, %v2155
      %2210 = vst.msk [vmem:[%s170 + $0x190] sm:$0xff] %vm2159, %v2156
      %2211 = vst.msk [vmem:[%s170 + $0x198] sm:$0xff] %vm2159, %v2157
      %vm2212 = vcmask 257024
      %2213 = vst.msk [vmem:[%s170 + $0x1a0] sm:$0xf] %vm2212, %v2158
      %p2214 = scmp.lt.s32.totalorder %s14, 1
      %s2215 = scalar_select %p2214, %s14, 1
      %s2216 = smul.addr %s2215, 53
      %s2217 = smul.addr %s2216, 8
      %s2218 = scalar_lea.vmem %s3, %s2217
      // Predicated region
      $region33: #{atari_backbone.3} parent=31 // pred_check
        %p2219 = pneg %p100
      $region34: #{atari_backbone.3} parent=31 // pred_check_branch
        %2221 = sbr.rel (%p2219) target = $region36
      $region35: #{atari_backbone.3} parent=31 // pred_region
        _
      $region36: #{atari_backbone.3} parent=31 // pred_fallthru
        _
    $region32: #{atari_backbone.3} parent=5 // pred_fallthru
      _
    %p2222 = scmp.le.s32.totalorder 2, %s9
    // Predicated region
    $region37: #{atari_backbone.3} parent=5 // pred_check
      %p2223 = pneg %p2222
    $region38: #{atari_backbone.3} parent=5 // pred_check_branch
      %2225 = sbr.rel (%p2223) target = $region40
    $region39: #{atari_backbone.3} parent=5 // pred_region
      %s2226 = ssub.s32 %s9, 2
      // Predicated region
      $region41: #{atari_backbone.3} parent=39 // pred_check
        %p2227 = pneg %p106
      $region42: #{atari_backbone.3} parent=39 // pred_check_branch
        %2229 = sbr.rel (%p2227) target = $region44
      $region43: #{atari_backbone.3} parent=39 // pred_region
        %p2230 = scmp.lt.s32.totalorder %s15, 1
        %s2231 = scalar_select %p2230, %s15, 1
        %s2232 = smul.addr %s2231, 53
        %s2233 = smul.addr %s2232, 8
        %s2234 = scalar_lea.vmem %s3, %s2233
      $region44: #{atari_backbone.3} parent=39 // pred_fallthru
        _
    $region40: #{atari_backbone.3} parent=5 // pred_fallthru
      _
  $region6: #{atari_backbone.3} parent=0 // loop_footer
    %s13 = sadd.s32 1, %s9
  $region7: #{atari_backbone.3} parent=0 // loop_footer_branch
    %8 = sbr.rel target = $region3
  $region8: #{atari_backbone.3} parent=0 // loop_exit
    _

// kernel: atari_backbone.4
$region0: #{atari_backbone.4}
  #allocation0 [shape = 'u32[]', space=smem, size = 0x4, offset = 0x4, fixed_abs, tag = 'smem constant byte address 0x4 - core index']
  #allocation1 [shape = 'u32[144,128]{1,0:T(1,128)}', space=vmem, size = 0x12000, scoped, tag = 'internal scratch']
  %s0 = inlined_call_operand.vmem [shape: f32[2,103,128], index: 0, kind: input, shape index: {}]
  %s1 = inlined_call_operand.vmem [shape: bf16[4,128,64], index: 1, kind: input, shape index: {}]
  %s2 = inlined_call_operand.vmem [shape: f32[1,64], index: 2, kind: input, shape index: {}]
  %s3 = inlined_call_operand.vmem [shape: bf16[9,64,64], index: 3, kind: input, shape index: {}]
  %s4 = inlined_call_operand.vmem [shape: f32[1,64], index: 4, kind: input, shape index: {}]
  %s5 = inlined_call_operand.vmem [shape: f32[2,70,64], index: 5, kind: output, shape index: {}]
  %s6 = sld [smem:[#allocation0]]
  $region53: #{atari_backbone.4} parent=0
    _
  %s8 = ssub.s32 1, %s6
  %s9 = scalar_select 0, %s8, %s6
  loop: start=0, step=1, limit=4
  $region2: #{atari_backbone.4} parent=0 // loop_pre_header
    _
  $region3: #{atari_backbone.4} parent=0 // loop_header
    %s11 = sphi 0, %s15
    %p12 = scmp.ge.s32.totalorder %s11, 4
    %s21 = sphi 0, %s23
    %s24 = sphi 0, %s21
    %s25 = sphi 0, %s24
    %s41 = sphi 0, %s25
    %s45 = sphi 0, %s45
    %s47 = sphi 0, %s45
    %s48 = sphi 0, %s47
    %s62 = sphi 0, %s48
    %s66 = sphi 0, %s66
    %s68 = sphi 0, %s66
    %s69 = sphi 0, %s68
    %s83 = sphi 0, %s69
    %s87 = sphi 0, %s87
    %s89 = sphi 0, %s87
    %s90 = sphi 0, %s89
    %s104 = sphi 0, %s90
    %s108 = sphi 0, %s108
    %s110 = sphi 0, %s108
    %s111 = sphi 0, %s110
    %s125 = sphi 0, %s111
    %s131 = sphi 0, %s133
    %s134 = sphi 0, %s131
    %s135 = sphi 0, %s134
    %s151 = sphi 0, %s135
  $region4: #{atari_backbone.4} parent=0 // loop_header_branch
    %14 = sbr.rel (%p12) target = $region8
  $region5: #{atari_backbone.4} parent=0 // loop_body
    %s16 = ssub.s32 %s11, 1
    %s17 = ssub.s32 %s11, 2
    %s18 = sadd.s32 %s11, 1
    %s19 = ssub.s32 %s11, %s18
    %p20 = scmp.eq.s32.totalorder %s19, 0
    %s22 = sadd.s32 %s21, 1
    %s23 = scalar_select %p20, %s21, %s22
    %p26 = pneg %p20
    %p27 = scmp.eq.s32.totalorder %s11, 1
    %p28 = por %p26, %p27
    %p29 = scmp.ne.s32.totalorder %s21, %s24
    %p30 = scmp.eq.s32.totalorder %s11, 0
    %p31 = por %p29, %p30
    %p32 = scmp.ne.s32.totalorder %s21, %s24
    %p33 = scmp.eq.s32.totalorder %s16, 1
    %p34 = por %p32, %p33
    %p35 = scmp.ne.s32.totalorder %s24, %s25
    %p36 = scmp.eq.s32.totalorder %s16, 0
    %p37 = por %p35, %p36
    %p38 = scmp.ne.s32.totalorder %s24, %s25
    %p39 = scmp.eq.s32.totalorder %s17, 1
    %p40 = por %p38, %p39
    %p42 = scmp.ne.s32.totalorder %s25, %s41
    %p43 = scmp.eq.s32.totalorder %s17, 0
    %p44 = por %p42, %p43
    %s46 = sadd.s32 %s45, 1
    %p49 = scmp.eq.s32.totalorder %s11, 1
    %p50 = scmp.ne.s32.totalorder %s45, %s47
    %p51 = scmp.eq.s32.totalorder %s11, 0
    %p52 = por %p50, %p51
    %p53 = scmp.ne.s32.totalorder %s45, %s47
    %p54 = scmp.eq.s32.totalorder %s16, 1
    %p55 = por %p53, %p54
    %p56 = scmp.ne.s32.totalorder %s47, %s48
    %p57 = scmp.eq.s32.totalorder %s16, 0
    %p58 = por %p56, %p57
    %p59 = scmp.ne.s32.totalorder %s47, %s48
    %p60 = scmp.eq.s32.totalorder %s17, 1
    %p61 = por %p59, %p60
    %p63 = scmp.ne.s32.totalorder %s48, %s62
    %p64 = scmp.eq.s32.totalorder %s17, 0
    %p65 = por %p63, %p64
    %s67 = sadd.s32 %s66, 1
    %p70 = scmp.eq.s32.totalorder %s11, 1
    %p71 = scmp.ne.s32.totalorder %s66, %s68
    %p72 = scmp.eq.s32.totalorder %s11, 0
    %p73 = por %p71, %p72
    %p74 = scmp.ne.s32.totalorder %s66, %s68
    %p75 = scmp.eq.s32.totalorder %s16, 1
    %p76 = por %p74, %p75
    %p77 = scmp.ne.s32.totalorder %s68, %s69
    %p78 = scmp.eq.s32.totalorder %s16, 0
    %p79 = por %p77, %p78
    %p80 = scmp.ne.s32.totalorder %s68, %s69
    %p81 = scmp.eq.s32.totalorder %s17, 1
    %p82 = por %p80, %p81
    %p84 = scmp.ne.s32.totalorder %s69, %s83
    %p85 = scmp.eq.s32.totalorder %s17, 0
    %p86 = por %p84, %p85
    %s88 = sadd.s32 %s87, 1
    %p91 = scmp.eq.s32.totalorder %s11, 1
    %p92 = scmp.ne.s32.totalorder %s87, %s89
    %p93 = scmp.eq.s32.totalorder %s11, 0
    %p94 = por %p92, %p93
    %p95 = scmp.ne.s32.totalorder %s87, %s89
    %p96 = scmp.eq.s32.totalorder %s16, 1
    %p97 = por %p95, %p96
    %p98 = scmp.ne.s32.totalorder %s89, %s90
    %p99 = scmp.eq.s32.totalorder %s16, 0
    %p100 = por %p98, %p99
    %p101 = scmp.ne.s32.totalorder %s89, %s90
    %p102 = scmp.eq.s32.totalorder %s17, 1
    %p103 = por %p101, %p102
    %p105 = scmp.ne.s32.totalorder %s90, %s104
    %p106 = scmp.eq.s32.totalorder %s17, 0
    %p107 = por %p105, %p106
    %s109 = sadd.s32 %s108, 1
    %p112 = scmp.eq.s32.totalorder %s11, 1
    %p113 = scmp.ne.s32.totalorder %s108, %s110
    %p114 = scmp.eq.s32.totalorder %s11, 0
    %p115 = por %p113, %p114
    %p116 = scmp.ne.s32.totalorder %s108, %s110
    %p117 = scmp.eq.s32.totalorder %s16, 1
    %p118 = por %p116, %p117
    %p119 = scmp.ne.s32.totalorder %s110, %s111
    %p120 = scmp.eq.s32.totalorder %s16, 0
    %p121 = por %p119, %p120
    %p122 = scmp.ne.s32.totalorder %s110, %s111
    %p123 = scmp.eq.s32.totalorder %s17, 1
    %p124 = por %p122, %p123
    %p126 = scmp.ne.s32.totalorder %s111, %s125
    %p127 = scmp.eq.s32.totalorder %s17, 0
    %p128 = por %p126, %p127
    %s129 = ssub.s32 %s11, %s18
    %p130 = scmp.eq.s32.totalorder %s129, 0
    %s132 = sadd.s32 %s131, 1
    %s133 = scalar_select %p130, %s131, %s132
    %p136 = pneg %p130
    %p137 = scmp.eq.s32.totalorder %s11, 1
    %p138 = por %p136, %p137
    %p139 = scmp.ne.s32.totalorder %s131, %s134
    %p140 = scmp.eq.s32.totalorder %s11, 0
    %p141 = por %p139, %p140
    %p142 = scmp.ne.s32.totalorder %s131, %s134
    %p143 = scmp.eq.s32.totalorder %s16, 1
    %p144 = por %p142, %p143
    %p145 = scmp.ne.s32.totalorder %s134, %s135
    %p146 = scmp.eq.s32.totalorder %s16, 0
    %p147 = por %p145, %p146
    %p148 = scmp.ne.s32.totalorder %s134, %s135
    %p149 = scmp.eq.s32.totalorder %s17, 1
    %p150 = por %p148, %p149
    %p152 = scmp.ne.s32.totalorder %s135, %s151
    %p153 = scmp.eq.s32.totalorder %s17, 0
    %p154 = por %p152, %p153
    %p155 = scmp.le.s32.totalorder 1, %s11
    %p156 = scmp.lt.s32.totalorder %s11, 3
    %p157 = pnand %p155, %p156
    %p158 = pneg %p157
    // Predicated region
    $region9: #{atari_backbone.4} parent=5 // pred_check
      _
    $region10: #{atari_backbone.4} parent=5 // pred_check_branch
      %160 = sbr.rel (%p157) target = $region12
    $region11: #{atari_backbone.4} parent=5 // pred_region
      %s161 = ssub.s32 %s11, 1
      // Predicated region
      $region13: #{atari_backbone.4} parent=11 // pred_check
        %p162 = pneg %p58
      $region14: #{atari_backbone.4} parent=11 // pred_check_branch
        %164 = sbr.rel (%p162) target = $region16
      $region15: #{atari_backbone.4} parent=11 // pred_region
        _
      $region16: #{atari_backbone.4} parent=11 // pred_fallthru
        _
      // Predicated region
      $region17: #{atari_backbone.4} parent=11 // pred_check
        %p165 = pneg %p79
      $region18: #{atari_backbone.4} parent=11 // pred_check_branch
        %167 = sbr.rel (%p165) target = $region20
      $region19: #{atari_backbone.4} parent=11 // pred_region
        _
      $region20: #{atari_backbone.4} parent=11 // pred_fallthru
        _
      // Predicated region
      $region21: #{atari_backbone.4} parent=11 // pred_check
        %p168 = pneg %p100
      $region22: #{atari_backbone.4} parent=11 // pred_check_branch
        %170 = sbr.rel (%p168) target = $region24
      $region23: #{atari_backbone.4} parent=11 // pred_region
        _
      $region24: #{atari_backbone.4} parent=11 // pred_fallthru
        _
      // Predicated region
      $region25: #{atari_backbone.4} parent=11 // pred_check
        %p171 = pneg %p121
      $region26: #{atari_backbone.4} parent=11 // pred_check_branch
        %173 = sbr.rel (%p171) target = $region28
      $region27: #{atari_backbone.4} parent=11 // pred_region
        _
      $region28: #{atari_backbone.4} parent=11 // pred_fallthru
        _
    $region12: #{atari_backbone.4} parent=5 // pred_fallthru
      _
    %p174 = scmp.lt.s32.totalorder %s11, 2
    // Predicated region
    $region29: #{atari_backbone.4} parent=5 // pred_check
      %p175 = pneg %p174
    $region30: #{atari_backbone.4} parent=5 // pred_check_branch
      %177 = sbr.rel (%p175) target = $region32
    $region31: #{atari_backbone.4} parent=5 // pred_region
      // Predicated region
      $region33: #{atari_backbone.4} parent=31 // pred_check
        %p178 = pneg %p31
      $region34: #{atari_backbone.4} parent=31 // pred_check_branch
        %180 = sbr.rel (%p178) target = $region36
      $region35: #{atari_backbone.4} parent=31 // pred_region
        %p181 = scmp.lt.s32.totalorder %s11, 1
        %s182 = scalar_select %p181, %s11, 1
        %s183 = smul.addr %s182, 13
        %s184 = smul.addr %s183, 8
        %s185 = scalar_lea.vmem %s0, %s184
      $region36: #{atari_backbone.4} parent=31 // pred_fallthru
        _
    $region32: #{atari_backbone.4} parent=5 // pred_fallthru
      _
    %p186 = scmp.le.s32.totalorder 1, %s11
    %p187 = scmp.lt.s32.totalorder %s11, 3
    %p188 = pnand %p186, %p187
    %p189 = pneg %p188
    // Predicated region
    $region37: #{atari_backbone.4} parent=5 // pred_check
      _
    $region38: #{atari_backbone.4} parent=5 // pred_check_branch
      %191 = sbr.rel (%p188) target = $region40
    $region39: #{atari_backbone.4} parent=5 // pred_region
      %s192 = ssub.s32 %s11, 1
      %p193 = scmp.lt.s32.totalorder %s16, 1
      %s194 = scalar_select %p193, %s16, 1
      %s195 = smul.addr %s194, 13
      %s196 = smul.addr %s195, 8
      %s197 = scalar_lea.vmem %s0, %s196
      %p198 = pneg %p37
      %p199 = pneg %p34
      %p200 = pneg %p58
      %p201 = pneg %p55
      %p202 = pneg %p79
      %p203 = pneg %p76
      %p204 = pneg %p100
      %p205 = pneg %p97
      %p206 = pneg %p121
      %p207 = pneg %p118
      %p208 = pneg %p147
      %p209 = pneg %p144
      %p210 = scmp.lt.s32.totalorder %s16, 1
      %s211 = scalar_select %p210, %s16, 1
      %s212 = smul.addr %s211, 9
      %s213 = smul.addr %s212, 8
      %s214 = scalar_lea.vmem %s5, %s213
      %p215 = scmp.lt.s32.totalorder %s16, 1
      %s216 = scalar_select %p215, %s16, 1
      %s217 = smul.addr %s216, 13
      %s218 = smul.addr %s217, 8
      %s219 = scalar_lea.vmem %s0, %s218
      %p220 = scmp.lt.s32.totalorder %s16, 1
      %s221 = scalar_select %p220, %s16, 1
      %s222 = smul.addr %s221, 9
      %s223 = smul.addr %s222, 8
      %s224 = scalar_lea.vmem %s5, %s223
      %v226 = vld [vmem:[%s219] sm:$0xff]
      %v227 = vld [vmem:[%s219 + $0x8] sm:$0xff]
      %v228 = vld [vmem:[%s219 + $0x10] sm:$0xff]
      %v229 = vld [vmem:[%s219 + $0x18] sm:$0xff]
      %v230 = vld [vmem:[%s219 + $0x20] sm:$0xff]
      %v231 = vld [vmem:[%s219 + $0x28] sm:$0xff]
      %v232 = vld [vmem:[%s219 + $0x30] sm:$0xff]
      %v233 = vld [vmem:[%s219 + $0x38] sm:$0xff]
      %v234 = vld [vmem:[%s219 + $0x40] sm:$0xff]
      %v235 = vld [vmem:[%s219 + $0x48] sm:$0xff]
      %v236 = vld [vmem:[%s219 + $0x50] sm:$0xff]
      %v237 = vld [vmem:[%s219 + $0x58] sm:$0xf]
      %v238 = vpack.c.bf16 %v227, %v226
      %v239 = vpack.c.bf16 %v229, %v228
      %v240 = vpack.c.bf16 %v231, %v230
      %v241 = vpack.c.bf16 %v233, %v232
      %v242 = vpack.c.bf16 %v235, %v234
      %v243 = vpack.c.bf16 %v237, %v236
      %v244 = vld [vmem:[%s1] sm:$0xf]
      %v245 = vld [vmem:[%s1 + $0x4] sm:$0xf]
      %v246 = vld [vmem:[%s1 + $0x8] sm:$0xf]
      %v247 = vld [vmem:[%s1 + $0xc] sm:$0xf]
      %v248 = vld [vmem:[%s1 + $0x10] sm:$0xf]
      %v249 = vld [vmem:[%s1 + $0x14] sm:$0xf]
      %v250 = vld [vmem:[%s1 + $0x18] sm:$0xf]
      %v251 = vld [vmem:[%s1 + $0x1c] sm:$0xf]
      %v252 = vld [vmem:[%s1 + $0x20] sm:$0xf]
      %v253 = vld [vmem:[%s1 + $0x24] sm:$0xf]
      %v254 = vld [vmem:[%s1 + $0x28] sm:$0xf]
      %v255 = vld [vmem:[%s1 + $0x2c] sm:$0xf]
      %v256 = vld [vmem:[%s1 + $0x30] sm:$0xf]
      %v257 = vld [vmem:[%s1 + $0x34] sm:$0xf]
      %v258 = vld [vmem:[%s1 + $0x38] sm:$0xf]
      %v259 = vld [vmem:[%s1 + $0x3c] sm:$0xf]
      %v260 = vld [vmem:[%s219 + $0x1] sm:$0xff]
      %v261 = vld [vmem:[%s219 + $0x9] sm:$0xff]
      %v262 = vld [vmem:[%s219 + $0x11] sm:$0xff]
      %v263 = vld [vmem:[%s219 + $0x19] sm:$0xff]
      %v264 = vld [vmem:[%s219 + $0x21] sm:$0xff]
      %v265 = vld [vmem:[%s219 + $0x29] sm:$0xff]
      %v266 = vld [vmem:[%s219 + $0x31] sm:$0xff]
      %v267 = vld [vmem:[%s219 + $0x39] sm:$0xff]
      %v268 = vld [vmem:[%s219 + $0x41] sm:$0xff]
      %v269 = vld [vmem:[%s219 + $0x49] sm:$0xff]
      %v270 = vld [vmem:[%s219 + $0x51] sm:$0xff]
      %v271 = vld [vmem:[%s219 + $0x59] sm:$0xf]
      %v272 = vpack.c.bf16 %v261, %v260
      %v273 = vpack.c.bf16 %v263, %v262
      %v274 = vpack.c.bf16 %v265, %v264
      %v275 = vpack.c.bf16 %v267, %v266
      %v276 = vpack.c.bf16 %v269, %v268
      %v277 = vpack.c.bf16 %v271, %v270
      %s278 = scalar_lea.vmem %s1, 64
      %v279 = vld [vmem:[%s278] sm:$0xf]
      %v280 = vld [vmem:[%s278 + $0x4] sm:$0xf]
      %v281 = vld [vmem:[%s278 + $0x8] sm:$0xf]
      %v282 = vld [vmem:[%s278 + $0xc] sm:$0xf]
      %v283 = vld [vmem:[%s278 + $0x10] sm:$0xf]
      %v284 = vld [vmem:[%s278 + $0x14] sm:$0xf]
      %v285 = vld [vmem:[%s278 + $0x18] sm:$0xf]
      %v286 = vld [vmem:[%s278 + $0x1c] sm:$0xf]
      %v287 = vld [vmem:[%s278 + $0x20] sm:$0xf]
      %v288 = vld [vmem:[%s278 + $0x24] sm:$0xf]
      %v289 = vld [vmem:[%s278 + $0x28] sm:$0xf]
      %v290 = vld [vmem:[%s278 + $0x2c] sm:$0xf]
      %v291 = vld [vmem:[%s278 + $0x30] sm:$0xf]
      %v292 = vld [vmem:[%s278 + $0x34] sm:$0xf]
      %v293 = vld [vmem:[%s278 + $0x38] sm:$0xf]
      %v294 = vld [vmem:[%s278 + $0x3c] sm:$0xf]
      %v311 = vunpack.c.l.b16 %v279
      %v312 = vunpack.c.l.b16 %v280
      %v313 = vunpack.c.l.b16 %v281
      %v314 = vunpack.c.l.b16 %v282
      %v315 = vunpack.c.l.b16 %v283
      %v316 = vunpack.c.l.b16 %v284
      %v317 = vunpack.c.l.b16 %v285
      %v318 = vunpack.c.l.b16 %v286
      %v319 = vunpack.c.l.b16 %v287
      %v320 = vunpack.c.l.b16 %v288
      %v321 = vunpack.c.l.b16 %v289
      %v322 = vunpack.c.l.b16 %v290
      %v323 = vunpack.c.l.b16 %v291
      %v324 = vunpack.c.l.b16 %v292
      %v325 = vunpack.c.l.b16 %v293
      %v326 = vunpack.c.l.b16 %v294
      %v327 = vpack.c.b16 %v312, %v311
      %v328 = vpack.c.b16 %v314, %v313
      %v329 = vpack.c.b16 %v316, %v315
      %v330 = vpack.c.b16 %v318, %v317
      %v331 = vpack.c.b16 %v320, %v319
      %v332 = vpack.c.b16 %v322, %v321
      %v333 = vpack.c.b16 %v324, %v323
      %v334 = vpack.c.b16 %v326, %v325
      %343 = vmatprep.subr.bf16.mxu0 0
      %344 = vmatpush1.bf16.msra.mxu0 %v327
      %345 = vmatprep.subr.bf16.mxu0 0
      %346 = vmatpush1.bf16.msra.mxu0 %v328
      %347 = vmatprep.subr.bf16.mxu0 0
      %348 = vmatpush1.bf16.msra.mxu0 %v329
      %349 = vmatprep.subr.bf16.mxu0 0
      %350 = vmatpush1.bf16.msra.mxu0 %v330
      %351 = vmatprep.subr.bf16.mxu0 0
      %352 = vmatpush1.bf16.msra.mxu0 %v331
      %353 = vmatprep.subr.bf16.mxu0 0
      %354 = vmatpush1.bf16.msra.mxu0 %v332
      %355 = vmatprep.subr.bf16.mxu0 0
      %356 = vmatpush1.bf16.msra.mxu0 %v333
      %357 = vmatprep.subr.bf16.mxu0 0
      %358 = vmatpush1.bf16.msra.mxu0 %v334
      %359 = vmatprep.subr.bf16.mxu0 0
      %360 = vmatpush1.bf16.msra.mxu0 0
      %361 = vmatprep.subr.bf16.mxu0 0
      %362 = vmatpush1.bf16.msra.mxu0 0
      %363 = vmatprep.subr.bf16.mxu0 0
      %364 = vmatpush1.bf16.msra.mxu0 0
      %365 = vmatprep.subr.bf16.mxu0 0
      %366 = vmatpush1.bf16.msra.mxu0 0
      %367 = vmatprep.subr.bf16.mxu0 0
      %368 = vmatpush1.bf16.msra.mxu0 0
      %369 = vmatprep.subr.bf16.mxu0 0
      %370 = vmatpush1.bf16.msra.mxu0 0
      %371 = vmatprep.subr.bf16.mxu0 0
      %372 = vmatpush1.bf16.msra.mxu0 0
      %373 = vmatprep.subr.bf16.mxu0 0
      %374 = vmatpush1.bf16.msra.mxu0 0
      %375 = vmatprep.mubr.bf16.mxu0 0
      %376 = vmatmul.mubr.bf16.gmra.mrb[0].mxu0 %v272
      %v377 = vpop.f32.mrb[0].mxu0
      %v378 = vadd.f32 0.0, %v377
      %v379 = vpop.f32.mrb[0].mxu0
      %v380 = vpop.f32.mrb[0].mxu0
      %v381 = vadd.f32 0.0, %v380
      %v382 = vpop.f32.mrb[0].mxu0
      %383 = vmatprep.mubr.bf16.mxu0 0
      %384 = vmatmul.mubr.bf16.gmra.mrb[0].mxu0 %v273
      %v385 = vpop.f32.mrb[0].mxu0
      %v386 = vadd.f32 0.0, %v385
      %v387 = vpop.f32.mrb[0].mxu0
      %v388 = vpop.f32.mrb[0].mxu0
      %v389 = vadd.f32 0.0, %v388
      %v390 = vpop.f32.mrb[0].mxu0
      %391 = vmatprep.mubr.bf16.mxu0 0
      %392 = vmatmul.mubr.bf16.gmra.mrb[0].mxu0 %v274
      %v393 = vpop.f32.mrb[0].mxu0
      %v394 = vadd.f32 0.0, %v393
      %v395 = vpop.f32.mrb[0].mxu0
      %v396 = vpop.f32.mrb[0].mxu0
      %v397 = vadd.f32 0.0, %v396
      %v398 = vpop.f32.mrb[0].mxu0
      %399 = vmatprep.mubr.bf16.mxu0 0
      %400 = vmatmul.mubr.bf16.gmra.mrb[0].mxu0 %v275
      %v401 = vpop.f32.mrb[0].mxu0
      %v402 = vadd.f32 0.0, %v401
      %v403 = vpop.f32.mrb[0].mxu0
      %v404 = vpop.f32.mrb[0].mxu0
      %v405 = vadd.f32 0.0, %v404
      %v406 = vpop.f32.mrb[0].mxu0
      %407 = vmatprep.mubr.bf16.mxu0 0
      %408 = vmatmul.mubr.bf16.gmra.mrb[0].mxu0 %v276
      %v409 = vpop.f32.mrb[0].mxu0
      %v410 = vadd.f32 0.0, %v409
      %v411 = vpop.f32.mrb[0].mxu0
      %v412 = vpop.f32.mrb[0].mxu0
      %v413 = vadd.f32 0.0, %v412
      %v414 = vpop.f32.mrb[0].mxu0
      %415 = vmatprep.mubr.bf16.mxu0 0
      %416 = vmatmul.mubr.bf16.gmra.mrb[0].mxu0 %v277
      %v417 = vpop.f32.mrb[0].mxu0
      %v418 = vadd.f32 0.0, %v417
      %v419 = vpop.f32.mrb[0].mxu0
      %v420 = vpop.f32.mrb[0].mxu0
      %v421 = vadd.f32 0.0, %v420
      %v422 = vpop.f32.mrb[0].mxu0
      %423 = vdwg.mxu0
      %v440 = vunpack.c.l.b16 %v244
      %v441 = vunpack.c.l.b16 %v245
      %v442 = vunpack.c.l.b16 %v246
      %v443 = vunpack.c.l.b16 %v247
      %v444 = vunpack.c.l.b16 %v248
      %v445 = vunpack.c.l.b16 %v249
      %v446 = vunpack.c.l.b16 %v250
      %v447 = vunpack.c.l.b16 %v251
      %v448 = vunpack.c.l.b16 %v252
      %v449 = vunpack.c.l.b16 %v253
      %v450 = vunpack.c.l.b16 %v254
      %v451 = vunpack.c.l.b16 %v255
      %v452 = vunpack.c.l.b16 %v256
      %v453 = vunpack.c.l.b16 %v257
      %v454 = vunpack.c.l.b16 %v258
      %v455 = vunpack.c.l.b16 %v259
      %v456 = vpack.c.b16 %v441, %v440
      %v457 = vpack.c.b16 %v443, %v442
      %v458 = vpack.c.b16 %v445, %v444
      %v459 = vpack.c.b16 %v447, %v446
      %v460 = vpack.c.b16 %v449, %v448
      %v461 = vpack.c.b16 %v451, %v450
      %v462 = vpack.c.b16 %v453, %v452
      %v463 = vpack.c.b16 %v455, %v454
      %472 = vmatprep.subr.bf16.mxu0 0
      %473 = vmatpush1.bf16.msra.mxu0 %v456
      %474 = vmatprep.subr.bf16.mxu0 0
      %475 = vmatpush1.bf16.msra.mxu0 %v457
      %476 = vmatprep.subr.bf16.mxu0 0
      %477 = vmatpush1.bf16.msra.mxu0 %v458
      %478 = vmatprep.subr.bf16.mxu0 0
      %479 = vmatpush1.bf16.msra.mxu0 %v459
      %480 = vmatprep.subr.bf16.mxu0 0
      %481 = vmatpush1.bf16.msra.mxu0 %v460
      %482 = vmatprep.subr.bf16.mxu0 0
      %483 = vmatpush1.bf16.msra.mxu0 %v461
      %484 = vmatprep.subr.bf16.mxu0 0
      %485 = vmatpush1.bf16.msra.mxu0 %v462
      %486 = vmatprep.subr.bf16.mxu0 0
      %487 = vmatpush1.bf16.msra.mxu0 %v463
      %488 = vmatprep.subr.bf16.mxu0 0
      %489 = vmatpush1.bf16.msra.mxu0 0
      %490 = vmatprep.subr.bf16.mxu0 0
      %491 = vmatpush1.bf16.msra.mxu0 0
      %492 = vmatprep.subr.bf16.mxu0 0
      %493 = vmatpush1.bf16.msra.mxu0 0
      %494 = vmatprep.subr.bf16.mxu0 0
      %495 = vmatpush1.bf16.msra.mxu0 0
      %496 = vmatprep.subr.bf16.mxu0 0
      %497 = vmatpush1.bf16.msra.mxu0 0
      %498 = vmatprep.subr.bf16.mxu0 0
      %499 = vmatpush1.bf16.msra.mxu0 0
      %500 = vmatprep.subr.bf16.mxu0 0
      %501 = vmatpush1.bf16.msra.mxu0 0
      %502 = vmatprep.subr.bf16.mxu0 0
      %503 = vmatpush1.bf16.msra.mxu0 0
      %504 = vmatprep.mubr.bf16.mxu0 0
      %505 = vmatmul.mubr.bf16.gmra.mrb[0].mxu0 %v238
      %v506 = vpop.f32.mrb[0].mxu0
      %v507 = vadd.f32 %v378, %v506
      %v508 = vpop.f32.mrb[0].mxu0
      %v509 = vpop.f32.mrb[0].mxu0
      %v510 = vadd.f32 %v381, %v509
      %v511 = vpop.f32.mrb[0].mxu0
      %512 = vmatprep.mubr.bf16.mxu0 0
      %513 = vmatmul.mubr.bf16.gmra.mrb[0].mxu0 %v239
      %v514 = vpop.f32.mrb[0].mxu0
      %v515 = vadd.f32 %v386, %v514
      %v516 = vpop.f32.mrb[0].mxu0
      %v517 = vpop.f32.mrb[0].mxu0
      %v518 = vadd.f32 %v389, %v517
      %v519 = vpop.f32.mrb[0].mxu0
      %520 = vmatprep.mubr.bf16.mxu0 0
      %521 = vmatmul.mubr.bf16.gmra.mrb[0].mxu0 %v240
      %v522 = vpop.f32.mrb[0].mxu0
      %v523 = vadd.f32 %v394, %v522
      %v524 = vpop.f32.mrb[0].mxu0
      %v525 = vpop.f32.mrb[0].mxu0
      %v526 = vadd.f32 %v397, %v525
      %v527 = vpop.f32.mrb[0].mxu0
      %528 = vmatprep.mubr.bf16.mxu0 0
      %529 = vmatmul.mubr.bf16.gmra.mrb[0].mxu0 %v241
      %v530 = vpop.f32.mrb[0].mxu0
      %v531 = vadd.f32 %v402, %v530
      %v532 = vpop.f32.mrb[0].mxu0
      %v533 = vpop.f32.mrb[0].mxu0
      %v534 = vadd.f32 %v405, %v533
      %v535 = vpop.f32.mrb[0].mxu0
      %536 = vmatprep.mubr.bf16.mxu0 0
      %537 = vmatmul.mubr.bf16.gmra.mrb[0].mxu0 %v242
      %v538 = vpop.f32.mrb[0].mxu0
      %v539 = vadd.f32 %v410, %v538
      %v540 = vpop.f32.mrb[0].mxu0
      %v541 = vpop.f32.mrb[0].mxu0
      %v542 = vadd.f32 %v413, %v541
      %v543 = vpop.f32.mrb[0].mxu0
      %544 = vmatprep.mubr.bf16.mxu0 0
      %545 = vmatmul.mubr.bf16.gmra.mrb[0].mxu0 %v243
      %v546 = vpop.f32.mrb[0].mxu0
      %v547 = vadd.f32 %v418, %v546
      %v548 = vpop.f32.mrb[0].mxu0
      %v549 = vpop.f32.mrb[0].mxu0
      %v550 = vadd.f32 %v421, %v549
      %v551 = vpop.f32.mrb[0].mxu0
      %552 = vdwg.mxu0
      %v553 = vld [vmem:[%s219 + $0xa] sm:$0xff]
      %v554 = vld [vmem:[%s219 + $0x12] sm:$0xff]
      %v555 = vld [vmem:[%s219 + $0x1a] sm:$0xff]
      %v556 = vld [vmem:[%s219 + $0x22] sm:$0xff]
      %v557 = vld [vmem:[%s219 + $0x2a] sm:$0xff]
      %v558 = vld [vmem:[%s219 + $0x32] sm:$0xff]
      %v559 = vld [vmem:[%s219 + $0x3a] sm:$0xff]
      %v560 = vld [vmem:[%s219 + $0x42] sm:$0xff]
      %v561 = vld [vmem:[%s219 + $0x4a] sm:$0xff]
      %v562 = vld [vmem:[%s219 + $0x52] sm:$0xff]
      %v563 = vld [vmem:[%s219 + $0x5a] sm:$0xff]
      %v564 = vld [vmem:[%s219 + $0x62] sm:$0xf]
      %v565 = vpack.c.bf16 %v554, %v553
      %v566 = vpack.c.bf16 %v556, %v555
      %v567 = vpack.c.bf16 %v558, %v557
      %v568 = vpack.c.bf16 %v560, %v559
      %v569 = vpack.c.bf16 %v562, %v561
      %v570 = vpack.c.bf16 %v564, %v563
      %s571 = scalar_lea.vmem %s1, 128
      %v572 = vld [vmem:[%s571] sm:$0xf]
      %v573 = vld [vmem:[%s571 + $0x4] sm:$0xf]
      %v574 = vld [vmem:[%s571 + $0x8] sm:$0xf]
      %v575 = vld [vmem:[%s571 + $0xc] sm:$0xf]
      %v576 = vld [vmem:[%s571 + $0x10] sm:$0xf]
      %v577 = vld [vmem:[%s571 + $0x14] sm:$0xf]
      %v578 = vld [vmem:[%s571 + $0x18] sm:$0xf]
      %v579 = vld [vmem:[%s571 + $0x1c] sm:$0xf]
      %v580 = vld [vmem:[%s571 + $0x20] sm:$0xf]
      %v581 = vld [vmem:[%s571 + $0x24] sm:$0xf]
      %v582 = vld [vmem:[%s571 + $0x28] sm:$0xf]
      %v583 = vld [vmem:[%s571 + $0x2c] sm:$0xf]
      %v584 = vld [vmem:[%s571 + $0x30] sm:$0xf]
      %v585 = vld [vmem:[%s571 + $0x34] sm:$0xf]
      %v586 = vld [vmem:[%s571 + $0x38] sm:$0xf]
      %v587 = vld [vmem:[%s571 + $0x3c] sm:$0xf]
      %v604 = vunpack.c.l.b16 %v572
      %v605 = vunpack.c.l.b16 %v573
      %v606 = vunpack.c.l.b16 %v574
      %v607 = vunpack.c.l.b16 %v575
      %v608 = vunpack.c.l.b16 %v576
      %v609 = vunpack.c.l.b16 %v577
      %v610 = vunpack.c.l.b16 %v578
      %v611 = vunpack.c.l.b16 %v579
      %v612 = vunpack.c.l.b16 %v580
      %v613 = vunpack.c.l.b16 %v581
      %v614 = vunpack.c.l.b16 %v582
      %v615 = vunpack.c.l.b16 %v583
      %v616 = vunpack.c.l.b16 %v584
      %v617 = vunpack.c.l.b16 %v585
      %v618 = vunpack.c.l.b16 %v586
      %v619 = vunpack.c.l.b16 %v587
      %v620 = vpack.c.b16 %v605, %v604
      %v621 = vpack.c.b16 %v607, %v606
      %v622 = vpack.c.b16 %v609, %v608
      %v623 = vpack.c.b16 %v611, %v610
      %v624 = vpack.c.b16 %v613, %v612
      %v625 = vpack.c.b16 %v615, %v614
      %v626 = vpack.c.b16 %v617, %v616
      %v627 = vpack.c.b16 %v619, %v618
      %636 = vmatprep.subr.bf16.mxu0 0
      %637 = vmatpush1.bf16.msra.mxu0 %v620
      %638 = vmatprep.subr.bf16.mxu0 0
      %639 = vmatpush1.bf16.msra.mxu0 %v621
      %640 = vmatprep.subr.bf16.mxu0 0
      %641 = vmatpush1.bf16.msra.mxu0 %v622
      %642 = vmatprep.subr.bf16.mxu0 0
      %643 = vmatpush1.bf16.msra.mxu0 %v623
      %644 = vmatprep.subr.bf16.mxu0 0
      %645 = vmatpush1.bf16.msra.mxu0 %v624
      %646 = vmatprep.subr.bf16.mxu0 0
      %647 = vmatpush1.bf16.msra.mxu0 %v625
      %648 = vmatprep.subr.bf16.mxu0 0
      %649 = vmatpush1.bf16.msra.mxu0 %v626
      %650 = vmatprep.subr.bf16.mxu0 0
      %651 = vmatpush1.bf16.msra.mxu0 %v627
      %652 = vmatprep.subr.bf16.mxu0 0
      %653 = vmatpush1.bf16.msra.mxu0 0
      %654 = vmatprep.subr.bf16.mxu0 0
      %655 = vmatpush1.bf16.msra.mxu0 0
      %656 = vmatprep.subr.bf16.mxu0 0
      %657 = vmatpush1.bf16.msra.mxu0 0
      %658 = vmatprep.subr.bf16.mxu0 0
      %659 = vmatpush1.bf16.msra.mxu0 0
      %660 = vmatprep.subr.bf16.mxu0 0
      %661 = vmatpush1.bf16.msra.mxu0 0
      %662 = vmatprep.subr.bf16.mxu0 0
      %663 = vmatpush1.bf16.msra.mxu0 0
      %664 = vmatprep.subr.bf16.mxu0 0
      %665 = vmatpush1.bf16.msra.mxu0 0
      %666 = vmatprep.subr.bf16.mxu0 0
      %667 = vmatpush1.bf16.msra.mxu0 0
      %668 = vmatprep.mubr.bf16.mxu0 0
      %669 = vmatmul.mubr.bf16.gmra.mrb[0].mxu0 %v565
      %v670 = vpop.f32.mrb[0].mxu0
      %v671 = vadd.f32 0.0, %v670
      %v672 = vpop.f32.mrb[0].mxu0
      %v673 = vpop.f32.mrb[0].mxu0
      %v674 = vadd.f32 0.0, %v673
      %v675 = vpop.f32.mrb[0].mxu0
      %676 = vmatprep.mubr.bf16.mxu0 0
      %677 = vmatmul.mubr.bf16.gmra.mrb[0].mxu0 %v566
      %v678 = vpop.f32.mrb[0].mxu0
      %v679 = vadd.f32 0.0, %v678
      %v680 = vpop.f32.mrb[0].mxu0
      %v681 = vpop.f32.mrb[0].mxu0
      %v682 = vadd.f32 0.0, %v681
      %v683 = vpop.f32.mrb[0].mxu0
      %684 = vmatprep.mubr.bf16.mxu0 0
      %685 = vmatmul.mubr.bf16.gmra.mrb[0].mxu0 %v567
      %v686 = vpop.f32.mrb[0].mxu0
      %v687 = vadd.f32 0.0, %v686
      %v688 = vpop.f32.mrb[0].mxu0
      %v689 = vpop.f32.mrb[0].mxu0
      %v690 = vadd.f32 0.0, %v689
      %v691 = vpop.f32.mrb[0].mxu0
      %692 = vmatprep.mubr.bf16.mxu0 0
      %693 = vmatmul.mubr.bf16.gmra.mrb[0].mxu0 %v568
      %v694 = vpop.f32.mrb[0].mxu0
      %v695 = vadd.f32 0.0, %v694
      %v696 = vpop.f32.mrb[0].mxu0
      %v697 = vpop.f32.mrb[0].mxu0
      %v698 = vadd.f32 0.0, %v697
      %v699 = vpop.f32.mrb[0].mxu0
      %700 = vmatprep.mubr.bf16.mxu0 0
      %701 = vmatmul.mubr.bf16.gmra.mrb[0].mxu0 %v569
      %v702 = vpop.f32.mrb[0].mxu0
      %v703 = vadd.f32 0.0, %v702
      %v704 = vpop.f32.mrb[0].mxu0
      %v705 = vpop.f32.mrb[0].mxu0
      %v706 = vadd.f32 0.0, %v705
      %v707 = vpop.f32.mrb[0].mxu0
      %708 = vmatprep.mubr.bf16.mxu0 0
      %709 = vmatmul.mubr.bf16.gmra.mrb[0].mxu0 %v570
      %v710 = vpop.f32.mrb[0].mxu0
      %v711 = vadd.f32 0.0, %v710
      %v712 = vpop.f32.mrb[0].mxu0
      %v713 = vpop.f32.mrb[0].mxu0
      %v714 = vadd.f32 0.0, %v713
      %v715 = vpop.f32.mrb[0].mxu0
      %716 = vdwg.mxu0
      %v717 = vadd.f32 %v507, %v671
      %v718 = vadd.f32 %v510, %v674
      %v719 = vadd.f32 %v515, %v679
      %v720 = vadd.f32 %v518, %v682
      %v721 = vadd.f32 %v523, %v687
      %v722 = vadd.f32 %v526, %v690
      %v723 = vadd.f32 %v531, %v695
      %v724 = vadd.f32 %v534, %v698
      %v725 = vadd.f32 %v539, %v703
      %v726 = vadd.f32 %v542, %v706
      %v727 = vadd.f32 %v547, %v711
      %v728 = vadd.f32 %v550, %v714
      %v729 = vld [vmem:[%s219 + $0xb] sm:$0xff]
      %v730 = vld [vmem:[%s219 + $0x13] sm:$0xff]
      %v731 = vld [vmem:[%s219 + $0x1b] sm:$0xff]
      %v732 = vld [vmem:[%s219 + $0x23] sm:$0xff]
      %v733 = vld [vmem:[%s219 + $0x2b] sm:$0xff]
      %v734 = vld [vmem:[%s219 + $0x33] sm:$0xff]
      %v735 = vld [vmem:[%s219 + $0x3b] sm:$0xff]
      %v736 = vld [vmem:[%s219 + $0x43] sm:$0xff]
      %v737 = vld [vmem:[%s219 + $0x4b] sm:$0xff]
      %v738 = vld [vmem:[%s219 + $0x53] sm:$0xff]
      %v739 = vld [vmem:[%s219 + $0x5b] sm:$0xff]
      %v740 = vld [vmem:[%s219 + $0x63] sm:$0xf]
      %v741 = vpack.c.bf16 %v730, %v729
      %v742 = vpack.c.bf16 %v732, %v731
      %v743 = vpack.c.bf16 %v734, %v733
      %v744 = vpack.c.bf16 %v736, %v735
      %v745 = vpack.c.bf16 %v738, %v737
      %v746 = vpack.c.bf16 %v740, %v739
      %s747 = scalar_lea.vmem %s1, 192
      %v748 = vld [vmem:[%s747] sm:$0xf]
      %v749 = vld [vmem:[%s747 + $0x4] sm:$0xf]
      %v750 = vld [vmem:[%s747 + $0x8] sm:$0xf]
      %v751 = vld [vmem:[%s747 + $0xc] sm:$0xf]
      %v752 = vld [vmem:[%s747 + $0x10] sm:$0xf]
      %v753 = vld [vmem:[%s747 + $0x14] sm:$0xf]
      %v754 = vld [vmem:[%s747 + $0x18] sm:$0xf]
      %v755 = vld [vmem:[%s747 + $0x1c] sm:$0xf]
      %v756 = vld [vmem:[%s747 + $0x20] sm:$0xf]
      %v757 = vld [vmem:[%s747 + $0x24] sm:$0xf]
      %v758 = vld [vmem:[%s747 + $0x28] sm:$0xf]
      %v759 = vld [vmem:[%s747 + $0x2c] sm:$0xf]
      %v760 = vld [vmem:[%s747 + $0x30] sm:$0xf]
      %v761 = vld [vmem:[%s747 + $0x34] sm:$0xf]
      %v762 = vld [vmem:[%s747 + $0x38] sm:$0xf]
      %v763 = vld [vmem:[%s747 + $0x3c] sm:$0xf]
      %v780 = vunpack.c.l.b16 %v748
      %v781 = vunpack.c.l.b16 %v749
      %v782 = vunpack.c.l.b16 %v750
      %v783 = vunpack.c.l.b16 %v751
      %v784 = vunpack.c.l.b16 %v752
      %v785 = vunpack.c.l.b16 %v753
      %v786 = vunpack.c.l.b16 %v754
      %v787 = vunpack.c.l.b16 %v755
      %v788 = vunpack.c.l.b16 %v756
      %v789 = vunpack.c.l.b16 %v757
      %v790 = vunpack.c.l.b16 %v758
      %v791 = vunpack.c.l.b16 %v759
      %v792 = vunpack.c.l.b16 %v760
      %v793 = vunpack.c.l.b16 %v761
      %v794 = vunpack.c.l.b16 %v762
      %v795 = vunpack.c.l.b16 %v763
      %v796 = vpack.c.b16 %v781, %v780
      %v797 = vpack.c.b16 %v783, %v782
      %v798 = vpack.c.b16 %v785, %v784
      %v799 = vpack.c.b16 %v787, %v786
      %v800 = vpack.c.b16 %v789, %v788
      %v801 = vpack.c.b16 %v791, %v790
      %v802 = vpack.c.b16 %v793, %v792
      %v803 = vpack.c.b16 %v795, %v794
      %812 = vmatprep.subr.bf16.mxu0 0
      %813 = vmatpush1.bf16.msra.mxu0 %v796
      %814 = vmatprep.subr.bf16.mxu0 0
      %815 = vmatpush1.bf16.msra.mxu0 %v797
      %816 = vmatprep.subr.bf16.mxu0 0
      %817 = vmatpush1.bf16.msra.mxu0 %v798
      %818 = vmatprep.subr.bf16.mxu0 0
      %819 = vmatpush1.bf16.msra.mxu0 %v799
      %820 = vmatprep.subr.bf16.mxu0 0
      %821 = vmatpush1.bf16.msra.mxu0 %v800
      %822 = vmatprep.subr.bf16.mxu0 0
      %823 = vmatpush1.bf16.msra.mxu0 %v801
      %824 = vmatprep.subr.bf16.mxu0 0
      %825 = vmatpush1.bf16.msra.mxu0 %v802
      %826 = vmatprep.subr.bf16.mxu0 0
      %827 = vmatpush1.bf16.msra.mxu0 %v803
      %828 = vmatprep.subr.bf16.mxu0 0
      %829 = vmatpush1.bf16.msra.mxu0 0
      %830 = vmatprep.subr.bf16.mxu0 0
      %831 = vmatpush1.bf16.msra.mxu0 0
      %832 = vmatprep.subr.bf16.mxu0 0
      %833 = vmatpush1.bf16.msra.mxu0 0
      %834 = vmatprep.subr.bf16.mxu0 0
      %835 = vmatpush1.bf16.msra.mxu0 0
      %836 = vmatprep.subr.bf16.mxu0 0
      %837 = vmatpush1.bf16.msra.mxu0 0
      %838 = vmatprep.subr.bf16.mxu0 0
      %839 = vmatpush1.bf16.msra.mxu0 0
      %840 = vmatprep.subr.bf16.mxu0 0
      %841 = vmatpush1.bf16.msra.mxu0 0
      %842 = vmatprep.subr.bf16.mxu0 0
      %843 = vmatpush1.bf16.msra.mxu0 0
      %844 = vmatprep.mubr.bf16.mxu0 0
      %845 = vmatmul.mubr.bf16.gmra.mrb[0].mxu0 %v741
      %v846 = vpop.f32.mrb[0].mxu0
      %v847 = vadd.f32 0.0, %v846
      %v848 = vpop.f32.mrb[0].mxu0
      %v849 = vpop.f32.mrb[0].mxu0
      %v850 = vadd.f32 0.0, %v849
      %v851 = vpop.f32.mrb[0].mxu0
      %852 = vmatprep.mubr.bf16.mxu0 0
      %853 = vmatmul.mubr.bf16.gmra.mrb[0].mxu0 %v742
      %v854 = vpop.f32.mrb[0].mxu0
      %v855 = vadd.f32 0.0, %v854
      %v856 = vpop.f32.mrb[0].mxu0
      %v857 = vpop.f32.mrb[0].mxu0
      %v858 = vadd.f32 0.0, %v857
      %v859 = vpop.f32.mrb[0].mxu0
      %860 = vmatprep.mubr.bf16.mxu0 0
      %861 = vmatmul.mubr.bf16.gmra.mrb[0].mxu0 %v743
      %v862 = vpop.f32.mrb[0].mxu0
      %v863 = vadd.f32 0.0, %v862
      %v864 = vpop.f32.mrb[0].mxu0
      %v865 = vpop.f32.mrb[0].mxu0
      %v866 = vadd.f32 0.0, %v865
      %v867 = vpop.f32.mrb[0].mxu0
      %868 = vmatprep.mubr.bf16.mxu0 0
      %869 = vmatmul.mubr.bf16.gmra.mrb[0].mxu0 %v744
      %v870 = vpop.f32.mrb[0].mxu0
      %v871 = vadd.f32 0.0, %v870
      %v872 = vpop.f32.mrb[0].mxu0
      %v873 = vpop.f32.mrb[0].mxu0
      %v874 = vadd.f32 0.0, %v873
      %v875 = vpop.f32.mrb[0].mxu0
      %876 = vmatprep.mubr.bf16.mxu0 0
      %877 = vmatmul.mubr.bf16.gmra.mrb[0].mxu0 %v745
      %v878 = vpop.f32.mrb[0].mxu0
      %v879 = vadd.f32 0.0, %v878
      %v880 = vpop.f32.mrb[0].mxu0
      %v881 = vpop.f32.mrb[0].mxu0
      %v882 = vadd.f32 0.0, %v881
      %v883 = vpop.f32.mrb[0].mxu0
      %884 = vmatprep.mubr.bf16.mxu0 0
      %885 = vmatmul.mubr.bf16.gmra.mrb[0].mxu0 %v746
      %v886 = vpop.f32.mrb[0].mxu0
      %v887 = vadd.f32 0.0, %v886
      %v888 = vpop.f32.mrb[0].mxu0
      %v889 = vpop.f32.mrb[0].mxu0
      %v890 = vadd.f32 0.0, %v889
      %v891 = vpop.f32.mrb[0].mxu0
      %892 = vdwg.mxu0
      %v893 = vadd.f32 %v717, %v847
      %v894 = vadd.f32 %v718, %v850
      %v895 = vadd.f32 %v719, %v855
      %v896 = vadd.f32 %v720, %v858
      %v897 = vadd.f32 %v721, %v863
      %v898 = vadd.f32 %v722, %v866
      %v899 = vadd.f32 %v723, %v871
      %v900 = vadd.f32 %v724, %v874
      %v901 = vadd.f32 %v725, %v879
      %v902 = vadd.f32 %v726, %v882
      %v903 = vadd.f32 %v727, %v887
      %v904 = vadd.f32 %v728, %v890
      %v905 = vld [vmem:[%s2] sm:$0x1]
      %v907 = vlaneseq
      %v908 = vshrl.u32 %v907, 7
      %v909 = vsub.s32 0, %v908
      %v910 = vrot.slane %v905, %v909
      %v912 = vadd.f32 %v893, %v910
      %v913 = vadd.f32 %v894, %v910
      %v914 = vadd.f32 %v895, %v910
      %v915 = vadd.f32 %v896, %v910
      %v916 = vadd.f32 %v897, %v910
      %v917 = vadd.f32 %v898, %v910
      %v918 = vadd.f32 %v899, %v910
      %v919 = vadd.f32 %v900, %v910
      %v920 = vadd.f32 %v901, %v910
      %v921 = vadd.f32 %v902, %v910
      %v922 = vadd.f32 %v903, %v910
      %v923 = vadd.f32 %v904, %v910
      %v924 = vmax.f32 %v912, 0.0
      %v925 = vmax.f32 %v913, 0.0
      %v926 = vmax.f32 %v914, 0.0
      %v927 = vmax.f32 %v915, 0.0
      %v928 = vmax.f32 %v916, 0.0
      %v929 = vmax.f32 %v917, 0.0
      %v930 = vmax.f32 %v918, 0.0
      %v931 = vmax.f32 %v919, 0.0
      %v932 = vmax.f32 %v920, 0.0
      %v933 = vmax.f32 %v921, 0.0
      %v934 = vmax.f32 %v922, 0.0
      %v935 = vmax.f32 %v923, 0.0
      %v936 = vpack.c.bf16 %v925, %v924
      %v937 = vpack.c.bf16 %v927, %v926
      %v938 = vpack.c.bf16 %v929, %v928
      %v939 = vpack.c.bf16 %v931, %v930
      %v940 = vpack.c.bf16 %v933, %v932
      %v941 = vpack.c.bf16 %v935, %v934
      %v942 = vld [vmem:[%s3] sm:$0xf]
      %v943 = vld [vmem:[%s3 + $0x4] sm:$0xf]
      %v944 = vld [vmem:[%s3 + $0x8] sm:$0xf]
      %v945 = vld [vmem:[%s3 + $0xc] sm:$0xf]
      %v946 = vld [vmem:[%s3 + $0x10] sm:$0xf]
      %v947 = vld [vmem:[%s3 + $0x14] sm:$0xf]
      %v948 = vld [vmem:[%s3 + $0x18] sm:$0xf]
      %v949 = vld [vmem:[%s3 + $0x1c] sm:$0xf]
      %s950 = scalar_lea.vmem %s3, 32
      %v951 = vld [vmem:[%s950] sm:$0xf]
      %v952 = vld [vmem:[%s950 + $0x4] sm:$0xf]
      %v953 = vld [vmem:[%s950 + $0x8] sm:$0xf]
      %v954 = vld [vmem:[%s950 + $0xc] sm:$0xf]
      %v955 = vld [vmem:[%s950 + $0x10] sm:$0xf]
      %v956 = vld [vmem:[%s950 + $0x14] sm:$0xf]
      %v957 = vld [vmem:[%s950 + $0x18] sm:$0xf]
      %v958 = vld [vmem:[%s950 + $0x1c] sm:$0xf]
      %vm959 = vsmask.f32 7424
      %v961 = vshrl.u32 %v936, 16
      %v963 = vshll.u32 %v936, 16
      %v965 = vrot.slane %v963, 1
      %v966 = vor.u32 %v961, %v965
      %v968 = vshll.u32 %v937, 16
      %v970 = vrot.slane %v968, 1
      %v971 = vsel %vm959, %v966, %v970
      %v972 = vshrl.u32 %v937, 16
      %v974 = vor.u32 %v972, %v970
      %v976 = vshll.u32 %v938, 16
      %v978 = vrot.slane %v976, 1
      %v979 = vsel %vm959, %v974, %v978
      %v980 = vshrl.u32 %v938, 16
      %v982 = vor.u32 %v980, %v978
      %v984 = vshll.u32 %v939, 16
      %v986 = vrot.slane %v984, 1
      %v987 = vsel %vm959, %v982, %v986
      %v988 = vshrl.u32 %v939, 16
      %v990 = vor.u32 %v988, %v986
      %v992 = vshll.u32 %v940, 16
      %v994 = vrot.slane %v992, 1
      %v995 = vsel %vm959, %v990, %v994
      %v996 = vshrl.u32 %v940, 16
      %v998 = vor.u32 %v996, %v994
      %v1007 = vunpack.c.l.b16 %v951
      %v1008 = vunpack.c.l.b16 %v952
      %v1009 = vunpack.c.l.b16 %v953
      %v1010 = vunpack.c.l.b16 %v954
      %v1011 = vunpack.c.l.b16 %v955
      %v1012 = vunpack.c.l.b16 %v956
      %v1013 = vunpack.c.l.b16 %v957
      %v1014 = vunpack.c.l.b16 %v958
      %v1015 = vpack.c.b16 %v1008, %v1007
      %v1016 = vpack.c.b16 %v1010, %v1009
      %v1017 = vpack.c.b16 %v1012, %v1011
      %v1018 = vpack.c.b16 %v1014, %v1013
      %vm1023 = vcmask 523264
      %v1025 = vsel %vm1023, %v971, 0
      %v1028 = vsel %vm1023, %v979, 0
      %v1031 = vsel %vm1023, %v987, 0
      %v1034 = vsel %vm1023, %v995, 0
      %v1037 = vsel %vm1023, %v998, 0
      %1039 = vmatprep.subr.bf16.mxu0 0
      %1040 = vmatpush1.bf16.msra.mxu0 %v1015
      %1041 = vmatprep.subr.bf16.mxu0 0
      %1042 = vmatpush1.bf16.msra.mxu0 %v1016
      %1043 = vmatprep.subr.bf16.mxu0 0
      %1044 = vmatpush1.bf16.msra.mxu0 %v1017
      %1045 = vmatprep.subr.bf16.mxu0 0
      %1046 = vmatpush1.bf16.msra.mxu0 %v1018
      %1047 = vmatprep.subr.bf16.mxu0 0
      %1048 = vmatpush1.bf16.msra.mxu0 0
      %1049 = vmatprep.subr.bf16.mxu0 0
      %1050 = vmatpush1.bf16.msra.mxu0 0
      %1051 = vmatprep.subr.bf16.mxu0 0
      %1052 = vmatpush1.bf16.msra.mxu0 0
      %1053 = vmatprep.subr.bf16.mxu0 0
      %1054 = vmatpush1.bf16.msra.mxu0 0
      %1055 = vmatprep.subr.bf16.mxu0 0
      %1056 = vmatpush1.bf16.msra.mxu0 0
      %1057 = vmatprep.subr.bf16.mxu0 0
      %1058 = vmatpush1.bf16.msra.mxu0 0
      %1059 = vmatprep.subr.bf16.mxu0 0
      %1060 = vmatpush1.bf16.msra.mxu0 0
      %1061 = vmatprep.subr.bf16.mxu0 0
      %1062 = vmatpush1.bf16.msra.mxu0 0
      %1063 = vmatprep.subr.bf16.mxu0 0
      %1064 = vmatpush1.bf16.msra.mxu0 0
      %1065 = vmatprep.subr.bf16.mxu0 0
      %1066 = vmatpush1.bf16.msra.mxu0 0
      %1067 = vmatprep.subr.bf16.mxu0 0
      %1068 = vmatpush1.bf16.msra.mxu0 0
      %1069 = vmatprep.subr.bf16.mxu0 0
      %1070 = vmatpush1.bf16.msra.mxu0 0
      %1071 = vmatprep.mubr.bf16.mxu0 0
      %1072 = vmatmul.mubr.bf16.gmra.mrb[0].mxu0 %v1025
      %v1073 = vpop.f32.mrb[0].mxu0
      %v1074 = vadd.f32 0.0, %v1073
      %v1075 = vpop.f32.mrb[0].mxu0
      %v1076 = vpop.f32.mrb[0].mxu0
      %v1077 = vadd.f32 0.0, %v1076
      %v1078 = vpop.f32.mrb[0].mxu0
      %1079 = vmatprep.mubr.bf16.mxu0 0
      %1080 = vmatmul.mubr.bf16.gmra.mrb[0].mxu0 %v1028
      %v1081 = vpop.f32.mrb[0].mxu0
      %v1082 = vadd.f32 0.0, %v1081
      %v1083 = vpop.f32.mrb[0].mxu0
      %v1084 = vpop.f32.mrb[0].mxu0
      %v1085 = vadd.f32 0.0, %v1084
      %v1086 = vpop.f32.mrb[0].mxu0
      %1087 = vmatprep.mubr.bf16.mxu0 0
      %1088 = vmatmul.mubr.bf16.gmra.mrb[0].mxu0 %v1031
      %v1089 = vpop.f32.mrb[0].mxu0
      %v1090 = vadd.f32 0.0, %v1089
      %v1091 = vpop.f32.mrb[0].mxu0
      %v1092 = vpop.f32.mrb[0].mxu0
      %v1093 = vadd.f32 0.0, %v1092
      %v1094 = vpop.f32.mrb[0].mxu0
      %1095 = vmatprep.mubr.bf16.mxu0 0
      %1096 = vmatmul.mubr.bf16.gmra.mrb[0].mxu0 %v1034
      %v1097 = vpop.f32.mrb[0].mxu0
      %v1098 = vadd.f32 0.0, %v1097
      %v1099 = vpop.f32.mrb[0].mxu0
      %v1100 = vpop.f32.mrb[0].mxu0
      %v1101 = vadd.f32 0.0, %v1100
      %v1102 = vpop.f32.mrb[0].mxu0
      %1103 = vmatprep.mubr.bf16.mxu0 0
      %1104 = vmatmul.mubr.bf16.gmra.mrb[0].mxu0 %v1037
      %v1105 = vpop.f32.mrb[0].mxu0
      %v1106 = vadd.f32 0.0, %v1105
      %v1107 = vpop.f32.mrb[0].mxu0
      %v1108 = vpop.f32.mrb[0].mxu0
      %v1109 = vpop.f32.mrb[0].mxu0
      %1110 = vdwg.mxu0
      %v1119 = vunpack.c.l.b16 %v942
      %v1120 = vunpack.c.l.b16 %v943
      %v1121 = vunpack.c.l.b16 %v944
      %v1122 = vunpack.c.l.b16 %v945
      %v1123 = vunpack.c.l.b16 %v946
      %v1124 = vunpack.c.l.b16 %v947
      %v1125 = vunpack.c.l.b16 %v948
      %v1126 = vunpack.c.l.b16 %v949
      %v1127 = vpack.c.b16 %v1120, %v1119
      %v1128 = vpack.c.b16 %v1122, %v1121
      %v1129 = vpack.c.b16 %v1124, %v1123
      %v1130 = vpack.c.b16 %v1126, %v1125
      %v1135 = vsel %vm1023, %v936, 0
      %v1137 = vsel %vm1023, %v937, 0
      %v1139 = vsel %vm1023, %v938, 0
      %v1141 = vsel %vm1023, %v939, 0
      %v1143 = vsel %vm1023, %v940, 0
      %1145 = vmatprep.subr.bf16.mxu0 0
      %1146 = vmatpush1.bf16.msra.mxu0 %v1127
      %1147 = vmatprep.subr.bf16.mxu0 0
      %1148 = vmatpush1.bf16.msra.mxu0 %v1128
      %1149 = vmatprep.subr.bf16.mxu0 0
      %1150 = vmatpush1.bf16.msra.mxu0 %v1129
      %1151 = vmatprep.subr.bf16.mxu0 0
      %1152 = vmatpush1.bf16.msra.mxu0 %v1130
      %1153 = vmatprep.subr.bf16.mxu0 0
      %1154 = vmatpush1.bf16.msra.mxu0 0
      %1155 = vmatprep.subr.bf16.mxu0 0
      %1156 = vmatpush1.bf16.msra.mxu0 0
      %1157 = vmatprep.subr.bf16.mxu0 0
      %1158 = vmatpush1.bf16.msra.mxu0 0
      %1159 = vmatprep.subr.bf16.mxu0 0
      %1160 = vmatpush1.bf16.msra.mxu0 0
      %1161 = vmatprep.subr.bf16.mxu0 0
      %1162 = vmatpush1.bf16.msra.mxu0 0
      %1163 = vmatprep.subr.bf16.mxu0 0
      %1164 = vmatpush1.bf16.msra.mxu0 0
      %1165 = vmatprep.subr.bf16.mxu0 0
      %1166 = vmatpush1.bf16.msra.mxu0 0
      %1167 = vmatprep.subr.bf16.mxu0 0
      %1168 = vmatpush1.bf16.msra.mxu0 0
      %1169 = vmatprep.subr.bf16.mxu0 0
      %1170 = vmatpush1.bf16.msra.mxu0 0
      %1171 = vmatprep.subr.bf16.mxu0 0
      %1172 = vmatpush1.bf16.msra.mxu0 0
      %1173 = vmatprep.subr.bf16.mxu0 0
      %1174 = vmatpush1.bf16.msra.mxu0 0
      %1175 = vmatprep.subr.bf16.mxu0 0
      %1176 = vmatpush1.bf16.msra.mxu0 0
      %1177 = vmatprep.mubr.bf16.mxu0 0
      %1178 = vmatmul.mubr.bf16.gmra.mrb[0].mxu0 %v1135
      %v1179 = vpop.f32.mrb[0].mxu0
      %v1180 = vadd.f32 %v1074, %v1179
      %v1181 = vpop.f32.mrb[0].mxu0
      %v1182 = vpop.f32.mrb[0].mxu0
      %v1183 = vadd.f32 %v1077, %v1182
      %v1184 = vpop.f32.mrb[0].mxu0
      %1185 = vmatprep.mubr.bf16.mxu0 0
      %1186 = vmatmul.mubr.bf16.gmra.mrb[0].mxu0 %v1137
      %v1187 = vpop.f32.mrb[0].mxu0
      %v1188 = vadd.f32 %v1082, %v1187
      %v1189 = vpop.f32.mrb[0].mxu0
      %v1190 = vpop.f32.mrb[0].mxu0
      %v1191 = vadd.f32 %v1085, %v1190
      %v1192 = vpop.f32.mrb[0].mxu0
      %1193 = vmatprep.mubr.bf16.mxu0 0
      %1194 = vmatmul.mubr.bf16.gmra.mrb[0].mxu0 %v1139
      %v1195 = vpop.f32.mrb[0].mxu0
      %v1196 = vadd.f32 %v1090, %v1195
      %v1197 = vpop.f32.mrb[0].mxu0
      %v1198 = vpop.f32.mrb[0].mxu0
      %v1199 = vadd.f32 %v1093, %v1198
      %v1200 = vpop.f32.mrb[0].mxu0
      %1201 = vmatprep.mubr.bf16.mxu0 0
      %1202 = vmatmul.mubr.bf16.gmra.mrb[0].mxu0 %v1141
      %v1203 = vpop.f32.mrb[0].mxu0
      %v1204 = vadd.f32 %v1098, %v1203
      %v1205 = vpop.f32.mrb[0].mxu0
      %v1206 = vpop.f32.mrb[0].mxu0
      %v1207 = vadd.f32 %v1101, %v1206
      %v1208 = vpop.f32.mrb[0].mxu0
      %1209 = vmatprep.mubr.bf16.mxu0 0
      %1210 = vmatmul.mubr.bf16.gmra.mrb[0].mxu0 %v1143
      %v1211 = vpop.f32.mrb[0].mxu0
      %v1212 = vadd.f32 %v1106, %v1211
      %v1213 = vpop.f32.mrb[0].mxu0
      %v1214 = vpop.f32.mrb[0].mxu0
      %v1215 = vpop.f32.mrb[0].mxu0
      %1216 = vdwg.mxu0
      %s1217 = scalar_lea.vmem %s3, 64
      %v1218 = vld [vmem:[%s1217] sm:$0xf]
      %v1219 = vld [vmem:[%s1217 + $0x4] sm:$0xf]
      %v1220 = vld [vmem:[%s1217 + $0x8] sm:$0xf]
      %v1221 = vld [vmem:[%s1217 + $0xc] sm:$0xf]
      %v1222 = vld [vmem:[%s1217 + $0x10] sm:$0xf]
      %v1223 = vld [vmem:[%s1217 + $0x14] sm:$0xf]
      %v1224 = vld [vmem:[%s1217 + $0x18] sm:$0xf]
      %v1225 = vld [vmem:[%s1217 + $0x1c] sm:$0xf]
      %vm1231 = vcmask 1046528
      %v1232 = vrot.slane %v936, 1
      %v1233 = vrot.slane %v937, 1
      %v1234 = vsel %vm1231, %v1232, %v1233
      %v1235 = vrot.slane %v938, 1
      %v1236 = vsel %vm1231, %v1233, %v1235
      %v1237 = vrot.slane %v939, 1
      %v1238 = vsel %vm1231, %v1235, %v1237
      %v1239 = vrot.slane %v940, 1
      %v1240 = vsel %vm1231, %v1237, %v1239
      %v1249 = vunpack.c.l.b16 %v1218
      %v1250 = vunpack.c.l.b16 %v1219
      %v1251 = vunpack.c.l.b16 %v1220
      %v1252 = vunpack.c.l.b16 %v1221
      %v1253 = vunpack.c.l.b16 %v1222
      %v1254 = vunpack.c.l.b16 %v1223
      %v1255 = vunpack.c.l.b16 %v1224
      %v1256 = vunpack.c.l.b16 %v1225
      %v1257 = vpack.c.b16 %v1250, %v1249
      %v1258 = vpack.c.b16 %v1252, %v1251
      %v1259 = vpack.c.b16 %v1254, %v1253
      %v1260 = vpack.c.b16 %v1256, %v1255
      %v1266 = vsel %vm1023, %v1234, 0
      %v1269 = vsel %vm1023, %v1236, 0
      %v1272 = vsel %vm1023, %v1238, 0
      %v1275 = vsel %vm1023, %v1240, 0
      %v1278 = vsel %vm1023, %v1239, 0
      %1280 = vmatprep.subr.bf16.mxu0 0
      %1281 = vmatpush1.bf16.msra.mxu0 %v1257
      %1282 = vmatprep.subr.bf16.mxu0 0
      %1283 = vmatpush1.bf16.msra.mxu0 %v1258
      %1284 = vmatprep.subr.bf16.mxu0 0
      %1285 = vmatpush1.bf16.msra.mxu0 %v1259
      %1286 = vmatprep.subr.bf16.mxu0 0
      %1287 = vmatpush1.bf16.msra.mxu0 %v1260
      %1288 = vmatprep.subr.bf16.mxu0 0
      %1289 = vmatpush1.bf16.msra.mxu0 0
      %1290 = vmatprep.subr.bf16.mxu0 0
      %1291 = vmatpush1.bf16.msra.mxu0 0
      %1292 = vmatprep.subr.bf16.mxu0 0
      %1293 = vmatpush1.bf16.msra.mxu0 0
      %1294 = vmatprep.subr.bf16.mxu0 0
      %1295 = vmatpush1.bf16.msra.mxu0 0
      %1296 = vmatprep.subr.bf16.mxu0 0
      %1297 = vmatpush1.bf16.msra.mxu0 0
      %1298 = vmatprep.subr.bf16.mxu0 0
      %1299 = vmatpush1.bf16.msra.mxu0 0
      %1300 = vmatprep.subr.bf16.mxu0 0
      %1301 = vmatpush1.bf16.msra.mxu0 0
      %1302 = vmatprep.subr.bf16.mxu0 0
      %1303 = vmatpush1.bf16.msra.mxu0 0
      %1304 = vmatprep.subr.bf16.mxu0 0
      %1305 = vmatpush1.bf16.msra.mxu0 0
      %1306 = vmatprep.subr.bf16.mxu0 0
      %1307 = vmatpush1.bf16.msra.mxu0 0
      %1308 = vmatprep.subr.bf16.mxu0 0
      %1309 = vmatpush1.bf16.msra.mxu0 0
      %1310 = vmatprep.subr.bf16.mxu0 0
      %1311 = vmatpush1.bf16.msra.mxu0 0
      %1312 = vmatprep.mubr.bf16.mxu0 0
      %1313 = vmatmul.mubr.bf16.gmra.mrb[0].mxu0 %v1266
      %v1314 = vpop.f32.mrb[0].mxu0
      %v1315 = vadd.f32 0.0, %v1314
      %v1316 = vpop.f32.mrb[0].mxu0
      %v1317 = vpop.f32.mrb[0].mxu0
      %v1318 = vadd.f32 0.0, %v1317
      %v1319 = vpop.f32.mrb[0].mxu0
      %1320 = vmatprep.mubr.bf16.mxu0 0
      %1321 = vmatmul.mubr.bf16.gmra.mrb[0].mxu0 %v1269
      %v1322 = vpop.f32.mrb[0].mxu0
      %v1323 = vadd.f32 0.0, %v1322
      %v1324 = vpop.f32.mrb[0].mxu0
      %v1325 = vpop.f32.mrb[0].mxu0
      %v1326 = vadd.f32 0.0, %v1325
      %v1327 = vpop.f32.mrb[0].mxu0
      %1328 = vmatprep.mubr.bf16.mxu0 0
      %1329 = vmatmul.mubr.bf16.gmra.mrb[0].mxu0 %v1272
      %v1330 = vpop.f32.mrb[0].mxu0
      %v1331 = vadd.f32 0.0, %v1330
      %v1332 = vpop.f32.mrb[0].mxu0
      %v1333 = vpop.f32.mrb[0].mxu0
      %v1334 = vadd.f32 0.0, %v1333
      %v1335 = vpop.f32.mrb[0].mxu0
      %1336 = vmatprep.mubr.bf16.mxu0 0
      %1337 = vmatmul.mubr.bf16.gmra.mrb[0].mxu0 %v1275
      %v1338 = vpop.f32.mrb[0].mxu0
      %v1339 = vadd.f32 0.0, %v1338
      %v1340 = vpop.f32.mrb[0].mxu0
      %v1341 = vpop.f32.mrb[0].mxu0
      %v1342 = vadd.f32 0.0, %v1341
      %v1343 = vpop.f32.mrb[0].mxu0
      %1344 = vmatprep.mubr.bf16.mxu0 0
      %1345 = vmatmul.mubr.bf16.gmra.mrb[0].mxu0 %v1278
      %v1346 = vpop.f32.mrb[0].mxu0
      %v1347 = vadd.f32 0.0, %v1346
      %v1348 = vpop.f32.mrb[0].mxu0
      %v1349 = vpop.f32.mrb[0].mxu0
      %v1350 = vpop.f32.mrb[0].mxu0
      %1351 = vdwg.mxu0
      %v1352 = vadd.f32 %v1180, %v1315
      %v1353 = vadd.f32 %v1183, %v1318
      %v1354 = vadd.f32 %v1188, %v1323
      %v1355 = vadd.f32 %v1191, %v1326
      %v1356 = vadd.f32 %v1196, %v1331
      %v1357 = vadd.f32 %v1199, %v1334
      %v1358 = vadd.f32 %v1204, %v1339
      %v1359 = vadd.f32 %v1207, %v1342
      %v1360 = vadd.f32 %v1212, %v1347
      %s1361 = scalar_lea.vmem %s3, 96
      %v1362 = vld [vmem:[%s1361] sm:$0xf]
      %v1363 = vld [vmem:[%s1361 + $0x4] sm:$0xf]
      %v1364 = vld [vmem:[%s1361 + $0x8] sm:$0xf]
      %v1365 = vld [vmem:[%s1361 + $0xc] sm:$0xf]
      %v1366 = vld [vmem:[%s1361 + $0x10] sm:$0xf]
      %v1367 = vld [vmem:[%s1361 + $0x14] sm:$0xf]
      %v1368 = vld [vmem:[%s1361 + $0x18] sm:$0xf]
      %v1369 = vld [vmem:[%s1361 + $0x1c] sm:$0xf]
      %vm1370 = vcmask 1042432
      %v1371 = vrot.slane %v936, 5
      %v1372 = vrot.slane %v937, 5
      %v1373 = vsel %vm1370, %v1371, %v1372
      %v1374 = vrot.slane %v938, 5
      %v1375 = vsel %vm1370, %v1372, %v1374
      %v1376 = vrot.slane %v939, 5
      %v1377 = vsel %vm1370, %v1374, %v1376
      %v1378 = vrot.slane %v940, 5
      %v1379 = vsel %vm1370, %v1376, %v1378
      %v1388 = vunpack.c.l.b16 %v1362
      %v1389 = vunpack.c.l.b16 %v1363
      %v1390 = vunpack.c.l.b16 %v1364
      %v1391 = vunpack.c.l.b16 %v1365
      %v1392 = vunpack.c.l.b16 %v1366
      %v1393 = vunpack.c.l.b16 %v1367
      %v1394 = vunpack.c.l.b16 %v1368
      %v1395 = vunpack.c.l.b16 %v1369
      %v1396 = vpack.c.b16 %v1389, %v1388
      %v1397 = vpack.c.b16 %v1391, %v1390
      %v1398 = vpack.c.b16 %v1393, %v1392
      %v1399 = vpack.c.b16 %v1395, %v1394
      %v1405 = vsel %vm1023, %v1373, 0
      %v1408 = vsel %vm1023, %v1375, 0
      %v1411 = vsel %vm1023, %v1377, 0
      %v1414 = vsel %vm1023, %v1379, 0
      %v1417 = vsel %vm1023, %v1378, 0
      %1419 = vmatprep.subr.bf16.mxu0 0
      %1420 = vmatpush1.bf16.msra.mxu0 %v1396
      %1421 = vmatprep.subr.bf16.mxu0 0
      %1422 = vmatpush1.bf16.msra.mxu0 %v1397
      %1423 = vmatprep.subr.bf16.mxu0 0
      %1424 = vmatpush1.bf16.msra.mxu0 %v1398
      %1425 = vmatprep.subr.bf16.mxu0 0
      %1426 = vmatpush1.bf16.msra.mxu0 %v1399
      %1427 = vmatprep.subr.bf16.mxu0 0
      %1428 = vmatpush1.bf16.msra.mxu0 0
      %1429 = vmatprep.subr.bf16.mxu0 0
      %1430 = vmatpush1.bf16.msra.mxu0 0
      %1431 = vmatprep.subr.bf16.mxu0 0
      %1432 = vmatpush1.bf16.msra.mxu0 0
      %1433 = vmatprep.subr.bf16.mxu0 0
      %1434 = vmatpush1.bf16.msra.mxu0 0
      %1435 = vmatprep.subr.bf16.mxu0 0
      %1436 = vmatpush1.bf16.msra.mxu0 0
      %1437 = vmatprep.subr.bf16.mxu0 0
      %1438 = vmatpush1.bf16.msra.mxu0 0
      %1439 = vmatprep.subr.bf16.mxu0 0
      %1440 = vmatpush1.bf16.msra.mxu0 0
      %1441 = vmatprep.subr.bf16.mxu0 0
      %1442 = vmatpush1.bf16.msra.mxu0 0
      %1443 = vmatprep.subr.bf16.mxu0 0
      %1444 = vmatpush1.bf16.msra.mxu0 0
      %1445 = vmatprep.subr.bf16.mxu0 0
      %1446 = vmatpush1.bf16.msra.mxu0 0
      %1447 = vmatprep.subr.bf16.mxu0 0
      %1448 = vmatpush1.bf16.msra.mxu0 0
      %1449 = vmatprep.subr.bf16.mxu0 0
      %1450 = vmatpush1.bf16.msra.mxu0 0
      %1451 = vmatprep.mubr.bf16.mxu0 0
      %1452 = vmatmul.mubr.bf16.gmra.mrb[0].mxu0 %v1405
      %v1453 = vpop.f32.mrb[0].mxu0
      %v1454 = vadd.f32 0.0, %v1453
      %v1455 = vpop.f32.mrb[0].mxu0
      %v1456 = vpop.f32.mrb[0].mxu0
      %v1457 = vadd.f32 0.0, %v1456
      %v1458 = vpop.f32.mrb[0].mxu0
      %1459 = vmatprep.mubr.bf16.mxu0 0
      %1460 = vmatmul.mubr.bf16.gmra.mrb[0].mxu0 %v1408
      %v1461 = vpop.f32.mrb[0].mxu0
      %v1462 = vadd.f32 0.0, %v1461
      %v1463 = vpop.f32.mrb[0].mxu0
      %v1464 = vpop.f32.mrb[0].mxu0
      %v1465 = vadd.f32 0.0, %v1464
      %v1466 = vpop.f32.mrb[0].mxu0
      %1467 = vmatprep.mubr.bf16.mxu0 0
      %1468 = vmatmul.mubr.bf16.gmra.mrb[0].mxu0 %v1411
      %v1469 = vpop.f32.mrb[0].mxu0
      %v1470 = vadd.f32 0.0, %v1469
      %v1471 = vpop.f32.mrb[0].mxu0
      %v1472 = vpop.f32.mrb[0].mxu0
      %v1473 = vadd.f32 0.0, %v1472
      %v1474 = vpop.f32.mrb[0].mxu0
      %1475 = vmatprep.mubr.bf16.mxu0 0
      %1476 = vmatmul.mubr.bf16.gmra.mrb[0].mxu0 %v1414
      %v1477 = vpop.f32.mrb[0].mxu0
      %v1478 = vadd.f32 0.0, %v1477
      %v1479 = vpop.f32.mrb[0].mxu0
      %v1480 = vpop.f32.mrb[0].mxu0
      %v1481 = vadd.f32 0.0, %v1480
      %v1482 = vpop.f32.mrb[0].mxu0
      %1483 = vmatprep.mubr.bf16.mxu0 0
      %1484 = vmatmul.mubr.bf16.gmra.mrb[0].mxu0 %v1417
      %v1485 = vpop.f32.mrb[0].mxu0
      %v1486 = vadd.f32 0.0, %v1485
      %v1487 = vpop.f32.mrb[0].mxu0
      %v1488 = vpop.f32.mrb[0].mxu0
      %v1489 = vpop.f32.mrb[0].mxu0
      %1490 = vdwg.mxu0
      %v1491 = vadd.f32 %v1352, %v1454
      %v1492 = vadd.f32 %v1353, %v1457
      %v1493 = vadd.f32 %v1354, %v1462
      %v1494 = vadd.f32 %v1355, %v1465
      %v1495 = vadd.f32 %v1356, %v1470
      %v1496 = vadd.f32 %v1357, %v1473
      %v1497 = vadd.f32 %v1358, %v1478
      %v1498 = vadd.f32 %v1359, %v1481
      %v1499 = vadd.f32 %v1360, %v1486
      %s1500 = scalar_lea.vmem %s3, 128
      %v1501 = vld [vmem:[%s1500] sm:$0xf]
      %v1502 = vld [vmem:[%s1500 + $0x4] sm:$0xf]
      %v1503 = vld [vmem:[%s1500 + $0x8] sm:$0xf]
      %v1504 = vld [vmem:[%s1500 + $0xc] sm:$0xf]
      %v1505 = vld [vmem:[%s1500 + $0x10] sm:$0xf]
      %v1506 = vld [vmem:[%s1500 + $0x14] sm:$0xf]
      %v1507 = vld [vmem:[%s1500 + $0x18] sm:$0xf]
      %v1508 = vld [vmem:[%s1500 + $0x1c] sm:$0xf]
      %vm1509 = vsmask.f32 2304
      %v1510 = vrot.slane %v961, 5
      %v1511 = vrot.slane %v963, 6
      %v1512 = vor.u32 %v1510, %v1511
      %v1513 = vrot.slane %v972, 5
      %v1514 = vrot.slane %v968, 6
      %v1515 = vor.u32 %v1513, %v1514
      %v1516 = vsel %vm1509, %v1512, %v1515
      %v1517 = vrot.slane %v980, 5
      %v1518 = vrot.slane %v976, 6
      %v1519 = vor.u32 %v1517, %v1518
      %v1520 = vsel %vm1509, %v1515, %v1519
      %v1521 = vrot.slane %v988, 5
      %v1522 = vrot.slane %v984, 6
      %v1523 = vor.u32 %v1521, %v1522
      %v1524 = vsel %vm1509, %v1519, %v1523
      %v1525 = vrot.slane %v996, 5
      %v1526 = vrot.slane %v992, 6
      %v1527 = vor.u32 %v1525, %v1526
      %v1528 = vsel %vm1509, %v1523, %v1527
      %v1530 = vshll.u32 %v941, 16
      %v1532 = vrot.slane %v1530, 6
      %v1533 = vsel %vm1509, %v1527, %v1532
      %v1542 = vunpack.c.l.b16 %v1501
      %v1543 = vunpack.c.l.b16 %v1502
      %v1544 = vunpack.c.l.b16 %v1503
      %v1545 = vunpack.c.l.b16 %v1504
      %v1546 = vunpack.c.l.b16 %v1505
      %v1547 = vunpack.c.l.b16 %v1506
      %v1548 = vunpack.c.l.b16 %v1507
      %v1549 = vunpack.c.l.b16 %v1508
      %v1550 = vpack.c.b16 %v1543, %v1542
      %v1551 = vpack.c.b16 %v1545, %v1544
      %v1552 = vpack.c.b16 %v1547, %v1546
      %v1553 = vpack.c.b16 %v1549, %v1548
      %v1559 = vsel %vm1023, %v1516, 0
      %v1562 = vsel %vm1023, %v1520, 0
      %v1565 = vsel %vm1023, %v1524, 0
      %v1568 = vsel %vm1023, %v1528, 0
      %v1571 = vsel %vm1023, %v1533, 0
      %1573 = vmatprep.subr.bf16.mxu0 0
      %1574 = vmatpush1.bf16.msra.mxu0 %v1550
      %1575 = vmatprep.subr.bf16.mxu0 0
      %1576 = vmatpush1.bf16.msra.mxu0 %v1551
      %1577 = vmatprep.subr.bf16.mxu0 0
      %1578 = vmatpush1.bf16.msra.mxu0 %v1552
      %1579 = vmatprep.subr.bf16.mxu0 0
      %1580 = vmatpush1.bf16.msra.mxu0 %v1553
      %1581 = vmatprep.subr.bf16.mxu0 0
      %1582 = vmatpush1.bf16.msra.mxu0 0
      %1583 = vmatprep.subr.bf16.mxu0 0
      %1584 = vmatpush1.bf16.msra.mxu0 0
      %1585 = vmatprep.subr.bf16.mxu0 0
      %1586 = vmatpush1.bf16.msra.mxu0 0
      %1587 = vmatprep.subr.bf16.mxu0 0
      %1588 = vmatpush1.bf16.msra.mxu0 0
      %1589 = vmatprep.subr.bf16.mxu0 0
      %1590 = vmatpush1.bf16.msra.mxu0 0
      %1591 = vmatprep.subr.bf16.mxu0 0
      %1592 = vmatpush1.bf16.msra.mxu0 0
      %1593 = vmatprep.subr.bf16.mxu0 0
      %1594 = vmatpush1.bf16.msra.mxu0 0
      %1595 = vmatprep.subr.bf16.mxu0 0
      %1596 = vmatpush1.bf16.msra.mxu0 0
      %1597 = vmatprep.subr.bf16.mxu0 0
      %1598 = vmatpush1.bf16.msra.mxu0 0
      %1599 = vmatprep.subr.bf16.mxu0 0
      %1600 = vmatpush1.bf16.msra.mxu0 0
      %1601 = vmatprep.subr.bf16.mxu0 0
      %1602 = vmatpush1.bf16.msra.mxu0 0
      %1603 = vmatprep.subr.bf16.mxu0 0
      %1604 = vmatpush1.bf16.msra.mxu0 0
      %1605 = vmatprep.mubr.bf16.mxu0 0
      %1606 = vmatmul.mubr.bf16.gmra.mrb[0].mxu0 %v1559
      %v1607 = vpop.f32.mrb[0].mxu0
      %v1608 = vadd.f32 0.0, %v1607
      %v1609 = vpop.f32.mrb[0].mxu0
      %v1610 = vpop.f32.mrb[0].mxu0
      %v1611 = vadd.f32 0.0, %v1610
      %v1612 = vpop.f32.mrb[0].mxu0
      %1613 = vmatprep.mubr.bf16.mxu0 0
      %1614 = vmatmul.mubr.bf16.gmra.mrb[0].mxu0 %v1562
      %v1615 = vpop.f32.mrb[0].mxu0
      %v1616 = vadd.f32 0.0, %v1615
      %v1617 = vpop.f32.mrb[0].mxu0
      %v1618 = vpop.f32.mrb[0].mxu0
      %v1619 = vadd.f32 0.0, %v1618
      %v1620 = vpop.f32.mrb[0].mxu0
      %1621 = vmatprep.mubr.bf16.mxu0 0
      %1622 = vmatmul.mubr.bf16.gmra.mrb[0].mxu0 %v1565
      %v1623 = vpop.f32.mrb[0].mxu0
      %v1624 = vadd.f32 0.0, %v1623
      %v1625 = vpop.f32.mrb[0].mxu0
      %v1626 = vpop.f32.mrb[0].mxu0
      %v1627 = vadd.f32 0.0, %v1626
      %v1628 = vpop.f32.mrb[0].mxu0
      %1629 = vmatprep.mubr.bf16.mxu0 0
      %1630 = vmatmul.mubr.bf16.gmra.mrb[0].mxu0 %v1568
      %v1631 = vpop.f32.mrb[0].mxu0
      %v1632 = vadd.f32 0.0, %v1631
      %v1633 = vpop.f32.mrb[0].mxu0
      %v1634 = vpop.f32.mrb[0].mxu0
      %v1635 = vadd.f32 0.0, %v1634
      %v1636 = vpop.f32.mrb[0].mxu0
      %1637 = vmatprep.mubr.bf16.mxu0 0
      %1638 = vmatmul.mubr.bf16.gmra.mrb[0].mxu0 %v1571
      %v1639 = vpop.f32.mrb[0].mxu0
      %v1640 = vadd.f32 0.0, %v1639
      %v1641 = vpop.f32.mrb[0].mxu0
      %v1642 = vpop.f32.mrb[0].mxu0
      %v1643 = vpop.f32.mrb[0].mxu0
      %1644 = vdwg.mxu0
      %v1645 = vadd.f32 %v1491, %v1608
      %v1646 = vadd.f32 %v1492, %v1611
      %v1647 = vadd.f32 %v1493, %v1616
      %v1648 = vadd.f32 %v1494, %v1619
      %v1649 = vadd.f32 %v1495, %v1624
      %v1650 = vadd.f32 %v1496, %v1627
      %v1651 = vadd.f32 %v1497, %v1632
      %v1652 = vadd.f32 %v1498, %v1635
      %v1653 = vadd.f32 %v1499, %v1640
      %s1654 = scalar_lea.vmem %s3, 160
      %v1655 = vld [vmem:[%s1654] sm:$0xf]
      %v1656 = vld [vmem:[%s1654 + $0x4] sm:$0xf]
      %v1657 = vld [vmem:[%s1654 + $0x8] sm:$0xf]
      %v1658 = vld [vmem:[%s1654 + $0xc] sm:$0xf]
      %v1659 = vld [vmem:[%s1654 + $0x10] sm:$0xf]
      %v1660 = vld [vmem:[%s1654 + $0x14] sm:$0xf]
      %v1661 = vld [vmem:[%s1654 + $0x18] sm:$0xf]
      %v1662 = vld [vmem:[%s1654 + $0x1c] sm:$0xf]
      %vm1664 = vcmask 1041408
      %v1665 = vrot.slane %v936, 6
      %v1666 = vrot.slane %v937, 6
      %v1667 = vsel %vm1664, %v1665, %v1666
      %v1668 = vrot.slane %v938, 6
      %v1669 = vsel %vm1664, %v1666, %v1668
      %v1670 = vrot.slane %v939, 6
      %v1671 = vsel %vm1664, %v1668, %v1670
      %v1672 = vrot.slane %v940, 6
      %v1673 = vsel %vm1664, %v1670, %v1672
      %v1674 = vrot.slane %v941, 6
      %v1675 = vsel %vm1664, %v1672, %v1674
      %v1684 = vunpack.c.l.b16 %v1655
      %v1685 = vunpack.c.l.b16 %v1656
      %v1686 = vunpack.c.l.b16 %v1657
      %v1687 = vunpack.c.l.b16 %v1658
      %v1688 = vunpack.c.l.b16 %v1659
      %v1689 = vunpack.c.l.b16 %v1660
      %v1690 = vunpack.c.l.b16 %v1661
      %v1691 = vunpack.c.l.b16 %v1662
      %v1692 = vpack.c.b16 %v1685, %v1684
      %v1693 = vpack.c.b16 %v1687, %v1686
      %v1694 = vpack.c.b16 %v1689, %v1688
      %v1695 = vpack.c.b16 %v1691, %v1690
      %v1701 = vsel %vm1023, %v1667, 0
      %v1704 = vsel %vm1023, %v1669, 0
      %v1707 = vsel %vm1023, %v1671, 0
      %v1710 = vsel %vm1023, %v1673, 0
      %v1713 = vsel %vm1023, %v1675, 0
      %1715 = vmatprep.subr.bf16.mxu0 0
      %1716 = vmatpush1.bf16.msra.mxu0 %v1692
      %1717 = vmatprep.subr.bf16.mxu0 0
      %1718 = vmatpush1.bf16.msra.mxu0 %v1693
      %1719 = vmatprep.subr.bf16.mxu0 0
      %1720 = vmatpush1.bf16.msra.mxu0 %v1694
      %1721 = vmatprep.subr.bf16.mxu0 0
      %1722 = vmatpush1.bf16.msra.mxu0 %v1695
      %1723 = vmatprep.subr.bf16.mxu0 0
      %1724 = vmatpush1.bf16.msra.mxu0 0
      %1725 = vmatprep.subr.bf16.mxu0 0
      %1726 = vmatpush1.bf16.msra.mxu0 0
      %1727 = vmatprep.subr.bf16.mxu0 0
      %1728 = vmatpush1.bf16.msra.mxu0 0
      %1729 = vmatprep.subr.bf16.mxu0 0
      %1730 = vmatpush1.bf16.msra.mxu0 0
      %1731 = vmatprep.subr.bf16.mxu0 0
      %1732 = vmatpush1.bf16.msra.mxu0 0
      %1733 = vmatprep.subr.bf16.mxu0 0
      %1734 = vmatpush1.bf16.msra.mxu0 0
      %1735 = vmatprep.subr.bf16.mxu0 0
      %1736 = vmatpush1.bf16.msra.mxu0 0
      %1737 = vmatprep.subr.bf16.mxu0 0
      %1738 = vmatpush1.bf16.msra.mxu0 0
      %1739 = vmatprep.subr.bf16.mxu0 0
      %1740 = vmatpush1.bf16.msra.mxu0 0
      %1741 = vmatprep.subr.bf16.mxu0 0
      %1742 = vmatpush1.bf16.msra.mxu0 0
      %1743 = vmatprep.subr.bf16.mxu0 0
      %1744 = vmatpush1.bf16.msra.mxu0 0
      %1745 = vmatprep.subr.bf16.mxu0 0
      %1746 = vmatpush1.bf16.msra.mxu0 0
      %1747 = vmatprep.mubr.bf16.mxu0 0
      %1748 = vmatmul.mubr.bf16.gmra.mrb[0].mxu0 %v1701
      %v1749 = vpop.f32.mrb[0].mxu0
      %v1750 = vadd.f32 0.0, %v1749
      %v1751 = vpop.f32.mrb[0].mxu0
      %v1752 = vpop.f32.mrb[0].mxu0
      %v1753 = vadd.f32 0.0, %v1752
      %v1754 = vpop.f32.mrb[0].mxu0
      %1755 = vmatprep.mubr.bf16.mxu0 0
      %1756 = vmatmul.mubr.bf16.gmra.mrb[0].mxu0 %v1704
      %v1757 = vpop.f32.mrb[0].mxu0
      %v1758 = vadd.f32 0.0, %v1757
      %v1759 = vpop.f32.mrb[0].mxu0
      %v1760 = vpop.f32.mrb[0].mxu0
      %v1761 = vadd.f32 0.0, %v1760
      %v1762 = vpop.f32.mrb[0].mxu0
      %1763 = vmatprep.mubr.bf16.mxu0 0
      %1764 = vmatmul.mubr.bf16.gmra.mrb[0].mxu0 %v1707
      %v1765 = vpop.f32.mrb[0].mxu0
      %v1766 = vadd.f32 0.0, %v1765
      %v1767 = vpop.f32.mrb[0].mxu0
      %v1768 = vpop.f32.mrb[0].mxu0
      %v1769 = vadd.f32 0.0, %v1768
      %v1770 = vpop.f32.mrb[0].mxu0
      %1771 = vmatprep.mubr.bf16.mxu0 0
      %1772 = vmatmul.mubr.bf16.gmra.mrb[0].mxu0 %v1710
      %v1773 = vpop.f32.mrb[0].mxu0
      %v1774 = vadd.f32 0.0, %v1773
      %v1775 = vpop.f32.mrb[0].mxu0
      %v1776 = vpop.f32.mrb[0].mxu0
      %v1777 = vadd.f32 0.0, %v1776
      %v1778 = vpop.f32.mrb[0].mxu0
      %1779 = vmatprep.mubr.bf16.mxu0 0
      %1780 = vmatmul.mubr.bf16.gmra.mrb[0].mxu0 %v1713
      %v1781 = vpop.f32.mrb[0].mxu0
      %v1782 = vadd.f32 0.0, %v1781
      %v1783 = vpop.f32.mrb[0].mxu0
      %v1784 = vpop.f32.mrb[0].mxu0
      %v1785 = vpop.f32.mrb[0].mxu0
      %1786 = vdwg.mxu0
      %v1787 = vadd.f32 %v1645, %v1750
      %v1788 = vadd.f32 %v1646, %v1753
      %v1789 = vadd.f32 %v1647, %v1758
      %v1790 = vadd.f32 %v1648, %v1761
      %v1791 = vadd.f32 %v1649, %v1766
      %v1792 = vadd.f32 %v1650, %v1769
      %v1793 = vadd.f32 %v1651, %v1774
      %v1794 = vadd.f32 %v1652, %v1777
      %v1795 = vadd.f32 %v1653, %v1782
      %s1796 = scalar_lea.vmem %s3, 192
      %v1797 = vld [vmem:[%s1796] sm:$0xf]
      %v1798 = vld [vmem:[%s1796 + $0x4] sm:$0xf]
      %v1799 = vld [vmem:[%s1796 + $0x8] sm:$0xf]
      %v1800 = vld [vmem:[%s1796 + $0xc] sm:$0xf]
      %v1801 = vld [vmem:[%s1796 + $0x10] sm:$0xf]
      %v1802 = vld [vmem:[%s1796 + $0x14] sm:$0xf]
      %v1803 = vld [vmem:[%s1796 + $0x18] sm:$0xf]
      %v1804 = vld [vmem:[%s1796 + $0x1c] sm:$0xf]
      %vm1805 = vcmask 1045504
      %v1806 = vrot.slane %v937, 2
      %v1807 = vrot.slane %v938, 2
      %v1808 = vsel %vm1805, %v1806, %v1807
      %v1809 = vrot.slane %v939, 2
      %v1810 = vsel %vm1805, %v1807, %v1809
      %v1811 = vrot.slane %v940, 2
      %v1812 = vsel %vm1805, %v1809, %v1811
      %v1813 = vrot.slane %v941, 2
      %v1814 = vsel %vm1805, %v1811, %v1813
      %v1823 = vunpack.c.l.b16 %v1797
      %v1824 = vunpack.c.l.b16 %v1798
      %v1825 = vunpack.c.l.b16 %v1799
      %v1826 = vunpack.c.l.b16 %v1800
      %v1827 = vunpack.c.l.b16 %v1801
      %v1828 = vunpack.c.l.b16 %v1802
      %v1829 = vunpack.c.l.b16 %v1803
      %v1830 = vunpack.c.l.b16 %v1804
      %v1831 = vpack.c.b16 %v1824, %v1823
      %v1832 = vpack.c.b16 %v1826, %v1825
      %v1833 = vpack.c.b16 %v1828, %v1827
      %v1834 = vpack.c.b16 %v1830, %v1829
      %v1840 = vsel %vm1023, %v1808, 0
      %v1843 = vsel %vm1023, %v1810, 0
      %v1846 = vsel %vm1023, %v1812, 0
      %v1849 = vsel %vm1023, %v1814, 0
      %v1852 = vsel %vm1023, %v1813, 0
      %1854 = vmatprep.subr.bf16.mxu0 0
      %1855 = vmatpush1.bf16.msra.mxu0 %v1831
      %1856 = vmatprep.subr.bf16.mxu0 0
      %1857 = vmatpush1.bf16.msra.mxu0 %v1832
      %1858 = vmatprep.subr.bf16.mxu0 0
      %1859 = vmatpush1.bf16.msra.mxu0 %v1833
      %1860 = vmatprep.subr.bf16.mxu0 0
      %1861 = vmatpush1.bf16.msra.mxu0 %v1834
      %1862 = vmatprep.subr.bf16.mxu0 0
      %1863 = vmatpush1.bf16.msra.mxu0 0
      %1864 = vmatprep.subr.bf16.mxu0 0
      %1865 = vmatpush1.bf16.msra.mxu0 0
      %1866 = vmatprep.subr.bf16.mxu0 0
      %1867 = vmatpush1.bf16.msra.mxu0 0
      %1868 = vmatprep.subr.bf16.mxu0 0
      %1869 = vmatpush1.bf16.msra.mxu0 0
      %1870 = vmatprep.subr.bf16.mxu0 0
      %1871 = vmatpush1.bf16.msra.mxu0 0
      %1872 = vmatprep.subr.bf16.mxu0 0
      %1873 = vmatpush1.bf16.msra.mxu0 0
      %1874 = vmatprep.subr.bf16.mxu0 0
      %1875 = vmatpush1.bf16.msra.mxu0 0
      %1876 = vmatprep.subr.bf16.mxu0 0
      %1877 = vmatpush1.bf16.msra.mxu0 0
      %1878 = vmatprep.subr.bf16.mxu0 0
      %1879 = vmatpush1.bf16.msra.mxu0 0
      %1880 = vmatprep.subr.bf16.mxu0 0
      %1881 = vmatpush1.bf16.msra.mxu0 0
      %1882 = vmatprep.subr.bf16.mxu0 0
      %1883 = vmatpush1.bf16.msra.mxu0 0
      %1884 = vmatprep.subr.bf16.mxu0 0
      %1885 = vmatpush1.bf16.msra.mxu0 0
      %1886 = vmatprep.mubr.bf16.mxu0 0
      %1887 = vmatmul.mubr.bf16.gmra.mrb[0].mxu0 %v1840
      %v1888 = vpop.f32.mrb[0].mxu0
      %v1889 = vadd.f32 0.0, %v1888
      %v1890 = vpop.f32.mrb[0].mxu0
      %v1891 = vpop.f32.mrb[0].mxu0
      %v1892 = vadd.f32 0.0, %v1891
      %v1893 = vpop.f32.mrb[0].mxu0
      %1894 = vmatprep.mubr.bf16.mxu0 0
      %1895 = vmatmul.mubr.bf16.gmra.mrb[0].mxu0 %v1843
      %v1896 = vpop.f32.mrb[0].mxu0
      %v1897 = vadd.f32 0.0, %v1896
      %v1898 = vpop.f32.mrb[0].mxu0
      %v1899 = vpop.f32.mrb[0].mxu0
      %v1900 = vadd.f32 0.0, %v1899
      %v1901 = vpop.f32.mrb[0].mxu0
      %1902 = vmatprep.mubr.bf16.mxu0 0
      %1903 = vmatmul.mubr.bf16.gmra.mrb[0].mxu0 %v1846
      %v1904 = vpop.f32.mrb[0].mxu0
      %v1905 = vadd.f32 0.0, %v1904
      %v1906 = vpop.f32.mrb[0].mxu0
      %v1907 = vpop.f32.mrb[0].mxu0
      %v1908 = vadd.f32 0.0, %v1907
      %v1909 = vpop.f32.mrb[0].mxu0
      %1910 = vmatprep.mubr.bf16.mxu0 0
      %1911 = vmatmul.mubr.bf16.gmra.mrb[0].mxu0 %v1849
      %v1912 = vpop.f32.mrb[0].mxu0
      %v1913 = vadd.f32 0.0, %v1912
      %v1914 = vpop.f32.mrb[0].mxu0
      %v1915 = vpop.f32.mrb[0].mxu0
      %v1916 = vadd.f32 0.0, %v1915
      %v1917 = vpop.f32.mrb[0].mxu0
      %1918 = vmatprep.mubr.bf16.mxu0 0
      %1919 = vmatmul.mubr.bf16.gmra.mrb[0].mxu0 %v1852
      %v1920 = vpop.f32.mrb[0].mxu0
      %v1921 = vadd.f32 0.0, %v1920
      %v1922 = vpop.f32.mrb[0].mxu0
      %v1923 = vpop.f32.mrb[0].mxu0
      %v1924 = vpop.f32.mrb[0].mxu0
      %1925 = vdwg.mxu0
      %v1926 = vadd.f32 %v1787, %v1889
      %v1927 = vadd.f32 %v1788, %v1892
      %v1928 = vadd.f32 %v1789, %v1897
      %v1929 = vadd.f32 %v1790, %v1900
      %v1930 = vadd.f32 %v1791, %v1905
      %v1931 = vadd.f32 %v1792, %v1908
      %v1932 = vadd.f32 %v1793, %v1913
      %v1933 = vadd.f32 %v1794, %v1916
      %v1934 = vadd.f32 %v1795, %v1921
      %s1935 = scalar_lea.vmem %s3, 224
      %v1936 = vld [vmem:[%s1935] sm:$0xf]
      %v1937 = vld [vmem:[%s1935 + $0x4] sm:$0xf]
      %v1938 = vld [vmem:[%s1935 + $0x8] sm:$0xf]
      %v1939 = vld [vmem:[%s1935 + $0xc] sm:$0xf]
      %v1940 = vld [vmem:[%s1935 + $0x10] sm:$0xf]
      %v1941 = vld [vmem:[%s1935 + $0x14] sm:$0xf]
      %v1942 = vld [vmem:[%s1935 + $0x18] sm:$0xf]
      %v1943 = vld [vmem:[%s1935 + $0x1c] sm:$0xf]
      %vm1944 = vsmask.f32 5376
      %v1945 = vrot.slane %v972, 2
      %v1946 = vrot.slane %v968, 3
      %v1947 = vor.u32 %v1945, %v1946
      %v1948 = vrot.slane %v980, 2
      %v1949 = vrot.slane %v976, 3
      %v1950 = vor.u32 %v1948, %v1949
      %v1951 = vsel %vm1944, %v1947, %v1950
      %v1952 = vrot.slane %v988, 2
      %v1953 = vrot.slane %v984, 3
      %v1954 = vor.u32 %v1952, %v1953
      %v1955 = vsel %vm1944, %v1950, %v1954
      %v1956 = vrot.slane %v996, 2
      %v1957 = vrot.slane %v992, 3
      %v1958 = vor.u32 %v1956, %v1957
      %v1959 = vsel %vm1944, %v1954, %v1958
      %v1960 = vshrl.u32 %v941, 16
      %v1962 = vrot.slane %v1960, 2
      %v1963 = vrot.slane %v1530, 3
      %v1964 = vor.u32 %v1962, %v1963
      %v1965 = vsel %vm1944, %v1958, %v1964
      %v1974 = vunpack.c.l.b16 %v1936
      %v1975 = vunpack.c.l.b16 %v1937
      %v1976 = vunpack.c.l.b16 %v1938
      %v1977 = vunpack.c.l.b16 %v1939
      %v1978 = vunpack.c.l.b16 %v1940
      %v1979 = vunpack.c.l.b16 %v1941
      %v1980 = vunpack.c.l.b16 %v1942
      %v1981 = vunpack.c.l.b16 %v1943
      %v1982 = vpack.c.b16 %v1975, %v1974
      %v1983 = vpack.c.b16 %v1977, %v1976
      %v1984 = vpack.c.b16 %v1979, %v1978
      %v1985 = vpack.c.b16 %v1981, %v1980
      %v1991 = vsel %vm1023, %v1951, 0
      %v1994 = vsel %vm1023, %v1955, 0
      %v1997 = vsel %vm1023, %v1959, 0
      %v2000 = vsel %vm1023, %v1965, 0
      %v2003 = vsel %vm1023, %v1964, 0
      %2005 = vmatprep.subr.bf16.mxu0 0
      %2006 = vmatpush1.bf16.msra.mxu0 %v1982
      %2007 = vmatprep.subr.bf16.mxu0 0
      %2008 = vmatpush1.bf16.msra.mxu0 %v1983
      %2009 = vmatprep.subr.bf16.mxu0 0
      %2010 = vmatpush1.bf16.msra.mxu0 %v1984
      %2011 = vmatprep.subr.bf16.mxu0 0
      %2012 = vmatpush1.bf16.msra.mxu0 %v1985
      %2013 = vmatprep.subr.bf16.mxu0 0
      %2014 = vmatpush1.bf16.msra.mxu0 0
      %2015 = vmatprep.subr.bf16.mxu0 0
      %2016 = vmatpush1.bf16.msra.mxu0 0
      %2017 = vmatprep.subr.bf16.mxu0 0
      %2018 = vmatpush1.bf16.msra.mxu0 0
      %2019 = vmatprep.subr.bf16.mxu0 0
      %2020 = vmatpush1.bf16.msra.mxu0 0
      %2021 = vmatprep.subr.bf16.mxu0 0
      %2022 = vmatpush1.bf16.msra.mxu0 0
      %2023 = vmatprep.subr.bf16.mxu0 0
      %2024 = vmatpush1.bf16.msra.mxu0 0
      %2025 = vmatprep.subr.bf16.mxu0 0
      %2026 = vmatpush1.bf16.msra.mxu0 0
      %2027 = vmatprep.subr.bf16.mxu0 0
      %2028 = vmatpush1.bf16.msra.mxu0 0
      %2029 = vmatprep.subr.bf16.mxu0 0
      %2030 = vmatpush1.bf16.msra.mxu0 0
      %2031 = vmatprep.subr.bf16.mxu0 0
      %2032 = vmatpush1.bf16.msra.mxu0 0
      %2033 = vmatprep.subr.bf16.mxu0 0
      %2034 = vmatpush1.bf16.msra.mxu0 0
      %2035 = vmatprep.subr.bf16.mxu0 0
      %2036 = vmatpush1.bf16.msra.mxu0 0
      %2037 = vmatprep.mubr.bf16.mxu0 0
      %2038 = vmatmul.mubr.bf16.gmra.mrb[0].mxu0 %v1991
      %v2039 = vpop.f32.mrb[0].mxu0
      %v2040 = vadd.f32 0.0, %v2039
      %v2041 = vpop.f32.mrb[0].mxu0
      %v2042 = vpop.f32.mrb[0].mxu0
      %v2043 = vadd.f32 0.0, %v2042
      %v2044 = vpop.f32.mrb[0].mxu0
      %2045 = vmatprep.mubr.bf16.mxu0 0
      %2046 = vmatmul.mubr.bf16.gmra.mrb[0].mxu0 %v1994
      %v2047 = vpop.f32.mrb[0].mxu0
      %v2048 = vadd.f32 0.0, %v2047
      %v2049 = vpop.f32.mrb[0].mxu0
      %v2050 = vpop.f32.mrb[0].mxu0
      %v2051 = vadd.f32 0.0, %v2050
      %v2052 = vpop.f32.mrb[0].mxu0
      %2053 = vmatprep.mubr.bf16.mxu0 0
      %2054 = vmatmul.mubr.bf16.gmra.mrb[0].mxu0 %v1997
      %v2055 = vpop.f32.mrb[0].mxu0
      %v2056 = vadd.f32 0.0, %v2055
      %v2057 = vpop.f32.mrb[0].mxu0
      %v2058 = vpop.f32.mrb[0].mxu0
      %v2059 = vadd.f32 0.0, %v2058
      %v2060 = vpop.f32.mrb[0].mxu0
      %2061 = vmatprep.mubr.bf16.mxu0 0
      %2062 = vmatmul.mubr.bf16.gmra.mrb[0].mxu0 %v2000
      %v2063 = vpop.f32.mrb[0].mxu0
      %v2064 = vadd.f32 0.0, %v2063
      %v2065 = vpop.f32.mrb[0].mxu0
      %v2066 = vpop.f32.mrb[0].mxu0
      %v2067 = vadd.f32 0.0, %v2066
      %v2068 = vpop.f32.mrb[0].mxu0
      %2069 = vmatprep.mubr.bf16.mxu0 0
      %2070 = vmatmul.mubr.bf16.gmra.mrb[0].mxu0 %v2003
      %v2071 = vpop.f32.mrb[0].mxu0
      %v2072 = vadd.f32 0.0, %v2071
      %v2073 = vpop.f32.mrb[0].mxu0
      %v2074 = vpop.f32.mrb[0].mxu0
      %v2075 = vpop.f32.mrb[0].mxu0
      %2076 = vdwg.mxu0
      %v2077 = vadd.f32 %v1926, %v2040
      %v2078 = vadd.f32 %v1927, %v2043
      %v2079 = vadd.f32 %v1928, %v2048
      %v2080 = vadd.f32 %v1929, %v2051
      %v2081 = vadd.f32 %v1930, %v2056
      %v2082 = vadd.f32 %v1931, %v2059
      %v2083 = vadd.f32 %v1932, %v2064
      %v2084 = vadd.f32 %v1933, %v2067
      %v2085 = vadd.f32 %v1934, %v2072
      %s2086 = scalar_lea.vmem %s3, 256
      %v2087 = vld [vmem:[%s2086] sm:$0xf]
      %v2088 = vld [vmem:[%s2086 + $0x4] sm:$0xf]
      %v2089 = vld [vmem:[%s2086 + $0x8] sm:$0xf]
      %v2090 = vld [vmem:[%s2086 + $0xc] sm:$0xf]
      %v2091 = vld [vmem:[%s2086 + $0x10] sm:$0xf]
      %v2092 = vld [vmem:[%s2086 + $0x14] sm:$0xf]
      %v2093 = vld [vmem:[%s2086 + $0x18] sm:$0xf]
      %v2094 = vld [vmem:[%s2086 + $0x1c] sm:$0xf]
      %vm2095 = vcmask 1044480
      %v2096 = vrot.slane %v937, 3
      %v2097 = vrot.slane %v938, 3
      %v2098 = vsel %vm2095, %v2096, %v2097
      %v2099 = vrot.slane %v939, 3
      %v2100 = vsel %vm2095, %v2097, %v2099
      %v2101 = vrot.slane %v940, 3
      %v2102 = vsel %vm2095, %v2099, %v2101
      %v2103 = vrot.slane %v941, 3
      %v2104 = vsel %vm2095, %v2101, %v2103
      %v2113 = vunpack.c.l.b16 %v2087
      %v2114 = vunpack.c.l.b16 %v2088
      %v2115 = vunpack.c.l.b16 %v2089
      %v2116 = vunpack.c.l.b16 %v2090
      %v2117 = vunpack.c.l.b16 %v2091
      %v2118 = vunpack.c.l.b16 %v2092
      %v2119 = vunpack.c.l.b16 %v2093
      %v2120 = vunpack.c.l.b16 %v2094
      %v2121 = vpack.c.b16 %v2114, %v2113
      %v2122 = vpack.c.b16 %v2116, %v2115
      %v2123 = vpack.c.b16 %v2118, %v2117
      %v2124 = vpack.c.b16 %v2120, %v2119
      %v2130 = vsel %vm1023, %v2098, 0
      %v2133 = vsel %vm1023, %v2100, 0
      %v2136 = vsel %vm1023, %v2102, 0
      %v2139 = vsel %vm1023, %v2104, 0
      %v2142 = vsel %vm1023, %v2103, 0
      %2144 = vmatprep.subr.bf16.mxu0 0
      %2145 = vmatpush1.bf16.msra.mxu0 %v2121
      %2146 = vmatprep.subr.bf16.mxu0 0
      %2147 = vmatpush1.bf16.msra.mxu0 %v2122
      %2148 = vmatprep.subr.bf16.mxu0 0
      %2149 = vmatpush1.bf16.msra.mxu0 %v2123
      %2150 = vmatprep.subr.bf16.mxu0 0
      %2151 = vmatpush1.bf16.msra.mxu0 %v2124
      %2152 = vmatprep.subr.bf16.mxu0 0
      %2153 = vmatpush1.bf16.msra.mxu0 0
      %2154 = vmatprep.subr.bf16.mxu0 0
      %2155 = vmatpush1.bf16.msra.mxu0 0
      %2156 = vmatprep.subr.bf16.mxu0 0
      %2157 = vmatpush1.bf16.msra.mxu0 0
      %2158 = vmatprep.subr.bf16.mxu0 0
      %2159 = vmatpush1.bf16.msra.mxu0 0
      %2160 = vmatprep.subr.bf16.mxu0 0
      %2161 = vmatpush1.bf16.msra.mxu0 0
      %2162 = vmatprep.subr.bf16.mxu0 0
      %2163 = vmatpush1.bf16.msra.mxu0 0
      %2164 = vmatprep.subr.bf16.mxu0 0
      %2165 = vmatpush1.bf16.msra.mxu0 0
      %2166 = vmatprep.subr.bf16.mxu0 0
      %2167 = vmatpush1.bf16.msra.mxu0 0
      %2168 = vmatprep.subr.bf16.mxu0 0
      %2169 = vmatpush1.bf16.msra.mxu0 0
      %2170 = vmatprep.subr.bf16.mxu0 0
      %2171 = vmatpush1.bf16.msra.mxu0 0
      %2172 = vmatprep.subr.bf16.mxu0 0
      %2173 = vmatpush1.bf16.msra.mxu0 0
      %2174 = vmatprep.subr.bf16.mxu0 0
      %2175 = vmatpush1.bf16.msra.mxu0 0
      %2176 = vmatprep.mubr.bf16.mxu0 0
      %2177 = vmatmul.mubr.bf16.gmra.mrb[0].mxu0 %v2130
      %v2178 = vpop.f32.mrb[0].mxu0
      %v2179 = vadd.f32 0.0, %v2178
      %v2180 = vpop.f32.mrb[0].mxu0
      %v2181 = vpop.f32.mrb[0].mxu0
      %v2182 = vadd.f32 0.0, %v2181
      %v2183 = vpop.f32.mrb[0].mxu0
      %2184 = vmatprep.mubr.bf16.mxu0 0
      %2185 = vmatmul.mubr.bf16.gmra.mrb[0].mxu0 %v2133
      %v2186 = vpop.f32.mrb[0].mxu0
      %v2187 = vadd.f32 0.0, %v2186
      %v2188 = vpop.f32.mrb[0].mxu0
      %v2189 = vpop.f32.mrb[0].mxu0
      %v2190 = vadd.f32 0.0, %v2189
      %v2191 = vpop.f32.mrb[0].mxu0
      %2192 = vmatprep.mubr.bf16.mxu0 0
      %2193 = vmatmul.mubr.bf16.gmra.mrb[0].mxu0 %v2136
      %v2194 = vpop.f32.mrb[0].mxu0
      %v2195 = vadd.f32 0.0, %v2194
      %v2196 = vpop.f32.mrb[0].mxu0
      %v2197 = vpop.f32.mrb[0].mxu0
      %v2198 = vadd.f32 0.0, %v2197
      %v2199 = vpop.f32.mrb[0].mxu0
      %2200 = vmatprep.mubr.bf16.mxu0 0
      %2201 = vmatmul.mubr.bf16.gmra.mrb[0].mxu0 %v2139
      %v2202 = vpop.f32.mrb[0].mxu0
      %v2203 = vadd.f32 0.0, %v2202
      %v2204 = vpop.f32.mrb[0].mxu0
      %v2205 = vpop.f32.mrb[0].mxu0
      %v2206 = vadd.f32 0.0, %v2205
      %v2207 = vpop.f32.mrb[0].mxu0
      %2208 = vmatprep.mubr.bf16.mxu0 0
      %2209 = vmatmul.mubr.bf16.gmra.mrb[0].mxu0 %v2142
      %v2210 = vpop.f32.mrb[0].mxu0
      %v2211 = vadd.f32 0.0, %v2210
      %v2212 = vpop.f32.mrb[0].mxu0
      %v2213 = vpop.f32.mrb[0].mxu0
      %v2214 = vpop.f32.mrb[0].mxu0
      %2215 = vdwg.mxu0
      %v2216 = vadd.f32 %v2077, %v2179
      %v2217 = vadd.f32 %v2078, %v2182
      %v2218 = vadd.f32 %v2079, %v2187
      %v2219 = vadd.f32 %v2080, %v2190
      %v2220 = vadd.f32 %v2081, %v2195
      %v2221 = vadd.f32 %v2082, %v2198
      %v2222 = vadd.f32 %v2083, %v2203
      %v2223 = vadd.f32 %v2084, %v2206
      %v2224 = vadd.f32 %v2085, %v2211
      %v2225 = vld [vmem:[%s4] sm:$0x1]
      %v2227 = vlaneseq
      %v2228 = vshrl.u32 %v2227, 7
      %v2229 = vsub.s32 0, %v2228
      %v2230 = vrot.slane %v2225, %v2229
      %v2232 = vadd.f32 %v2216, %v2230
      %v2233 = vadd.f32 %v2217, %v2230
      %v2234 = vadd.f32 %v2218, %v2230
      %v2235 = vadd.f32 %v2219, %v2230
      %v2236 = vadd.f32 %v2220, %v2230
      %v2237 = vadd.f32 %v2221, %v2230
      %v2238 = vadd.f32 %v2222, %v2230
      %v2239 = vadd.f32 %v2223, %v2230
      %v2240 = vadd.f32 %v2224, %v2230
      %v2241 = vmax.f32 %v2232, 0.0
      %v2242 = vmax.f32 %v2233, 0.0
      %v2243 = vmax.f32 %v2234, 0.0
      %v2244 = vmax.f32 %v2235, 0.0
      %v2245 = vmax.f32 %v2236, 0.0
      %v2246 = vmax.f32 %v2237, 0.0
      %v2247 = vmax.f32 %v2238, 0.0
      %v2248 = vmax.f32 %v2239, 0.0
      %v2249 = vmax.f32 %v2240, 0.0
      %2250 = vst.msk [vmem:[%s224] sm:$0xff] %vm1023, %v2241
      %2251 = vst.msk [vmem:[%s224 + $0x8] sm:$0xff] %vm1023, %v2242
      %2252 = vst.msk [vmem:[%s224 + $0x10] sm:$0xff] %vm1023, %v2243
      %2253 = vst.msk [vmem:[%s224 + $0x18] sm:$0xff] %vm1023, %v2244
      %2254 = vst.msk [vmem:[%s224 + $0x20] sm:$0xff] %vm1023, %v2245
      %2255 = vst.msk [vmem:[%s224 + $0x28] sm:$0xff] %vm1023, %v2246
      %2256 = vst.msk [vmem:[%s224 + $0x30] sm:$0xff] %vm1023, %v2247
      %2257 = vst.msk [vmem:[%s224 + $0x38] sm:$0xff] %vm1023, %v2248
      %vm2258 = vcmask 521216
      %2259 = vst.msk [vmem:[%s224 + $0x40] sm:$0x3f] %vm2258, %v2249
      %p2260 = scmp.lt.s32.totalorder %s16, 1
      %s2261 = scalar_select %p2260, %s16, 1
      %s2262 = smul.addr %s2261, 9
      %s2263 = smul.addr %s2262, 8
      %s2264 = scalar_lea.vmem %s5, %s2263
      // Predicated region
      $region41: #{atari_backbone.4} parent=39 // pred_check
        %p2265 = pneg %p144
      $region42: #{atari_backbone.4} parent=39 // pred_check_branch
        %2267 = sbr.rel (%p2265) target = $region44
      $region43: #{atari_backbone.4} parent=39 // pred_region
        _
      $region44: #{atari_backbone.4} parent=39 // pred_fallthru
        _
    $region40: #{atari_backbone.4} parent=5 // pred_fallthru
      _
    %p2268 = scmp.le.s32.totalorder 2, %s11
    // Predicated region
    $region45: #{atari_backbone.4} parent=5 // pred_check
      %p2269 = pneg %p2268
    $region46: #{atari_backbone.4} parent=5 // pred_check_branch
      %2271 = sbr.rel (%p2269) target = $region48
    $region47: #{atari_backbone.4} parent=5 // pred_region
      %s2272 = ssub.s32 %s11, 2
      // Predicated region
      $region49: #{atari_backbone.4} parent=47 // pred_check
        %p2273 = pneg %p150
      $region50: #{atari_backbone.4} parent=47 // pred_check_branch
        %2275 = sbr.rel (%p2273) target = $region52
      $region51: #{atari_backbone.4} parent=47 // pred_region
        %p2276 = scmp.lt.s32.totalorder %s17, 1
        %s2277 = scalar_select %p2276, %s17, 1
        %s2278 = smul.addr %s2277, 9
        %s2279 = smul.addr %s2278, 8
        %s2280 = scalar_lea.vmem %s5, %s2279
      $region52: #{atari_backbone.4} parent=47 // pred_fallthru
        _
    $region48: #{atari_backbone.4} parent=5 // pred_fallthru
      _
  $region6: #{atari_backbone.4} parent=0 // loop_footer
    %s15 = sadd.s32 1, %s11
  $region7: #{atari_backbone.4} parent=0 // loop_footer_branch
    %10 = sbr.rel target = $region3
  $region8: #{atari_backbone.4} parent=0 // loop_exit
    _

// kernel: atari_backbone.5
$region0: #{atari_backbone.5}
  #allocation0 [shape = 'u32[]', space=smem, size = 0x4, offset = 0x4, fixed_abs, tag = 'smem constant byte address 0x4 - core index']
  #allocation1 [shape = 'u32[144,128]{1,0:T(1,128)}', space=vmem, size = 0x12000, scoped, tag = 'internal scratch']
  %s0 = inlined_call_operand.vmem [shape: f32[2,3136], index: 0, kind: input, shape index: {}]
  %s1 = inlined_call_operand.vmem [shape: bf16[3136,512], index: 1, kind: input, shape index: {}]
  %s2 = inlined_call_operand.vmem [shape: f32[1,512], index: 2, kind: input, shape index: {}]
  %s3 = inlined_call_operand.hbm [shape: f32[2,512], index: 3, kind: output, shape index: {}]
  %s4 = sld [smem:[#allocation0]]
  $region83: #{atari_backbone.5} parent=0
    _
  %s6 = ssub.s32 1, %s4
  %s7 = scalar_select 0, %s6, %s4
  $region1: #{atari_backbone.5} parent=0
    #allocation2 [shape = 'u8[3211264]{0}', space=vmem, size = 0x310000, scoped, tag = 'input window, operand 1']
    #allocation3 [shape = 'u8[4096]{0}', space=vmem, size = 0x1000, scoped, tag = 'output window, operand 0']
    #allocation4 [shape = 's32[2]{0}', space=sflag, size = 0x8, scoped, tag = 'scoped memory for atari_backbone.5']
    %8 = vsyncpa [#allocation4], 0
    %s9 = scalar_lea.sflag [#allocation4], 1
    %10 = vsyncpa %s9, 0
    loop: start=0, step=1, limit=4
    $region2: #{atari_backbone.5} parent=1 // loop_pre_header
      _
    $region3: #{atari_backbone.5} parent=1 // loop_header
      %s12 = sphi 0, %s16
      %p13 = scmp.ge.s32.totalorder %s12, 4
      %s20 = sphi 0, %s20
      %s22 = sphi 0, %s20
      %s23 = sphi 0, %s22
      %s37 = sphi 0, %s23
      %s43 = sphi 0, %s45
      %s46 = sphi 0, %s43
      %s47 = sphi 0, %s46
      %s63 = sphi 0, %s47
      %s69 = sphi 0, %s71
      %s72 = sphi 0, %s69
      %s73 = sphi 0, %s72
      %s89 = sphi 0, %s73
      %s95 = sphi 0, %s97
      %s98 = sphi 0, %s95
      %s99 = sphi 0, %s98
      %s115 = sphi 0, %s99
    $region4: #{atari_backbone.5} parent=1 // loop_header_branch
      %15 = sbr.rel (%p13) target = $region8
    $region5: #{atari_backbone.5} parent=1 // loop_body
      %s17 = ssub.s32 %s12, 1
      %s18 = ssub.s32 %s12, 2
      %s19 = sadd.s32 %s12, 1
      %s21 = sadd.s32 %s20, 1
      %p24 = scmp.eq.s32.totalorder %s12, 1
      %p25 = scmp.ne.s32.totalorder %s20, %s22
      %p26 = scmp.eq.s32.totalorder %s12, 0
      %p27 = por %p25, %p26
      %p28 = scmp.ne.s32.totalorder %s20, %s22
      %p29 = scmp.eq.s32.totalorder %s17, 1
      %p30 = por %p28, %p29
      %p31 = scmp.ne.s32.totalorder %s22, %s23
      %p32 = scmp.eq.s32.totalorder %s17, 0
      %p33 = por %p31, %p32
      %p34 = scmp.ne.s32.totalorder %s22, %s23
      %p35 = scmp.eq.s32.totalorder %s18, 1
      %p36 = por %p34, %p35
      %p38 = scmp.ne.s32.totalorder %s23, %s37
      %p39 = scmp.eq.s32.totalorder %s18, 0
      %p40 = por %p38, %p39
      %s41 = ssub.s32 %s12, %s19
      %p42 = scmp.eq.s32.totalorder %s41, 0
      %s44 = sadd.s32 %s43, 1
      %s45 = scalar_select %p42, %s43, %s44
      %p48 = pneg %p42
      %p49 = scmp.eq.s32.totalorder %s12, 1
      %p50 = por %p48, %p49
      %p51 = scmp.ne.s32.totalorder %s43, %s46
      %p52 = scmp.eq.s32.totalorder %s12, 0
      %p53 = por %p51, %p52
      %p54 = scmp.ne.s32.totalorder %s43, %s46
      %p55 = scmp.eq.s32.totalorder %s17, 1
      %p56 = por %p54, %p55
      %p57 = scmp.ne.s32.totalorder %s46, %s47
      %p58 = scmp.eq.s32.totalorder %s17, 0
      %p59 = por %p57, %p58
      %p60 = scmp.ne.s32.totalorder %s46, %s47
      %p61 = scmp.eq.s32.totalorder %s18, 1
      %p62 = por %p60, %p61
      %p64 = scmp.ne.s32.totalorder %s47, %s63
      %p65 = scmp.eq.s32.totalorder %s18, 0
      %p66 = por %p64, %p65
      %s67 = ssub.s32 %s12, %s19
      %p68 = scmp.eq.s32.totalorder %s67, 0
      %s70 = sadd.s32 %s69, 1
      %s71 = scalar_select %p68, %s69, %s70
      %p74 = pneg %p68
      %p75 = scmp.eq.s32.totalorder %s12, 1
      %p76 = por %p74, %p75
      %p77 = scmp.ne.s32.totalorder %s69, %s72
      %p78 = scmp.eq.s32.totalorder %s12, 0
      %p79 = por %p77, %p78
      %p80 = scmp.ne.s32.totalorder %s69, %s72
      %p81 = scmp.eq.s32.totalorder %s17, 1
      %p82 = por %p80, %p81
      %p83 = scmp.ne.s32.totalorder %s72, %s73
      %p84 = scmp.eq.s32.totalorder %s17, 0
      %p85 = por %p83, %p84
      %p86 = scmp.ne.s32.totalorder %s72, %s73
      %p87 = scmp.eq.s32.totalorder %s18, 1
      %p88 = por %p86, %p87
      %p90 = scmp.ne.s32.totalorder %s73, %s89
      %p91 = scmp.eq.s32.totalorder %s18, 0
      %p92 = por %p90, %p91
      %s93 = ssub.s32 %s12, %s19
      %p94 = scmp.eq.s32.totalorder %s93, 0
      %s96 = sadd.s32 %s95, 1
      %s97 = scalar_select %p94, %s95, %s96
      %p100 = pneg %p94
      %p101 = scmp.eq.s32.totalorder %s12, 1
      %p102 = por %p100, %p101
      %p103 = scmp.ne.s32.totalorder %s95, %s98
      %p104 = scmp.eq.s32.totalorder %s12, 0
      %p105 = por %p103, %p104
      %p106 = scmp.ne.s32.totalorder %s95, %s98
      %p107 = scmp.eq.s32.totalorder %s17, 1
      %p108 = por %p106, %p107
      %p109 = scmp.ne.s32.totalorder %s98, %s99
      %p110 = scmp.eq.s32.totalorder %s17, 0
      %p111 = por %p109, %p110
      %p112 = scmp.ne.s32.totalorder %s98, %s99
      %p113 = scmp.eq.s32.totalorder %s18, 1
      %p114 = por %p112, %p113
      %p116 = scmp.ne.s32.totalorder %s99, %s115
      %p117 = scmp.eq.s32.totalorder %s18, 0
      %p118 = por %p116, %p117
      %p119 = scmp.le.s32.totalorder 1, %s12
      %p120 = scmp.lt.s32.totalorder %s12, 3
      %p121 = pnand %p119, %p120
      %p122 = pneg %p121
      // Predicated region
      $region9: #{atari_backbone.5} parent=5 // pred_check
        _
      $region10: #{atari_backbone.5} parent=5 // pred_check_branch
        %124 = sbr.rel (%p121) target = $region12
      $region11: #{atari_backbone.5} parent=5 // pred_region
        %s125 = ssub.s32 %s12, 1
        // Predicated region
        $region13: #{atari_backbone.5} parent=11 // pred_check
          %p126 = pneg %p33
        $region14: #{atari_backbone.5} parent=11 // pred_check_branch
          %128 = sbr.rel (%p126) target = $region16
        $region15: #{atari_backbone.5} parent=11 // pred_region
          _
        $region16: #{atari_backbone.5} parent=11 // pred_fallthru
          _
      $region12: #{atari_backbone.5} parent=5 // pred_fallthru
        _
      %p129 = scmp.lt.s32.totalorder %s12, 2
      // Predicated region
      $region17: #{atari_backbone.5} parent=5 // pred_check
        %p130 = pneg %p129
      $region18: #{atari_backbone.5} parent=5 // pred_check_branch
        %132 = sbr.rel (%p130) target = $region20
      $region19: #{atari_backbone.5} parent=5 // pred_region
        // Predicated region
        $region21: #{atari_backbone.5} parent=19 // pred_check
          %p133 = pneg %p53
        $region22: #{atari_backbone.5} parent=19 // pred_check_branch
          %135 = sbr.rel (%p133) target = $region24
        $region23: #{atari_backbone.5} parent=19 // pred_region
          %s136 = sand.u32 %s43, 1
          %s137 = sand.u32 %s43, 1
          %s138 = smul.addr %s137, 3136
          %s139 = scalar_lea.vmem [#allocation2], %s138
          %s140 = smul.u32 2, %s12
          %s141 = smul.addr %s140, 4
          %s142 = scalar_lea.vmem %s1, %s141
          // Predicated region
          $region25: #{atari_backbone.5} parent=23 // pred_check
            _
          $region26: #{atari_backbone.5} parent=23 // pred_check_branch
            %144 = sbr.rel (0) target = $region28
          $region27: #{atari_backbone.5} parent=23 // pred_region
            // Predicated region
            $region29: #{atari_backbone.5} parent=27 // pred_check
              _
            $region30: #{atari_backbone.5} parent=27 // pred_check_branch
              %146 = sbr.rel (0) target = $region32
            $region31: #{atari_backbone.5} parent=27 // pred_region
              // Predicated region
              $region44: #{atari_backbone.5} parent=31 // pred_check
                _
              $region45: #{atari_backbone.5} parent=31 // pred_check_branch
                %943 = sbr.rel (0) target = $region47
              $region46: #{atari_backbone.5} parent=31 // pred_region
                loop: start=0, step=1, limit=1
                $region48: #{atari_backbone.5} parent=46 // loop_pre_header
                  _
                $region49: #{atari_backbone.5} parent=46 // loop_header
                  %s945 = sphi 0, %s949
                  %p946 = scmp.ge.s32.totalorder %s945, 1
                  %s950 = sphi %s142, %s142
                  %s951 = sphi %s139, %s139
                $region50: #{atari_backbone.5} parent=46 // loop_header_branch
                  %948 = sbr.rel (%p946) target = $region54
                $region51: #{atari_backbone.5} parent=46 // loop_body
                  %v952 = vld [vmem:[%s950] sm:$0xff]
                  %953 = vst [vmem:[%s951] sm:$0xff] %v952
                  %v954 = vld [vmem:[%s950 + $0x10] sm:$0xff]
                  %955 = vst [vmem:[%s951 + $0x8] sm:$0xff] %v954
                  %v956 = vld [vmem:[%s950 + $0x20] sm:$0xff]
                  %957 = vst [vmem:[%s951 + $0x10] sm:$0xff] %v956
                  %v958 = vld [vmem:[%s950 + $0x30] sm:$0xff]
                  %959 = vst [vmem:[%s951 + $0x18] sm:$0xff] %v958
                  %v960 = vld [vmem:[%s950 + $0x40] sm:$0xff]
                  %961 = vst [vmem:[%s951 + $0x20] sm:$0xff] %v960
                  %v962 = vld [vmem:[%s950 + $0x50] sm:$0xff]
                  %963 = vst [vmem:[%s951 + $0x28] sm:$0xff] %v962
                  %v964 = vld [vmem:[%s950 + $0x60] sm:$0xff]
                  %965 = vst [vmem:[%s951 + $0x30] sm:$0xff] %v964
                  %v966 = vld [vmem:[%s950 + $0x70] sm:$0xff]
                  %967 = vst [vmem:[%s951 + $0x38] sm:$0xff] %v966
                  %v968 = vld [vmem:[%s950 + $0x80] sm:$0xff]
                  %969 = vst [vmem:[%s951 + $0x40] sm:$0xff] %v968
                  %v970 = vld [vmem:[%s950 + $0x90] sm:$0xff]
                  %971 = vst [vmem:[%s951 + $0x48] sm:$0xff] %v970
                  %v972 = vld [vmem:[%s950 + $0xa0] sm:$0xff]
                  %973 = vst [vmem:[%s951 + $0x50] sm:$0xff] %v972
                  %v974 = vld [vmem:[%s950 + $0xb0] sm:$0xff]
                  %975 = vst [vmem:[%s951 + $0x58] sm:$0xff] %v974
                  %v976 = vld [vmem:[%s950 + $0xc0] sm:$0xff]
                  %977 = vst [vmem:[%s951 + $0x60] sm:$0xff] %v976
                  %v978 = vld [vmem:[%s950 + $0xd0] sm:$0xff]
                  %979 = vst [vmem:[%s951 + $0x68] sm:$0xff] %v978
                  %v980 = vld [vmem:[%s950 + $0xe0] sm:$0xff]
                  %981 = vst [vmem:[%s951 + $0x70] sm:$0xff] %v980
                  %v982 = vld [vmem:[%s950 + $0xf0] sm:$0xff]
                  %983 = vst [vmem:[%s951 + $0x78] sm:$0xff] %v982
                  %v984 = vld [vmem:[%s950 + $0x100] sm:$0xff]
                  %985 = vst [vmem:[%s951 + $0x80] sm:$0xff] %v984
                  %v986 = vld [vmem:[%s950 + $0x110] sm:$0xff]
                  %987 = vst [vmem:[%s951 + $0x88] sm:$0xff] %v986
                  %v988 = vld [vmem:[%s950 + $0x120] sm:$0xff]
                  %989 = vst [vmem:[%s951 + $0x90] sm:$0xff] %v988
                  %v990 = vld [vmem:[%s950 + $0x130] sm:$0xff]
                  %991 = vst [vmem:[%s951 + $0x98] sm:$0xff] %v990
                  %v992 = vld [vmem:[%s950 + $0x140] sm:$0xff]
                  %993 = vst [vmem:[%s951 + $0xa0] sm:$0xff] %v992
                  %v994 = vld [vmem:[%s950 + $0x150] sm:$0xff]
                  %995 = vst [vmem:[%s951 + $0xa8] sm:$0xff] %v994
                  %v996 = vld [vmem:[%s950 + $0x160] sm:$0xff]
                  %997 = vst [vmem:[%s951 + $0xb0] sm:$0xff] %v996
                  %v998 = vld [vmem:[%s950 + $0x170] sm:$0xff]
                  %999 = vst [vmem:[%s951 + $0xb8] sm:$0xff] %v998
                  %v1000 = vld [vmem:[%s950 + $0x180] sm:$0xff]
                  %1001 = vst [vmem:[%s951 + $0xc0] sm:$0xff] %v1000
                  %v1002 = vld [vmem:[%s950 + $0x190] sm:$0xff]
                  %1003 = vst [vmem:[%s951 + $0xc8] sm:$0xff] %v1002
                  %v1004 = vld [vmem:[%s950 + $0x1a0] sm:$0xff]
                  %1005 = vst [vmem:[%s951 + $0xd0] sm:$0xff] %v1004
                  %v1006 = vld [vmem:[%s950 + $0x1b0] sm:$0xff]
                  %1007 = vst [vmem:[%s951 + $0xd8] sm:$0xff] %v1006
                  %v1008 = vld [vmem:[%s950 + $0x1c0] sm:$0xff]
                  %1009 = vst [vmem:[%s951 + $0xe0] sm:$0xff] %v1008
                  %v1010 = vld [vmem:[%s950 + $0x1d0] sm:$0xff]
                  %1011 = vst [vmem:[%s951 + $0xe8] sm:$0xff] %v1010
                  %v1012 = vld [vmem:[%s950 + $0x1e0] sm:$0xff]
                  %1013 = vst [vmem:[%s951 + $0xf0] sm:$0xff] %v1012
                  %v1014 = vld [vmem:[%s950 + $0x1f0] sm:$0xff]
                  %1015 = vst [vmem:[%s951 + $0xf8] sm:$0xff] %v1014
                  %v1016 = vld [vmem:[%s950 + $0x200] sm:$0xff]
                  %1017 = vst [vmem:[%s951 + $0x100] sm:$0xff] %v1016
                  %v1018 = vld [vmem:[%s950 + $0x210] sm:$0xff]
                  %1019 = vst [vmem:[%s951 + $0x108] sm:$0xff] %v1018
                  %v1020 = vld [vmem:[%s950 + $0x220] sm:$0xff]
                  %1021 = vst [vmem:[%s951 + $0x110] sm:$0xff] %v1020
                  %v1022 = vld [vmem:[%s950 + $0x230] sm:$0xff]
                  %1023 = vst [vmem:[%s951 + $0x118] sm:$0xff] %v1022
                  %v1024 = vld [vmem:[%s950 + $0x240] sm:$0xff]
                  %1025 = vst [vmem:[%s951 + $0x120] sm:$0xff] %v1024
                  %v1026 = vld [vmem:[%s950 + $0x250] sm:$0xff]
                  %1027 = vst [vmem:[%s951 + $0x128] sm:$0xff] %v1026
                  %v1028 = vld [vmem:[%s950 + $0x260] sm:$0xff]
                  %1029 = vst [vmem:[%s951 + $0x130] sm:$0xff] %v1028
                  %v1030 = vld [vmem:[%s950 + $0x270] sm:$0xff]
                  %1031 = vst [vmem:[%s951 + $0x138] sm:$0xff] %v1030
                  %v1032 = vld [vmem:[%s950 + $0x280] sm:$0xff]
                  %1033 = vst [vmem:[%s951 + $0x140] sm:$0xff] %v1032
                  %v1034 = vld [vmem:[%s950 + $0x290] sm:$0xff]
                  %1035 = vst [vmem:[%s951 + $0x148] sm:$0xff] %v1034
                  %v1036 = vld [vmem:[%s950 + $0x2a0] sm:$0xff]
                  %1037 = vst [vmem:[%s951 + $0x150] sm:$0xff] %v1036
                  %v1038 = vld [vmem:[%s950 + $0x2b0] sm:$0xff]
                  %1039 = vst [vmem:[%s951 + $0x158] sm:$0xff] %v1038
                  %v1040 = vld [vmem:[%s950 + $0x2c0] sm:$0xff]
                  %1041 = vst [vmem:[%s951 + $0x160] sm:$0xff] %v1040
                  %v1042 = vld [vmem:[%s950 + $0x2d0] sm:$0xff]
                  %1043 = vst [vmem:[%s951 + $0x168] sm:$0xff] %v1042
                  %v1044 = vld [vmem:[%s950 + $0x2e0] sm:$0xff]
                  %1045 = vst [vmem:[%s951 + $0x170] sm:$0xff] %v1044
                  %v1046 = vld [vmem:[%s950 + $0x2f0] sm:$0xff]
                  %1047 = vst [vmem:[%s951 + $0x178] sm:$0xff] %v1046
                  %v1048 = vld [vmem:[%s950 + $0x300] sm:$0xff]
                  %1049 = vst [vmem:[%s951 + $0x180] sm:$0xff] %v1048
                  %v1050 = vld [vmem:[%s950 + $0x310] sm:$0xff]
                  %1051 = vst [vmem:[%s951 + $0x188] sm:$0xff] %v1050
                  %v1052 = vld [vmem:[%s950 + $0x320] sm:$0xff]
                  %1053 = vst [vmem:[%s951 + $0x190] sm:$0xff] %v1052
                  %v1054 = vld [vmem:[%s950 + $0x330] sm:$0xff]
                  %1055 = vst [vmem:[%s951 + $0x198] sm:$0xff] %v1054
                  %v1056 = vld [vmem:[%s950 + $0x340] sm:$0xff]
                  %1057 = vst [vmem:[%s951 + $0x1a0] sm:$0xff] %v1056
                  %v1058 = vld [vmem:[%s950 + $0x350] sm:$0xff]
                  %1059 = vst [vmem:[%s951 + $0x1a8] sm:$0xff] %v1058
                  %v1060 = vld [vmem:[%s950 + $0x360] sm:$0xff]
                  %1061 = vst [vmem:[%s951 + $0x1b0] sm:$0xff] %v1060
                  %v1062 = vld [vmem:[%s950 + $0x370] sm:$0xff]
                  %1063 = vst [vmem:[%s951 + $0x1b8] sm:$0xff] %v1062
                  %v1064 = vld [vmem:[%s950 + $0x380] sm:$0xff]
                  %1065 = vst [vmem:[%s951 + $0x1c0] sm:$0xff] %v1064
                  %v1066 = vld [vmem:[%s950 + $0x390] sm:$0xff]
                  %1067 = vst [vmem:[%s951 + $0x1c8] sm:$0xff] %v1066
                  %v1068 = vld [vmem:[%s950 + $0x3a0] sm:$0xff]
                  %1069 = vst [vmem:[%s951 + $0x1d0] sm:$0xff] %v1068
                  %v1070 = vld [vmem:[%s950 + $0x3b0] sm:$0xff]
                  %1071 = vst [vmem:[%s951 + $0x1d8] sm:$0xff] %v1070
                  %v1072 = vld [vmem:[%s950 + $0x3c0] sm:$0xff]
                  %1073 = vst [vmem:[%s951 + $0x1e0] sm:$0xff] %v1072
                  %v1074 = vld [vmem:[%s950 + $0x3d0] sm:$0xff]
                  %1075 = vst [vmem:[%s951 + $0x1e8] sm:$0xff] %v1074
                  %v1076 = vld [vmem:[%s950 + $0x3e0] sm:$0xff]
                  %1077 = vst [vmem:[%s951 + $0x1f0] sm:$0xff] %v1076
                  %v1078 = vld [vmem:[%s950 + $0x3f0] sm:$0xff]
                  %1079 = vst [vmem:[%s951 + $0x1f8] sm:$0xff] %v1078
                  %v1080 = vld [vmem:[%s950 + $0x400] sm:$0xff]
                  %1081 = vst [vmem:[%s951 + $0x200] sm:$0xff] %v1080
                  %v1082 = vld [vmem:[%s950 + $0x410] sm:$0xff]
                  %1083 = vst [vmem:[%s951 + $0x208] sm:$0xff] %v1082
                  %v1084 = vld [vmem:[%s950 + $0x420] sm:$0xff]
                  %1085 = vst [vmem:[%s951 + $0x210] sm:$0xff] %v1084
                  %v1086 = vld [vmem:[%s950 + $0x430] sm:$0xff]
                  %1087 = vst [vmem:[%s951 + $0x218] sm:$0xff] %v1086
                  %v1088 = vld [vmem:[%s950 + $0x440] sm:$0xff]
                  %1089 = vst [vmem:[%s951 + $0x220] sm:$0xff] %v1088
                  %v1090 = vld [vmem:[%s950 + $0x450] sm:$0xff]
                  %1091 = vst [vmem:[%s951 + $0x228] sm:$0xff] %v1090
                  %v1092 = vld [vmem:[%s950 + $0x460] sm:$0xff]
                  %1093 = vst [vmem:[%s951 + $0x230] sm:$0xff] %v1092
                  %v1094 = vld [vmem:[%s950 + $0x470] sm:$0xff]
                  %1095 = vst [vmem:[%s951 + $0x238] sm:$0xff] %v1094
                  %v1096 = vld [vmem:[%s950 + $0x480] sm:$0xff]
                  %1097 = vst [vmem:[%s951 + $0x240] sm:$0xff] %v1096
                  %v1098 = vld [vmem:[%s950 + $0x490] sm:$0xff]
                  %1099 = vst [vmem:[%s951 + $0x248] sm:$0xff] %v1098
                  %v1100 = vld [vmem:[%s950 + $0x4a0] sm:$0xff]
                  %1101 = vst [vmem:[%s951 + $0x250] sm:$0xff] %v1100
                  %v1102 = vld [vmem:[%s950 + $0x4b0] sm:$0xff]
                  %1103 = vst [vmem:[%s951 + $0x258] sm:$0xff] %v1102
                  %v1104 = vld [vmem:[%s950 + $0x4c0] sm:$0xff]
                  %1105 = vst [vmem:[%s951 + $0x260] sm:$0xff] %v1104
                  %v1106 = vld [vmem:[%s950 + $0x4d0] sm:$0xff]
                  %1107 = vst [vmem:[%s951 + $0x268] sm:$0xff] %v1106
                  %v1108 = vld [vmem:[%s950 + $0x4e0] sm:$0xff]
                  %1109 = vst [vmem:[%s951 + $0x270] sm:$0xff] %v1108
                  %v1110 = vld [vmem:[%s950 + $0x4f0] sm:$0xff]
                  %1111 = vst [vmem:[%s951 + $0x278] sm:$0xff] %v1110
                  %v1112 = vld [vmem:[%s950 + $0x500] sm:$0xff]
                  %1113 = vst [vmem:[%s951 + $0x280] sm:$0xff] %v1112
                  %v1114 = vld [vmem:[%s950 + $0x510] sm:$0xff]
                  %1115 = vst [vmem:[%s951 + $0x288] sm:$0xff] %v1114
                  %v1116 = vld [vmem:[%s950 + $0x520] sm:$0xff]
                  %1117 = vst [vmem:[%s951 + $0x290] sm:$0xff] %v1116
                  %v1118 = vld [vmem:[%s950 + $0x530] sm:$0xff]
                  %1119 = vst [vmem:[%s951 + $0x298] sm:$0xff] %v1118
                  %v1120 = vld [vmem:[%s950 + $0x540] sm:$0xff]
                  %1121 = vst [vmem:[%s951 + $0x2a0] sm:$0xff] %v1120
                  %v1122 = vld [vmem:[%s950 + $0x550] sm:$0xff]
                  %1123 = vst [vmem:[%s951 + $0x2a8] sm:$0xff] %v1122
                  %v1124 = vld [vmem:[%s950 + $0x560] sm:$0xff]
                  %1125 = vst [vmem:[%s951 + $0x2b0] sm:$0xff] %v1124
                  %v1126 = vld [vmem:[%s950 + $0x570] sm:$0xff]
                  %1127 = vst [vmem:[%s951 + $0x2b8] sm:$0xff] %v1126
                  %v1128 = vld [vmem:[%s950 + $0x580] sm:$0xff]
                  %1129 = vst [vmem:[%s951 + $0x2c0] sm:$0xff] %v1128
                  %v1130 = vld [vmem:[%s950 + $0x590] sm:$0xff]
                  %1131 = vst [vmem:[%s951 + $0x2c8] sm:$0xff] %v1130
                  %v1132 = vld [vmem:[%s950 + $0x5a0] sm:$0xff]
                  %1133 = vst [vmem:[%s951 + $0x2d0] sm:$0xff] %v1132
                  %v1134 = vld [vmem:[%s950 + $0x5b0] sm:$0xff]
                  %1135 = vst [vmem:[%s951 + $0x2d8] sm:$0xff] %v1134
                  %v1136 = vld [vmem:[%s950 + $0x5c0] sm:$0xff]
                  %1137 = vst [vmem:[%s951 + $0x2e0] sm:$0xff] %v1136
                  %v1138 = vld [vmem:[%s950 + $0x5d0] sm:$0xff]
                  %1139 = vst [vmem:[%s951 + $0x2e8] sm:$0xff] %v1138
                  %v1140 = vld [vmem:[%s950 + $0x5e0] sm:$0xff]
                  %1141 = vst [vmem:[%s951 + $0x2f0] sm:$0xff] %v1140
                  %v1142 = vld [vmem:[%s950 + $0x5f0] sm:$0xff]
                  %1143 = vst [vmem:[%s951 + $0x2f8] sm:$0xff] %v1142
                  %v1144 = vld [vmem:[%s950 + $0x600] sm:$0xff]
                  %1145 = vst [vmem:[%s951 + $0x300] sm:$0xff] %v1144
                  %v1146 = vld [vmem:[%s950 + $0x610] sm:$0xff]
                  %1147 = vst [vmem:[%s951 + $0x308] sm:$0xff] %v1146
                  %v1148 = vld [vmem:[%s950 + $0x620] sm:$0xff]
                  %1149 = vst [vmem:[%s951 + $0x310] sm:$0xff] %v1148
                  %v1150 = vld [vmem:[%s950 + $0x630] sm:$0xff]
                  %1151 = vst [vmem:[%s951 + $0x318] sm:$0xff] %v1150
                  %v1152 = vld [vmem:[%s950 + $0x640] sm:$0xff]
                  %1153 = vst [vmem:[%s951 + $0x320] sm:$0xff] %v1152
                  %v1154 = vld [vmem:[%s950 + $0x650] sm:$0xff]
                  %1155 = vst [vmem:[%s951 + $0x328] sm:$0xff] %v1154
                  %v1156 = vld [vmem:[%s950 + $0x660] sm:$0xff]
                  %1157 = vst [vmem:[%s951 + $0x330] sm:$0xff] %v1156
                  %v1158 = vld [vmem:[%s950 + $0x670] sm:$0xff]
                  %1159 = vst [vmem:[%s951 + $0x338] sm:$0xff] %v1158
                  %v1160 = vld [vmem:[%s950 + $0x680] sm:$0xff]
                  %1161 = vst [vmem:[%s951 + $0x340] sm:$0xff] %v1160
                  %v1162 = vld [vmem:[%s950 + $0x690] sm:$0xff]
                  %1163 = vst [vmem:[%s951 + $0x348] sm:$0xff] %v1162
                  %v1164 = vld [vmem:[%s950 + $0x6a0] sm:$0xff]
                  %1165 = vst [vmem:[%s951 + $0x350] sm:$0xff] %v1164
                  %v1166 = vld [vmem:[%s950 + $0x6b0] sm:$0xff]
                  %1167 = vst [vmem:[%s951 + $0x358] sm:$0xff] %v1166
                  %v1168 = vld [vmem:[%s950 + $0x6c0] sm:$0xff]
                  %1169 = vst [vmem:[%s951 + $0x360] sm:$0xff] %v1168
                  %v1170 = vld [vmem:[%s950 + $0x6d0] sm:$0xff]
                  %1171 = vst [vmem:[%s951 + $0x368] sm:$0xff] %v1170
                  %v1172 = vld [vmem:[%s950 + $0x6e0] sm:$0xff]
                  %1173 = vst [vmem:[%s951 + $0x370] sm:$0xff] %v1172
                  %v1174 = vld [vmem:[%s950 + $0x6f0] sm:$0xff]
                  %1175 = vst [vmem:[%s951 + $0x378] sm:$0xff] %v1174
                  %v1176 = vld [vmem:[%s950 + $0x700] sm:$0xff]
                  %1177 = vst [vmem:[%s951 + $0x380] sm:$0xff] %v1176
                  %v1178 = vld [vmem:[%s950 + $0x710] sm:$0xff]
                  %1179 = vst [vmem:[%s951 + $0x388] sm:$0xff] %v1178
                  %v1180 = vld [vmem:[%s950 + $0x720] sm:$0xff]
                  %1181 = vst [vmem:[%s951 + $0x390] sm:$0xff] %v1180
                  %v1182 = vld [vmem:[%s950 + $0x730] sm:$0xff]
                  %1183 = vst [vmem:[%s951 + $0x398] sm:$0xff] %v1182
                  %v1184 = vld [vmem:[%s950 + $0x740] sm:$0xff]
                  %1185 = vst [vmem:[%s951 + $0x3a0] sm:$0xff] %v1184
                  %v1186 = vld [vmem:[%s950 + $0x750] sm:$0xff]
                  %1187 = vst [vmem:[%s951 + $0x3a8] sm:$0xff] %v1186
                  %v1188 = vld [vmem:[%s950 + $0x760] sm:$0xff]
                  %1189 = vst [vmem:[%s951 + $0x3b0] sm:$0xff] %v1188
                  %v1190 = vld [vmem:[%s950 + $0x770] sm:$0xff]
                  %1191 = vst [vmem:[%s951 + $0x3b8] sm:$0xff] %v1190
                  %v1192 = vld [vmem:[%s950 + $0x780] sm:$0xff]
                  %1193 = vst [vmem:[%s951 + $0x3c0] sm:$0xff] %v1192
                  %v1194 = vld [vmem:[%s950 + $0x790] sm:$0xff]
                  %1195 = vst [vmem:[%s951 + $0x3c8] sm:$0xff] %v1194
                  %v1196 = vld [vmem:[%s950 + $0x7a0] sm:$0xff]
                  %1197 = vst [vmem:[%s951 + $0x3d0] sm:$0xff] %v1196
                  %v1198 = vld [vmem:[%s950 + $0x7b0] sm:$0xff]
                  %1199 = vst [vmem:[%s951 + $0x3d8] sm:$0xff] %v1198
                  %v1200 = vld [vmem:[%s950 + $0x7c0] sm:$0xff]
                  %1201 = vst [vmem:[%s951 + $0x3e0] sm:$0xff] %v1200
                  %v1202 = vld [vmem:[%s950 + $0x7d0] sm:$0xff]
                  %1203 = vst [vmem:[%s951 + $0x3e8] sm:$0xff] %v1202
                  %v1204 = vld [vmem:[%s950 + $0x7e0] sm:$0xff]
                  %1205 = vst [vmem:[%s951 + $0x3f0] sm:$0xff] %v1204
                  %v1206 = vld [vmem:[%s950 + $0x7f0] sm:$0xff]
                  %1207 = vst [vmem:[%s951 + $0x3f8] sm:$0xff] %v1206
                  %v1208 = vld [vmem:[%s950 + $0x800] sm:$0xff]
                  %1209 = vst [vmem:[%s951 + $0x400] sm:$0xff] %v1208
                  %v1210 = vld [vmem:[%s950 + $0x810] sm:$0xff]
                  %1211 = vst [vmem:[%s951 + $0x408] sm:$0xff] %v1210
                  %v1212 = vld [vmem:[%s950 + $0x820] sm:$0xff]
                  %1213 = vst [vmem:[%s951 + $0x410] sm:$0xff] %v1212
                  %v1214 = vld [vmem:[%s950 + $0x830] sm:$0xff]
                  %1215 = vst [vmem:[%s951 + $0x418] sm:$0xff] %v1214
                  %v1216 = vld [vmem:[%s950 + $0x840] sm:$0xff]
                  %1217 = vst [vmem:[%s951 + $0x420] sm:$0xff] %v1216
                  %v1218 = vld [vmem:[%s950 + $0x850] sm:$0xff]
                  %1219 = vst [vmem:[%s951 + $0x428] sm:$0xff] %v1218
                  %v1220 = vld [vmem:[%s950 + $0x860] sm:$0xff]
                  %1221 = vst [vmem:[%s951 + $0x430] sm:$0xff] %v1220
                  %v1222 = vld [vmem:[%s950 + $0x870] sm:$0xff]
                  %1223 = vst [vmem:[%s951 + $0x438] sm:$0xff] %v1222
                  %v1224 = vld [vmem:[%s950 + $0x880] sm:$0xff]
                  %1225 = vst [vmem:[%s951 + $0x440] sm:$0xff] %v1224
                  %v1226 = vld [vmem:[%s950 + $0x890] sm:$0xff]
                  %1227 = vst [vmem:[%s951 + $0x448] sm:$0xff] %v1226
                  %v1228 = vld [vmem:[%s950 + $0x8a0] sm:$0xff]
                  %1229 = vst [vmem:[%s951 + $0x450] sm:$0xff] %v1228
                  %v1230 = vld [vmem:[%s950 + $0x8b0] sm:$0xff]
                  %1231 = vst [vmem:[%s951 + $0x458] sm:$0xff] %v1230
                  %v1232 = vld [vmem:[%s950 + $0x8c0] sm:$0xff]
                  %1233 = vst [vmem:[%s951 + $0x460] sm:$0xff] %v1232
                  %v1234 = vld [vmem:[%s950 + $0x8d0] sm:$0xff]
                  %1235 = vst [vmem:[%s951 + $0x468] sm:$0xff] %v1234
                  %v1236 = vld [vmem:[%s950 + $0x8e0] sm:$0xff]
                  %1237 = vst [vmem:[%s951 + $0x470] sm:$0xff] %v1236
                  %v1238 = vld [vmem:[%s950 + $0x8f0] sm:$0xff]
                  %1239 = vst [vmem:[%s951 + $0x478] sm:$0xff] %v1238
                  %v1240 = vld [vmem:[%s950 + $0x900] sm:$0xff]
                  %1241 = vst [vmem:[%s951 + $0x480] sm:$0xff] %v1240
                  %v1242 = vld [vmem:[%s950 + $0x910] sm:$0xff]
                  %1243 = vst [vmem:[%s951 + $0x488] sm:$0xff] %v1242
                  %v1244 = vld [vmem:[%s950 + $0x920] sm:$0xff]
                  %1245 = vst [vmem:[%s951 + $0x490] sm:$0xff] %v1244
                  %v1246 = vld [vmem:[%s950 + $0x930] sm:$0xff]
                  %1247 = vst [vmem:[%s951 + $0x498] sm:$0xff] %v1246
                  %v1248 = vld [vmem:[%s950 + $0x940] sm:$0xff]
                  %1249 = vst [vmem:[%s951 + $0x4a0] sm:$0xff] %v1248
                  %v1250 = vld [vmem:[%s950 + $0x950] sm:$0xff]
                  %1251 = vst [vmem:[%s951 + $0x4a8] sm:$0xff] %v1250
                  %v1252 = vld [vmem:[%s950 + $0x960] sm:$0xff]
                  %1253 = vst [vmem:[%s951 + $0x4b0] sm:$0xff] %v1252
                  %v1254 = vld [vmem:[%s950 + $0x970] sm:$0xff]
                  %1255 = vst [vmem:[%s951 + $0x4b8] sm:$0xff] %v1254
                  %v1256 = vld [vmem:[%s950 + $0x980] sm:$0xff]
                  %1257 = vst [vmem:[%s951 + $0x4c0] sm:$0xff] %v1256
                  %v1258 = vld [vmem:[%s950 + $0x990] sm:$0xff]
                  %1259 = vst [vmem:[%s951 + $0x4c8] sm:$0xff] %v1258
                  %v1260 = vld [vmem:[%s950 + $0x9a0] sm:$0xff]
                  %1261 = vst [vmem:[%s951 + $0x4d0] sm:$0xff] %v1260
                  %v1262 = vld [vmem:[%s950 + $0x9b0] sm:$0xff]
                  %1263 = vst [vmem:[%s951 + $0x4d8] sm:$0xff] %v1262
                  %v1264 = vld [vmem:[%s950 + $0x9c0] sm:$0xff]
                  %1265 = vst [vmem:[%s951 + $0x4e0] sm:$0xff] %v1264
                  %v1266 = vld [vmem:[%s950 + $0x9d0] sm:$0xff]
                  %1267 = vst [vmem:[%s951 + $0x4e8] sm:$0xff] %v1266
                  %v1268 = vld [vmem:[%s950 + $0x9e0] sm:$0xff]
                  %1269 = vst [vmem:[%s951 + $0x4f0] sm:$0xff] %v1268
                  %v1270 = vld [vmem:[%s950 + $0x9f0] sm:$0xff]
                  %1271 = vst [vmem:[%s951 + $0x4f8] sm:$0xff] %v1270
                  %v1272 = vld [vmem:[%s950 + $0xa00] sm:$0xff]
                  %1273 = vst [vmem:[%s951 + $0x500] sm:$0xff] %v1272
                  %v1274 = vld [vmem:[%s950 + $0xa10] sm:$0xff]
                  %1275 = vst [vmem:[%s951 + $0x508] sm:$0xff] %v1274
                  %v1276 = vld [vmem:[%s950 + $0xa20] sm:$0xff]
                  %1277 = vst [vmem:[%s951 + $0x510] sm:$0xff] %v1276
                  %v1278 = vld [vmem:[%s950 + $0xa30] sm:$0xff]
                  %1279 = vst [vmem:[%s951 + $0x518] sm:$0xff] %v1278
                  %v1280 = vld [vmem:[%s950 + $0xa40] sm:$0xff]
                  %1281 = vst [vmem:[%s951 + $0x520] sm:$0xff] %v1280
                  %v1282 = vld [vmem:[%s950 + $0xa50] sm:$0xff]
                  %1283 = vst [vmem:[%s951 + $0x528] sm:$0xff] %v1282
                  %v1284 = vld [vmem:[%s950 + $0xa60] sm:$0xff]
                  %1285 = vst [vmem:[%s951 + $0x530] sm:$0xff] %v1284
                  %v1286 = vld [vmem:[%s950 + $0xa70] sm:$0xff]
                  %1287 = vst [vmem:[%s951 + $0x538] sm:$0xff] %v1286
                  %v1288 = vld [vmem:[%s950 + $0xa80] sm:$0xff]
                  %1289 = vst [vmem:[%s951 + $0x540] sm:$0xff] %v1288
                  %v1290 = vld [vmem:[%s950 + $0xa90] sm:$0xff]
                  %1291 = vst [vmem:[%s951 + $0x548] sm:$0xff] %v1290
                  %v1292 = vld [vmem:[%s950 + $0xaa0] sm:$0xff]
                  %1293 = vst [vmem:[%s951 + $0x550] sm:$0xff] %v1292
                  %v1294 = vld [vmem:[%s950 + $0xab0] sm:$0xff]
                  %1295 = vst [vmem:[%s951 + $0x558] sm:$0xff] %v1294
                  %v1296 = vld [vmem:[%s950 + $0xac0] sm:$0xff]
                  %1297 = vst [vmem:[%s951 + $0x560] sm:$0xff] %v1296
                  %v1298 = vld [vmem:[%s950 + $0xad0] sm:$0xff]
                  %1299 = vst [vmem:[%s951 + $0x568] sm:$0xff] %v1298
                  %v1300 = vld [vmem:[%s950 + $0xae0] sm:$0xff]
                  %1301 = vst [vmem:[%s951 + $0x570] sm:$0xff] %v1300
                  %v1302 = vld [vmem:[%s950 + $0xaf0] sm:$0xff]
                  %1303 = vst [vmem:[%s951 + $0x578] sm:$0xff] %v1302
                  %v1304 = vld [vmem:[%s950 + $0xb00] sm:$0xff]
                  %1305 = vst [vmem:[%s951 + $0x580] sm:$0xff] %v1304
                  %v1306 = vld [vmem:[%s950 + $0xb10] sm:$0xff]
                  %1307 = vst [vmem:[%s951 + $0x588] sm:$0xff] %v1306
                  %v1308 = vld [vmem:[%s950 + $0xb20] sm:$0xff]
                  %1309 = vst [vmem:[%s951 + $0x590] sm:$0xff] %v1308
                  %v1310 = vld [vmem:[%s950 + $0xb30] sm:$0xff]
                  %1311 = vst [vmem:[%s951 + $0x598] sm:$0xff] %v1310
                  %v1312 = vld [vmem:[%s950 + $0xb40] sm:$0xff]
                  %1313 = vst [vmem:[%s951 + $0x5a0] sm:$0xff] %v1312
                  %v1314 = vld [vmem:[%s950 + $0xb50] sm:$0xff]
                  %1315 = vst [vmem:[%s951 + $0x5a8] sm:$0xff] %v1314
                  %v1316 = vld [vmem:[%s950 + $0xb60] sm:$0xff]
                  %1317 = vst [vmem:[%s951 + $0x5b0] sm:$0xff] %v1316
                  %v1318 = vld [vmem:[%s950 + $0xb70] sm:$0xff]
                  %1319 = vst [vmem:[%s951 + $0x5b8] sm:$0xff] %v1318
                  %v1320 = vld [vmem:[%s950 + $0xb80] sm:$0xff]
                  %1321 = vst [vmem:[%s951 + $0x5c0] sm:$0xff] %v1320
                  %v1322 = vld [vmem:[%s950 + $0xb90] sm:$0xff]
                  %1323 = vst [vmem:[%s951 + $0x5c8] sm:$0xff] %v1322
                  %v1324 = vld [vmem:[%s950 + $0xba0] sm:$0xff]
                  %1325 = vst [vmem:[%s951 + $0x5d0] sm:$0xff] %v1324
                  %v1326 = vld [vmem:[%s950 + $0xbb0] sm:$0xff]
                  %1327 = vst [vmem:[%s951 + $0x5d8] sm:$0xff] %v1326
                  %v1328 = vld [vmem:[%s950 + $0xbc0] sm:$0xff]
                  %1329 = vst [vmem:[%s951 + $0x5e0] sm:$0xff] %v1328
                  %v1330 = vld [vmem:[%s950 + $0xbd0] sm:$0xff]
                  %1331 = vst [vmem:[%s951 + $0x5e8] sm:$0xff] %v1330
                  %v1332 = vld [vmem:[%s950 + $0xbe0] sm:$0xff]
                  %1333 = vst [vmem:[%s951 + $0x5f0] sm:$0xff] %v1332
                  %v1334 = vld [vmem:[%s950 + $0xbf0] sm:$0xff]
                  %1335 = vst [vmem:[%s951 + $0x5f8] sm:$0xff] %v1334
                  %v1336 = vld [vmem:[%s950 + $0xc00] sm:$0xff]
                  %1337 = vst [vmem:[%s951 + $0x600] sm:$0xff] %v1336
                  %v1338 = vld [vmem:[%s950 + $0xc10] sm:$0xff]
                  %1339 = vst [vmem:[%s951 + $0x608] sm:$0xff] %v1338
                  %v1340 = vld [vmem:[%s950 + $0xc20] sm:$0xff]
                  %1341 = vst [vmem:[%s951 + $0x610] sm:$0xff] %v1340
                  %v1342 = vld [vmem:[%s950 + $0xc30] sm:$0xff]
                  %1343 = vst [vmem:[%s951 + $0x618] sm:$0xff] %v1342
                  %v1344 = vld [vmem:[%s950 + $0xc40] sm:$0xff]
                  %1345 = vst [vmem:[%s951 + $0x620] sm:$0xff] %v1344
                  %v1346 = vld [vmem:[%s950 + $0xc50] sm:$0xff]
                  %1347 = vst [vmem:[%s951 + $0x628] sm:$0xff] %v1346
                  %v1348 = vld [vmem:[%s950 + $0xc60] sm:$0xff]
                  %1349 = vst [vmem:[%s951 + $0x630] sm:$0xff] %v1348
                  %v1350 = vld [vmem:[%s950 + $0xc70] sm:$0xff]
                  %1351 = vst [vmem:[%s951 + $0x638] sm:$0xff] %v1350
                  %v1352 = vld [vmem:[%s950 + $0xc80] sm:$0xff]
                  %1353 = vst [vmem:[%s951 + $0x640] sm:$0xff] %v1352
                  %v1354 = vld [vmem:[%s950 + $0xc90] sm:$0xff]
                  %1355 = vst [vmem:[%s951 + $0x648] sm:$0xff] %v1354
                  %v1356 = vld [vmem:[%s950 + $0xca0] sm:$0xff]
                  %1357 = vst [vmem:[%s951 + $0x650] sm:$0xff] %v1356
                  %v1358 = vld [vmem:[%s950 + $0xcb0] sm:$0xff]
                  %1359 = vst [vmem:[%s951 + $0x658] sm:$0xff] %v1358
                  %v1360 = vld [vmem:[%s950 + $0xcc0] sm:$0xff]
                  %1361 = vst [vmem:[%s951 + $0x660] sm:$0xff] %v1360
                  %v1362 = vld [vmem:[%s950 + $0xcd0] sm:$0xff]
                  %1363 = vst [vmem:[%s951 + $0x668] sm:$0xff] %v1362
                  %v1364 = vld [vmem:[%s950 + $0xce0] sm:$0xff]
                  %1365 = vst [vmem:[%s951 + $0x670] sm:$0xff] %v1364
                  %v1366 = vld [vmem:[%s950 + $0xcf0] sm:$0xff]
                  %1367 = vst [vmem:[%s951 + $0x678] sm:$0xff] %v1366
                  %v1368 = vld [vmem:[%s950 + $0xd00] sm:$0xff]
                  %1369 = vst [vmem:[%s951 + $0x680] sm:$0xff] %v1368
                  %v1370 = vld [vmem:[%s950 + $0xd10] sm:$0xff]
                  %1371 = vst [vmem:[%s951 + $0x688] sm:$0xff] %v1370
                  %v1372 = vld [vmem:[%s950 + $0xd20] sm:$0xff]
                  %1373 = vst [vmem:[%s951 + $0x690] sm:$0xff] %v1372
                  %v1374 = vld [vmem:[%s950 + $0xd30] sm:$0xff]
                  %1375 = vst [vmem:[%s951 + $0x698] sm:$0xff] %v1374
                  %v1376 = vld [vmem:[%s950 + $0xd40] sm:$0xff]
                  %1377 = vst [vmem:[%s951 + $0x6a0] sm:$0xff] %v1376
                  %v1378 = vld [vmem:[%s950 + $0xd50] sm:$0xff]
                  %1379 = vst [vmem:[%s951 + $0x6a8] sm:$0xff] %v1378
                  %v1380 = vld [vmem:[%s950 + $0xd60] sm:$0xff]
                  %1381 = vst [vmem:[%s951 + $0x6b0] sm:$0xff] %v1380
                  %v1382 = vld [vmem:[%s950 + $0xd70] sm:$0xff]
                  %1383 = vst [vmem:[%s951 + $0x6b8] sm:$0xff] %v1382
                  %v1384 = vld [vmem:[%s950 + $0xd80] sm:$0xff]
                  %1385 = vst [vmem:[%s951 + $0x6c0] sm:$0xff] %v1384
                  %v1386 = vld [vmem:[%s950 + $0xd90] sm:$0xff]
                  %1387 = vst [vmem:[%s951 + $0x6c8] sm:$0xff] %v1386
                  %v1388 = vld [vmem:[%s950 + $0xda0] sm:$0xff]
                  %1389 = vst [vmem:[%s951 + $0x6d0] sm:$0xff] %v1388
                  %v1390 = vld [vmem:[%s950 + $0xdb0] sm:$0xff]
                  %1391 = vst [vmem:[%s951 + $0x6d8] sm:$0xff] %v1390
                  %v1392 = vld [vmem:[%s950 + $0xdc0] sm:$0xff]
                  %1393 = vst [vmem:[%s951 + $0x6e0] sm:$0xff] %v1392
                  %v1394 = vld [vmem:[%s950 + $0xdd0] sm:$0xff]
                  %1395 = vst [vmem:[%s951 + $0x6e8] sm:$0xff] %v1394
                  %v1396 = vld [vmem:[%s950 + $0xde0] sm:$0xff]
                  %1397 = vst [vmem:[%s951 + $0x6f0] sm:$0xff] %v1396
                  %v1398 = vld [vmem:[%s950 + $0xdf0] sm:$0xff]
                  %1399 = vst [vmem:[%s951 + $0x6f8] sm:$0xff] %v1398
                  %v1400 = vld [vmem:[%s950 + $0xe00] sm:$0xff]
                  %1401 = vst [vmem:[%s951 + $0x700] sm:$0xff] %v1400
                  %v1402 = vld [vmem:[%s950 + $0xe10] sm:$0xff]
                  %1403 = vst [vmem:[%s951 + $0x708] sm:$0xff] %v1402
                  %v1404 = vld [vmem:[%s950 + $0xe20] sm:$0xff]
                  %1405 = vst [vmem:[%s951 + $0x710] sm:$0xff] %v1404
                  %v1406 = vld [vmem:[%s950 + $0xe30] sm:$0xff]
                  %1407 = vst [vmem:[%s951 + $0x718] sm:$0xff] %v1406
                  %v1408 = vld [vmem:[%s950 + $0xe40] sm:$0xff]
                  %1409 = vst [vmem:[%s951 + $0x720] sm:$0xff] %v1408
                  %v1410 = vld [vmem:[%s950 + $0xe50] sm:$0xff]
                  %1411 = vst [vmem:[%s951 + $0x728] sm:$0xff] %v1410
                  %v1412 = vld [vmem:[%s950 + $0xe60] sm:$0xff]
                  %1413 = vst [vmem:[%s951 + $0x730] sm:$0xff] %v1412
                  %v1414 = vld [vmem:[%s950 + $0xe70] sm:$0xff]
                  %1415 = vst [vmem:[%s951 + $0x738] sm:$0xff] %v1414
                  %v1416 = vld [vmem:[%s950 + $0xe80] sm:$0xff]
                  %1417 = vst [vmem:[%s951 + $0x740] sm:$0xff] %v1416
                  %v1418 = vld [vmem:[%s950 + $0xe90] sm:$0xff]
                  %1419 = vst [vmem:[%s951 + $0x748] sm:$0xff] %v1418
                  %v1420 = vld [vmem:[%s950 + $0xea0] sm:$0xff]
                  %1421 = vst [vmem:[%s951 + $0x750] sm:$0xff] %v1420
                  %v1422 = vld [vmem:[%s950 + $0xeb0] sm:$0xff]
                  %1423 = vst [vmem:[%s951 + $0x758] sm:$0xff] %v1422
                  %v1424 = vld [vmem:[%s950 + $0xec0] sm:$0xff]
                  %1425 = vst [vmem:[%s951 + $0x760] sm:$0xff] %v1424
                  %v1426 = vld [vmem:[%s950 + $0xed0] sm:$0xff]
                  %1427 = vst [vmem:[%s951 + $0x768] sm:$0xff] %v1426
                  %v1428 = vld [vmem:[%s950 + $0xee0] sm:$0xff]
                  %1429 = vst [vmem:[%s951 + $0x770] sm:$0xff] %v1428
                  %v1430 = vld [vmem:[%s950 + $0xef0] sm:$0xff]
                  %1431 = vst [vmem:[%s951 + $0x778] sm:$0xff] %v1430
                  %v1432 = vld [vmem:[%s950 + $0xf00] sm:$0xff]
                  %1433 = vst [vmem:[%s951 + $0x780] sm:$0xff] %v1432
                  %v1434 = vld [vmem:[%s950 + $0xf10] sm:$0xff]
                  %1435 = vst [vmem:[%s951 + $0x788] sm:$0xff] %v1434
                  %v1436 = vld [vmem:[%s950 + $0xf20] sm:$0xff]
                  %1437 = vst [vmem:[%s951 + $0x790] sm:$0xff] %v1436
                  %v1438 = vld [vmem:[%s950 + $0xf30] sm:$0xff]
                  %1439 = vst [vmem:[%s951 + $0x798] sm:$0xff] %v1438
                  %v1440 = vld [vmem:[%s950 + $0xf40] sm:$0xff]
                  %1441 = vst [vmem:[%s951 + $0x7a0] sm:$0xff] %v1440
                  %v1442 = vld [vmem:[%s950 + $0xf50] sm:$0xff]
                  %1443 = vst [vmem:[%s951 + $0x7a8] sm:$0xff] %v1442
                  %v1444 = vld [vmem:[%s950 + $0xf60] sm:$0xff]
                  %1445 = vst [vmem:[%s951 + $0x7b0] sm:$0xff] %v1444
                  %v1446 = vld [vmem:[%s950 + $0xf70] sm:$0xff]
                  %1447 = vst [vmem:[%s951 + $0x7b8] sm:$0xff] %v1446
                  %v1448 = vld [vmem:[%s950 + $0xf80] sm:$0xff]
                  %1449 = vst [vmem:[%s951 + $0x7c0] sm:$0xff] %v1448
                  %v1450 = vld [vmem:[%s950 + $0xf90] sm:$0xff]
                  %1451 = vst [vmem:[%s951 + $0x7c8] sm:$0xff] %v1450
                  %v1452 = vld [vmem:[%s950 + $0xfa0] sm:$0xff]
                  %1453 = vst [vmem:[%s951 + $0x7d0] sm:$0xff] %v1452
                  %v1454 = vld [vmem:[%s950 + $0xfb0] sm:$0xff]
                  %1455 = vst [vmem:[%s951 + $0x7d8] sm:$0xff] %v1454
                  %v1456 = vld [vmem:[%s950 + $0xfc0] sm:$0xff]
                  %1457 = vst [vmem:[%s951 + $0x7e0] sm:$0xff] %v1456
                  %v1458 = vld [vmem:[%s950 + $0xfd0] sm:$0xff]
                  %1459 = vst [vmem:[%s951 + $0x7e8] sm:$0xff] %v1458
                  %v1460 = vld [vmem:[%s950 + $0xfe0] sm:$0xff]
                  %1461 = vst [vmem:[%s951 + $0x7f0] sm:$0xff] %v1460
                  %v1462 = vld [vmem:[%s950 + $0xff0] sm:$0xff]
                  %1463 = vst [vmem:[%s951 + $0x7f8] sm:$0xff] %v1462
                  %v1464 = vld [vmem:[%s950 + $0x1000] sm:$0xff]
                  %1465 = vst [vmem:[%s951 + $0x800] sm:$0xff] %v1464
                  %v1466 = vld [vmem:[%s950 + $0x1010] sm:$0xff]
                  %1467 = vst [vmem:[%s951 + $0x808] sm:$0xff] %v1466
                  %v1468 = vld [vmem:[%s950 + $0x1020] sm:$0xff]
                  %1469 = vst [vmem:[%s951 + $0x810] sm:$0xff] %v1468
                  %v1470 = vld [vmem:[%s950 + $0x1030] sm:$0xff]
                  %1471 = vst [vmem:[%s951 + $0x818] sm:$0xff] %v1470
                  %v1472 = vld [vmem:[%s950 + $0x1040] sm:$0xff]
                  %1473 = vst [vmem:[%s951 + $0x820] sm:$0xff] %v1472
                  %v1474 = vld [vmem:[%s950 + $0x1050] sm:$0xff]
                  %1475 = vst [vmem:[%s951 + $0x828] sm:$0xff] %v1474
                  %v1476 = vld [vmem:[%s950 + $0x1060] sm:$0xff]
                  %1477 = vst [vmem:[%s951 + $0x830] sm:$0xff] %v1476
                  %v1478 = vld [vmem:[%s950 + $0x1070] sm:$0xff]
                  %1479 = vst [vmem:[%s951 + $0x838] sm:$0xff] %v1478
                  %v1480 = vld [vmem:[%s950 + $0x1080] sm:$0xff]
                  %1481 = vst [vmem:[%s951 + $0x840] sm:$0xff] %v1480
                  %v1482 = vld [vmem:[%s950 + $0x1090] sm:$0xff]
                  %1483 = vst [vmem:[%s951 + $0x848] sm:$0xff] %v1482
                  %v1484 = vld [vmem:[%s950 + $0x10a0] sm:$0xff]
                  %1485 = vst [vmem:[%s951 + $0x850] sm:$0xff] %v1484
                  %v1486 = vld [vmem:[%s950 + $0x10b0] sm:$0xff]
                  %1487 = vst [vmem:[%s951 + $0x858] sm:$0xff] %v1486
                  %v1488 = vld [vmem:[%s950 + $0x10c0] sm:$0xff]
                  %1489 = vst [vmem:[%s951 + $0x860] sm:$0xff] %v1488
                  %v1490 = vld [vmem:[%s950 + $0x10d0] sm:$0xff]
                  %1491 = vst [vmem:[%s951 + $0x868] sm:$0xff] %v1490
                  %v1492 = vld [vmem:[%s950 + $0x10e0] sm:$0xff]
                  %1493 = vst [vmem:[%s951 + $0x870] sm:$0xff] %v1492
                  %v1494 = vld [vmem:[%s950 + $0x10f0] sm:$0xff]
                  %1495 = vst [vmem:[%s951 + $0x878] sm:$0xff] %v1494
                  %v1496 = vld [vmem:[%s950 + $0x1100] sm:$0xff]
                  %1497 = vst [vmem:[%s951 + $0x880] sm:$0xff] %v1496
                  %v1498 = vld [vmem:[%s950 + $0x1110] sm:$0xff]
                  %1499 = vst [vmem:[%s951 + $0x888] sm:$0xff] %v1498
                  %v1500 = vld [vmem:[%s950 + $0x1120] sm:$0xff]
                  %1501 = vst [vmem:[%s951 + $0x890] sm:$0xff] %v1500
                  %v1502 = vld [vmem:[%s950 + $0x1130] sm:$0xff]
                  %1503 = vst [vmem:[%s951 + $0x898] sm:$0xff] %v1502
                  %v1504 = vld [vmem:[%s950 + $0x1140] sm:$0xff]
                  %1505 = vst [vmem:[%s951 + $0x8a0] sm:$0xff] %v1504
                  %v1506 = vld [vmem:[%s950 + $0x1150] sm:$0xff]
                  %1507 = vst [vmem:[%s951 + $0x8a8] sm:$0xff] %v1506
                  %v1508 = vld [vmem:[%s950 + $0x1160] sm:$0xff]
                  %1509 = vst [vmem:[%s951 + $0x8b0] sm:$0xff] %v1508
                  %v1510 = vld [vmem:[%s950 + $0x1170] sm:$0xff]
                  %1511 = vst [vmem:[%s951 + $0x8b8] sm:$0xff] %v1510
                  %v1512 = vld [vmem:[%s950 + $0x1180] sm:$0xff]
                  %1513 = vst [vmem:[%s951 + $0x8c0] sm:$0xff] %v1512
                  %v1514 = vld [vmem:[%s950 + $0x1190] sm:$0xff]
                  %1515 = vst [vmem:[%s951 + $0x8c8] sm:$0xff] %v1514
                  %v1516 = vld [vmem:[%s950 + $0x11a0] sm:$0xff]
                  %1517 = vst [vmem:[%s951 + $0x8d0] sm:$0xff] %v1516
                  %v1518 = vld [vmem:[%s950 + $0x11b0] sm:$0xff]
                  %1519 = vst [vmem:[%s951 + $0x8d8] sm:$0xff] %v1518
                  %v1520 = vld [vmem:[%s950 + $0x11c0] sm:$0xff]
                  %1521 = vst [vmem:[%s951 + $0x8e0] sm:$0xff] %v1520
                  %v1522 = vld [vmem:[%s950 + $0x11d0] sm:$0xff]
                  %1523 = vst [vmem:[%s951 + $0x8e8] sm:$0xff] %v1522
                  %v1524 = vld [vmem:[%s950 + $0x11e0] sm:$0xff]
                  %1525 = vst [vmem:[%s951 + $0x8f0] sm:$0xff] %v1524
                  %v1526 = vld [vmem:[%s950 + $0x11f0] sm:$0xff]
                  %1527 = vst [vmem:[%s951 + $0x8f8] sm:$0xff] %v1526
                  %v1528 = vld [vmem:[%s950 + $0x1200] sm:$0xff]
                  %1529 = vst [vmem:[%s951 + $0x900] sm:$0xff] %v1528
                  %v1530 = vld [vmem:[%s950 + $0x1210] sm:$0xff]
                  %1531 = vst [vmem:[%s951 + $0x908] sm:$0xff] %v1530
                  %v1532 = vld [vmem:[%s950 + $0x1220] sm:$0xff]
                  %1533 = vst [vmem:[%s951 + $0x910] sm:$0xff] %v1532
                  %v1534 = vld [vmem:[%s950 + $0x1230] sm:$0xff]
                  %1535 = vst [vmem:[%s951 + $0x918] sm:$0xff] %v1534
                  %v1536 = vld [vmem:[%s950 + $0x1240] sm:$0xff]
                  %1537 = vst [vmem:[%s951 + $0x920] sm:$0xff] %v1536
                  %v1538 = vld [vmem:[%s950 + $0x1250] sm:$0xff]
                  %1539 = vst [vmem:[%s951 + $0x928] sm:$0xff] %v1538
                  %v1540 = vld [vmem:[%s950 + $0x1260] sm:$0xff]
                  %1541 = vst [vmem:[%s951 + $0x930] sm:$0xff] %v1540
                  %v1542 = vld [vmem:[%s950 + $0x1270] sm:$0xff]
                  %1543 = vst [vmem:[%s951 + $0x938] sm:$0xff] %v1542
                  %v1544 = vld [vmem:[%s950 + $0x1280] sm:$0xff]
                  %1545 = vst [vmem:[%s951 + $0x940] sm:$0xff] %v1544
                  %v1546 = vld [vmem:[%s950 + $0x1290] sm:$0xff]
                  %1547 = vst [vmem:[%s951 + $0x948] sm:$0xff] %v1546
                  %v1548 = vld [vmem:[%s950 + $0x12a0] sm:$0xff]
                  %1549 = vst [vmem:[%s951 + $0x950] sm:$0xff] %v1548
                  %v1550 = vld [vmem:[%s950 + $0x12b0] sm:$0xff]
                  %1551 = vst [vmem:[%s951 + $0x958] sm:$0xff] %v1550
                  %v1552 = vld [vmem:[%s950 + $0x12c0] sm:$0xff]
                  %1553 = vst [vmem:[%s951 + $0x960] sm:$0xff] %v1552
                  %v1554 = vld [vmem:[%s950 + $0x12d0] sm:$0xff]
                  %1555 = vst [vmem:[%s951 + $0x968] sm:$0xff] %v1554
                  %v1556 = vld [vmem:[%s950 + $0x12e0] sm:$0xff]
                  %1557 = vst [vmem:[%s951 + $0x970] sm:$0xff] %v1556
                  %v1558 = vld [vmem:[%s950 + $0x12f0] sm:$0xff]
                  %1559 = vst [vmem:[%s951 + $0x978] sm:$0xff] %v1558
                  %v1560 = vld [vmem:[%s950 + $0x1300] sm:$0xff]
                  %1561 = vst [vmem:[%s951 + $0x980] sm:$0xff] %v1560
                  %v1562 = vld [vmem:[%s950 + $0x1310] sm:$0xff]
                  %1563 = vst [vmem:[%s951 + $0x988] sm:$0xff] %v1562
                  %v1564 = vld [vmem:[%s950 + $0x1320] sm:$0xff]
                  %1565 = vst [vmem:[%s951 + $0x990] sm:$0xff] %v1564
                  %v1566 = vld [vmem:[%s950 + $0x1330] sm:$0xff]
                  %1567 = vst [vmem:[%s951 + $0x998] sm:$0xff] %v1566
                  %v1568 = vld [vmem:[%s950 + $0x1340] sm:$0xff]
                  %1569 = vst [vmem:[%s951 + $0x9a0] sm:$0xff] %v1568
                  %v1570 = vld [vmem:[%s950 + $0x1350] sm:$0xff]
                  %1571 = vst [vmem:[%s951 + $0x9a8] sm:$0xff] %v1570
                  %v1572 = vld [vmem:[%s950 + $0x1360] sm:$0xff]
                  %1573 = vst [vmem:[%s951 + $0x9b0] sm:$0xff] %v1572
                  %v1574 = vld [vmem:[%s950 + $0x1370] sm:$0xff]
                  %1575 = vst [vmem:[%s951 + $0x9b8] sm:$0xff] %v1574
                  %v1576 = vld [vmem:[%s950 + $0x1380] sm:$0xff]
                  %1577 = vst [vmem:[%s951 + $0x9c0] sm:$0xff] %v1576
                  %v1578 = vld [vmem:[%s950 + $0x1390] sm:$0xff]
                  %1579 = vst [vmem:[%s951 + $0x9c8] sm:$0xff] %v1578
                  %v1580 = vld [vmem:[%s950 + $0x13a0] sm:$0xff]
                  %1581 = vst [vmem:[%s951 + $0x9d0] sm:$0xff] %v1580
                  %v1582 = vld [vmem:[%s950 + $0x13b0] sm:$0xff]
                  %1583 = vst [vmem:[%s951 + $0x9d8] sm:$0xff] %v1582
                  %v1584 = vld [vmem:[%s950 + $0x13c0] sm:$0xff]
                  %1585 = vst [vmem:[%s951 + $0x9e0] sm:$0xff] %v1584
                  %v1586 = vld [vmem:[%s950 + $0x13d0] sm:$0xff]
                  %1587 = vst [vmem:[%s951 + $0x9e8] sm:$0xff] %v1586
                  %v1588 = vld [vmem:[%s950 + $0x13e0] sm:$0xff]
                  %1589 = vst [vmem:[%s951 + $0x9f0] sm:$0xff] %v1588
                  %v1590 = vld [vmem:[%s950 + $0x13f0] sm:$0xff]
                  %1591 = vst [vmem:[%s951 + $0x9f8] sm:$0xff] %v1590
                  %v1592 = vld [vmem:[%s950 + $0x1400] sm:$0xff]
                  %1593 = vst [vmem:[%s951 + $0xa00] sm:$0xff] %v1592
                  %v1594 = vld [vmem:[%s950 + $0x1410] sm:$0xff]
                  %1595 = vst [vmem:[%s951 + $0xa08] sm:$0xff] %v1594
                  %v1596 = vld [vmem:[%s950 + $0x1420] sm:$0xff]
                  %1597 = vst [vmem:[%s951 + $0xa10] sm:$0xff] %v1596
                  %v1598 = vld [vmem:[%s950 + $0x1430] sm:$0xff]
                  %1599 = vst [vmem:[%s951 + $0xa18] sm:$0xff] %v1598
                  %v1600 = vld [vmem:[%s950 + $0x1440] sm:$0xff]
                  %1601 = vst [vmem:[%s951 + $0xa20] sm:$0xff] %v1600
                  %v1602 = vld [vmem:[%s950 + $0x1450] sm:$0xff]
                  %1603 = vst [vmem:[%s951 + $0xa28] sm:$0xff] %v1602
                  %v1604 = vld [vmem:[%s950 + $0x1460] sm:$0xff]
                  %1605 = vst [vmem:[%s951 + $0xa30] sm:$0xff] %v1604
                  %v1606 = vld [vmem:[%s950 + $0x1470] sm:$0xff]
                  %1607 = vst [vmem:[%s951 + $0xa38] sm:$0xff] %v1606
                  %v1608 = vld [vmem:[%s950 + $0x1480] sm:$0xff]
                  %1609 = vst [vmem:[%s951 + $0xa40] sm:$0xff] %v1608
                  %v1610 = vld [vmem:[%s950 + $0x1490] sm:$0xff]
                  %1611 = vst [vmem:[%s951 + $0xa48] sm:$0xff] %v1610
                  %v1612 = vld [vmem:[%s950 + $0x14a0] sm:$0xff]
                  %1613 = vst [vmem:[%s951 + $0xa50] sm:$0xff] %v1612
                  %v1614 = vld [vmem:[%s950 + $0x14b0] sm:$0xff]
                  %1615 = vst [vmem:[%s951 + $0xa58] sm:$0xff] %v1614
                  %v1616 = vld [vmem:[%s950 + $0x14c0] sm:$0xff]
                  %1617 = vst [vmem:[%s951 + $0xa60] sm:$0xff] %v1616
                  %v1618 = vld [vmem:[%s950 + $0x14d0] sm:$0xff]
                  %1619 = vst [vmem:[%s951 + $0xa68] sm:$0xff] %v1618
                  %v1620 = vld [vmem:[%s950 + $0x14e0] sm:$0xff]
                  %1621 = vst [vmem:[%s951 + $0xa70] sm:$0xff] %v1620
                  %v1622 = vld [vmem:[%s950 + $0x14f0] sm:$0xff]
                  %1623 = vst [vmem:[%s951 + $0xa78] sm:$0xff] %v1622
                  %v1624 = vld [vmem:[%s950 + $0x1500] sm:$0xff]
                  %1625 = vst [vmem:[%s951 + $0xa80] sm:$0xff] %v1624
                  %v1626 = vld [vmem:[%s950 + $0x1510] sm:$0xff]
                  %1627 = vst [vmem:[%s951 + $0xa88] sm:$0xff] %v1626
                  %v1628 = vld [vmem:[%s950 + $0x1520] sm:$0xff]
                  %1629 = vst [vmem:[%s951 + $0xa90] sm:$0xff] %v1628
                  %v1630 = vld [vmem:[%s950 + $0x1530] sm:$0xff]
                  %1631 = vst [vmem:[%s951 + $0xa98] sm:$0xff] %v1630
                  %v1632 = vld [vmem:[%s950 + $0x1540] sm:$0xff]
                  %1633 = vst [vmem:[%s951 + $0xaa0] sm:$0xff] %v1632
                  %v1634 = vld [vmem:[%s950 + $0x1550] sm:$0xff]
                  %1635 = vst [vmem:[%s951 + $0xaa8] sm:$0xff] %v1634
                  %v1636 = vld [vmem:[%s950 + $0x1560] sm:$0xff]
                  %1637 = vst [vmem:[%s951 + $0xab0] sm:$0xff] %v1636
                  %v1638 = vld [vmem:[%s950 + $0x1570] sm:$0xff]
                  %1639 = vst [vmem:[%s951 + $0xab8] sm:$0xff] %v1638
                  %v1640 = vld [vmem:[%s950 + $0x1580] sm:$0xff]
                  %1641 = vst [vmem:[%s951 + $0xac0] sm:$0xff] %v1640
                  %v1642 = vld [vmem:[%s950 + $0x1590] sm:$0xff]
                  %1643 = vst [vmem:[%s951 + $0xac8] sm:$0xff] %v1642
                  %v1644 = vld [vmem:[%s950 + $0x15a0] sm:$0xff]
                  %1645 = vst [vmem:[%s951 + $0xad0] sm:$0xff] %v1644
                  %v1646 = vld [vmem:[%s950 + $0x15b0] sm:$0xff]
                  %1647 = vst [vmem:[%s951 + $0xad8] sm:$0xff] %v1646
                  %v1648 = vld [vmem:[%s950 + $0x15c0] sm:$0xff]
                  %1649 = vst [vmem:[%s951 + $0xae0] sm:$0xff] %v1648
                  %v1650 = vld [vmem:[%s950 + $0x15d0] sm:$0xff]
                  %1651 = vst [vmem:[%s951 + $0xae8] sm:$0xff] %v1650
                  %v1652 = vld [vmem:[%s950 + $0x15e0] sm:$0xff]
                  %1653 = vst [vmem:[%s951 + $0xaf0] sm:$0xff] %v1652
                  %v1654 = vld [vmem:[%s950 + $0x15f0] sm:$0xff]
                  %1655 = vst [vmem:[%s951 + $0xaf8] sm:$0xff] %v1654
                  %v1656 = vld [vmem:[%s950 + $0x1600] sm:$0xff]
                  %1657 = vst [vmem:[%s951 + $0xb00] sm:$0xff] %v1656
                  %v1658 = vld [vmem:[%s950 + $0x1610] sm:$0xff]
                  %1659 = vst [vmem:[%s951 + $0xb08] sm:$0xff] %v1658
                  %v1660 = vld [vmem:[%s950 + $0x1620] sm:$0xff]
                  %1661 = vst [vmem:[%s951 + $0xb10] sm:$0xff] %v1660
                  %v1662 = vld [vmem:[%s950 + $0x1630] sm:$0xff]
                  %1663 = vst [vmem:[%s951 + $0xb18] sm:$0xff] %v1662
                  %v1664 = vld [vmem:[%s950 + $0x1640] sm:$0xff]
                  %1665 = vst [vmem:[%s951 + $0xb20] sm:$0xff] %v1664
                  %v1666 = vld [vmem:[%s950 + $0x1650] sm:$0xff]
                  %1667 = vst [vmem:[%s951 + $0xb28] sm:$0xff] %v1666
                  %v1668 = vld [vmem:[%s950 + $0x1660] sm:$0xff]
                  %1669 = vst [vmem:[%s951 + $0xb30] sm:$0xff] %v1668
                  %v1670 = vld [vmem:[%s950 + $0x1670] sm:$0xff]
                  %1671 = vst [vmem:[%s951 + $0xb38] sm:$0xff] %v1670
                  %v1672 = vld [vmem:[%s950 + $0x1680] sm:$0xff]
                  %1673 = vst [vmem:[%s951 + $0xb40] sm:$0xff] %v1672
                  %v1674 = vld [vmem:[%s950 + $0x1690] sm:$0xff]
                  %1675 = vst [vmem:[%s951 + $0xb48] sm:$0xff] %v1674
                  %v1676 = vld [vmem:[%s950 + $0x16a0] sm:$0xff]
                  %1677 = vst [vmem:[%s951 + $0xb50] sm:$0xff] %v1676
                  %v1678 = vld [vmem:[%s950 + $0x16b0] sm:$0xff]
                  %1679 = vst [vmem:[%s951 + $0xb58] sm:$0xff] %v1678
                  %v1680 = vld [vmem:[%s950 + $0x16c0] sm:$0xff]
                  %1681 = vst [vmem:[%s951 + $0xb60] sm:$0xff] %v1680
                  %v1682 = vld [vmem:[%s950 + $0x16d0] sm:$0xff]
                  %1683 = vst [vmem:[%s951 + $0xb68] sm:$0xff] %v1682
                  %v1684 = vld [vmem:[%s950 + $0x16e0] sm:$0xff]
                  %1685 = vst [vmem:[%s951 + $0xb70] sm:$0xff] %v1684
                  %v1686 = vld [vmem:[%s950 + $0x16f0] sm:$0xff]
                  %1687 = vst [vmem:[%s951 + $0xb78] sm:$0xff] %v1686
                  %v1688 = vld [vmem:[%s950 + $0x1700] sm:$0xff]
                  %1689 = vst [vmem:[%s951 + $0xb80] sm:$0xff] %v1688
                  %v1690 = vld [vmem:[%s950 + $0x1710] sm:$0xff]
                  %1691 = vst [vmem:[%s951 + $0xb88] sm:$0xff] %v1690
                  %v1692 = vld [vmem:[%s950 + $0x1720] sm:$0xff]
                  %1693 = vst [vmem:[%s951 + $0xb90] sm:$0xff] %v1692
                  %v1694 = vld [vmem:[%s950 + $0x1730] sm:$0xff]
                  %1695 = vst [vmem:[%s951 + $0xb98] sm:$0xff] %v1694
                  %v1696 = vld [vmem:[%s950 + $0x1740] sm:$0xff]
                  %1697 = vst [vmem:[%s951 + $0xba0] sm:$0xff] %v1696
                  %v1698 = vld [vmem:[%s950 + $0x1750] sm:$0xff]
                  %1699 = vst [vmem:[%s951 + $0xba8] sm:$0xff] %v1698
                  %v1700 = vld [vmem:[%s950 + $0x1760] sm:$0xff]
                  %1701 = vst [vmem:[%s951 + $0xbb0] sm:$0xff] %v1700
                  %v1702 = vld [vmem:[%s950 + $0x1770] sm:$0xff]
                  %1703 = vst [vmem:[%s951 + $0xbb8] sm:$0xff] %v1702
                  %v1704 = vld [vmem:[%s950 + $0x1780] sm:$0xff]
                  %1705 = vst [vmem:[%s951 + $0xbc0] sm:$0xff] %v1704
                  %v1706 = vld [vmem:[%s950 + $0x1790] sm:$0xff]
                  %1707 = vst [vmem:[%s951 + $0xbc8] sm:$0xff] %v1706
                  %v1708 = vld [vmem:[%s950 + $0x17a0] sm:$0xff]
                  %1709 = vst [vmem:[%s951 + $0xbd0] sm:$0xff] %v1708
                  %v1710 = vld [vmem:[%s950 + $0x17b0] sm:$0xff]
                  %1711 = vst [vmem:[%s951 + $0xbd8] sm:$0xff] %v1710
                  %v1712 = vld [vmem:[%s950 + $0x17c0] sm:$0xff]
                  %1713 = vst [vmem:[%s951 + $0xbe0] sm:$0xff] %v1712
                  %v1714 = vld [vmem:[%s950 + $0x17d0] sm:$0xff]
                  %1715 = vst [vmem:[%s951 + $0xbe8] sm:$0xff] %v1714
                  %v1716 = vld [vmem:[%s950 + $0x17e0] sm:$0xff]
                  %1717 = vst [vmem:[%s951 + $0xbf0] sm:$0xff] %v1716
                  %v1718 = vld [vmem:[%s950 + $0x17f0] sm:$0xff]
                  %1719 = vst [vmem:[%s951 + $0xbf8] sm:$0xff] %v1718
                  %v1720 = vld [vmem:[%s950 + $0x1800] sm:$0xff]
                  %1721 = vst [vmem:[%s951 + $0xc00] sm:$0xff] %v1720
                  %v1722 = vld [vmem:[%s950 + $0x1810] sm:$0xff]
                  %1723 = vst [vmem:[%s951 + $0xc08] sm:$0xff] %v1722
                  %v1724 = vld [vmem:[%s950 + $0x1820] sm:$0xff]
                  %1725 = vst [vmem:[%s951 + $0xc10] sm:$0xff] %v1724
                  %v1726 = vld [vmem:[%s950 + $0x1830] sm:$0xff]
                  %1727 = vst [vmem:[%s951 + $0xc18] sm:$0xff] %v1726
                  %v1728 = vld [vmem:[%s950 + $0x1840] sm:$0xff]
                  %1729 = vst [vmem:[%s951 + $0xc20] sm:$0xff] %v1728
                  %v1730 = vld [vmem:[%s950 + $0x1850] sm:$0xff]
                  %1731 = vst [vmem:[%s951 + $0xc28] sm:$0xff] %v1730
                  %v1732 = vld [vmem:[%s950 + $0x1860] sm:$0xff]
                  %1733 = vst [vmem:[%s951 + $0xc30] sm:$0xff] %v1732
                  %v1734 = vld [vmem:[%s950 + $0x1870] sm:$0xff]
                  %1735 = vst [vmem:[%s951 + $0xc38] sm:$0xff] %v1734
                $region52: #{atari_backbone.5} parent=46 // loop_footer
                  %s949 = sadd.s32 1, %s945
                $region53: #{atari_backbone.5} parent=46 // loop_footer_branch
                  %944 = sbr.rel target = $region49
                $region54: #{atari_backbone.5} parent=46 // loop_exit
                  _
              $region47: #{atari_backbone.5} parent=31 // pred_fallthru
                _
              // Predicated region
              $region55: #{atari_backbone.5} parent=31 // pred_check
                _
              $region56: #{atari_backbone.5} parent=31 // pred_check_branch
                %1737 = sbr.rel target = $region58
              $region57: #{atari_backbone.5} parent=31 // pred_region
                _
              $region58: #{atari_backbone.5} parent=31 // pred_fallthru
                _
            $region32: #{atari_backbone.5} parent=27 // pred_fallthru
              _
            // Predicated region
            $region33: #{atari_backbone.5} parent=27 // pred_check
              _
            $region34: #{atari_backbone.5} parent=27 // pred_check_branch
              %148 = sbr.rel target = $region36
            $region35: #{atari_backbone.5} parent=27 // pred_region
              loop: start=0, step=1, limit=1
              $region37: #{atari_backbone.5} parent=35 // loop_pre_header
                _
              $region38: #{atari_backbone.5} parent=35 // loop_header
                %s151 = sphi 0, %s155
                %p152 = scmp.ge.s32.totalorder %s151, 1
                %s156 = sphi %s142, %s142
                %s157 = sphi %s139, %s139
              $region39: #{atari_backbone.5} parent=35 // loop_header_branch
                %154 = sbr.rel (%p152) target = $region43
              $region40: #{atari_backbone.5} parent=35 // loop_body
                %v158 = vld [vmem:[%s156] sm:$0xff]
                %159 = vst [vmem:[%s157] sm:$0xff] %v158
                %v160 = vld [vmem:[%s156 + $0x10] sm:$0xff]
                %161 = vst [vmem:[%s157 + $0x8] sm:$0xff] %v160
                %v162 = vld [vmem:[%s156 + $0x20] sm:$0xff]
                %163 = vst [vmem:[%s157 + $0x10] sm:$0xff] %v162
                %v164 = vld [vmem:[%s156 + $0x30] sm:$0xff]
                %165 = vst [vmem:[%s157 + $0x18] sm:$0xff] %v164
                %v166 = vld [vmem:[%s156 + $0x40] sm:$0xff]
                %167 = vst [vmem:[%s157 + $0x20] sm:$0xff] %v166
                %v168 = vld [vmem:[%s156 + $0x50] sm:$0xff]
                %169 = vst [vmem:[%s157 + $0x28] sm:$0xff] %v168
                %v170 = vld [vmem:[%s156 + $0x60] sm:$0xff]
                %171 = vst [vmem:[%s157 + $0x30] sm:$0xff] %v170
                %v172 = vld [vmem:[%s156 + $0x70] sm:$0xff]
                %173 = vst [vmem:[%s157 + $0x38] sm:$0xff] %v172
                %v174 = vld [vmem:[%s156 + $0x80] sm:$0xff]
                %175 = vst [vmem:[%s157 + $0x40] sm:$0xff] %v174
                %v176 = vld [vmem:[%s156 + $0x90] sm:$0xff]
                %177 = vst [vmem:[%s157 + $0x48] sm:$0xff] %v176
                %v178 = vld [vmem:[%s156 + $0xa0] sm:$0xff]
                %179 = vst [vmem:[%s157 + $0x50] sm:$0xff] %v178
                %v180 = vld [vmem:[%s156 + $0xb0] sm:$0xff]
                %181 = vst [vmem:[%s157 + $0x58] sm:$0xff] %v180
                %v182 = vld [vmem:[%s156 + $0xc0] sm:$0xff]
                %183 = vst [vmem:[%s157 + $0x60] sm:$0xff] %v182
                %v184 = vld [vmem:[%s156 + $0xd0] sm:$0xff]
                %185 = vst [vmem:[%s157 + $0x68] sm:$0xff] %v184
                %v186 = vld [vmem:[%s156 + $0xe0] sm:$0xff]
                %187 = vst [vmem:[%s157 + $0x70] sm:$0xff] %v186
                %v188 = vld [vmem:[%s156 + $0xf0] sm:$0xff]
                %189 = vst [vmem:[%s157 + $0x78] sm:$0xff] %v188
                %v190 = vld [vmem:[%s156 + $0x100] sm:$0xff]
                %191 = vst [vmem:[%s157 + $0x80] sm:$0xff] %v190
                %v192 = vld [vmem:[%s156 + $0x110] sm:$0xff]
                %193 = vst [vmem:[%s157 + $0x88] sm:$0xff] %v192
                %v194 = vld [vmem:[%s156 + $0x120] sm:$0xff]
                %195 = vst [vmem:[%s157 + $0x90] sm:$0xff] %v194
                %v196 = vld [vmem:[%s156 + $0x130] sm:$0xff]
                %197 = vst [vmem:[%s157 + $0x98] sm:$0xff] %v196
                %v198 = vld [vmem:[%s156 + $0x140] sm:$0xff]
                %199 = vst [vmem:[%s157 + $0xa0] sm:$0xff] %v198
                %v200 = vld [vmem:[%s156 + $0x150] sm:$0xff]
                %201 = vst [vmem:[%s157 + $0xa8] sm:$0xff] %v200
                %v202 = vld [vmem:[%s156 + $0x160] sm:$0xff]
                %203 = vst [vmem:[%s157 + $0xb0] sm:$0xff] %v202
                %v204 = vld [vmem:[%s156 + $0x170] sm:$0xff]
                %205 = vst [vmem:[%s157 + $0xb8] sm:$0xff] %v204
                %v206 = vld [vmem:[%s156 + $0x180] sm:$0xff]
                %207 = vst [vmem:[%s157 + $0xc0] sm:$0xff] %v206
                %v208 = vld [vmem:[%s156 + $0x190] sm:$0xff]
                %209 = vst [vmem:[%s157 + $0xc8] sm:$0xff] %v208
                %v210 = vld [vmem:[%s156 + $0x1a0] sm:$0xff]
                %211 = vst [vmem:[%s157 + $0xd0] sm:$0xff] %v210
                %v212 = vld [vmem:[%s156 + $0x1b0] sm:$0xff]
                %213 = vst [vmem:[%s157 + $0xd8] sm:$0xff] %v212
                %v214 = vld [vmem:[%s156 + $0x1c0] sm:$0xff]
                %215 = vst [vmem:[%s157 + $0xe0] sm:$0xff] %v214
                %v216 = vld [vmem:[%s156 + $0x1d0] sm:$0xff]
                %217 = vst [vmem:[%s157 + $0xe8] sm:$0xff] %v216
                %v218 = vld [vmem:[%s156 + $0x1e0] sm:$0xff]
                %219 = vst [vmem:[%s157 + $0xf0] sm:$0xff] %v218
                %v220 = vld [vmem:[%s156 + $0x1f0] sm:$0xff]
                %221 = vst [vmem:[%s157 + $0xf8] sm:$0xff] %v220
                %v222 = vld [vmem:[%s156 + $0x200] sm:$0xff]
                %223 = vst [vmem:[%s157 + $0x100] sm:$0xff] %v222
                %v224 = vld [vmem:[%s156 + $0x210] sm:$0xff]
                %225 = vst [vmem:[%s157 + $0x108] sm:$0xff] %v224
                %v226 = vld [vmem:[%s156 + $0x220] sm:$0xff]
                %227 = vst [vmem:[%s157 + $0x110] sm:$0xff] %v226
                %v228 = vld [vmem:[%s156 + $0x230] sm:$0xff]
                %229 = vst [vmem:[%s157 + $0x118] sm:$0xff] %v228
                %v230 = vld [vmem:[%s156 + $0x240] sm:$0xff]
                %231 = vst [vmem:[%s157 + $0x120] sm:$0xff] %v230
                %v232 = vld [vmem:[%s156 + $0x250] sm:$0xff]
                %233 = vst [vmem:[%s157 + $0x128] sm:$0xff] %v232
                %v234 = vld [vmem:[%s156 + $0x260] sm:$0xff]
                %235 = vst [vmem:[%s157 + $0x130] sm:$0xff] %v234
                %v236 = vld [vmem:[%s156 + $0x270] sm:$0xff]
                %237 = vst [vmem:[%s157 + $0x138] sm:$0xff] %v236
                %v238 = vld [vmem:[%s156 + $0x280] sm:$0xff]
                %239 = vst [vmem:[%s157 + $0x140] sm:$0xff] %v238
                %v240 = vld [vmem:[%s156 + $0x290] sm:$0xff]
                %241 = vst [vmem:[%s157 + $0x148] sm:$0xff] %v240
                %v242 = vld [vmem:[%s156 + $0x2a0] sm:$0xff]
                %243 = vst [vmem:[%s157 + $0x150] sm:$0xff] %v242
                %v244 = vld [vmem:[%s156 + $0x2b0] sm:$0xff]
                %245 = vst [vmem:[%s157 + $0x158] sm:$0xff] %v244
                %v246 = vld [vmem:[%s156 + $0x2c0] sm:$0xff]
                %247 = vst [vmem:[%s157 + $0x160] sm:$0xff] %v246
                %v248 = vld [vmem:[%s156 + $0x2d0] sm:$0xff]
                %249 = vst [vmem:[%s157 + $0x168] sm:$0xff] %v248
                %v250 = vld [vmem:[%s156 + $0x2e0] sm:$0xff]
                %251 = vst [vmem:[%s157 + $0x170] sm:$0xff] %v250
                %v252 = vld [vmem:[%s156 + $0x2f0] sm:$0xff]
                %253 = vst [vmem:[%s157 + $0x178] sm:$0xff] %v252
                %v254 = vld [vmem:[%s156 + $0x300] sm:$0xff]
                %255 = vst [vmem:[%s157 + $0x180] sm:$0xff] %v254
                %v256 = vld [vmem:[%s156 + $0x310] sm:$0xff]
                %257 = vst [vmem:[%s157 + $0x188] sm:$0xff] %v256
                %v258 = vld [vmem:[%s156 + $0x320] sm:$0xff]
                %259 = vst [vmem:[%s157 + $0x190] sm:$0xff] %v258
                %v260 = vld [vmem:[%s156 + $0x330] sm:$0xff]
                %261 = vst [vmem:[%s157 + $0x198] sm:$0xff] %v260
                %v262 = vld [vmem:[%s156 + $0x340] sm:$0xff]
                %263 = vst [vmem:[%s157 + $0x1a0] sm:$0xff] %v262
                %v264 = vld [vmem:[%s156 + $0x350] sm:$0xff]
                %265 = vst [vmem:[%s157 + $0x1a8] sm:$0xff] %v264
                %v266 = vld [vmem:[%s156 + $0x360] sm:$0xff]
                %267 = vst [vmem:[%s157 + $0x1b0] sm:$0xff] %v266
                %v268 = vld [vmem:[%s156 + $0x370] sm:$0xff]
                %269 = vst [vmem:[%s157 + $0x1b8] sm:$0xff] %v268
                %v270 = vld [vmem:[%s156 + $0x380] sm:$0xff]
                %271 = vst [vmem:[%s157 + $0x1c0] sm:$0xff] %v270
                %v272 = vld [vmem:[%s156 + $0x390] sm:$0xff]
                %273 = vst [vmem:[%s157 + $0x1c8] sm:$0xff] %v272
                %v274 = vld [vmem:[%s156 + $0x3a0] sm:$0xff]
                %275 = vst [vmem:[%s157 + $0x1d0] sm:$0xff] %v274
                %v276 = vld [vmem:[%s156 + $0x3b0] sm:$0xff]
                %277 = vst [vmem:[%s157 + $0x1d8] sm:$0xff] %v276
                %v278 = vld [vmem:[%s156 + $0x3c0] sm:$0xff]
                %279 = vst [vmem:[%s157 + $0x1e0] sm:$0xff] %v278
                %v280 = vld [vmem:[%s156 + $0x3d0] sm:$0xff]
                %281 = vst [vmem:[%s157 + $0x1e8] sm:$0xff] %v280
                %v282 = vld [vmem:[%s156 + $0x3e0] sm:$0xff]
                %283 = vst [vmem:[%s157 + $0x1f0] sm:$0xff] %v282
                %v284 = vld [vmem:[%s156 + $0x3f0] sm:$0xff]
                %285 = vst [vmem:[%s157 + $0x1f8] sm:$0xff] %v284
                %v286 = vld [vmem:[%s156 + $0x400] sm:$0xff]
                %287 = vst [vmem:[%s157 + $0x200] sm:$0xff] %v286
                %v288 = vld [vmem:[%s156 + $0x410] sm:$0xff]
                %289 = vst [vmem:[%s157 + $0x208] sm:$0xff] %v288
                %v290 = vld [vmem:[%s156 + $0x420] sm:$0xff]
                %291 = vst [vmem:[%s157 + $0x210] sm:$0xff] %v290
                %v292 = vld [vmem:[%s156 + $0x430] sm:$0xff]
                %293 = vst [vmem:[%s157 + $0x218] sm:$0xff] %v292
                %v294 = vld [vmem:[%s156 + $0x440] sm:$0xff]
                %295 = vst [vmem:[%s157 + $0x220] sm:$0xff] %v294
                %v296 = vld [vmem:[%s156 + $0x450] sm:$0xff]
                %297 = vst [vmem:[%s157 + $0x228] sm:$0xff] %v296
                %v298 = vld [vmem:[%s156 + $0x460] sm:$0xff]
                %299 = vst [vmem:[%s157 + $0x230] sm:$0xff] %v298
                %v300 = vld [vmem:[%s156 + $0x470] sm:$0xff]
                %301 = vst [vmem:[%s157 + $0x238] sm:$0xff] %v300
                %v302 = vld [vmem:[%s156 + $0x480] sm:$0xff]
                %303 = vst [vmem:[%s157 + $0x240] sm:$0xff] %v302
                %v304 = vld [vmem:[%s156 + $0x490] sm:$0xff]
                %305 = vst [vmem:[%s157 + $0x248] sm:$0xff] %v304
                %v306 = vld [vmem:[%s156 + $0x4a0] sm:$0xff]
                %307 = vst [vmem:[%s157 + $0x250] sm:$0xff] %v306
                %v308 = vld [vmem:[%s156 + $0x4b0] sm:$0xff]
                %309 = vst [vmem:[%s157 + $0x258] sm:$0xff] %v308
                %v310 = vld [vmem:[%s156 + $0x4c0] sm:$0xff]
                %311 = vst [vmem:[%s157 + $0x260] sm:$0xff] %v310
                %v312 = vld [vmem:[%s156 + $0x4d0] sm:$0xff]
                %313 = vst [vmem:[%s157 + $0x268] sm:$0xff] %v312
                %v314 = vld [vmem:[%s156 + $0x4e0] sm:$0xff]
                %315 = vst [vmem:[%s157 + $0x270] sm:$0xff] %v314
                %v316 = vld [vmem:[%s156 + $0x4f0] sm:$0xff]
                %317 = vst [vmem:[%s157 + $0x278] sm:$0xff] %v316
                %v318 = vld [vmem:[%s156 + $0x500] sm:$0xff]
                %319 = vst [vmem:[%s157 + $0x280] sm:$0xff] %v318
                %v320 = vld [vmem:[%s156 + $0x510] sm:$0xff]
                %321 = vst [vmem:[%s157 + $0x288] sm:$0xff] %v320
                %v322 = vld [vmem:[%s156 + $0x520] sm:$0xff]
                %323 = vst [vmem:[%s157 + $0x290] sm:$0xff] %v322
                %v324 = vld [vmem:[%s156 + $0x530] sm:$0xff]
                %325 = vst [vmem:[%s157 + $0x298] sm:$0xff] %v324
                %v326 = vld [vmem:[%s156 + $0x540] sm:$0xff]
                %327 = vst [vmem:[%s157 + $0x2a0] sm:$0xff] %v326
                %v328 = vld [vmem:[%s156 + $0x550] sm:$0xff]
                %329 = vst [vmem:[%s157 + $0x2a8] sm:$0xff] %v328
                %v330 = vld [vmem:[%s156 + $0x560] sm:$0xff]
                %331 = vst [vmem:[%s157 + $0x2b0] sm:$0xff] %v330
                %v332 = vld [vmem:[%s156 + $0x570] sm:$0xff]
                %333 = vst [vmem:[%s157 + $0x2b8] sm:$0xff] %v332
                %v334 = vld [vmem:[%s156 + $0x580] sm:$0xff]
                %335 = vst [vmem:[%s157 + $0x2c0] sm:$0xff] %v334
                %v336 = vld [vmem:[%s156 + $0x590] sm:$0xff]
                %337 = vst [vmem:[%s157 + $0x2c8] sm:$0xff] %v336
                %v338 = vld [vmem:[%s156 + $0x5a0] sm:$0xff]
                %339 = vst [vmem:[%s157 + $0x2d0] sm:$0xff] %v338
                %v340 = vld [vmem:[%s156 + $0x5b0] sm:$0xff]
                %341 = vst [vmem:[%s157 + $0x2d8] sm:$0xff] %v340
                %v342 = vld [vmem:[%s156 + $0x5c0] sm:$0xff]
                %343 = vst [vmem:[%s157 + $0x2e0] sm:$0xff] %v342
                %v344 = vld [vmem:[%s156 + $0x5d0] sm:$0xff]
                %345 = vst [vmem:[%s157 + $0x2e8] sm:$0xff] %v344
                %v346 = vld [vmem:[%s156 + $0x5e0] sm:$0xff]
                %347 = vst [vmem:[%s157 + $0x2f0] sm:$0xff] %v346
                %v348 = vld [vmem:[%s156 + $0x5f0] sm:$0xff]
                %349 = vst [vmem:[%s157 + $0x2f8] sm:$0xff] %v348
                %v350 = vld [vmem:[%s156 + $0x600] sm:$0xff]
                %351 = vst [vmem:[%s157 + $0x300] sm:$0xff] %v350
                %v352 = vld [vmem:[%s156 + $0x610] sm:$0xff]
                %353 = vst [vmem:[%s157 + $0x308] sm:$0xff] %v352
                %v354 = vld [vmem:[%s156 + $0x620] sm:$0xff]
                %355 = vst [vmem:[%s157 + $0x310] sm:$0xff] %v354
                %v356 = vld [vmem:[%s156 + $0x630] sm:$0xff]
                %357 = vst [vmem:[%s157 + $0x318] sm:$0xff] %v356
                %v358 = vld [vmem:[%s156 + $0x640] sm:$0xff]
                %359 = vst [vmem:[%s157 + $0x320] sm:$0xff] %v358
                %v360 = vld [vmem:[%s156 + $0x650] sm:$0xff]
                %361 = vst [vmem:[%s157 + $0x328] sm:$0xff] %v360
                %v362 = vld [vmem:[%s156 + $0x660] sm:$0xff]
                %363 = vst [vmem:[%s157 + $0x330] sm:$0xff] %v362
                %v364 = vld [vmem:[%s156 + $0x670] sm:$0xff]
                %365 = vst [vmem:[%s157 + $0x338] sm:$0xff] %v364
                %v366 = vld [vmem:[%s156 + $0x680] sm:$0xff]
                %367 = vst [vmem:[%s157 + $0x340] sm:$0xff] %v366
                %v368 = vld [vmem:[%s156 + $0x690] sm:$0xff]
                %369 = vst [vmem:[%s157 + $0x348] sm:$0xff] %v368
                %v370 = vld [vmem:[%s156 + $0x6a0] sm:$0xff]
                %371 = vst [vmem:[%s157 + $0x350] sm:$0xff] %v370
                %v372 = vld [vmem:[%s156 + $0x6b0] sm:$0xff]
                %373 = vst [vmem:[%s157 + $0x358] sm:$0xff] %v372
                %v374 = vld [vmem:[%s156 + $0x6c0] sm:$0xff]
                %375 = vst [vmem:[%s157 + $0x360] sm:$0xff] %v374
                %v376 = vld [vmem:[%s156 + $0x6d0] sm:$0xff]
                %377 = vst [vmem:[%s157 + $0x368] sm:$0xff] %v376
                %v378 = vld [vmem:[%s156 + $0x6e0] sm:$0xff]
                %379 = vst [vmem:[%s157 + $0x370] sm:$0xff] %v378
                %v380 = vld [vmem:[%s156 + $0x6f0] sm:$0xff]
                %381 = vst [vmem:[%s157 + $0x378] sm:$0xff] %v380
                %v382 = vld [vmem:[%s156 + $0x700] sm:$0xff]
                %383 = vst [vmem:[%s157 + $0x380] sm:$0xff] %v382
                %v384 = vld [vmem:[%s156 + $0x710] sm:$0xff]
                %385 = vst [vmem:[%s157 + $0x388] sm:$0xff] %v384
                %v386 = vld [vmem:[%s156 + $0x720] sm:$0xff]
                %387 = vst [vmem:[%s157 + $0x390] sm:$0xff] %v386
                %v388 = vld [vmem:[%s156 + $0x730] sm:$0xff]
                %389 = vst [vmem:[%s157 + $0x398] sm:$0xff] %v388
                %v390 = vld [vmem:[%s156 + $0x740] sm:$0xff]
                %391 = vst [vmem:[%s157 + $0x3a0] sm:$0xff] %v390
                %v392 = vld [vmem:[%s156 + $0x750] sm:$0xff]
                %393 = vst [vmem:[%s157 + $0x3a8] sm:$0xff] %v392
                %v394 = vld [vmem:[%s156 + $0x760] sm:$0xff]
                %395 = vst [vmem:[%s157 + $0x3b0] sm:$0xff] %v394
                %v396 = vld [vmem:[%s156 + $0x770] sm:$0xff]
                %397 = vst [vmem:[%s157 + $0x3b8] sm:$0xff] %v396
                %v398 = vld [vmem:[%s156 + $0x780] sm:$0xff]
                %399 = vst [vmem:[%s157 + $0x3c0] sm:$0xff] %v398
                %v400 = vld [vmem:[%s156 + $0x790] sm:$0xff]
                %401 = vst [vmem:[%s157 + $0x3c8] sm:$0xff] %v400
                %v402 = vld [vmem:[%s156 + $0x7a0] sm:$0xff]
                %403 = vst [vmem:[%s157 + $0x3d0] sm:$0xff] %v402
                %v404 = vld [vmem:[%s156 + $0x7b0] sm:$0xff]
                %405 = vst [vmem:[%s157 + $0x3d8] sm:$0xff] %v404
                %v406 = vld [vmem:[%s156 + $0x7c0] sm:$0xff]
                %407 = vst [vmem:[%s157 + $0x3e0] sm:$0xff] %v406
                %v408 = vld [vmem:[%s156 + $0x7d0] sm:$0xff]
                %409 = vst [vmem:[%s157 + $0x3e8] sm:$0xff] %v408
                %v410 = vld [vmem:[%s156 + $0x7e0] sm:$0xff]
                %411 = vst [vmem:[%s157 + $0x3f0] sm:$0xff] %v410
                %v412 = vld [vmem:[%s156 + $0x7f0] sm:$0xff]
                %413 = vst [vmem:[%s157 + $0x3f8] sm:$0xff] %v412
                %v414 = vld [vmem:[%s156 + $0x800] sm:$0xff]
                %415 = vst [vmem:[%s157 + $0x400] sm:$0xff] %v414
                %v416 = vld [vmem:[%s156 + $0x810] sm:$0xff]
                %417 = vst [vmem:[%s157 + $0x408] sm:$0xff] %v416
                %v418 = vld [vmem:[%s156 + $0x820] sm:$0xff]
                %419 = vst [vmem:[%s157 + $0x410] sm:$0xff] %v418
                %v420 = vld [vmem:[%s156 + $0x830] sm:$0xff]
                %421 = vst [vmem:[%s157 + $0x418] sm:$0xff] %v420
                %v422 = vld [vmem:[%s156 + $0x840] sm:$0xff]
                %423 = vst [vmem:[%s157 + $0x420] sm:$0xff] %v422
                %v424 = vld [vmem:[%s156 + $0x850] sm:$0xff]
                %425 = vst [vmem:[%s157 + $0x428] sm:$0xff] %v424
                %v426 = vld [vmem:[%s156 + $0x860] sm:$0xff]
                %427 = vst [vmem:[%s157 + $0x430] sm:$0xff] %v426
                %v428 = vld [vmem:[%s156 + $0x870] sm:$0xff]
                %429 = vst [vmem:[%s157 + $0x438] sm:$0xff] %v428
                %v430 = vld [vmem:[%s156 + $0x880] sm:$0xff]
                %431 = vst [vmem:[%s157 + $0x440] sm:$0xff] %v430
                %v432 = vld [vmem:[%s156 + $0x890] sm:$0xff]
                %433 = vst [vmem:[%s157 + $0x448] sm:$0xff] %v432
                %v434 = vld [vmem:[%s156 + $0x8a0] sm:$0xff]
                %435 = vst [vmem:[%s157 + $0x450] sm:$0xff] %v434
                %v436 = vld [vmem:[%s156 + $0x8b0] sm:$0xff]
                %437 = vst [vmem:[%s157 + $0x458] sm:$0xff] %v436
                %v438 = vld [vmem:[%s156 + $0x8c0] sm:$0xff]
                %439 = vst [vmem:[%s157 + $0x460] sm:$0xff] %v438
                %v440 = vld [vmem:[%s156 + $0x8d0] sm:$0xff]
                %441 = vst [vmem:[%s157 + $0x468] sm:$0xff] %v440
                %v442 = vld [vmem:[%s156 + $0x8e0] sm:$0xff]
                %443 = vst [vmem:[%s157 + $0x470] sm:$0xff] %v442
                %v444 = vld [vmem:[%s156 + $0x8f0] sm:$0xff]
                %445 = vst [vmem:[%s157 + $0x478] sm:$0xff] %v444
                %v446 = vld [vmem:[%s156 + $0x900] sm:$0xff]
                %447 = vst [vmem:[%s157 + $0x480] sm:$0xff] %v446
                %v448 = vld [vmem:[%s156 + $0x910] sm:$0xff]
                %449 = vst [vmem:[%s157 + $0x488] sm:$0xff] %v448
                %v450 = vld [vmem:[%s156 + $0x920] sm:$0xff]
                %451 = vst [vmem:[%s157 + $0x490] sm:$0xff] %v450
                %v452 = vld [vmem:[%s156 + $0x930] sm:$0xff]
                %453 = vst [vmem:[%s157 + $0x498] sm:$0xff] %v452
                %v454 = vld [vmem:[%s156 + $0x940] sm:$0xff]
                %455 = vst [vmem:[%s157 + $0x4a0] sm:$0xff] %v454
                %v456 = vld [vmem:[%s156 + $0x950] sm:$0xff]
                %457 = vst [vmem:[%s157 + $0x4a8] sm:$0xff] %v456
                %v458 = vld [vmem:[%s156 + $0x960] sm:$0xff]
                %459 = vst [vmem:[%s157 + $0x4b0] sm:$0xff] %v458
                %v460 = vld [vmem:[%s156 + $0x970] sm:$0xff]
                %461 = vst [vmem:[%s157 + $0x4b8] sm:$0xff] %v460
                %v462 = vld [vmem:[%s156 + $0x980] sm:$0xff]
                %463 = vst [vmem:[%s157 + $0x4c0] sm:$0xff] %v462
                %v464 = vld [vmem:[%s156 + $0x990] sm:$0xff]
                %465 = vst [vmem:[%s157 + $0x4c8] sm:$0xff] %v464
                %v466 = vld [vmem:[%s156 + $0x9a0] sm:$0xff]
                %467 = vst [vmem:[%s157 + $0x4d0] sm:$0xff] %v466
                %v468 = vld [vmem:[%s156 + $0x9b0] sm:$0xff]
                %469 = vst [vmem:[%s157 + $0x4d8] sm:$0xff] %v468
                %v470 = vld [vmem:[%s156 + $0x9c0] sm:$0xff]
                %471 = vst [vmem:[%s157 + $0x4e0] sm:$0xff] %v470
                %v472 = vld [vmem:[%s156 + $0x9d0] sm:$0xff]
                %473 = vst [vmem:[%s157 + $0x4e8] sm:$0xff] %v472
                %v474 = vld [vmem:[%s156 + $0x9e0] sm:$0xff]
                %475 = vst [vmem:[%s157 + $0x4f0] sm:$0xff] %v474
                %v476 = vld [vmem:[%s156 + $0x9f0] sm:$0xff]
                %477 = vst [vmem:[%s157 + $0x4f8] sm:$0xff] %v476
                %v478 = vld [vmem:[%s156 + $0xa00] sm:$0xff]
                %479 = vst [vmem:[%s157 + $0x500] sm:$0xff] %v478
                %v480 = vld [vmem:[%s156 + $0xa10] sm:$0xff]
                %481 = vst [vmem:[%s157 + $0x508] sm:$0xff] %v480
                %v482 = vld [vmem:[%s156 + $0xa20] sm:$0xff]
                %483 = vst [vmem:[%s157 + $0x510] sm:$0xff] %v482
                %v484 = vld [vmem:[%s156 + $0xa30] sm:$0xff]
                %485 = vst [vmem:[%s157 + $0x518] sm:$0xff] %v484
                %v486 = vld [vmem:[%s156 + $0xa40] sm:$0xff]
                %487 = vst [vmem:[%s157 + $0x520] sm:$0xff] %v486
                %v488 = vld [vmem:[%s156 + $0xa50] sm:$0xff]
                %489 = vst [vmem:[%s157 + $0x528] sm:$0xff] %v488
                %v490 = vld [vmem:[%s156 + $0xa60] sm:$0xff]
                %491 = vst [vmem:[%s157 + $0x530] sm:$0xff] %v490
                %v492 = vld [vmem:[%s156 + $0xa70] sm:$0xff]
                %493 = vst [vmem:[%s157 + $0x538] sm:$0xff] %v492
                %v494 = vld [vmem:[%s156 + $0xa80] sm:$0xff]
                %495 = vst [vmem:[%s157 + $0x540] sm:$0xff] %v494
                %v496 = vld [vmem:[%s156 + $0xa90] sm:$0xff]
                %497 = vst [vmem:[%s157 + $0x548] sm:$0xff] %v496
                %v498 = vld [vmem:[%s156 + $0xaa0] sm:$0xff]
                %499 = vst [vmem:[%s157 + $0x550] sm:$0xff] %v498
                %v500 = vld [vmem:[%s156 + $0xab0] sm:$0xff]
                %501 = vst [vmem:[%s157 + $0x558] sm:$0xff] %v500
                %v502 = vld [vmem:[%s156 + $0xac0] sm:$0xff]
                %503 = vst [vmem:[%s157 + $0x560] sm:$0xff] %v502
                %v504 = vld [vmem:[%s156 + $0xad0] sm:$0xff]
                %505 = vst [vmem:[%s157 + $0x568] sm:$0xff] %v504
                %v506 = vld [vmem:[%s156 + $0xae0] sm:$0xff]
                %507 = vst [vmem:[%s157 + $0x570] sm:$0xff] %v506
                %v508 = vld [vmem:[%s156 + $0xaf0] sm:$0xff]
                %509 = vst [vmem:[%s157 + $0x578] sm:$0xff] %v508
                %v510 = vld [vmem:[%s156 + $0xb00] sm:$0xff]
                %511 = vst [vmem:[%s157 + $0x580] sm:$0xff] %v510
                %v512 = vld [vmem:[%s156 + $0xb10] sm:$0xff]
                %513 = vst [vmem:[%s157 + $0x588] sm:$0xff] %v512
                %v514 = vld [vmem:[%s156 + $0xb20] sm:$0xff]
                %515 = vst [vmem:[%s157 + $0x590] sm:$0xff] %v514
                %v516 = vld [vmem:[%s156 + $0xb30] sm:$0xff]
                %517 = vst [vmem:[%s157 + $0x598] sm:$0xff] %v516
                %v518 = vld [vmem:[%s156 + $0xb40] sm:$0xff]
                %519 = vst [vmem:[%s157 + $0x5a0] sm:$0xff] %v518
                %v520 = vld [vmem:[%s156 + $0xb50] sm:$0xff]
                %521 = vst [vmem:[%s157 + $0x5a8] sm:$0xff] %v520
                %v522 = vld [vmem:[%s156 + $0xb60] sm:$0xff]
                %523 = vst [vmem:[%s157 + $0x5b0] sm:$0xff] %v522
                %v524 = vld [vmem:[%s156 + $0xb70] sm:$0xff]
                %525 = vst [vmem:[%s157 + $0x5b8] sm:$0xff] %v524
                %v526 = vld [vmem:[%s156 + $0xb80] sm:$0xff]
                %527 = vst [vmem:[%s157 + $0x5c0] sm:$0xff] %v526
                %v528 = vld [vmem:[%s156 + $0xb90] sm:$0xff]
                %529 = vst [vmem:[%s157 + $0x5c8] sm:$0xff] %v528
                %v530 = vld [vmem:[%s156 + $0xba0] sm:$0xff]
                %531 = vst [vmem:[%s157 + $0x5d0] sm:$0xff] %v530
                %v532 = vld [vmem:[%s156 + $0xbb0] sm:$0xff]
                %533 = vst [vmem:[%s157 + $0x5d8] sm:$0xff] %v532
                %v534 = vld [vmem:[%s156 + $0xbc0] sm:$0xff]
                %535 = vst [vmem:[%s157 + $0x5e0] sm:$0xff] %v534
                %v536 = vld [vmem:[%s156 + $0xbd0] sm:$0xff]
                %537 = vst [vmem:[%s157 + $0x5e8] sm:$0xff] %v536
                %v538 = vld [vmem:[%s156 + $0xbe0] sm:$0xff]
                %539 = vst [vmem:[%s157 + $0x5f0] sm:$0xff] %v538
                %v540 = vld [vmem:[%s156 + $0xbf0] sm:$0xff]
                %541 = vst [vmem:[%s157 + $0x5f8] sm:$0xff] %v540
                %v542 = vld [vmem:[%s156 + $0xc00] sm:$0xff]
                %543 = vst [vmem:[%s157 + $0x600] sm:$0xff] %v542
                %v544 = vld [vmem:[%s156 + $0xc10] sm:$0xff]
                %545 = vst [vmem:[%s157 + $0x608] sm:$0xff] %v544
                %v546 = vld [vmem:[%s156 + $0xc20] sm:$0xff]
                %547 = vst [vmem:[%s157 + $0x610] sm:$0xff] %v546
                %v548 = vld [vmem:[%s156 + $0xc30] sm:$0xff]
                %549 = vst [vmem:[%s157 + $0x618] sm:$0xff] %v548
                %v550 = vld [vmem:[%s156 + $0xc40] sm:$0xff]
                %551 = vst [vmem:[%s157 + $0x620] sm:$0xff] %v550
                %v552 = vld [vmem:[%s156 + $0xc50] sm:$0xff]
                %553 = vst [vmem:[%s157 + $0x628] sm:$0xff] %v552
                %v554 = vld [vmem:[%s156 + $0xc60] sm:$0xff]
                %555 = vst [vmem:[%s157 + $0x630] sm:$0xff] %v554
                %v556 = vld [vmem:[%s156 + $0xc70] sm:$0xff]
                %557 = vst [vmem:[%s157 + $0x638] sm:$0xff] %v556
                %v558 = vld [vmem:[%s156 + $0xc80] sm:$0xff]
                %559 = vst [vmem:[%s157 + $0x640] sm:$0xff] %v558
                %v560 = vld [vmem:[%s156 + $0xc90] sm:$0xff]
                %561 = vst [vmem:[%s157 + $0x648] sm:$0xff] %v560
                %v562 = vld [vmem:[%s156 + $0xca0] sm:$0xff]
                %563 = vst [vmem:[%s157 + $0x650] sm:$0xff] %v562
                %v564 = vld [vmem:[%s156 + $0xcb0] sm:$0xff]
                %565 = vst [vmem:[%s157 + $0x658] sm:$0xff] %v564
                %v566 = vld [vmem:[%s156 + $0xcc0] sm:$0xff]
                %567 = vst [vmem:[%s157 + $0x660] sm:$0xff] %v566
                %v568 = vld [vmem:[%s156 + $0xcd0] sm:$0xff]
                %569 = vst [vmem:[%s157 + $0x668] sm:$0xff] %v568
                %v570 = vld [vmem:[%s156 + $0xce0] sm:$0xff]
                %571 = vst [vmem:[%s157 + $0x670] sm:$0xff] %v570
                %v572 = vld [vmem:[%s156 + $0xcf0] sm:$0xff]
                %573 = vst [vmem:[%s157 + $0x678] sm:$0xff] %v572
                %v574 = vld [vmem:[%s156 + $0xd00] sm:$0xff]
                %575 = vst [vmem:[%s157 + $0x680] sm:$0xff] %v574
                %v576 = vld [vmem:[%s156 + $0xd10] sm:$0xff]
                %577 = vst [vmem:[%s157 + $0x688] sm:$0xff] %v576
                %v578 = vld [vmem:[%s156 + $0xd20] sm:$0xff]
                %579 = vst [vmem:[%s157 + $0x690] sm:$0xff] %v578
                %v580 = vld [vmem:[%s156 + $0xd30] sm:$0xff]
                %581 = vst [vmem:[%s157 + $0x698] sm:$0xff] %v580
                %v582 = vld [vmem:[%s156 + $0xd40] sm:$0xff]
                %583 = vst [vmem:[%s157 + $0x6a0] sm:$0xff] %v582
                %v584 = vld [vmem:[%s156 + $0xd50] sm:$0xff]
                %585 = vst [vmem:[%s157 + $0x6a8] sm:$0xff] %v584
                %v586 = vld [vmem:[%s156 + $0xd60] sm:$0xff]
                %587 = vst [vmem:[%s157 + $0x6b0] sm:$0xff] %v586
                %v588 = vld [vmem:[%s156 + $0xd70] sm:$0xff]
                %589 = vst [vmem:[%s157 + $0x6b8] sm:$0xff] %v588
                %v590 = vld [vmem:[%s156 + $0xd80] sm:$0xff]
                %591 = vst [vmem:[%s157 + $0x6c0] sm:$0xff] %v590
                %v592 = vld [vmem:[%s156 + $0xd90] sm:$0xff]
                %593 = vst [vmem:[%s157 + $0x6c8] sm:$0xff] %v592
                %v594 = vld [vmem:[%s156 + $0xda0] sm:$0xff]
                %595 = vst [vmem:[%s157 + $0x6d0] sm:$0xff] %v594
                %v596 = vld [vmem:[%s156 + $0xdb0] sm:$0xff]
                %597 = vst [vmem:[%s157 + $0x6d8] sm:$0xff] %v596
                %v598 = vld [vmem:[%s156 + $0xdc0] sm:$0xff]
                %599 = vst [vmem:[%s157 + $0x6e0] sm:$0xff] %v598
                %v600 = vld [vmem:[%s156 + $0xdd0] sm:$0xff]
                %601 = vst [vmem:[%s157 + $0x6e8] sm:$0xff] %v600
                %v602 = vld [vmem:[%s156 + $0xde0] sm:$0xff]
                %603 = vst [vmem:[%s157 + $0x6f0] sm:$0xff] %v602
                %v604 = vld [vmem:[%s156 + $0xdf0] sm:$0xff]
                %605 = vst [vmem:[%s157 + $0x6f8] sm:$0xff] %v604
                %v606 = vld [vmem:[%s156 + $0xe00] sm:$0xff]
                %607 = vst [vmem:[%s157 + $0x700] sm:$0xff] %v606
                %v608 = vld [vmem:[%s156 + $0xe10] sm:$0xff]
                %609 = vst [vmem:[%s157 + $0x708] sm:$0xff] %v608
                %v610 = vld [vmem:[%s156 + $0xe20] sm:$0xff]
                %611 = vst [vmem:[%s157 + $0x710] sm:$0xff] %v610
                %v612 = vld [vmem:[%s156 + $0xe30] sm:$0xff]
                %613 = vst [vmem:[%s157 + $0x718] sm:$0xff] %v612
                %v614 = vld [vmem:[%s156 + $0xe40] sm:$0xff]
                %615 = vst [vmem:[%s157 + $0x720] sm:$0xff] %v614
                %v616 = vld [vmem:[%s156 + $0xe50] sm:$0xff]
                %617 = vst [vmem:[%s157 + $0x728] sm:$0xff] %v616
                %v618 = vld [vmem:[%s156 + $0xe60] sm:$0xff]
                %619 = vst [vmem:[%s157 + $0x730] sm:$0xff] %v618
                %v620 = vld [vmem:[%s156 + $0xe70] sm:$0xff]
                %621 = vst [vmem:[%s157 + $0x738] sm:$0xff] %v620
                %v622 = vld [vmem:[%s156 + $0xe80] sm:$0xff]
                %623 = vst [vmem:[%s157 + $0x740] sm:$0xff] %v622
                %v624 = vld [vmem:[%s156 + $0xe90] sm:$0xff]
                %625 = vst [vmem:[%s157 + $0x748] sm:$0xff] %v624
                %v626 = vld [vmem:[%s156 + $0xea0] sm:$0xff]
                %627 = vst [vmem:[%s157 + $0x750] sm:$0xff] %v626
                %v628 = vld [vmem:[%s156 + $0xeb0] sm:$0xff]
                %629 = vst [vmem:[%s157 + $0x758] sm:$0xff] %v628
                %v630 = vld [vmem:[%s156 + $0xec0] sm:$0xff]
                %631 = vst [vmem:[%s157 + $0x760] sm:$0xff] %v630
                %v632 = vld [vmem:[%s156 + $0xed0] sm:$0xff]
                %633 = vst [vmem:[%s157 + $0x768] sm:$0xff] %v632
                %v634 = vld [vmem:[%s156 + $0xee0] sm:$0xff]
                %635 = vst [vmem:[%s157 + $0x770] sm:$0xff] %v634
                %v636 = vld [vmem:[%s156 + $0xef0] sm:$0xff]
                %637 = vst [vmem:[%s157 + $0x778] sm:$0xff] %v636
                %v638 = vld [vmem:[%s156 + $0xf00] sm:$0xff]
                %639 = vst [vmem:[%s157 + $0x780] sm:$0xff] %v638
                %v640 = vld [vmem:[%s156 + $0xf10] sm:$0xff]
                %641 = vst [vmem:[%s157 + $0x788] sm:$0xff] %v640
                %v642 = vld [vmem:[%s156 + $0xf20] sm:$0xff]
                %643 = vst [vmem:[%s157 + $0x790] sm:$0xff] %v642
                %v644 = vld [vmem:[%s156 + $0xf30] sm:$0xff]
                %645 = vst [vmem:[%s157 + $0x798] sm:$0xff] %v644
                %v646 = vld [vmem:[%s156 + $0xf40] sm:$0xff]
                %647 = vst [vmem:[%s157 + $0x7a0] sm:$0xff] %v646
                %v648 = vld [vmem:[%s156 + $0xf50] sm:$0xff]
                %649 = vst [vmem:[%s157 + $0x7a8] sm:$0xff] %v648
                %v650 = vld [vmem:[%s156 + $0xf60] sm:$0xff]
                %651 = vst [vmem:[%s157 + $0x7b0] sm:$0xff] %v650
                %v652 = vld [vmem:[%s156 + $0xf70] sm:$0xff]
                %653 = vst [vmem:[%s157 + $0x7b8] sm:$0xff] %v652
                %v654 = vld [vmem:[%s156 + $0xf80] sm:$0xff]
                %655 = vst [vmem:[%s157 + $0x7c0] sm:$0xff] %v654
                %v656 = vld [vmem:[%s156 + $0xf90] sm:$0xff]
                %657 = vst [vmem:[%s157 + $0x7c8] sm:$0xff] %v656
                %v658 = vld [vmem:[%s156 + $0xfa0] sm:$0xff]
                %659 = vst [vmem:[%s157 + $0x7d0] sm:$0xff] %v658
                %v660 = vld [vmem:[%s156 + $0xfb0] sm:$0xff]
                %661 = vst [vmem:[%s157 + $0x7d8] sm:$0xff] %v660
                %v662 = vld [vmem:[%s156 + $0xfc0] sm:$0xff]
                %663 = vst [vmem:[%s157 + $0x7e0] sm:$0xff] %v662
                %v664 = vld [vmem:[%s156 + $0xfd0] sm:$0xff]
                %665 = vst [vmem:[%s157 + $0x7e8] sm:$0xff] %v664
                %v666 = vld [vmem:[%s156 + $0xfe0] sm:$0xff]
                %667 = vst [vmem:[%s157 + $0x7f0] sm:$0xff] %v666
                %v668 = vld [vmem:[%s156 + $0xff0] sm:$0xff]
                %669 = vst [vmem:[%s157 + $0x7f8] sm:$0xff] %v668
                %v670 = vld [vmem:[%s156 + $0x1000] sm:$0xff]
                %671 = vst [vmem:[%s157 + $0x800] sm:$0xff] %v670
                %v672 = vld [vmem:[%s156 + $0x1010] sm:$0xff]
                %673 = vst [vmem:[%s157 + $0x808] sm:$0xff] %v672
                %v674 = vld [vmem:[%s156 + $0x1020] sm:$0xff]
                %675 = vst [vmem:[%s157 + $0x810] sm:$0xff] %v674
                %v676 = vld [vmem:[%s156 + $0x1030] sm:$0xff]
                %677 = vst [vmem:[%s157 + $0x818] sm:$0xff] %v676
                %v678 = vld [vmem:[%s156 + $0x1040] sm:$0xff]
                %679 = vst [vmem:[%s157 + $0x820] sm:$0xff] %v678
                %v680 = vld [vmem:[%s156 + $0x1050] sm:$0xff]
                %681 = vst [vmem:[%s157 + $0x828] sm:$0xff] %v680
                %v682 = vld [vmem:[%s156 + $0x1060] sm:$0xff]
                %683 = vst [vmem:[%s157 + $0x830] sm:$0xff] %v682
                %v684 = vld [vmem:[%s156 + $0x1070] sm:$0xff]
                %685 = vst [vmem:[%s157 + $0x838] sm:$0xff] %v684
                %v686 = vld [vmem:[%s156 + $0x1080] sm:$0xff]
                %687 = vst [vmem:[%s157 + $0x840] sm:$0xff] %v686
                %v688 = vld [vmem:[%s156 + $0x1090] sm:$0xff]
                %689 = vst [vmem:[%s157 + $0x848] sm:$0xff] %v688
                %v690 = vld [vmem:[%s156 + $0x10a0] sm:$0xff]
                %691 = vst [vmem:[%s157 + $0x850] sm:$0xff] %v690
                %v692 = vld [vmem:[%s156 + $0x10b0] sm:$0xff]
                %693 = vst [vmem:[%s157 + $0x858] sm:$0xff] %v692
                %v694 = vld [vmem:[%s156 + $0x10c0] sm:$0xff]
                %695 = vst [vmem:[%s157 + $0x860] sm:$0xff] %v694
                %v696 = vld [vmem:[%s156 + $0x10d0] sm:$0xff]
                %697 = vst [vmem:[%s157 + $0x868] sm:$0xff] %v696
                %v698 = vld [vmem:[%s156 + $0x10e0] sm:$0xff]
                %699 = vst [vmem:[%s157 + $0x870] sm:$0xff] %v698
                %v700 = vld [vmem:[%s156 + $0x10f0] sm:$0xff]
                %701 = vst [vmem:[%s157 + $0x878] sm:$0xff] %v700
                %v702 = vld [vmem:[%s156 + $0x1100] sm:$0xff]
                %703 = vst [vmem:[%s157 + $0x880] sm:$0xff] %v702
                %v704 = vld [vmem:[%s156 + $0x1110] sm:$0xff]
                %705 = vst [vmem:[%s157 + $0x888] sm:$0xff] %v704
                %v706 = vld [vmem:[%s156 + $0x1120] sm:$0xff]
                %707 = vst [vmem:[%s157 + $0x890] sm:$0xff] %v706
                %v708 = vld [vmem:[%s156 + $0x1130] sm:$0xff]
                %709 = vst [vmem:[%s157 + $0x898] sm:$0xff] %v708
                %v710 = vld [vmem:[%s156 + $0x1140] sm:$0xff]
                %711 = vst [vmem:[%s157 + $0x8a0] sm:$0xff] %v710
                %v712 = vld [vmem:[%s156 + $0x1150] sm:$0xff]
                %713 = vst [vmem:[%s157 + $0x8a8] sm:$0xff] %v712
                %v714 = vld [vmem:[%s156 + $0x1160] sm:$0xff]
                %715 = vst [vmem:[%s157 + $0x8b0] sm:$0xff] %v714
                %v716 = vld [vmem:[%s156 + $0x1170] sm:$0xff]
                %717 = vst [vmem:[%s157 + $0x8b8] sm:$0xff] %v716
                %v718 = vld [vmem:[%s156 + $0x1180] sm:$0xff]
                %719 = vst [vmem:[%s157 + $0x8c0] sm:$0xff] %v718
                %v720 = vld [vmem:[%s156 + $0x1190] sm:$0xff]
                %721 = vst [vmem:[%s157 + $0x8c8] sm:$0xff] %v720
                %v722 = vld [vmem:[%s156 + $0x11a0] sm:$0xff]
                %723 = vst [vmem:[%s157 + $0x8d0] sm:$0xff] %v722
                %v724 = vld [vmem:[%s156 + $0x11b0] sm:$0xff]
                %725 = vst [vmem:[%s157 + $0x8d8] sm:$0xff] %v724
                %v726 = vld [vmem:[%s156 + $0x11c0] sm:$0xff]
                %727 = vst [vmem:[%s157 + $0x8e0] sm:$0xff] %v726
                %v728 = vld [vmem:[%s156 + $0x11d0] sm:$0xff]
                %729 = vst [vmem:[%s157 + $0x8e8] sm:$0xff] %v728
                %v730 = vld [vmem:[%s156 + $0x11e0] sm:$0xff]
                %731 = vst [vmem:[%s157 + $0x8f0] sm:$0xff] %v730
                %v732 = vld [vmem:[%s156 + $0x11f0] sm:$0xff]
                %733 = vst [vmem:[%s157 + $0x8f8] sm:$0xff] %v732
                %v734 = vld [vmem:[%s156 + $0x1200] sm:$0xff]
                %735 = vst [vmem:[%s157 + $0x900] sm:$0xff] %v734
                %v736 = vld [vmem:[%s156 + $0x1210] sm:$0xff]
                %737 = vst [vmem:[%s157 + $0x908] sm:$0xff] %v736
                %v738 = vld [vmem:[%s156 + $0x1220] sm:$0xff]
                %739 = vst [vmem:[%s157 + $0x910] sm:$0xff] %v738
                %v740 = vld [vmem:[%s156 + $0x1230] sm:$0xff]
                %741 = vst [vmem:[%s157 + $0x918] sm:$0xff] %v740
                %v742 = vld [vmem:[%s156 + $0x1240] sm:$0xff]
                %743 = vst [vmem:[%s157 + $0x920] sm:$0xff] %v742
                %v744 = vld [vmem:[%s156 + $0x1250] sm:$0xff]
                %745 = vst [vmem:[%s157 + $0x928] sm:$0xff] %v744
                %v746 = vld [vmem:[%s156 + $0x1260] sm:$0xff]
                %747 = vst [vmem:[%s157 + $0x930] sm:$0xff] %v746
                %v748 = vld [vmem:[%s156 + $0x1270] sm:$0xff]
                %749 = vst [vmem:[%s157 + $0x938] sm:$0xff] %v748
                %v750 = vld [vmem:[%s156 + $0x1280] sm:$0xff]
                %751 = vst [vmem:[%s157 + $0x940] sm:$0xff] %v750
                %v752 = vld [vmem:[%s156 + $0x1290] sm:$0xff]
                %753 = vst [vmem:[%s157 + $0x948] sm:$0xff] %v752
                %v754 = vld [vmem:[%s156 + $0x12a0] sm:$0xff]
                %755 = vst [vmem:[%s157 + $0x950] sm:$0xff] %v754
                %v756 = vld [vmem:[%s156 + $0x12b0] sm:$0xff]
                %757 = vst [vmem:[%s157 + $0x958] sm:$0xff] %v756
                %v758 = vld [vmem:[%s156 + $0x12c0] sm:$0xff]
                %759 = vst [vmem:[%s157 + $0x960] sm:$0xff] %v758
                %v760 = vld [vmem:[%s156 + $0x12d0] sm:$0xff]
                %761 = vst [vmem:[%s157 + $0x968] sm:$0xff] %v760
                %v762 = vld [vmem:[%s156 + $0x12e0] sm:$0xff]
                %763 = vst [vmem:[%s157 + $0x970] sm:$0xff] %v762
                %v764 = vld [vmem:[%s156 + $0x12f0] sm:$0xff]
                %765 = vst [vmem:[%s157 + $0x978] sm:$0xff] %v764
                %v766 = vld [vmem:[%s156 + $0x1300] sm:$0xff]
                %767 = vst [vmem:[%s157 + $0x980] sm:$0xff] %v766
                %v768 = vld [vmem:[%s156 + $0x1310] sm:$0xff]
                %769 = vst [vmem:[%s157 + $0x988] sm:$0xff] %v768
                %v770 = vld [vmem:[%s156 + $0x1320] sm:$0xff]
                %771 = vst [vmem:[%s157 + $0x990] sm:$0xff] %v770
                %v772 = vld [vmem:[%s156 + $0x1330] sm:$0xff]
                %773 = vst [vmem:[%s157 + $0x998] sm:$0xff] %v772
                %v774 = vld [vmem:[%s156 + $0x1340] sm:$0xff]
                %775 = vst [vmem:[%s157 + $0x9a0] sm:$0xff] %v774
                %v776 = vld [vmem:[%s156 + $0x1350] sm:$0xff]
                %777 = vst [vmem:[%s157 + $0x9a8] sm:$0xff] %v776
                %v778 = vld [vmem:[%s156 + $0x1360] sm:$0xff]
                %779 = vst [vmem:[%s157 + $0x9b0] sm:$0xff] %v778
                %v780 = vld [vmem:[%s156 + $0x1370] sm:$0xff]
                %781 = vst [vmem:[%s157 + $0x9b8] sm:$0xff] %v780
                %v782 = vld [vmem:[%s156 + $0x1380] sm:$0xff]
                %783 = vst [vmem:[%s157 + $0x9c0] sm:$0xff] %v782
                %v784 = vld [vmem:[%s156 + $0x1390] sm:$0xff]
                %785 = vst [vmem:[%s157 + $0x9c8] sm:$0xff] %v784
                %v786 = vld [vmem:[%s156 + $0x13a0] sm:$0xff]
                %787 = vst [vmem:[%s157 + $0x9d0] sm:$0xff] %v786
                %v788 = vld [vmem:[%s156 + $0x13b0] sm:$0xff]
                %789 = vst [vmem:[%s157 + $0x9d8] sm:$0xff] %v788
                %v790 = vld [vmem:[%s156 + $0x13c0] sm:$0xff]
                %791 = vst [vmem:[%s157 + $0x9e0] sm:$0xff] %v790
                %v792 = vld [vmem:[%s156 + $0x13d0] sm:$0xff]
                %793 = vst [vmem:[%s157 + $0x9e8] sm:$0xff] %v792
                %v794 = vld [vmem:[%s156 + $0x13e0] sm:$0xff]
                %795 = vst [vmem:[%s157 + $0x9f0] sm:$0xff] %v794
                %v796 = vld [vmem:[%s156 + $0x13f0] sm:$0xff]
                %797 = vst [vmem:[%s157 + $0x9f8] sm:$0xff] %v796
                %v798 = vld [vmem:[%s156 + $0x1400] sm:$0xff]
                %799 = vst [vmem:[%s157 + $0xa00] sm:$0xff] %v798
                %v800 = vld [vmem:[%s156 + $0x1410] sm:$0xff]
                %801 = vst [vmem:[%s157 + $0xa08] sm:$0xff] %v800
                %v802 = vld [vmem:[%s156 + $0x1420] sm:$0xff]
                %803 = vst [vmem:[%s157 + $0xa10] sm:$0xff] %v802
                %v804 = vld [vmem:[%s156 + $0x1430] sm:$0xff]
                %805 = vst [vmem:[%s157 + $0xa18] sm:$0xff] %v804
                %v806 = vld [vmem:[%s156 + $0x1440] sm:$0xff]
                %807 = vst [vmem:[%s157 + $0xa20] sm:$0xff] %v806
                %v808 = vld [vmem:[%s156 + $0x1450] sm:$0xff]
                %809 = vst [vmem:[%s157 + $0xa28] sm:$0xff] %v808
                %v810 = vld [vmem:[%s156 + $0x1460] sm:$0xff]
                %811 = vst [vmem:[%s157 + $0xa30] sm:$0xff] %v810
                %v812 = vld [vmem:[%s156 + $0x1470] sm:$0xff]
                %813 = vst [vmem:[%s157 + $0xa38] sm:$0xff] %v812
                %v814 = vld [vmem:[%s156 + $0x1480] sm:$0xff]
                %815 = vst [vmem:[%s157 + $0xa40] sm:$0xff] %v814
                %v816 = vld [vmem:[%s156 + $0x1490] sm:$0xff]
                %817 = vst [vmem:[%s157 + $0xa48] sm:$0xff] %v816
                %v818 = vld [vmem:[%s156 + $0x14a0] sm:$0xff]
                %819 = vst [vmem:[%s157 + $0xa50] sm:$0xff] %v818
                %v820 = vld [vmem:[%s156 + $0x14b0] sm:$0xff]
                %821 = vst [vmem:[%s157 + $0xa58] sm:$0xff] %v820
                %v822 = vld [vmem:[%s156 + $0x14c0] sm:$0xff]
                %823 = vst [vmem:[%s157 + $0xa60] sm:$0xff] %v822
                %v824 = vld [vmem:[%s156 + $0x14d0] sm:$0xff]
                %825 = vst [vmem:[%s157 + $0xa68] sm:$0xff] %v824
                %v826 = vld [vmem:[%s156 + $0x14e0] sm:$0xff]
                %827 = vst [vmem:[%s157 + $0xa70] sm:$0xff] %v826
                %v828 = vld [vmem:[%s156 + $0x14f0] sm:$0xff]
                %829 = vst [vmem:[%s157 + $0xa78] sm:$0xff] %v828
                %v830 = vld [vmem:[%s156 + $0x1500] sm:$0xff]
                %831 = vst [vmem:[%s157 + $0xa80] sm:$0xff] %v830
                %v832 = vld [vmem:[%s156 + $0x1510] sm:$0xff]
                %833 = vst [vmem:[%s157 + $0xa88] sm:$0xff] %v832
                %v834 = vld [vmem:[%s156 + $0x1520] sm:$0xff]
                %835 = vst [vmem:[%s157 + $0xa90] sm:$0xff] %v834
                %v836 = vld [vmem:[%s156 + $0x1530] sm:$0xff]
                %837 = vst [vmem:[%s157 + $0xa98] sm:$0xff] %v836
                %v838 = vld [vmem:[%s156 + $0x1540] sm:$0xff]
                %839 = vst [vmem:[%s157 + $0xaa0] sm:$0xff] %v838
                %v840 = vld [vmem:[%s156 + $0x1550] sm:$0xff]
                %841 = vst [vmem:[%s157 + $0xaa8] sm:$0xff] %v840
                %v842 = vld [vmem:[%s156 + $0x1560] sm:$0xff]
                %843 = vst [vmem:[%s157 + $0xab0] sm:$0xff] %v842
                %v844 = vld [vmem:[%s156 + $0x1570] sm:$0xff]
                %845 = vst [vmem:[%s157 + $0xab8] sm:$0xff] %v844
                %v846 = vld [vmem:[%s156 + $0x1580] sm:$0xff]
                %847 = vst [vmem:[%s157 + $0xac0] sm:$0xff] %v846
                %v848 = vld [vmem:[%s156 + $0x1590] sm:$0xff]
                %849 = vst [vmem:[%s157 + $0xac8] sm:$0xff] %v848
                %v850 = vld [vmem:[%s156 + $0x15a0] sm:$0xff]
                %851 = vst [vmem:[%s157 + $0xad0] sm:$0xff] %v850
                %v852 = vld [vmem:[%s156 + $0x15b0] sm:$0xff]
                %853 = vst [vmem:[%s157 + $0xad8] sm:$0xff] %v852
                %v854 = vld [vmem:[%s156 + $0x15c0] sm:$0xff]
                %855 = vst [vmem:[%s157 + $0xae0] sm:$0xff] %v854
                %v856 = vld [vmem:[%s156 + $0x15d0] sm:$0xff]
                %857 = vst [vmem:[%s157 + $0xae8] sm:$0xff] %v856
                %v858 = vld [vmem:[%s156 + $0x15e0] sm:$0xff]
                %859 = vst [vmem:[%s157 + $0xaf0] sm:$0xff] %v858
                %v860 = vld [vmem:[%s156 + $0x15f0] sm:$0xff]
                %861 = vst [vmem:[%s157 + $0xaf8] sm:$0xff] %v860
                %v862 = vld [vmem:[%s156 + $0x1600] sm:$0xff]
                %863 = vst [vmem:[%s157 + $0xb00] sm:$0xff] %v862
                %v864 = vld [vmem:[%s156 + $0x1610] sm:$0xff]
                %865 = vst [vmem:[%s157 + $0xb08] sm:$0xff] %v864
                %v866 = vld [vmem:[%s156 + $0x1620] sm:$0xff]
                %867 = vst [vmem:[%s157 + $0xb10] sm:$0xff] %v866
                %v868 = vld [vmem:[%s156 + $0x1630] sm:$0xff]
                %869 = vst [vmem:[%s157 + $0xb18] sm:$0xff] %v868
                %v870 = vld [vmem:[%s156 + $0x1640] sm:$0xff]
                %871 = vst [vmem:[%s157 + $0xb20] sm:$0xff] %v870
                %v872 = vld [vmem:[%s156 + $0x1650] sm:$0xff]
                %873 = vst [vmem:[%s157 + $0xb28] sm:$0xff] %v872
                %v874 = vld [vmem:[%s156 + $0x1660] sm:$0xff]
                %875 = vst [vmem:[%s157 + $0xb30] sm:$0xff] %v874
                %v876 = vld [vmem:[%s156 + $0x1670] sm:$0xff]
                %877 = vst [vmem:[%s157 + $0xb38] sm:$0xff] %v876
                %v878 = vld [vmem:[%s156 + $0x1680] sm:$0xff]
                %879 = vst [vmem:[%s157 + $0xb40] sm:$0xff] %v878
                %v880 = vld [vmem:[%s156 + $0x1690] sm:$0xff]
                %881 = vst [vmem:[%s157 + $0xb48] sm:$0xff] %v880
                %v882 = vld [vmem:[%s156 + $0x16a0] sm:$0xff]
                %883 = vst [vmem:[%s157 + $0xb50] sm:$0xff] %v882
                %v884 = vld [vmem:[%s156 + $0x16b0] sm:$0xff]
                %885 = vst [vmem:[%s157 + $0xb58] sm:$0xff] %v884
                %v886 = vld [vmem:[%s156 + $0x16c0] sm:$0xff]
                %887 = vst [vmem:[%s157 + $0xb60] sm:$0xff] %v886
                %v888 = vld [vmem:[%s156 + $0x16d0] sm:$0xff]
                %889 = vst [vmem:[%s157 + $0xb68] sm:$0xff] %v888
                %v890 = vld [vmem:[%s156 + $0x16e0] sm:$0xff]
                %891 = vst [vmem:[%s157 + $0xb70] sm:$0xff] %v890
                %v892 = vld [vmem:[%s156 + $0x16f0] sm:$0xff]
                %893 = vst [vmem:[%s157 + $0xb78] sm:$0xff] %v892
                %v894 = vld [vmem:[%s156 + $0x1700] sm:$0xff]
                %895 = vst [vmem:[%s157 + $0xb80] sm:$0xff] %v894
                %v896 = vld [vmem:[%s156 + $0x1710] sm:$0xff]
                %897 = vst [vmem:[%s157 + $0xb88] sm:$0xff] %v896
                %v898 = vld [vmem:[%s156 + $0x1720] sm:$0xff]
                %899 = vst [vmem:[%s157 + $0xb90] sm:$0xff] %v898
                %v900 = vld [vmem:[%s156 + $0x1730] sm:$0xff]
                %901 = vst [vmem:[%s157 + $0xb98] sm:$0xff] %v900
                %v902 = vld [vmem:[%s156 + $0x1740] sm:$0xff]
                %903 = vst [vmem:[%s157 + $0xba0] sm:$0xff] %v902
                %v904 = vld [vmem:[%s156 + $0x1750] sm:$0xff]
                %905 = vst [vmem:[%s157 + $0xba8] sm:$0xff] %v904
                %v906 = vld [vmem:[%s156 + $0x1760] sm:$0xff]
                %907 = vst [vmem:[%s157 + $0xbb0] sm:$0xff] %v906
                %v908 = vld [vmem:[%s156 + $0x1770] sm:$0xff]
                %909 = vst [vmem:[%s157 + $0xbb8] sm:$0xff] %v908
                %v910 = vld [vmem:[%s156 + $0x1780] sm:$0xff]
                %911 = vst [vmem:[%s157 + $0xbc0] sm:$0xff] %v910
                %v912 = vld [vmem:[%s156 + $0x1790] sm:$0xff]
                %913 = vst [vmem:[%s157 + $0xbc8] sm:$0xff] %v912
                %v914 = vld [vmem:[%s156 + $0x17a0] sm:$0xff]
                %915 = vst [vmem:[%s157 + $0xbd0] sm:$0xff] %v914
                %v916 = vld [vmem:[%s156 + $0x17b0] sm:$0xff]
                %917 = vst [vmem:[%s157 + $0xbd8] sm:$0xff] %v916
                %v918 = vld [vmem:[%s156 + $0x17c0] sm:$0xff]
                %919 = vst [vmem:[%s157 + $0xbe0] sm:$0xff] %v918
                %v920 = vld [vmem:[%s156 + $0x17d0] sm:$0xff]
                %921 = vst [vmem:[%s157 + $0xbe8] sm:$0xff] %v920
                %v922 = vld [vmem:[%s156 + $0x17e0] sm:$0xff]
                %923 = vst [vmem:[%s157 + $0xbf0] sm:$0xff] %v922
                %v924 = vld [vmem:[%s156 + $0x17f0] sm:$0xff]
                %925 = vst [vmem:[%s157 + $0xbf8] sm:$0xff] %v924
                %v926 = vld [vmem:[%s156 + $0x1800] sm:$0xff]
                %927 = vst [vmem:[%s157 + $0xc00] sm:$0xff] %v926
                %v928 = vld [vmem:[%s156 + $0x1810] sm:$0xff]
                %929 = vst [vmem:[%s157 + $0xc08] sm:$0xff] %v928
                %v930 = vld [vmem:[%s156 + $0x1820] sm:$0xff]
                %931 = vst [vmem:[%s157 + $0xc10] sm:$0xff] %v930
                %v932 = vld [vmem:[%s156 + $0x1830] sm:$0xff]
                %933 = vst [vmem:[%s157 + $0xc18] sm:$0xff] %v932
                %v934 = vld [vmem:[%s156 + $0x1840] sm:$0xff]
                %935 = vst [vmem:[%s157 + $0xc20] sm:$0xff] %v934
                %v936 = vld [vmem:[%s156 + $0x1850] sm:$0xff]
                %937 = vst [vmem:[%s157 + $0xc28] sm:$0xff] %v936
                %v938 = vld [vmem:[%s156 + $0x1860] sm:$0xff]
                %939 = vst [vmem:[%s157 + $0xc30] sm:$0xff] %v938
                %v940 = vld [vmem:[%s156 + $0x1870] sm:$0xff]
                %941 = vst [vmem:[%s157 + $0xc38] sm:$0xff] %v940
              $region41: #{atari_backbone.5} parent=35 // loop_footer
                %s155 = sadd.s32 1, %s151
              $region42: #{atari_backbone.5} parent=35 // loop_footer_branch
                %150 = sbr.rel target = $region38
              $region43: #{atari_backbone.5} parent=35 // loop_exit
                _
            $region36: #{atari_backbone.5} parent=27 // pred_fallthru
              _
          $region28: #{atari_backbone.5} parent=23 // pred_fallthru
            _
          %1738 = vnop
        $region24: #{atari_backbone.5} parent=19 // pred_fallthru
          _
        // Predicated region
        $region59: #{atari_backbone.5} parent=19 // pred_check
          %p1739 = pneg %p79
        $region60: #{atari_backbone.5} parent=19 // pred_check_branch
          %1741 = sbr.rel (%p1739) target = $region62
        $region61: #{atari_backbone.5} parent=19 // pred_region
          %s1742 = smul.u32 2, %s12
          %p1743 = scmp.lt.s32.totalorder %s1742, 3
          %s1744 = scalar_select %p1743, %s1742, 3
          %s1745 = scalar_lea.vmem %s2, %s1744
          %s1746 = smul.u32 2, %s12
        $region62: #{atari_backbone.5} parent=19 // pred_fallthru
          _
      $region20: #{atari_backbone.5} parent=5 // pred_fallthru
        _
      %p1747 = scmp.le.s32.totalorder 1, %s12
      %p1748 = scmp.lt.s32.totalorder %s12, 3
      %p1749 = pnand %p1747, %p1748
      %p1750 = pneg %p1749
      // Predicated region
      $region63: #{atari_backbone.5} parent=5 // pred_check
        _
      $region64: #{atari_backbone.5} parent=5 // pred_check_branch
        %1752 = sbr.rel (%p1749) target = $region66
      $region65: #{atari_backbone.5} parent=5 // pred_region
        %s1753 = ssub.s32 %s12, 1
        %s1754 = sand.u32 %s46, 1
        %s1755 = sand.u32 %s46, 1
        %s1756 = smul.addr %s1755, 3136
        %s1757 = scalar_lea.vmem [#allocation2], %s1756
        // Predicated region
        $region67: #{atari_backbone.5} parent=65 // pred_check
          %p1758 = pneg %p59
        $region68: #{atari_backbone.5} parent=65 // pred_check_branch
          %1760 = sbr.rel (%p1758) target = $region70
        $region69: #{atari_backbone.5} parent=65 // pred_region
          _
        $region70: #{atari_backbone.5} parent=65 // pred_fallthru
          _
        %p1761 = pneg %p33
        %p1762 = pneg %p30
        %s1763 = sand.u32 %s46, 1
        %s1764 = sand.u32 %s46, 1
        %s1765 = smul.addr %s1764, 3136
        %s1766 = scalar_lea.vmem [#allocation2], %s1765
        %p1767 = pneg %p59
        %p1768 = pneg %p56
        %s1769 = smul.u32 2, %s17
        %p1770 = scmp.lt.s32.totalorder %s1769, 3
        %s1771 = scalar_select %p1770, %s1769, 3
        %s1772 = scalar_lea.vmem %s2, %s1771
        %p1773 = pneg %p85
        %p1774 = pneg %p82
        %p1775 = pneg %p111
        %p1776 = pneg %p108
        %s1777 = sand.u32 %s98, 1
        %s1778 = scalar_lea.sflag [#allocation4], %s1777
        %s1779 = sand.u32 %s98, 1
        %s1780 = smul.addr %s1779, 4
        %s1781 = scalar_lea.vmem [#allocation3], %s1780
        %s1782 = smul.u32 2, %s17
        %s1783 = smul.u32 2, %s17
        %p1784 = scmp.lt.s32.totalorder %s1783, 3
        %s1785 = scalar_select %p1784, %s1783, 3
        %s1786 = scalar_lea.vmem %s2, %s1785
        %s1787 = smul.u32 2, %s17
        %s1788 = smul.u32 2, %s17
        %v1790 = vld [vmem:[%s0] sm:$0xff]
        %v1791 = vld [vmem:[%s0 + $0x8] sm:$0xff]
        %v1792 = vld [vmem:[%s0 + $0x10] sm:$0xff]
        %v1793 = vld [vmem:[%s0 + $0x18] sm:$0xff]
        %v1794 = vld [vmem:[%s0 + $0x20] sm:$0xff]
        %v1795 = vld [vmem:[%s0 + $0x28] sm:$0xff]
        %v1796 = vld [vmem:[%s0 + $0x30] sm:$0x3]
        %v1804 = vcombine.high %v1790, %v1790
        %v1806 = vunpack.c.l.s4 1983009808
        %v1807 = vunpack.c.0.s8 %v1806
        %v1808 = vlaneseq
        %v1809 = vshrl.u32 %v1808, 7
        %v1810 = vsub.s32 %v1807, %v1809
        %v1811 = vrot.slane %v1790, %v1810
        %v1813 = vunpack.c.l.s4 1983009808
        %v1814 = vunpack.c.0.s8 %v1813
        %v1815 = vlaneseq
        %v1816 = vshrl.u32 %v1815, 7
        %v1817 = vsub.s32 %v1814, %v1816
        %v1818 = vrot.slane %v1804, %v1817
        %v1819 = vcombine.high %v1811, %v1811
        %v1820 = vcombine.high %v1818, %v1818
        %v1821 = vcombine.high %v1791, %v1791
        %v1823 = vunpack.c.l.s4 1983009808
        %v1824 = vunpack.c.0.s8 %v1823
        %v1825 = vlaneseq
        %v1826 = vshrl.u32 %v1825, 7
        %v1827 = vsub.s32 %v1824, %v1826
        %v1828 = vrot.slane %v1791, %v1827
        %v1830 = vunpack.c.l.s4 1983009808
        %v1831 = vunpack.c.0.s8 %v1830
        %v1832 = vlaneseq
        %v1833 = vshrl.u32 %v1832, 7
        %v1834 = vsub.s32 %v1831, %v1833
        %v1835 = vrot.slane %v1821, %v1834
        %v1836 = vcombine.high %v1828, %v1828
        %v1837 = vcombine.high %v1835, %v1835
        %v1838 = vcombine.high %v1792, %v1792
        %v1840 = vunpack.c.l.s4 1983009808
        %v1841 = vunpack.c.0.s8 %v1840
        %v1842 = vlaneseq
        %v1843 = vshrl.u32 %v1842, 7
        %v1844 = vsub.s32 %v1841, %v1843
        %v1845 = vrot.slane %v1792, %v1844
        %v1847 = vunpack.c.l.s4 1983009808
        %v1848 = vunpack.c.0.s8 %v1847
        %v1849 = vlaneseq
        %v1850 = vshrl.u32 %v1849, 7
        %v1851 = vsub.s32 %v1848, %v1850
        %v1852 = vrot.slane %v1838, %v1851
        %v1853 = vcombine.high %v1845, %v1845
        %v1854 = vcombine.high %v1852, %v1852
        %v1855 = vcombine.high %v1793, %v1793
        %v1857 = vunpack.c.l.s4 1983009808
        %v1858 = vunpack.c.0.s8 %v1857
        %v1859 = vlaneseq
        %v1860 = vshrl.u32 %v1859, 7
        %v1861 = vsub.s32 %v1858, %v1860
        %v1862 = vrot.slane %v1793, %v1861
        %v1864 = vunpack.c.l.s4 1983009808
        %v1865 = vunpack.c.0.s8 %v1864
        %v1866 = vlaneseq
        %v1867 = vshrl.u32 %v1866, 7
        %v1868 = vsub.s32 %v1865, %v1867
        %v1869 = vrot.slane %v1855, %v1868
        %v1870 = vcombine.high %v1862, %v1862
        %v1871 = vcombine.high %v1869, %v1869
        %v1872 = vcombine.high %v1794, %v1794
        %v1874 = vunpack.c.l.s4 1983009808
        %v1875 = vunpack.c.0.s8 %v1874
        %v1876 = vlaneseq
        %v1877 = vshrl.u32 %v1876, 7
        %v1878 = vsub.s32 %v1875, %v1877
        %v1879 = vrot.slane %v1794, %v1878
        %v1881 = vunpack.c.l.s4 1983009808
        %v1882 = vunpack.c.0.s8 %v1881
        %v1883 = vlaneseq
        %v1884 = vshrl.u32 %v1883, 7
        %v1885 = vsub.s32 %v1882, %v1884
        %v1886 = vrot.slane %v1872, %v1885
        %v1887 = vcombine.high %v1879, %v1879
        %v1888 = vcombine.high %v1886, %v1886
        %v1889 = vcombine.high %v1795, %v1795
        %v1891 = vunpack.c.l.s4 1983009808
        %v1892 = vunpack.c.0.s8 %v1891
        %v1893 = vlaneseq
        %v1894 = vshrl.u32 %v1893, 7
        %v1895 = vsub.s32 %v1892, %v1894
        %v1896 = vrot.slane %v1795, %v1895
        %v1898 = vunpack.c.l.s4 1983009808
        %v1899 = vunpack.c.0.s8 %v1898
        %v1900 = vlaneseq
        %v1901 = vshrl.u32 %v1900, 7
        %v1902 = vsub.s32 %v1899, %v1901
        %v1903 = vrot.slane %v1889, %v1902
        %v1904 = vcombine.high %v1896, %v1896
        %v1905 = vcombine.high %v1903, %v1903
        %v1907 = vunpack.c.l.s4 1983009808
        %v1908 = vunpack.c.0.s8 %v1907
        %v1909 = vlaneseq
        %v1910 = vshrl.u32 %v1909, 7
        %v1911 = vsub.s32 %v1908, %v1910
        %v1912 = vrot.slane %v1796, %v1911
        %v1938 = vpack.c.bf16 %v1811, %v1811
        %v1939 = vpack.c.bf16 %v1819, %v1819
        %v1940 = vpack.c.bf16 %v1818, %v1818
        %v1941 = vpack.c.bf16 %v1820, %v1820
        %v1942 = vpack.c.bf16 %v1828, %v1828
        %v1943 = vpack.c.bf16 %v1836, %v1836
        %v1944 = vpack.c.bf16 %v1835, %v1835
        %v1945 = vpack.c.bf16 %v1837, %v1837
        %v1946 = vpack.c.bf16 %v1845, %v1845
        %v1947 = vpack.c.bf16 %v1853, %v1853
        %v1948 = vpack.c.bf16 %v1852, %v1852
        %v1949 = vpack.c.bf16 %v1854, %v1854
        %v1950 = vpack.c.bf16 %v1862, %v1862
        %v1951 = vpack.c.bf16 %v1870, %v1870
        %v1952 = vpack.c.bf16 %v1869, %v1869
        %v1953 = vpack.c.bf16 %v1871, %v1871
        %v1954 = vpack.c.bf16 %v1879, %v1879
        %v1955 = vpack.c.bf16 %v1887, %v1887
        %v1956 = vpack.c.bf16 %v1886, %v1886
        %v1957 = vpack.c.bf16 %v1888, %v1888
        %v1958 = vpack.c.bf16 %v1896, %v1896
        %v1959 = vpack.c.bf16 %v1904, %v1904
        %v1960 = vpack.c.bf16 %v1903, %v1903
        %v1961 = vpack.c.bf16 %v1905, %v1905
        %v1962 = vpack.c.bf16 %v1912, %v1912
        %v1963 = vld [vmem:[%s1757] sm:$0xff]
        %v1964 = vld [vmem:[%s1757 + $0x8] sm:$0xff]
        %v1965 = vld [vmem:[%s1757 + $0x10] sm:$0xff]
        %v1966 = vld [vmem:[%s1757 + $0x18] sm:$0xff]
        %v1967 = vld [vmem:[%s1757 + $0x20] sm:$0xff]
        %v1968 = vld [vmem:[%s1757 + $0x28] sm:$0xff]
        %v1969 = vld [vmem:[%s1757 + $0x30] sm:$0xff]
        %v1970 = vld [vmem:[%s1757 + $0x38] sm:$0xff]
        %v1971 = vld [vmem:[%s1757 + $0x40] sm:$0xff]
        %v1972 = vld [vmem:[%s1757 + $0x48] sm:$0xff]
        %v1973 = vld [vmem:[%s1757 + $0x50] sm:$0xff]
        %v1974 = vld [vmem:[%s1757 + $0x58] sm:$0xff]
        %v1975 = vld [vmem:[%s1757 + $0x60] sm:$0xff]
        %v1976 = vld [vmem:[%s1757 + $0x68] sm:$0xff]
        %v1977 = vld [vmem:[%s1757 + $0x70] sm:$0xff]
        %v1978 = vld [vmem:[%s1757 + $0x78] sm:$0xff]
        %v1979 = vld [vmem:[%s1757 + $0x80] sm:$0xff]
        %v1980 = vld [vmem:[%s1757 + $0x88] sm:$0xff]
        %v1981 = vld [vmem:[%s1757 + $0x90] sm:$0xff]
        %v1982 = vld [vmem:[%s1757 + $0x98] sm:$0xff]
        %v1983 = vld [vmem:[%s1757 + $0xa0] sm:$0xff]
        %v1984 = vld [vmem:[%s1757 + $0xa8] sm:$0xff]
        %v1985 = vld [vmem:[%s1757 + $0xb0] sm:$0xff]
        %v1986 = vld [vmem:[%s1757 + $0xb8] sm:$0xff]
        %v1987 = vld [vmem:[%s1757 + $0xc0] sm:$0xff]
        %v1988 = vld [vmem:[%s1757 + $0xc8] sm:$0xff]
        %v1989 = vld [vmem:[%s1757 + $0xd0] sm:$0xff]
        %v1990 = vld [vmem:[%s1757 + $0xd8] sm:$0xff]
        %v1991 = vld [vmem:[%s1757 + $0xe0] sm:$0xff]
        %v1992 = vld [vmem:[%s1757 + $0xe8] sm:$0xff]
        %v1993 = vld [vmem:[%s1757 + $0xf0] sm:$0xff]
        %v1994 = vld [vmem:[%s1757 + $0xf8] sm:$0xff]
        %v1995 = vld [vmem:[%s1757 + $0x100] sm:$0xff]
        %v1996 = vld [vmem:[%s1757 + $0x108] sm:$0xff]
        %v1997 = vld [vmem:[%s1757 + $0x110] sm:$0xff]
        %v1998 = vld [vmem:[%s1757 + $0x118] sm:$0xff]
        %v1999 = vld [vmem:[%s1757 + $0x120] sm:$0xff]
        %v2000 = vld [vmem:[%s1757 + $0x128] sm:$0xff]
        %v2001 = vld [vmem:[%s1757 + $0x130] sm:$0xff]
        %v2002 = vld [vmem:[%s1757 + $0x138] sm:$0xff]
        %v2003 = vld [vmem:[%s1757 + $0x140] sm:$0xff]
        %v2004 = vld [vmem:[%s1757 + $0x148] sm:$0xff]
        %v2005 = vld [vmem:[%s1757 + $0x150] sm:$0xff]
        %v2006 = vld [vmem:[%s1757 + $0x158] sm:$0xff]
        %v2007 = vld [vmem:[%s1757 + $0x160] sm:$0xff]
        %v2008 = vld [vmem:[%s1757 + $0x168] sm:$0xff]
        %v2009 = vld [vmem:[%s1757 + $0x170] sm:$0xff]
        %v2010 = vld [vmem:[%s1757 + $0x178] sm:$0xff]
        %v2011 = vld [vmem:[%s1757 + $0x180] sm:$0xff]
        %v2012 = vld [vmem:[%s1757 + $0x188] sm:$0xff]
        %v2013 = vld [vmem:[%s1757 + $0x190] sm:$0xff]
        %v2014 = vld [vmem:[%s1757 + $0x198] sm:$0xff]
        %v2015 = vld [vmem:[%s1757 + $0x1a0] sm:$0xff]
        %v2016 = vld [vmem:[%s1757 + $0x1a8] sm:$0xff]
        %v2017 = vld [vmem:[%s1757 + $0x1b0] sm:$0xff]
        %v2018 = vld [vmem:[%s1757 + $0x1b8] sm:$0xff]
        %v2019 = vld [vmem:[%s1757 + $0x1c0] sm:$0xff]
        %v2020 = vld [vmem:[%s1757 + $0x1c8] sm:$0xff]
        %v2021 = vld [vmem:[%s1757 + $0x1d0] sm:$0xff]
        %v2022 = vld [vmem:[%s1757 + $0x1d8] sm:$0xff]
        %v2023 = vld [vmem:[%s1757 + $0x1e0] sm:$0xff]
        %v2024 = vld [vmem:[%s1757 + $0x1e8] sm:$0xff]
        %v2025 = vld [vmem:[%s1757 + $0x1f0] sm:$0xff]
        %v2026 = vld [vmem:[%s1757 + $0x1f8] sm:$0xff]
        %v2027 = vld [vmem:[%s1757 + $0x200] sm:$0xff]
        %v2028 = vld [vmem:[%s1757 + $0x208] sm:$0xff]
        %v2029 = vld [vmem:[%s1757 + $0x210] sm:$0xff]
        %v2030 = vld [vmem:[%s1757 + $0x218] sm:$0xff]
        %v2031 = vld [vmem:[%s1757 + $0x220] sm:$0xff]
        %v2032 = vld [vmem:[%s1757 + $0x228] sm:$0xff]
        %v2033 = vld [vmem:[%s1757 + $0x230] sm:$0xff]
        %v2034 = vld [vmem:[%s1757 + $0x238] sm:$0xff]
        %v2035 = vld [vmem:[%s1757 + $0x240] sm:$0xff]
        %v2036 = vld [vmem:[%s1757 + $0x248] sm:$0xff]
        %v2037 = vld [vmem:[%s1757 + $0x250] sm:$0xff]
        %v2038 = vld [vmem:[%s1757 + $0x258] sm:$0xff]
        %v2039 = vld [vmem:[%s1757 + $0x260] sm:$0xff]
        %v2040 = vld [vmem:[%s1757 + $0x268] sm:$0xff]
        %v2041 = vld [vmem:[%s1757 + $0x270] sm:$0xff]
        %v2042 = vld [vmem:[%s1757 + $0x278] sm:$0xff]
        %v2043 = vld [vmem:[%s1757 + $0x280] sm:$0xff]
        %v2044 = vld [vmem:[%s1757 + $0x288] sm:$0xff]
        %v2045 = vld [vmem:[%s1757 + $0x290] sm:$0xff]
        %v2046 = vld [vmem:[%s1757 + $0x298] sm:$0xff]
        %v2047 = vld [vmem:[%s1757 + $0x2a0] sm:$0xff]
        %v2048 = vld [vmem:[%s1757 + $0x2a8] sm:$0xff]
        %v2049 = vld [vmem:[%s1757 + $0x2b0] sm:$0xff]
        %v2050 = vld [vmem:[%s1757 + $0x2b8] sm:$0xff]
        %v2051 = vld [vmem:[%s1757 + $0x2c0] sm:$0xff]
        %v2052 = vld [vmem:[%s1757 + $0x2c8] sm:$0xff]
        %v2053 = vld [vmem:[%s1757 + $0x2d0] sm:$0xff]
        %v2054 = vld [vmem:[%s1757 + $0x2d8] sm:$0xff]
        %v2055 = vld [vmem:[%s1757 + $0x2e0] sm:$0xff]
        %v2056 = vld [vmem:[%s1757 + $0x2e8] sm:$0xff]
        %v2057 = vld [vmem:[%s1757 + $0x2f0] sm:$0xff]
        %v2058 = vld [vmem:[%s1757 + $0x2f8] sm:$0xff]
        %v2059 = vld [vmem:[%s1757 + $0x300] sm:$0xff]
        %v2060 = vld [vmem:[%s1757 + $0x308] sm:$0xff]
        %v2061 = vld [vmem:[%s1757 + $0x310] sm:$0xff]
        %v2062 = vld [vmem:[%s1757 + $0x318] sm:$0xff]
        %v2063 = vld [vmem:[%s1757 + $0x320] sm:$0xff]
        %v2064 = vld [vmem:[%s1757 + $0x328] sm:$0xff]
        %v2065 = vld [vmem:[%s1757 + $0x330] sm:$0xff]
        %v2066 = vld [vmem:[%s1757 + $0x338] sm:$0xff]
        %v2067 = vld [vmem:[%s1757 + $0x340] sm:$0xff]
        %v2068 = vld [vmem:[%s1757 + $0x348] sm:$0xff]
        %v2069 = vld [vmem:[%s1757 + $0x350] sm:$0xff]
        %v2070 = vld [vmem:[%s1757 + $0x358] sm:$0xff]
        %v2071 = vld [vmem:[%s1757 + $0x360] sm:$0xff]
        %v2072 = vld [vmem:[%s1757 + $0x368] sm:$0xff]
        %v2073 = vld [vmem:[%s1757 + $0x370] sm:$0xff]
        %v2074 = vld [vmem:[%s1757 + $0x378] sm:$0xff]
        %v2075 = vld [vmem:[%s1757 + $0x380] sm:$0xff]
        %v2076 = vld [vmem:[%s1757 + $0x388] sm:$0xff]
        %v2077 = vld [vmem:[%s1757 + $0x390] sm:$0xff]
        %v2078 = vld [vmem:[%s1757 + $0x398] sm:$0xff]
        %v2079 = vld [vmem:[%s1757 + $0x3a0] sm:$0xff]
        %v2080 = vld [vmem:[%s1757 + $0x3a8] sm:$0xff]
        %v2081 = vld [vmem:[%s1757 + $0x3b0] sm:$0xff]
        %v2082 = vld [vmem:[%s1757 + $0x3b8] sm:$0xff]
        %v2083 = vld [vmem:[%s1757 + $0x3c0] sm:$0xff]
        %v2084 = vld [vmem:[%s1757 + $0x3c8] sm:$0xff]
        %v2085 = vld [vmem:[%s1757 + $0x3d0] sm:$0xff]
        %v2086 = vld [vmem:[%s1757 + $0x3d8] sm:$0xff]
        %v2087 = vld [vmem:[%s1757 + $0x3e0] sm:$0xff]
        %v2088 = vld [vmem:[%s1757 + $0x3e8] sm:$0xff]
        %v2089 = vld [vmem:[%s1757 + $0x3f0] sm:$0xff]
        %v2090 = vld [vmem:[%s1757 + $0x3f8] sm:$0xff]
        %v2091 = vld [vmem:[%s1757 + $0x400] sm:$0xff]
        %v2092 = vld [vmem:[%s1757 + $0x408] sm:$0xff]
        %v2093 = vld [vmem:[%s1757 + $0x410] sm:$0xff]
        %v2094 = vld [vmem:[%s1757 + $0x418] sm:$0xff]
        %v2095 = vld [vmem:[%s1757 + $0x420] sm:$0xff]
        %v2096 = vld [vmem:[%s1757 + $0x428] sm:$0xff]
        %v2097 = vld [vmem:[%s1757 + $0x430] sm:$0xff]
        %v2098 = vld [vmem:[%s1757 + $0x438] sm:$0xff]
        %v2099 = vld [vmem:[%s1757 + $0x440] sm:$0xff]
        %v2100 = vld [vmem:[%s1757 + $0x448] sm:$0xff]
        %v2101 = vld [vmem:[%s1757 + $0x450] sm:$0xff]
        %v2102 = vld [vmem:[%s1757 + $0x458] sm:$0xff]
        %v2103 = vld [vmem:[%s1757 + $0x460] sm:$0xff]
        %v2104 = vld [vmem:[%s1757 + $0x468] sm:$0xff]
        %v2105 = vld [vmem:[%s1757 + $0x470] sm:$0xff]
        %v2106 = vld [vmem:[%s1757 + $0x478] sm:$0xff]
        %v2107 = vld [vmem:[%s1757 + $0x480] sm:$0xff]
        %v2108 = vld [vmem:[%s1757 + $0x488] sm:$0xff]
        %v2109 = vld [vmem:[%s1757 + $0x490] sm:$0xff]
        %v2110 = vld [vmem:[%s1757 + $0x498] sm:$0xff]
        %v2111 = vld [vmem:[%s1757 + $0x4a0] sm:$0xff]
        %v2112 = vld [vmem:[%s1757 + $0x4a8] sm:$0xff]
        %v2113 = vld [vmem:[%s1757 + $0x4b0] sm:$0xff]
        %v2114 = vld [vmem:[%s1757 + $0x4b8] sm:$0xff]
        %v2115 = vld [vmem:[%s1757 + $0x4c0] sm:$0xff]
        %v2116 = vld [vmem:[%s1757 + $0x4c8] sm:$0xff]
        %v2117 = vld [vmem:[%s1757 + $0x4d0] sm:$0xff]
        %v2118 = vld [vmem:[%s1757 + $0x4d8] sm:$0xff]
        %v2119 = vld [vmem:[%s1757 + $0x4e0] sm:$0xff]
        %v2120 = vld [vmem:[%s1757 + $0x4e8] sm:$0xff]
        %v2121 = vld [vmem:[%s1757 + $0x4f0] sm:$0xff]
        %v2122 = vld [vmem:[%s1757 + $0x4f8] sm:$0xff]
        %v2123 = vld [vmem:[%s1757 + $0x500] sm:$0xff]
        %v2124 = vld [vmem:[%s1757 + $0x508] sm:$0xff]
        %v2125 = vld [vmem:[%s1757 + $0x510] sm:$0xff]
        %v2126 = vld [vmem:[%s1757 + $0x518] sm:$0xff]
        %v2127 = vld [vmem:[%s1757 + $0x520] sm:$0xff]
        %v2128 = vld [vmem:[%s1757 + $0x528] sm:$0xff]
        %v2129 = vld [vmem:[%s1757 + $0x530] sm:$0xff]
        %v2130 = vld [vmem:[%s1757 + $0x538] sm:$0xff]
        %v2131 = vld [vmem:[%s1757 + $0x540] sm:$0xff]
        %v2132 = vld [vmem:[%s1757 + $0x548] sm:$0xff]
        %v2133 = vld [vmem:[%s1757 + $0x550] sm:$0xff]
        %v2134 = vld [vmem:[%s1757 + $0x558] sm:$0xff]
        %v2135 = vld [vmem:[%s1757 + $0x560] sm:$0xff]
        %v2136 = vld [vmem:[%s1757 + $0x568] sm:$0xff]
        %v2137 = vld [vmem:[%s1757 + $0x570] sm:$0xff]
        %v2138 = vld [vmem:[%s1757 + $0x578] sm:$0xff]
        %v2139 = vld [vmem:[%s1757 + $0x580] sm:$0xff]
        %v2140 = vld [vmem:[%s1757 + $0x588] sm:$0xff]
        %v2141 = vld [vmem:[%s1757 + $0x590] sm:$0xff]
        %v2142 = vld [vmem:[%s1757 + $0x598] sm:$0xff]
        %v2143 = vld [vmem:[%s1757 + $0x5a0] sm:$0xff]
        %v2144 = vld [vmem:[%s1757 + $0x5a8] sm:$0xff]
        %v2145 = vld [vmem:[%s1757 + $0x5b0] sm:$0xff]
        %v2146 = vld [vmem:[%s1757 + $0x5b8] sm:$0xff]
        %v2147 = vld [vmem:[%s1757 + $0x5c0] sm:$0xff]
        %v2148 = vld [vmem:[%s1757 + $0x5c8] sm:$0xff]
        %v2149 = vld [vmem:[%s1757 + $0x5d0] sm:$0xff]
        %v2150 = vld [vmem:[%s1757 + $0x5d8] sm:$0xff]
        %v2151 = vld [vmem:[%s1757 + $0x5e0] sm:$0xff]
        %v2152 = vld [vmem:[%s1757 + $0x5e8] sm:$0xff]
        %v2153 = vld [vmem:[%s1757 + $0x5f0] sm:$0xff]
        %v2154 = vld [vmem:[%s1757 + $0x5f8] sm:$0xff]
        %v2155 = vld [vmem:[%s1757 + $0x600] sm:$0xff]
        %v2156 = vld [vmem:[%s1757 + $0x608] sm:$0xff]
        %v2157 = vld [vmem:[%s1757 + $0x610] sm:$0xff]
        %v2158 = vld [vmem:[%s1757 + $0x618] sm:$0xff]
        %v2159 = vld [vmem:[%s1757 + $0x620] sm:$0xff]
        %v2160 = vld [vmem:[%s1757 + $0x628] sm:$0xff]
        %v2161 = vld [vmem:[%s1757 + $0x630] sm:$0xff]
        %v2162 = vld [vmem:[%s1757 + $0x638] sm:$0xff]
        %v2163 = vld [vmem:[%s1757 + $0x640] sm:$0xff]
        %v2164 = vld [vmem:[%s1757 + $0x648] sm:$0xff]
        %v2165 = vld [vmem:[%s1757 + $0x650] sm:$0xff]
        %v2166 = vld [vmem:[%s1757 + $0x658] sm:$0xff]
        %v2167 = vld [vmem:[%s1757 + $0x660] sm:$0xff]
        %v2168 = vld [vmem:[%s1757 + $0x668] sm:$0xff]
        %v2169 = vld [vmem:[%s1757 + $0x670] sm:$0xff]
        %v2170 = vld [vmem:[%s1757 + $0x678] sm:$0xff]
        %v2171 = vld [vmem:[%s1757 + $0x680] sm:$0xff]
        %v2172 = vld [vmem:[%s1757 + $0x688] sm:$0xff]
        %v2173 = vld [vmem:[%s1757 + $0x690] sm:$0xff]
        %v2174 = vld [vmem:[%s1757 + $0x698] sm:$0xff]
        %v2175 = vld [vmem:[%s1757 + $0x6a0] sm:$0xff]
        %v2176 = vld [vmem:[%s1757 + $0x6a8] sm:$0xff]
        %v2177 = vld [vmem:[%s1757 + $0x6b0] sm:$0xff]
        %v2178 = vld [vmem:[%s1757 + $0x6b8] sm:$0xff]
        %v2179 = vld [vmem:[%s1757 + $0x6c0] sm:$0xff]
        %v2180 = vld [vmem:[%s1757 + $0x6c8] sm:$0xff]
        %v2181 = vld [vmem:[%s1757 + $0x6d0] sm:$0xff]
        %v2182 = vld [vmem:[%s1757 + $0x6d8] sm:$0xff]
        %v2183 = vld [vmem:[%s1757 + $0x6e0] sm:$0xff]
        %v2184 = vld [vmem:[%s1757 + $0x6e8] sm:$0xff]
        %v2185 = vld [vmem:[%s1757 + $0x6f0] sm:$0xff]
        %v2186 = vld [vmem:[%s1757 + $0x6f8] sm:$0xff]
        %v2187 = vld [vmem:[%s1757 + $0x700] sm:$0xff]
        %v2188 = vld [vmem:[%s1757 + $0x708] sm:$0xff]
        %v2189 = vld [vmem:[%s1757 + $0x710] sm:$0xff]
        %v2190 = vld [vmem:[%s1757 + $0x718] sm:$0xff]
        %v2191 = vld [vmem:[%s1757 + $0x720] sm:$0xff]
        %v2192 = vld [vmem:[%s1757 + $0x728] sm:$0xff]
        %v2193 = vld [vmem:[%s1757 + $0x730] sm:$0xff]
        %v2194 = vld [vmem:[%s1757 + $0x738] sm:$0xff]
        %v2195 = vld [vmem:[%s1757 + $0x740] sm:$0xff]
        %v2196 = vld [vmem:[%s1757 + $0x748] sm:$0xff]
        %v2197 = vld [vmem:[%s1757 + $0x750] sm:$0xff]
        %v2198 = vld [vmem:[%s1757 + $0x758] sm:$0xff]
        %v2199 = vld [vmem:[%s1757 + $0x760] sm:$0xff]
        %v2200 = vld [vmem:[%s1757 + $0x768] sm:$0xff]
        %v2201 = vld [vmem:[%s1757 + $0x770] sm:$0xff]
        %v2202 = vld [vmem:[%s1757 + $0x778] sm:$0xff]
        %v2203 = vld [vmem:[%s1757 + $0x780] sm:$0xff]
        %v2204 = vld [vmem:[%s1757 + $0x788] sm:$0xff]
        %v2205 = vld [vmem:[%s1757 + $0x790] sm:$0xff]
        %v2206 = vld [vmem:[%s1757 + $0x798] sm:$0xff]
        %v2207 = vld [vmem:[%s1757 + $0x7a0] sm:$0xff]
        %v2208 = vld [vmem:[%s1757 + $0x7a8] sm:$0xff]
        %v2209 = vld [vmem:[%s1757 + $0x7b0] sm:$0xff]
        %v2210 = vld [vmem:[%s1757 + $0x7b8] sm:$0xff]
        %v2211 = vld [vmem:[%s1757 + $0x7c0] sm:$0xff]
        %v2212 = vld [vmem:[%s1757 + $0x7c8] sm:$0xff]
        %v2213 = vld [vmem:[%s1757 + $0x7d0] sm:$0xff]
        %v2214 = vld [vmem:[%s1757 + $0x7d8] sm:$0xff]
        %v2215 = vld [vmem:[%s1757 + $0x7e0] sm:$0xff]
        %v2216 = vld [vmem:[%s1757 + $0x7e8] sm:$0xff]
        %v2217 = vld [vmem:[%s1757 + $0x7f0] sm:$0xff]
        %v2218 = vld [vmem:[%s1757 + $0x7f8] sm:$0xff]
        %v2219 = vld [vmem:[%s1757 + $0x800] sm:$0xff]
        %v2220 = vld [vmem:[%s1757 + $0x808] sm:$0xff]
        %v2221 = vld [vmem:[%s1757 + $0x810] sm:$0xff]
        %v2222 = vld [vmem:[%s1757 + $0x818] sm:$0xff]
        %v2223 = vld [vmem:[%s1757 + $0x820] sm:$0xff]
        %v2224 = vld [vmem:[%s1757 + $0x828] sm:$0xff]
        %v2225 = vld [vmem:[%s1757 + $0x830] sm:$0xff]
        %v2226 = vld [vmem:[%s1757 + $0x838] sm:$0xff]
        %v2227 = vld [vmem:[%s1757 + $0x840] sm:$0xff]
        %v2228 = vld [vmem:[%s1757 + $0x848] sm:$0xff]
        %v2229 = vld [vmem:[%s1757 + $0x850] sm:$0xff]
        %v2230 = vld [vmem:[%s1757 + $0x858] sm:$0xff]
        %v2231 = vld [vmem:[%s1757 + $0x860] sm:$0xff]
        %v2232 = vld [vmem:[%s1757 + $0x868] sm:$0xff]
        %v2233 = vld [vmem:[%s1757 + $0x870] sm:$0xff]
        %v2234 = vld [vmem:[%s1757 + $0x878] sm:$0xff]
        %v2235 = vld [vmem:[%s1757 + $0x880] sm:$0xff]
        %v2236 = vld [vmem:[%s1757 + $0x888] sm:$0xff]
        %v2237 = vld [vmem:[%s1757 + $0x890] sm:$0xff]
        %v2238 = vld [vmem:[%s1757 + $0x898] sm:$0xff]
        %v2239 = vld [vmem:[%s1757 + $0x8a0] sm:$0xff]
        %v2240 = vld [vmem:[%s1757 + $0x8a8] sm:$0xff]
        %v2241 = vld [vmem:[%s1757 + $0x8b0] sm:$0xff]
        %v2242 = vld [vmem:[%s1757 + $0x8b8] sm:$0xff]
        %v2243 = vld [vmem:[%s1757 + $0x8c0] sm:$0xff]
        %v2244 = vld [vmem:[%s1757 + $0x8c8] sm:$0xff]
        %v2245 = vld [vmem:[%s1757 + $0x8d0] sm:$0xff]
        %v2246 = vld [vmem:[%s1757 + $0x8d8] sm:$0xff]
        %v2247 = vld [vmem:[%s1757 + $0x8e0] sm:$0xff]
        %v2248 = vld [vmem:[%s1757 + $0x8e8] sm:$0xff]
        %v2249 = vld [vmem:[%s1757 + $0x8f0] sm:$0xff]
        %v2250 = vld [vmem:[%s1757 + $0x8f8] sm:$0xff]
        %v2251 = vld [vmem:[%s1757 + $0x900] sm:$0xff]
        %v2252 = vld [vmem:[%s1757 + $0x908] sm:$0xff]
        %v2253 = vld [vmem:[%s1757 + $0x910] sm:$0xff]
        %v2254 = vld [vmem:[%s1757 + $0x918] sm:$0xff]
        %v2255 = vld [vmem:[%s1757 + $0x920] sm:$0xff]
        %v2256 = vld [vmem:[%s1757 + $0x928] sm:$0xff]
        %v2257 = vld [vmem:[%s1757 + $0x930] sm:$0xff]
        %v2258 = vld [vmem:[%s1757 + $0x938] sm:$0xff]
        %v2259 = vld [vmem:[%s1757 + $0x940] sm:$0xff]
        %v2260 = vld [vmem:[%s1757 + $0x948] sm:$0xff]
        %v2261 = vld [vmem:[%s1757 + $0x950] sm:$0xff]
        %v2262 = vld [vmem:[%s1757 + $0x958] sm:$0xff]
        %v2263 = vld [vmem:[%s1757 + $0x960] sm:$0xff]
        %v2264 = vld [vmem:[%s1757 + $0x968] sm:$0xff]
        %v2265 = vld [vmem:[%s1757 + $0x970] sm:$0xff]
        %v2266 = vld [vmem:[%s1757 + $0x978] sm:$0xff]
        %v2267 = vld [vmem:[%s1757 + $0x980] sm:$0xff]
        %v2268 = vld [vmem:[%s1757 + $0x988] sm:$0xff]
        %v2269 = vld [vmem:[%s1757 + $0x990] sm:$0xff]
        %v2270 = vld [vmem:[%s1757 + $0x998] sm:$0xff]
        %v2271 = vld [vmem:[%s1757 + $0x9a0] sm:$0xff]
        %v2272 = vld [vmem:[%s1757 + $0x9a8] sm:$0xff]
        %v2273 = vld [vmem:[%s1757 + $0x9b0] sm:$0xff]
        %v2274 = vld [vmem:[%s1757 + $0x9b8] sm:$0xff]
        %v2275 = vld [vmem:[%s1757 + $0x9c0] sm:$0xff]
        %v2276 = vld [vmem:[%s1757 + $0x9c8] sm:$0xff]
        %v2277 = vld [vmem:[%s1757 + $0x9d0] sm:$0xff]
        %v2278 = vld [vmem:[%s1757 + $0x9d8] sm:$0xff]
        %v2279 = vld [vmem:[%s1757 + $0x9e0] sm:$0xff]
        %v2280 = vld [vmem:[%s1757 + $0x9e8] sm:$0xff]
        %v2281 = vld [vmem:[%s1757 + $0x9f0] sm:$0xff]
        %v2282 = vld [vmem:[%s1757 + $0x9f8] sm:$0xff]
        %v2283 = vld [vmem:[%s1757 + $0xa00] sm:$0xff]
        %v2284 = vld [vmem:[%s1757 + $0xa08] sm:$0xff]
        %v2285 = vld [vmem:[%s1757 + $0xa10] sm:$0xff]
        %v2286 = vld [vmem:[%s1757 + $0xa18] sm:$0xff]
        %v2287 = vld [vmem:[%s1757 + $0xa20] sm:$0xff]
        %v2288 = vld [vmem:[%s1757 + $0xa28] sm:$0xff]
        %v2289 = vld [vmem:[%s1757 + $0xa30] sm:$0xff]
        %v2290 = vld [vmem:[%s1757 + $0xa38] sm:$0xff]
        %v2291 = vld [vmem:[%s1757 + $0xa40] sm:$0xff]
        %v2292 = vld [vmem:[%s1757 + $0xa48] sm:$0xff]
        %v2293 = vld [vmem:[%s1757 + $0xa50] sm:$0xff]
        %v2294 = vld [vmem:[%s1757 + $0xa58] sm:$0xff]
        %v2295 = vld [vmem:[%s1757 + $0xa60] sm:$0xff]
        %v2296 = vld [vmem:[%s1757 + $0xa68] sm:$0xff]
        %v2297 = vld [vmem:[%s1757 + $0xa70] sm:$0xff]
        %v2298 = vld [vmem:[%s1757 + $0xa78] sm:$0xff]
        %v2299 = vld [vmem:[%s1757 + $0xa80] sm:$0xff]
        %v2300 = vld [vmem:[%s1757 + $0xa88] sm:$0xff]
        %v2301 = vld [vmem:[%s1757 + $0xa90] sm:$0xff]
        %v2302 = vld [vmem:[%s1757 + $0xa98] sm:$0xff]
        %v2303 = vld [vmem:[%s1757 + $0xaa0] sm:$0xff]
        %v2304 = vld [vmem:[%s1757 + $0xaa8] sm:$0xff]
        %v2305 = vld [vmem:[%s1757 + $0xab0] sm:$0xff]
        %v2306 = vld [vmem:[%s1757 + $0xab8] sm:$0xff]
        %v2307 = vld [vmem:[%s1757 + $0xac0] sm:$0xff]
        %v2308 = vld [vmem:[%s1757 + $0xac8] sm:$0xff]
        %v2309 = vld [vmem:[%s1757 + $0xad0] sm:$0xff]
        %v2310 = vld [vmem:[%s1757 + $0xad8] sm:$0xff]
        %v2311 = vld [vmem:[%s1757 + $0xae0] sm:$0xff]
        %v2312 = vld [vmem:[%s1757 + $0xae8] sm:$0xff]
        %v2313 = vld [vmem:[%s1757 + $0xaf0] sm:$0xff]
        %v2314 = vld [vmem:[%s1757 + $0xaf8] sm:$0xff]
        %v2315 = vld [vmem:[%s1757 + $0xb00] sm:$0xff]
        %v2316 = vld [vmem:[%s1757 + $0xb08] sm:$0xff]
        %v2317 = vld [vmem:[%s1757 + $0xb10] sm:$0xff]
        %v2318 = vld [vmem:[%s1757 + $0xb18] sm:$0xff]
        %v2319 = vld [vmem:[%s1757 + $0xb20] sm:$0xff]
        %v2320 = vld [vmem:[%s1757 + $0xb28] sm:$0xff]
        %v2321 = vld [vmem:[%s1757 + $0xb30] sm:$0xff]
        %v2322 = vld [vmem:[%s1757 + $0xb38] sm:$0xff]
        %v2323 = vld [vmem:[%s1757 + $0xb40] sm:$0xff]
        %v2324 = vld [vmem:[%s1757 + $0xb48] sm:$0xff]
        %v2325 = vld [vmem:[%s1757 + $0xb50] sm:$0xff]
        %v2326 = vld [vmem:[%s1757 + $0xb58] sm:$0xff]
        %v2327 = vld [vmem:[%s1757 + $0xb60] sm:$0xff]
        %v2328 = vld [vmem:[%s1757 + $0xb68] sm:$0xff]
        %v2329 = vld [vmem:[%s1757 + $0xb70] sm:$0xff]
        %v2330 = vld [vmem:[%s1757 + $0xb78] sm:$0xff]
        %v2331 = vld [vmem:[%s1757 + $0xb80] sm:$0xff]
        %v2332 = vld [vmem:[%s1757 + $0xb88] sm:$0xff]
        %v2333 = vld [vmem:[%s1757 + $0xb90] sm:$0xff]
        %v2334 = vld [vmem:[%s1757 + $0xb98] sm:$0xff]
        %v2335 = vld [vmem:[%s1757 + $0xba0] sm:$0xff]
        %v2336 = vld [vmem:[%s1757 + $0xba8] sm:$0xff]
        %v2337 = vld [vmem:[%s1757 + $0xbb0] sm:$0xff]
        %v2338 = vld [vmem:[%s1757 + $0xbb8] sm:$0xff]
        %v2339 = vld [vmem:[%s1757 + $0xbc0] sm:$0xff]
        %v2340 = vld [vmem:[%s1757 + $0xbc8] sm:$0xff]
        %v2341 = vld [vmem:[%s1757 + $0xbd0] sm:$0xff]
        %v2342 = vld [vmem:[%s1757 + $0xbd8] sm:$0xff]
        %v2343 = vld [vmem:[%s1757 + $0xbe0] sm:$0xff]
        %v2344 = vld [vmem:[%s1757 + $0xbe8] sm:$0xff]
        %v2345 = vld [vmem:[%s1757 + $0xbf0] sm:$0xff]
        %v2346 = vld [vmem:[%s1757 + $0xbf8] sm:$0xff]
        %v2347 = vld [vmem:[%s1757 + $0xc00] sm:$0xff]
        %v2348 = vld [vmem:[%s1757 + $0xc08] sm:$0xff]
        %v2349 = vld [vmem:[%s1757 + $0xc10] sm:$0xff]
        %v2350 = vld [vmem:[%s1757 + $0xc18] sm:$0xff]
        %v2351 = vld [vmem:[%s1757 + $0xc20] sm:$0xff]
        %v2352 = vld [vmem:[%s1757 + $0xc28] sm:$0xff]
        %v2353 = vld [vmem:[%s1757 + $0xc30] sm:$0xff]
        %v2354 = vld [vmem:[%s1757 + $0xc38] sm:$0xff]
        %v2355 = vld [vmem:[%s1786] sm:$0x3]
        %v2357 = vlaneseq
        %v2358 = vshrl.u32 %v2357, 7
        %v2359 = vsub.s32 0, %v2358
        %v2360 = vrot.slane %v2355, %v2359
        %v2361 = vlaneseq
        %v2362 = vshrl.u32 %v2361, 7
        %v2363 = vsub.s32 1, %v2362
        %v2364 = vrot.slane %v2355, %v2363
        %v2759 = vunpack.c.l.b16 %v1963
        %v2760 = vunpack.c.h.b16 %v1963
        %v2761 = vunpack.c.l.b16 %v1964
        %v2762 = vunpack.c.h.b16 %v1964
        %v2763 = vunpack.c.l.b16 %v1965
        %v2764 = vunpack.c.h.b16 %v1965
        %v2765 = vunpack.c.l.b16 %v1966
        %v2766 = vunpack.c.h.b16 %v1966
        %v2767 = vunpack.c.l.b16 %v1967
        %v2768 = vunpack.c.h.b16 %v1967
        %v2769 = vunpack.c.l.b16 %v1968
        %v2770 = vunpack.c.h.b16 %v1968
        %v2771 = vunpack.c.l.b16 %v1969
        %v2772 = vunpack.c.h.b16 %v1969
        %v2773 = vunpack.c.l.b16 %v1970
        %v2774 = vunpack.c.h.b16 %v1970
        %v2775 = vunpack.c.l.b16 %v1971
        %v2776 = vunpack.c.h.b16 %v1971
        %v2777 = vunpack.c.l.b16 %v1972
        %v2778 = vunpack.c.h.b16 %v1972
        %v2779 = vunpack.c.l.b16 %v1973
        %v2780 = vunpack.c.h.b16 %v1973
        %v2781 = vunpack.c.l.b16 %v1974
        %v2782 = vunpack.c.h.b16 %v1974
        %v2783 = vunpack.c.l.b16 %v1975
        %v2784 = vunpack.c.h.b16 %v1975
        %v2785 = vunpack.c.l.b16 %v1976
        %v2786 = vunpack.c.h.b16 %v1976
        %v2787 = vunpack.c.l.b16 %v1977
        %v2788 = vunpack.c.h.b16 %v1977
        %v2789 = vunpack.c.l.b16 %v1978
        %v2790 = vunpack.c.h.b16 %v1978
        %v2791 = vunpack.c.l.b16 %v1979
        %v2792 = vunpack.c.h.b16 %v1979
        %v2793 = vunpack.c.l.b16 %v1980
        %v2794 = vunpack.c.h.b16 %v1980
        %v2795 = vunpack.c.l.b16 %v1981
        %v2796 = vunpack.c.h.b16 %v1981
        %v2797 = vunpack.c.l.b16 %v1982
        %v2798 = vunpack.c.h.b16 %v1982
        %v2799 = vunpack.c.l.b16 %v1983
        %v2800 = vunpack.c.h.b16 %v1983
        %v2801 = vunpack.c.l.b16 %v1984
        %v2802 = vunpack.c.h.b16 %v1984
        %v2803 = vunpack.c.l.b16 %v1985
        %v2804 = vunpack.c.h.b16 %v1985
        %v2805 = vunpack.c.l.b16 %v1986
        %v2806 = vunpack.c.h.b16 %v1986
        %v2807 = vunpack.c.l.b16 %v1987
        %v2808 = vunpack.c.h.b16 %v1987
        %v2809 = vunpack.c.l.b16 %v1988
        %v2810 = vunpack.c.h.b16 %v1988
        %v2811 = vunpack.c.l.b16 %v1989
        %v2812 = vunpack.c.h.b16 %v1989
        %v2813 = vunpack.c.l.b16 %v1990
        %v2814 = vunpack.c.h.b16 %v1990
        %v2815 = vunpack.c.l.b16 %v1991
        %v2816 = vunpack.c.h.b16 %v1991
        %v2817 = vunpack.c.l.b16 %v1992
        %v2818 = vunpack.c.h.b16 %v1992
        %v2819 = vunpack.c.l.b16 %v1993
        %v2820 = vunpack.c.h.b16 %v1993
        %v2821 = vunpack.c.l.b16 %v1994
        %v2822 = vunpack.c.h.b16 %v1994
        %v2823 = vunpack.c.l.b16 %v1995
        %v2824 = vunpack.c.h.b16 %v1995
        %v2825 = vunpack.c.l.b16 %v1996
        %v2826 = vunpack.c.h.b16 %v1996
        %v2827 = vunpack.c.l.b16 %v1997
        %v2828 = vunpack.c.h.b16 %v1997
        %v2829 = vunpack.c.l.b16 %v1998
        %v2830 = vunpack.c.h.b16 %v1998
        %v2831 = vunpack.c.l.b16 %v1999
        %v2832 = vunpack.c.h.b16 %v1999
        %v2833 = vunpack.c.l.b16 %v2000
        %v2834 = vunpack.c.h.b16 %v2000
        %v2835 = vunpack.c.l.b16 %v2001
        %v2836 = vunpack.c.h.b16 %v2001
        %v2837 = vunpack.c.l.b16 %v2002
        %v2838 = vunpack.c.h.b16 %v2002
        %v2839 = vunpack.c.l.b16 %v2003
        %v2840 = vunpack.c.h.b16 %v2003
        %v2841 = vunpack.c.l.b16 %v2004
        %v2842 = vunpack.c.h.b16 %v2004
        %v2843 = vunpack.c.l.b16 %v2005
        %v2844 = vunpack.c.h.b16 %v2005
        %v2845 = vunpack.c.l.b16 %v2006
        %v2846 = vunpack.c.h.b16 %v2006
        %v2847 = vunpack.c.l.b16 %v2007
        %v2848 = vunpack.c.h.b16 %v2007
        %v2849 = vunpack.c.l.b16 %v2008
        %v2850 = vunpack.c.h.b16 %v2008
        %v2851 = vunpack.c.l.b16 %v2009
        %v2852 = vunpack.c.h.b16 %v2009
        %v2853 = vunpack.c.l.b16 %v2010
        %v2854 = vunpack.c.h.b16 %v2010
        %v2855 = vunpack.c.l.b16 %v2011
        %v2856 = vunpack.c.h.b16 %v2011
        %v2857 = vunpack.c.l.b16 %v2012
        %v2858 = vunpack.c.h.b16 %v2012
        %v2859 = vunpack.c.l.b16 %v2013
        %v2860 = vunpack.c.h.b16 %v2013
        %v2861 = vunpack.c.l.b16 %v2014
        %v2862 = vunpack.c.h.b16 %v2014
        %v2863 = vunpack.c.l.b16 %v2015
        %v2864 = vunpack.c.h.b16 %v2015
        %v2865 = vunpack.c.l.b16 %v2016
        %v2866 = vunpack.c.h.b16 %v2016
        %v2867 = vunpack.c.l.b16 %v2017
        %v2868 = vunpack.c.h.b16 %v2017
        %v2869 = vunpack.c.l.b16 %v2018
        %v2870 = vunpack.c.h.b16 %v2018
        %v2871 = vunpack.c.l.b16 %v2019
        %v2872 = vunpack.c.h.b16 %v2019
        %v2873 = vunpack.c.l.b16 %v2020
        %v2874 = vunpack.c.h.b16 %v2020
        %v2875 = vunpack.c.l.b16 %v2021
        %v2876 = vunpack.c.h.b16 %v2021
        %v2877 = vunpack.c.l.b16 %v2022
        %v2878 = vunpack.c.h.b16 %v2022
        %v2879 = vunpack.c.l.b16 %v2023
        %v2880 = vunpack.c.h.b16 %v2023
        %v2881 = vunpack.c.l.b16 %v2024
        %v2882 = vunpack.c.h.b16 %v2024
        %v2883 = vunpack.c.l.b16 %v2025
        %v2884 = vunpack.c.h.b16 %v2025
        %v2885 = vunpack.c.l.b16 %v2026
        %v2886 = vunpack.c.h.b16 %v2026
        %v2887 = vunpack.c.l.b16 %v2027
        %v2888 = vunpack.c.h.b16 %v2027
        %v2889 = vunpack.c.l.b16 %v2028
        %v2890 = vunpack.c.h.b16 %v2028
        %v2891 = vunpack.c.l.b16 %v2029
        %v2892 = vunpack.c.h.b16 %v2029
        %v2893 = vunpack.c.l.b16 %v2030
        %v2894 = vunpack.c.h.b16 %v2030
        %v2895 = vunpack.c.l.b16 %v2031
        %v2896 = vunpack.c.h.b16 %v2031
        %v2897 = vunpack.c.l.b16 %v2032
        %v2898 = vunpack.c.h.b16 %v2032
        %v2899 = vunpack.c.l.b16 %v2033
        %v2900 = vunpack.c.h.b16 %v2033
        %v2901 = vunpack.c.l.b16 %v2034
        %v2902 = vunpack.c.h.b16 %v2034
        %v2903 = vunpack.c.l.b16 %v2035
        %v2904 = vunpack.c.h.b16 %v2035
        %v2905 = vunpack.c.l.b16 %v2036
        %v2906 = vunpack.c.h.b16 %v2036
        %v2907 = vunpack.c.l.b16 %v2037
        %v2908 = vunpack.c.h.b16 %v2037
        %v2909 = vunpack.c.l.b16 %v2038
        %v2910 = vunpack.c.h.b16 %v2038
        %v2911 = vunpack.c.l.b16 %v2039
        %v2912 = vunpack.c.h.b16 %v2039
        %v2913 = vunpack.c.l.b16 %v2040
        %v2914 = vunpack.c.h.b16 %v2040
        %v2915 = vunpack.c.l.b16 %v2041
        %v2916 = vunpack.c.h.b16 %v2041
        %v2917 = vunpack.c.l.b16 %v2042
        %v2918 = vunpack.c.h.b16 %v2042
        %v2919 = vunpack.c.l.b16 %v2043
        %v2920 = vunpack.c.h.b16 %v2043
        %v2921 = vunpack.c.l.b16 %v2044
        %v2922 = vunpack.c.h.b16 %v2044
        %v2923 = vunpack.c.l.b16 %v2045
        %v2924 = vunpack.c.h.b16 %v2045
        %v2925 = vunpack.c.l.b16 %v2046
        %v2926 = vunpack.c.h.b16 %v2046
        %v2927 = vunpack.c.l.b16 %v2047
        %v2928 = vunpack.c.h.b16 %v2047
        %v2929 = vunpack.c.l.b16 %v2048
        %v2930 = vunpack.c.h.b16 %v2048
        %v2931 = vunpack.c.l.b16 %v2049
        %v2932 = vunpack.c.h.b16 %v2049
        %v2933 = vunpack.c.l.b16 %v2050
        %v2934 = vunpack.c.h.b16 %v2050
        %v2935 = vunpack.c.l.b16 %v2051
        %v2936 = vunpack.c.h.b16 %v2051
        %v2937 = vunpack.c.l.b16 %v2052
        %v2938 = vunpack.c.h.b16 %v2052
        %v2939 = vunpack.c.l.b16 %v2053
        %v2940 = vunpack.c.h.b16 %v2053
        %v2941 = vunpack.c.l.b16 %v2054
        %v2942 = vunpack.c.h.b16 %v2054
        %v2943 = vunpack.c.l.b16 %v2055
        %v2944 = vunpack.c.h.b16 %v2055
        %v2945 = vunpack.c.l.b16 %v2056
        %v2946 = vunpack.c.h.b16 %v2056
        %v2947 = vunpack.c.l.b16 %v2057
        %v2948 = vunpack.c.h.b16 %v2057
        %v2949 = vunpack.c.l.b16 %v2058
        %v2950 = vunpack.c.h.b16 %v2058
        %v2951 = vunpack.c.l.b16 %v2059
        %v2952 = vunpack.c.h.b16 %v2059
        %v2953 = vunpack.c.l.b16 %v2060
        %v2954 = vunpack.c.h.b16 %v2060
        %v2955 = vunpack.c.l.b16 %v2061
        %v2956 = vunpack.c.h.b16 %v2061
        %v2957 = vunpack.c.l.b16 %v2062
        %v2958 = vunpack.c.h.b16 %v2062
        %v2959 = vunpack.c.l.b16 %v2063
        %v2960 = vunpack.c.h.b16 %v2063
        %v2961 = vunpack.c.l.b16 %v2064
        %v2962 = vunpack.c.h.b16 %v2064
        %v2963 = vunpack.c.l.b16 %v2065
        %v2964 = vunpack.c.h.b16 %v2065
        %v2965 = vunpack.c.l.b16 %v2066
        %v2966 = vunpack.c.h.b16 %v2066
        %v2967 = vunpack.c.l.b16 %v2067
        %v2968 = vunpack.c.h.b16 %v2067
        %v2969 = vunpack.c.l.b16 %v2068
        %v2970 = vunpack.c.h.b16 %v2068
        %v2971 = vunpack.c.l.b16 %v2069
        %v2972 = vunpack.c.h.b16 %v2069
        %v2973 = vunpack.c.l.b16 %v2070
        %v2974 = vunpack.c.h.b16 %v2070
        %v2975 = vunpack.c.l.b16 %v2071
        %v2976 = vunpack.c.h.b16 %v2071
        %v2977 = vunpack.c.l.b16 %v2072
        %v2978 = vunpack.c.h.b16 %v2072
        %v2979 = vunpack.c.l.b16 %v2073
        %v2980 = vunpack.c.h.b16 %v2073
        %v2981 = vunpack.c.l.b16 %v2074
        %v2982 = vunpack.c.h.b16 %v2074
        %v2983 = vunpack.c.l.b16 %v2075
        %v2984 = vunpack.c.h.b16 %v2075
        %v2985 = vunpack.c.l.b16 %v2076
        %v2986 = vunpack.c.h.b16 %v2076
        %v2987 = vunpack.c.l.b16 %v2077
        %v2988 = vunpack.c.h.b16 %v2077
        %v2989 = vunpack.c.l.b16 %v2078
        %v2990 = vunpack.c.h.b16 %v2078
        %v2991 = vunpack.c.l.b16 %v2079
        %v2992 = vunpack.c.h.b16 %v2079
        %v2993 = vunpack.c.l.b16 %v2080
        %v2994 = vunpack.c.h.b16 %v2080
        %v2995 = vunpack.c.l.b16 %v2081
        %v2996 = vunpack.c.h.b16 %v2081
        %v2997 = vunpack.c.l.b16 %v2082
        %v2998 = vunpack.c.h.b16 %v2082
        %v2999 = vunpack.c.l.b16 %v2083
        %v3000 = vunpack.c.h.b16 %v2083
        %v3001 = vunpack.c.l.b16 %v2084
        %v3002 = vunpack.c.h.b16 %v2084
        %v3003 = vunpack.c.l.b16 %v2085
        %v3004 = vunpack.c.h.b16 %v2085
        %v3005 = vunpack.c.l.b16 %v2086
        %v3006 = vunpack.c.h.b16 %v2086
        %v3007 = vunpack.c.l.b16 %v2087
        %v3008 = vunpack.c.h.b16 %v2087
        %v3009 = vunpack.c.l.b16 %v2088
        %v3010 = vunpack.c.h.b16 %v2088
        %v3011 = vunpack.c.l.b16 %v2089
        %v3012 = vunpack.c.h.b16 %v2089
        %v3013 = vunpack.c.l.b16 %v2090
        %v3014 = vunpack.c.h.b16 %v2090
        %v3015 = vunpack.c.l.b16 %v2091
        %v3016 = vunpack.c.h.b16 %v2091
        %v3017 = vunpack.c.l.b16 %v2092
        %v3018 = vunpack.c.h.b16 %v2092
        %v3019 = vunpack.c.l.b16 %v2093
        %v3020 = vunpack.c.h.b16 %v2093
        %v3021 = vunpack.c.l.b16 %v2094
        %v3022 = vunpack.c.h.b16 %v2094
        %v3023 = vunpack.c.l.b16 %v2095
        %v3024 = vunpack.c.h.b16 %v2095
        %v3025 = vunpack.c.l.b16 %v2096
        %v3026 = vunpack.c.h.b16 %v2096
        %v3027 = vunpack.c.l.b16 %v2097
        %v3028 = vunpack.c.h.b16 %v2097
        %v3029 = vunpack.c.l.b16 %v2098
        %v3030 = vunpack.c.h.b16 %v2098
        %v3031 = vunpack.c.l.b16 %v2099
        %v3032 = vunpack.c.h.b16 %v2099
        %v3033 = vunpack.c.l.b16 %v2100
        %v3034 = vunpack.c.h.b16 %v2100
        %v3035 = vunpack.c.l.b16 %v2101
        %v3036 = vunpack.c.h.b16 %v2101
        %v3037 = vunpack.c.l.b16 %v2102
        %v3038 = vunpack.c.h.b16 %v2102
        %v3039 = vunpack.c.l.b16 %v2103
        %v3040 = vunpack.c.h.b16 %v2103
        %v3041 = vunpack.c.l.b16 %v2104
        %v3042 = vunpack.c.h.b16 %v2104
        %v3043 = vunpack.c.l.b16 %v2105
        %v3044 = vunpack.c.h.b16 %v2105
        %v3045 = vunpack.c.l.b16 %v2106
        %v3046 = vunpack.c.h.b16 %v2106
        %v3047 = vunpack.c.l.b16 %v2107
        %v3048 = vunpack.c.h.b16 %v2107
        %v3049 = vunpack.c.l.b16 %v2108
        %v3050 = vunpack.c.h.b16 %v2108
        %v3051 = vunpack.c.l.b16 %v2109
        %v3052 = vunpack.c.h.b16 %v2109
        %v3053 = vunpack.c.l.b16 %v2110
        %v3054 = vunpack.c.h.b16 %v2110
        %v3055 = vunpack.c.l.b16 %v2111
        %v3056 = vunpack.c.h.b16 %v2111
        %v3057 = vunpack.c.l.b16 %v2112
        %v3058 = vunpack.c.h.b16 %v2112
        %v3059 = vunpack.c.l.b16 %v2113
        %v3060 = vunpack.c.h.b16 %v2113
        %v3061 = vunpack.c.l.b16 %v2114
        %v3062 = vunpack.c.h.b16 %v2114
        %v3063 = vunpack.c.l.b16 %v2115
        %v3064 = vunpack.c.h.b16 %v2115
        %v3065 = vunpack.c.l.b16 %v2116
        %v3066 = vunpack.c.h.b16 %v2116
        %v3067 = vunpack.c.l.b16 %v2117
        %v3068 = vunpack.c.h.b16 %v2117
        %v3069 = vunpack.c.l.b16 %v2118
        %v3070 = vunpack.c.h.b16 %v2118
        %v3071 = vunpack.c.l.b16 %v2119
        %v3072 = vunpack.c.h.b16 %v2119
        %v3073 = vunpack.c.l.b16 %v2120
        %v3074 = vunpack.c.h.b16 %v2120
        %v3075 = vunpack.c.l.b16 %v2121
        %v3076 = vunpack.c.h.b16 %v2121
        %v3077 = vunpack.c.l.b16 %v2122
        %v3078 = vunpack.c.h.b16 %v2122
        %v3079 = vunpack.c.l.b16 %v2123
        %v3080 = vunpack.c.h.b16 %v2123
        %v3081 = vunpack.c.l.b16 %v2124
        %v3082 = vunpack.c.h.b16 %v2124
        %v3083 = vunpack.c.l.b16 %v2125
        %v3084 = vunpack.c.h.b16 %v2125
        %v3085 = vunpack.c.l.b16 %v2126
        %v3086 = vunpack.c.h.b16 %v2126
        %v3087 = vunpack.c.l.b16 %v2127
        %v3088 = vunpack.c.h.b16 %v2127
        %v3089 = vunpack.c.l.b16 %v2128
        %v3090 = vunpack.c.h.b16 %v2128
        %v3091 = vunpack.c.l.b16 %v2129
        %v3092 = vunpack.c.h.b16 %v2129
        %v3093 = vunpack.c.l.b16 %v2130
        %v3094 = vunpack.c.h.b16 %v2130
        %v3095 = vunpack.c.l.b16 %v2131
        %v3096 = vunpack.c.h.b16 %v2131
        %v3097 = vunpack.c.l.b16 %v2132
        %v3098 = vunpack.c.h.b16 %v2132
        %v3099 = vunpack.c.l.b16 %v2133
        %v3100 = vunpack.c.h.b16 %v2133
        %v3101 = vunpack.c.l.b16 %v2134
        %v3102 = vunpack.c.h.b16 %v2134
        %v3103 = vunpack.c.l.b16 %v2135
        %v3104 = vunpack.c.h.b16 %v2135
        %v3105 = vunpack.c.l.b16 %v2136
        %v3106 = vunpack.c.h.b16 %v2136
        %v3107 = vunpack.c.l.b16 %v2137
        %v3108 = vunpack.c.h.b16 %v2137
        %v3109 = vunpack.c.l.b16 %v2138
        %v3110 = vunpack.c.h.b16 %v2138
        %v3111 = vunpack.c.l.b16 %v2139
        %v3112 = vunpack.c.h.b16 %v2139
        %v3113 = vunpack.c.l.b16 %v2140
        %v3114 = vunpack.c.h.b16 %v2140
        %v3115 = vunpack.c.l.b16 %v2141
        %v3116 = vunpack.c.h.b16 %v2141
        %v3117 = vunpack.c.l.b16 %v2142
        %v3118 = vunpack.c.h.b16 %v2142
        %v3119 = vunpack.c.l.b16 %v2143
        %v3120 = vunpack.c.h.b16 %v2143
        %v3121 = vunpack.c.l.b16 %v2144
        %v3122 = vunpack.c.h.b16 %v2144
        %v3123 = vunpack.c.l.b16 %v2145
        %v3124 = vunpack.c.h.b16 %v2145
        %v3125 = vunpack.c.l.b16 %v2146
        %v3126 = vunpack.c.h.b16 %v2146
        %v3127 = vunpack.c.l.b16 %v2147
        %v3128 = vunpack.c.h.b16 %v2147
        %v3129 = vunpack.c.l.b16 %v2148
        %v3130 = vunpack.c.h.b16 %v2148
        %v3131 = vunpack.c.l.b16 %v2149
        %v3132 = vunpack.c.h.b16 %v2149
        %v3133 = vunpack.c.l.b16 %v2150
        %v3134 = vunpack.c.h.b16 %v2150
        %v3135 = vunpack.c.l.b16 %v2151
        %v3136 = vunpack.c.h.b16 %v2151
        %v3137 = vunpack.c.l.b16 %v2152
        %v3138 = vunpack.c.h.b16 %v2152
        %v3139 = vunpack.c.l.b16 %v2153
        %v3140 = vunpack.c.h.b16 %v2153
        %v3141 = vunpack.c.l.b16 %v2154
        %v3142 = vunpack.c.h.b16 %v2154
        %v3143 = vunpack.c.l.b16 %v2155
        %v3144 = vunpack.c.h.b16 %v2155
        %v3145 = vunpack.c.l.b16 %v2156
        %v3146 = vunpack.c.h.b16 %v2156
        %v3147 = vunpack.c.l.b16 %v2157
        %v3148 = vunpack.c.h.b16 %v2157
        %v3149 = vunpack.c.l.b16 %v2158
        %v3150 = vunpack.c.h.b16 %v2158
        %v3151 = vunpack.c.l.b16 %v2159
        %v3152 = vunpack.c.h.b16 %v2159
        %v3153 = vunpack.c.l.b16 %v2160
        %v3154 = vunpack.c.h.b16 %v2160
        %v3155 = vunpack.c.l.b16 %v2161
        %v3156 = vunpack.c.h.b16 %v2161
        %v3157 = vunpack.c.l.b16 %v2162
        %v3158 = vunpack.c.h.b16 %v2162
        %v3159 = vunpack.c.l.b16 %v2163
        %v3160 = vunpack.c.h.b16 %v2163
        %v3161 = vunpack.c.l.b16 %v2164
        %v3162 = vunpack.c.h.b16 %v2164
        %v3163 = vunpack.c.l.b16 %v2165
        %v3164 = vunpack.c.h.b16 %v2165
        %v3165 = vunpack.c.l.b16 %v2166
        %v3166 = vunpack.c.h.b16 %v2166
        %v3167 = vunpack.c.l.b16 %v2167
        %v3168 = vunpack.c.h.b16 %v2167
        %v3169 = vunpack.c.l.b16 %v2168
        %v3170 = vunpack.c.h.b16 %v2168
        %v3171 = vunpack.c.l.b16 %v2169
        %v3172 = vunpack.c.h.b16 %v2169
        %v3173 = vunpack.c.l.b16 %v2170
        %v3174 = vunpack.c.h.b16 %v2170
        %v3175 = vunpack.c.l.b16 %v2171
        %v3176 = vunpack.c.h.b16 %v2171
        %v3177 = vunpack.c.l.b16 %v2172
        %v3178 = vunpack.c.h.b16 %v2172
        %v3179 = vunpack.c.l.b16 %v2173
        %v3180 = vunpack.c.h.b16 %v2173
        %v3181 = vunpack.c.l.b16 %v2174
        %v3182 = vunpack.c.h.b16 %v2174
        %v3183 = vunpack.c.l.b16 %v2175
        %v3184 = vunpack.c.h.b16 %v2175
        %v3185 = vunpack.c.l.b16 %v2176
        %v3186 = vunpack.c.h.b16 %v2176
        %v3187 = vunpack.c.l.b16 %v2177
        %v3188 = vunpack.c.h.b16 %v2177
        %v3189 = vunpack.c.l.b16 %v2178
        %v3190 = vunpack.c.h.b16 %v2178
        %v3191 = vunpack.c.l.b16 %v2179
        %v3192 = vunpack.c.h.b16 %v2179
        %v3193 = vunpack.c.l.b16 %v2180
        %v3194 = vunpack.c.h.b16 %v2180
        %v3195 = vunpack.c.l.b16 %v2181
        %v3196 = vunpack.c.h.b16 %v2181
        %v3197 = vunpack.c.l.b16 %v2182
        %v3198 = vunpack.c.h.b16 %v2182
        %v3199 = vunpack.c.l.b16 %v2183
        %v3200 = vunpack.c.h.b16 %v2183
        %v3201 = vunpack.c.l.b16 %v2184
        %v3202 = vunpack.c.h.b16 %v2184
        %v3203 = vunpack.c.l.b16 %v2185
        %v3204 = vunpack.c.h.b16 %v2185
        %v3205 = vunpack.c.l.b16 %v2186
        %v3206 = vunpack.c.h.b16 %v2186
        %v3207 = vunpack.c.l.b16 %v2187
        %v3208 = vunpack.c.h.b16 %v2187
        %v3209 = vunpack.c.l.b16 %v2188
        %v3210 = vunpack.c.h.b16 %v2188
        %v3211 = vunpack.c.l.b16 %v2189
        %v3212 = vunpack.c.h.b16 %v2189
        %v3213 = vunpack.c.l.b16 %v2190
        %v3214 = vunpack.c.h.b16 %v2190
        %v3215 = vunpack.c.l.b16 %v2191
        %v3216 = vunpack.c.h.b16 %v2191
        %v3217 = vunpack.c.l.b16 %v2192
        %v3218 = vunpack.c.h.b16 %v2192
        %v3219 = vunpack.c.l.b16 %v2193
        %v3220 = vunpack.c.h.b16 %v2193
        %v3221 = vunpack.c.l.b16 %v2194
        %v3222 = vunpack.c.h.b16 %v2194
        %v3223 = vunpack.c.l.b16 %v2195
        %v3224 = vunpack.c.h.b16 %v2195
        %v3225 = vunpack.c.l.b16 %v2196
        %v3226 = vunpack.c.h.b16 %v2196
        %v3227 = vunpack.c.l.b16 %v2197
        %v3228 = vunpack.c.h.b16 %v2197
        %v3229 = vunpack.c.l.b16 %v2198
        %v3230 = vunpack.c.h.b16 %v2198
        %v3231 = vunpack.c.l.b16 %v2199
        %v3232 = vunpack.c.h.b16 %v2199
        %v3233 = vunpack.c.l.b16 %v2200
        %v3234 = vunpack.c.h.b16 %v2200
        %v3235 = vunpack.c.l.b16 %v2201
        %v3236 = vunpack.c.h.b16 %v2201
        %v3237 = vunpack.c.l.b16 %v2202
        %v3238 = vunpack.c.h.b16 %v2202
        %v3239 = vunpack.c.l.b16 %v2203
        %v3240 = vunpack.c.h.b16 %v2203
        %v3241 = vunpack.c.l.b16 %v2204
        %v3242 = vunpack.c.h.b16 %v2204
        %v3243 = vunpack.c.l.b16 %v2205
        %v3244 = vunpack.c.h.b16 %v2205
        %v3245 = vunpack.c.l.b16 %v2206
        %v3246 = vunpack.c.h.b16 %v2206
        %v3247 = vunpack.c.l.b16 %v2207
        %v3248 = vunpack.c.h.b16 %v2207
        %v3249 = vunpack.c.l.b16 %v2208
        %v3250 = vunpack.c.h.b16 %v2208
        %v3251 = vunpack.c.l.b16 %v2209
        %v3252 = vunpack.c.h.b16 %v2209
        %v3253 = vunpack.c.l.b16 %v2210
        %v3254 = vunpack.c.h.b16 %v2210
        %v3255 = vunpack.c.l.b16 %v2211
        %v3256 = vunpack.c.h.b16 %v2211
        %v3257 = vunpack.c.l.b16 %v2212
        %v3258 = vunpack.c.h.b16 %v2212
        %v3259 = vunpack.c.l.b16 %v2213
        %v3260 = vunpack.c.h.b16 %v2213
        %v3261 = vunpack.c.l.b16 %v2214
        %v3262 = vunpack.c.h.b16 %v2214
        %v3263 = vunpack.c.l.b16 %v2215
        %v3264 = vunpack.c.h.b16 %v2215
        %v3265 = vunpack.c.l.b16 %v2216
        %v3266 = vunpack.c.h.b16 %v2216
        %v3267 = vunpack.c.l.b16 %v2217
        %v3268 = vunpack.c.h.b16 %v2217
        %v3269 = vunpack.c.l.b16 %v2218
        %v3270 = vunpack.c.h.b16 %v2218
        %v3271 = vunpack.c.l.b16 %v2219
        %v3272 = vunpack.c.h.b16 %v2219
        %v3273 = vunpack.c.l.b16 %v2220
        %v3274 = vunpack.c.h.b16 %v2220
        %v3275 = vunpack.c.l.b16 %v2221
        %v3276 = vunpack.c.h.b16 %v2221
        %v3277 = vunpack.c.l.b16 %v2222
        %v3278 = vunpack.c.h.b16 %v2222
        %v3279 = vunpack.c.l.b16 %v2223
        %v3280 = vunpack.c.h.b16 %v2223
        %v3281 = vunpack.c.l.b16 %v2224
        %v3282 = vunpack.c.h.b16 %v2224
        %v3283 = vunpack.c.l.b16 %v2225
        %v3284 = vunpack.c.h.b16 %v2225
        %v3285 = vunpack.c.l.b16 %v2226
        %v3286 = vunpack.c.h.b16 %v2226
        %v3287 = vunpack.c.l.b16 %v2227
        %v3288 = vunpack.c.h.b16 %v2227
        %v3289 = vunpack.c.l.b16 %v2228
        %v3290 = vunpack.c.h.b16 %v2228
        %v3291 = vunpack.c.l.b16 %v2229
        %v3292 = vunpack.c.h.b16 %v2229
        %v3293 = vunpack.c.l.b16 %v2230
        %v3294 = vunpack.c.h.b16 %v2230
        %v3295 = vunpack.c.l.b16 %v2231
        %v3296 = vunpack.c.h.b16 %v2231
        %v3297 = vunpack.c.l.b16 %v2232
        %v3298 = vunpack.c.h.b16 %v2232
        %v3299 = vunpack.c.l.b16 %v2233
        %v3300 = vunpack.c.h.b16 %v2233
        %v3301 = vunpack.c.l.b16 %v2234
        %v3302 = vunpack.c.h.b16 %v2234
        %v3303 = vunpack.c.l.b16 %v2235
        %v3304 = vunpack.c.h.b16 %v2235
        %v3305 = vunpack.c.l.b16 %v2236
        %v3306 = vunpack.c.h.b16 %v2236
        %v3307 = vunpack.c.l.b16 %v2237
        %v3308 = vunpack.c.h.b16 %v2237
        %v3309 = vunpack.c.l.b16 %v2238
        %v3310 = vunpack.c.h.b16 %v2238
        %v3311 = vunpack.c.l.b16 %v2239
        %v3312 = vunpack.c.h.b16 %v2239
        %v3313 = vunpack.c.l.b16 %v2240
        %v3314 = vunpack.c.h.b16 %v2240
        %v3315 = vunpack.c.l.b16 %v2241
        %v3316 = vunpack.c.h.b16 %v2241
        %v3317 = vunpack.c.l.b16 %v2242
        %v3318 = vunpack.c.h.b16 %v2242
        %v3319 = vunpack.c.l.b16 %v2243
        %v3320 = vunpack.c.h.b16 %v2243
        %v3321 = vunpack.c.l.b16 %v2244
        %v3322 = vunpack.c.h.b16 %v2244
        %v3323 = vunpack.c.l.b16 %v2245
        %v3324 = vunpack.c.h.b16 %v2245
        %v3325 = vunpack.c.l.b16 %v2246
        %v3326 = vunpack.c.h.b16 %v2246
        %v3327 = vunpack.c.l.b16 %v2247
        %v3328 = vunpack.c.h.b16 %v2247
        %v3329 = vunpack.c.l.b16 %v2248
        %v3330 = vunpack.c.h.b16 %v2248
        %v3331 = vunpack.c.l.b16 %v2249
        %v3332 = vunpack.c.h.b16 %v2249
        %v3333 = vunpack.c.l.b16 %v2250
        %v3334 = vunpack.c.h.b16 %v2250
        %v3335 = vunpack.c.l.b16 %v2251
        %v3336 = vunpack.c.h.b16 %v2251
        %v3337 = vunpack.c.l.b16 %v2252
        %v3338 = vunpack.c.h.b16 %v2252
        %v3339 = vunpack.c.l.b16 %v2253
        %v3340 = vunpack.c.h.b16 %v2253
        %v3341 = vunpack.c.l.b16 %v2254
        %v3342 = vunpack.c.h.b16 %v2254
        %v3343 = vunpack.c.l.b16 %v2255
        %v3344 = vunpack.c.h.b16 %v2255
        %v3345 = vunpack.c.l.b16 %v2256
        %v3346 = vunpack.c.h.b16 %v2256
        %v3347 = vunpack.c.l.b16 %v2257
        %v3348 = vunpack.c.h.b16 %v2257
        %v3349 = vunpack.c.l.b16 %v2258
        %v3350 = vunpack.c.h.b16 %v2258
        %v3351 = vunpack.c.l.b16 %v2259
        %v3352 = vunpack.c.h.b16 %v2259
        %v3353 = vunpack.c.l.b16 %v2260
        %v3354 = vunpack.c.h.b16 %v2260
        %v3355 = vunpack.c.l.b16 %v2261
        %v3356 = vunpack.c.h.b16 %v2261
        %v3357 = vunpack.c.l.b16 %v2262
        %v3358 = vunpack.c.h.b16 %v2262
        %v3359 = vunpack.c.l.b16 %v2263
        %v3360 = vunpack.c.h.b16 %v2263
        %v3361 = vunpack.c.l.b16 %v2264
        %v3362 = vunpack.c.h.b16 %v2264
        %v3363 = vunpack.c.l.b16 %v2265
        %v3364 = vunpack.c.h.b16 %v2265
        %v3365 = vunpack.c.l.b16 %v2266
        %v3366 = vunpack.c.h.b16 %v2266
        %v3367 = vunpack.c.l.b16 %v2267
        %v3368 = vunpack.c.h.b16 %v2267
        %v3369 = vunpack.c.l.b16 %v2268
        %v3370 = vunpack.c.h.b16 %v2268
        %v3371 = vunpack.c.l.b16 %v2269
        %v3372 = vunpack.c.h.b16 %v2269
        %v3373 = vunpack.c.l.b16 %v2270
        %v3374 = vunpack.c.h.b16 %v2270
        %v3375 = vunpack.c.l.b16 %v2271
        %v3376 = vunpack.c.h.b16 %v2271
        %v3377 = vunpack.c.l.b16 %v2272
        %v3378 = vunpack.c.h.b16 %v2272
        %v3379 = vunpack.c.l.b16 %v2273
        %v3380 = vunpack.c.h.b16 %v2273
        %v3381 = vunpack.c.l.b16 %v2274
        %v3382 = vunpack.c.h.b16 %v2274
        %v3383 = vunpack.c.l.b16 %v2275
        %v3384 = vunpack.c.h.b16 %v2275
        %v3385 = vunpack.c.l.b16 %v2276
        %v3386 = vunpack.c.h.b16 %v2276
        %v3387 = vunpack.c.l.b16 %v2277
        %v3388 = vunpack.c.h.b16 %v2277
        %v3389 = vunpack.c.l.b16 %v2278
        %v3390 = vunpack.c.h.b16 %v2278
        %v3391 = vunpack.c.l.b16 %v2279
        %v3392 = vunpack.c.h.b16 %v2279
        %v3393 = vunpack.c.l.b16 %v2280
        %v3394 = vunpack.c.h.b16 %v2280
        %v3395 = vunpack.c.l.b16 %v2281
        %v3396 = vunpack.c.h.b16 %v2281
        %v3397 = vunpack.c.l.b16 %v2282
        %v3398 = vunpack.c.h.b16 %v2282
        %v3399 = vunpack.c.l.b16 %v2283
        %v3400 = vunpack.c.h.b16 %v2283
        %v3401 = vunpack.c.l.b16 %v2284
        %v3402 = vunpack.c.h.b16 %v2284
        %v3403 = vunpack.c.l.b16 %v2285
        %v3404 = vunpack.c.h.b16 %v2285
        %v3405 = vunpack.c.l.b16 %v2286
        %v3406 = vunpack.c.h.b16 %v2286
        %v3407 = vunpack.c.l.b16 %v2287
        %v3408 = vunpack.c.h.b16 %v2287
        %v3409 = vunpack.c.l.b16 %v2288
        %v3410 = vunpack.c.h.b16 %v2288
        %v3411 = vunpack.c.l.b16 %v2289
        %v3412 = vunpack.c.h.b16 %v2289
        %v3413 = vunpack.c.l.b16 %v2290
        %v3414 = vunpack.c.h.b16 %v2290
        %v3415 = vunpack.c.l.b16 %v2291
        %v3416 = vunpack.c.h.b16 %v2291
        %v3417 = vunpack.c.l.b16 %v2292
        %v3418 = vunpack.c.h.b16 %v2292
        %v3419 = vunpack.c.l.b16 %v2293
        %v3420 = vunpack.c.h.b16 %v2293
        %v3421 = vunpack.c.l.b16 %v2294
        %v3422 = vunpack.c.h.b16 %v2294
        %v3423 = vunpack.c.l.b16 %v2295
        %v3424 = vunpack.c.h.b16 %v2295
        %v3425 = vunpack.c.l.b16 %v2296
        %v3426 = vunpack.c.h.b16 %v2296
        %v3427 = vunpack.c.l.b16 %v2297
        %v3428 = vunpack.c.h.b16 %v2297
        %v3429 = vunpack.c.l.b16 %v2298
        %v3430 = vunpack.c.h.b16 %v2298
        %v3431 = vunpack.c.l.b16 %v2299
        %v3432 = vunpack.c.h.b16 %v2299
        %v3433 = vunpack.c.l.b16 %v2300
        %v3434 = vunpack.c.h.b16 %v2300
        %v3435 = vunpack.c.l.b16 %v2301
        %v3436 = vunpack.c.h.b16 %v2301
        %v3437 = vunpack.c.l.b16 %v2302
        %v3438 = vunpack.c.h.b16 %v2302
        %v3439 = vunpack.c.l.b16 %v2303
        %v3440 = vunpack.c.h.b16 %v2303
        %v3441 = vunpack.c.l.b16 %v2304
        %v3442 = vunpack.c.h.b16 %v2304
        %v3443 = vunpack.c.l.b16 %v2305
        %v3444 = vunpack.c.h.b16 %v2305
        %v3445 = vunpack.c.l.b16 %v2306
        %v3446 = vunpack.c.h.b16 %v2306
        %v3447 = vunpack.c.l.b16 %v2307
        %v3448 = vunpack.c.h.b16 %v2307
        %v3449 = vunpack.c.l.b16 %v2308
        %v3450 = vunpack.c.h.b16 %v2308
        %v3451 = vunpack.c.l.b16 %v2309
        %v3452 = vunpack.c.h.b16 %v2309
        %v3453 = vunpack.c.l.b16 %v2310
        %v3454 = vunpack.c.h.b16 %v2310
        %v3455 = vunpack.c.l.b16 %v2311
        %v3456 = vunpack.c.h.b16 %v2311
        %v3457 = vunpack.c.l.b16 %v2312
        %v3458 = vunpack.c.h.b16 %v2312
        %v3459 = vunpack.c.l.b16 %v2313
        %v3460 = vunpack.c.h.b16 %v2313
        %v3461 = vunpack.c.l.b16 %v2314
        %v3462 = vunpack.c.h.b16 %v2314
        %v3463 = vunpack.c.l.b16 %v2315
        %v3464 = vunpack.c.h.b16 %v2315
        %v3465 = vunpack.c.l.b16 %v2316
        %v3466 = vunpack.c.h.b16 %v2316
        %v3467 = vunpack.c.l.b16 %v2317
        %v3468 = vunpack.c.h.b16 %v2317
        %v3469 = vunpack.c.l.b16 %v2318
        %v3470 = vunpack.c.h.b16 %v2318
        %v3471 = vunpack.c.l.b16 %v2319
        %v3472 = vunpack.c.h.b16 %v2319
        %v3473 = vunpack.c.l.b16 %v2320
        %v3474 = vunpack.c.h.b16 %v2320
        %v3475 = vunpack.c.l.b16 %v2321
        %v3476 = vunpack.c.h.b16 %v2321
        %v3477 = vunpack.c.l.b16 %v2322
        %v3478 = vunpack.c.h.b16 %v2322
        %v3479 = vunpack.c.l.b16 %v2323
        %v3480 = vunpack.c.h.b16 %v2323
        %v3481 = vunpack.c.l.b16 %v2324
        %v3482 = vunpack.c.h.b16 %v2324
        %v3483 = vunpack.c.l.b16 %v2325
        %v3484 = vunpack.c.h.b16 %v2325
        %v3485 = vunpack.c.l.b16 %v2326
        %v3486 = vunpack.c.h.b16 %v2326
        %v3487 = vunpack.c.l.b16 %v2327
        %v3488 = vunpack.c.h.b16 %v2327
        %v3489 = vunpack.c.l.b16 %v2328
        %v3490 = vunpack.c.h.b16 %v2328
        %v3491 = vunpack.c.l.b16 %v2329
        %v3492 = vunpack.c.h.b16 %v2329
        %v3493 = vunpack.c.l.b16 %v2330
        %v3494 = vunpack.c.h.b16 %v2330
        %v3495 = vunpack.c.l.b16 %v2331
        %v3496 = vunpack.c.h.b16 %v2331
        %v3497 = vunpack.c.l.b16 %v2332
        %v3498 = vunpack.c.h.b16 %v2332
        %v3499 = vunpack.c.l.b16 %v2333
        %v3500 = vunpack.c.h.b16 %v2333
        %v3501 = vunpack.c.l.b16 %v2334
        %v3502 = vunpack.c.h.b16 %v2334
        %v3503 = vunpack.c.l.b16 %v2335
        %v3504 = vunpack.c.h.b16 %v2335
        %v3505 = vunpack.c.l.b16 %v2336
        %v3506 = vunpack.c.h.b16 %v2336
        %v3507 = vunpack.c.l.b16 %v2337
        %v3508 = vunpack.c.h.b16 %v2337
        %v3509 = vunpack.c.l.b16 %v2338
        %v3510 = vunpack.c.h.b16 %v2338
        %v3511 = vunpack.c.l.b16 %v2339
        %v3512 = vunpack.c.h.b16 %v2339
        %v3513 = vunpack.c.l.b16 %v2340
        %v3514 = vunpack.c.h.b16 %v2340
        %v3515 = vunpack.c.l.b16 %v2341
        %v3516 = vunpack.c.h.b16 %v2341
        %v3517 = vunpack.c.l.b16 %v2342
        %v3518 = vunpack.c.h.b16 %v2342
        %v3519 = vunpack.c.l.b16 %v2343
        %v3520 = vunpack.c.h.b16 %v2343
        %v3521 = vunpack.c.l.b16 %v2344
        %v3522 = vunpack.c.h.b16 %v2344
        %v3523 = vunpack.c.l.b16 %v2345
        %v3524 = vunpack.c.h.b16 %v2345
        %v3525 = vunpack.c.l.b16 %v2346
        %v3526 = vunpack.c.h.b16 %v2346
        %v3527 = vunpack.c.l.b16 %v2347
        %v3528 = vunpack.c.h.b16 %v2347
        %v3529 = vunpack.c.l.b16 %v2348
        %v3530 = vunpack.c.h.b16 %v2348
        %v3531 = vunpack.c.l.b16 %v2349
        %v3532 = vunpack.c.h.b16 %v2349
        %v3533 = vunpack.c.l.b16 %v2350
        %v3534 = vunpack.c.h.b16 %v2350
        %v3535 = vunpack.c.l.b16 %v2351
        %v3536 = vunpack.c.h.b16 %v2351
        %v3537 = vunpack.c.l.b16 %v2352
        %v3538 = vunpack.c.h.b16 %v2352
        %v3539 = vunpack.c.l.b16 %v2353
        %v3540 = vunpack.c.h.b16 %v2353
        %v3541 = vunpack.c.l.b16 %v2354
        %v3542 = vunpack.c.h.b16 %v2354
        %v3543 = vpack.c.b16 %v2761, %v2759
        %v3544 = vpack.c.b16 %v2762, %v2760
        %v3545 = vpack.c.b16 %v2765, %v2763
        %v3546 = vpack.c.b16 %v2766, %v2764
        %v3547 = vpack.c.b16 %v2769, %v2767
        %v3548 = vpack.c.b16 %v2770, %v2768
        %v3549 = vpack.c.b16 %v2773, %v2771
        %v3550 = vpack.c.b16 %v2774, %v2772
        %v3551 = vpack.c.b16 %v2777, %v2775
        %v3552 = vpack.c.b16 %v2778, %v2776
        %v3553 = vpack.c.b16 %v2781, %v2779
        %v3554 = vpack.c.b16 %v2782, %v2780
        %v3555 = vpack.c.b16 %v2785, %v2783
        %v3556 = vpack.c.b16 %v2786, %v2784
        %v3557 = vpack.c.b16 %v2789, %v2787
        %v3558 = vpack.c.b16 %v2790, %v2788
        %v3559 = vpack.c.b16 %v2793, %v2791
        %v3560 = vpack.c.b16 %v2794, %v2792
        %v3561 = vpack.c.b16 %v2797, %v2795
        %v3562 = vpack.c.b16 %v2798, %v2796
        %v3563 = vpack.c.b16 %v2801, %v2799
        %v3564 = vpack.c.b16 %v2802, %v2800
        %v3565 = vpack.c.b16 %v2805, %v2803
        %v3566 = vpack.c.b16 %v2806, %v2804
        %v3567 = vpack.c.b16 %v2809, %v2807
        %v3568 = vpack.c.b16 %v2810, %v2808
        %v3569 = vpack.c.b16 %v2813, %v2811
        %v3570 = vpack.c.b16 %v2814, %v2812
        %v3571 = vpack.c.b16 %v2817, %v2815
        %v3572 = vpack.c.b16 %v2818, %v2816
        %v3573 = vpack.c.b16 %v2821, %v2819
        %v3574 = vpack.c.b16 %v2822, %v2820
        %v3575 = vpack.c.b16 %v2825, %v2823
        %v3576 = vpack.c.b16 %v2826, %v2824
        %v3577 = vpack.c.b16 %v2829, %v2827
        %v3578 = vpack.c.b16 %v2830, %v2828
        %v3579 = vpack.c.b16 %v2833, %v2831
        %v3580 = vpack.c.b16 %v2834, %v2832
        %v3581 = vpack.c.b16 %v2837, %v2835
        %v3582 = vpack.c.b16 %v2838, %v2836
        %v3583 = vpack.c.b16 %v2841, %v2839
        %v3584 = vpack.c.b16 %v2842, %v2840
        %v3585 = vpack.c.b16 %v2845, %v2843
        %v3586 = vpack.c.b16 %v2846, %v2844
        %v3587 = vpack.c.b16 %v2849, %v2847
        %v3588 = vpack.c.b16 %v2850, %v2848
        %v3589 = vpack.c.b16 %v2853, %v2851
        %v3590 = vpack.c.b16 %v2854, %v2852
        %v3591 = vpack.c.b16 %v2857, %v2855
        %v3592 = vpack.c.b16 %v2858, %v2856
        %v3593 = vpack.c.b16 %v2861, %v2859
        %v3594 = vpack.c.b16 %v2862, %v2860
        %v3595 = vpack.c.b16 %v2865, %v2863
        %v3596 = vpack.c.b16 %v2866, %v2864
        %v3597 = vpack.c.b16 %v2869, %v2867
        %v3598 = vpack.c.b16 %v2870, %v2868
        %v3599 = vpack.c.b16 %v2873, %v2871
        %v3600 = vpack.c.b16 %v2874, %v2872
        %v3601 = vpack.c.b16 %v2877, %v2875
        %v3602 = vpack.c.b16 %v2878, %v2876
        %v3603 = vpack.c.b16 %v2881, %v2879
        %v3604 = vpack.c.b16 %v2882, %v2880
        %v3605 = vpack.c.b16 %v2885, %v2883
        %v3606 = vpack.c.b16 %v2886, %v2884
        %v3607 = vpack.c.b16 %v2889, %v2887
        %v3608 = vpack.c.b16 %v2890, %v2888
        %v3609 = vpack.c.b16 %v2893, %v2891
        %v3610 = vpack.c.b16 %v2894, %v2892
        %v3611 = vpack.c.b16 %v2897, %v2895
        %v3612 = vpack.c.b16 %v2898, %v2896
        %v3613 = vpack.c.b16 %v2901, %v2899
        %v3614 = vpack.c.b16 %v2902, %v2900
        %v3615 = vpack.c.b16 %v2905, %v2903
        %v3616 = vpack.c.b16 %v2906, %v2904
        %v3617 = vpack.c.b16 %v2909, %v2907
        %v3618 = vpack.c.b16 %v2910, %v2908
        %v3619 = vpack.c.b16 %v2913, %v2911
        %v3620 = vpack.c.b16 %v2914, %v2912
        %v3621 = vpack.c.b16 %v2917, %v2915
        %v3622 = vpack.c.b16 %v2918, %v2916
        %v3623 = vpack.c.b16 %v2921, %v2919
        %v3624 = vpack.c.b16 %v2922, %v2920
        %v3625 = vpack.c.b16 %v2925, %v2923
        %v3626 = vpack.c.b16 %v2926, %v2924
        %v3627 = vpack.c.b16 %v2929, %v2927
        %v3628 = vpack.c.b16 %v2930, %v2928
        %v3629 = vpack.c.b16 %v2933, %v2931
        %v3630 = vpack.c.b16 %v2934, %v2932
        %v3631 = vpack.c.b16 %v2937, %v2935
        %v3632 = vpack.c.b16 %v2938, %v2936
        %v3633 = vpack.c.b16 %v2941, %v2939
        %v3634 = vpack.c.b16 %v2942, %v2940
        %v3635 = vpack.c.b16 %v2945, %v2943
        %v3636 = vpack.c.b16 %v2946, %v2944
        %v3637 = vpack.c.b16 %v2949, %v2947
        %v3638 = vpack.c.b16 %v2950, %v2948
        %v3639 = vpack.c.b16 %v2953, %v2951
        %v3640 = vpack.c.b16 %v2954, %v2952
        %v3641 = vpack.c.b16 %v2957, %v2955
        %v3642 = vpack.c.b16 %v2958, %v2956
        %v3643 = vpack.c.b16 %v2961, %v2959
        %v3644 = vpack.c.b16 %v2962, %v2960
        %v3645 = vpack.c.b16 %v2965, %v2963
        %v3646 = vpack.c.b16 %v2966, %v2964
        %v3647 = vpack.c.b16 %v2969, %v2967
        %v3648 = vpack.c.b16 %v2970, %v2968
        %v3649 = vpack.c.b16 %v2973, %v2971
        %v3650 = vpack.c.b16 %v2974, %v2972
        %v3651 = vpack.c.b16 %v2977, %v2975
        %v3652 = vpack.c.b16 %v2978, %v2976
        %v3653 = vpack.c.b16 %v2981, %v2979
        %v3654 = vpack.c.b16 %v2982, %v2980
        %v3655 = vpack.c.b16 %v2985, %v2983
        %v3656 = vpack.c.b16 %v2986, %v2984
        %v3657 = vpack.c.b16 %v2989, %v2987
        %v3658 = vpack.c.b16 %v2990, %v2988
        %v3659 = vpack.c.b16 %v2993, %v2991
        %v3660 = vpack.c.b16 %v2994, %v2992
        %v3661 = vpack.c.b16 %v2997, %v2995
        %v3662 = vpack.c.b16 %v2998, %v2996
        %v3663 = vpack.c.b16 %v3001, %v2999
        %v3664 = vpack.c.b16 %v3002, %v3000
        %v3665 = vpack.c.b16 %v3005, %v3003
        %v3666 = vpack.c.b16 %v3006, %v3004
        %v3667 = vpack.c.b16 %v3009, %v3007
        %v3668 = vpack.c.b16 %v3010, %v3008
        %v3669 = vpack.c.b16 %v3013, %v3011
        %v3670 = vpack.c.b16 %v3014, %v3012
        %v3671 = vpack.c.b16 %v3017, %v3015
        %v3672 = vpack.c.b16 %v3018, %v3016
        %v3673 = vpack.c.b16 %v3021, %v3019
        %v3674 = vpack.c.b16 %v3022, %v3020
        %v3675 = vpack.c.b16 %v3025, %v3023
        %v3676 = vpack.c.b16 %v3026, %v3024
        %v3677 = vpack.c.b16 %v3029, %v3027
        %v3678 = vpack.c.b16 %v3030, %v3028
        %v3679 = vpack.c.b16 %v3033, %v3031
        %v3680 = vpack.c.b16 %v3034, %v3032
        %v3681 = vpack.c.b16 %v3037, %v3035
        %v3682 = vpack.c.b16 %v3038, %v3036
        %v3683 = vpack.c.b16 %v3041, %v3039
        %v3684 = vpack.c.b16 %v3042, %v3040
        %v3685 = vpack.c.b16 %v3045, %v3043
        %v3686 = vpack.c.b16 %v3046, %v3044
        %v3687 = vpack.c.b16 %v3049, %v3047
        %v3688 = vpack.c.b16 %v3050, %v3048
        %v3689 = vpack.c.b16 %v3053, %v3051
        %v3690 = vpack.c.b16 %v3054, %v3052
        %v3691 = vpack.c.b16 %v3057, %v3055
        %v3692 = vpack.c.b16 %v3058, %v3056
        %v3693 = vpack.c.b16 %v3061, %v3059
        %v3694 = vpack.c.b16 %v3062, %v3060
        %v3695 = vpack.c.b16 %v3065, %v3063
        %v3696 = vpack.c.b16 %v3066, %v3064
        %v3697 = vpack.c.b16 %v3069, %v3067
        %v3698 = vpack.c.b16 %v3070, %v3068
        %v3699 = vpack.c.b16 %v3073, %v3071
        %v3700 = vpack.c.b16 %v3074, %v3072
        %v3701 = vpack.c.b16 %v3077, %v3075
        %v3702 = vpack.c.b16 %v3078, %v3076
        %v3703 = vpack.c.b16 %v3081, %v3079
        %v3704 = vpack.c.b16 %v3082, %v3080
        %v3705 = vpack.c.b16 %v3085, %v3083
        %v3706 = vpack.c.b16 %v3086, %v3084
        %v3707 = vpack.c.b16 %v3089, %v3087
        %v3708 = vpack.c.b16 %v3090, %v3088
        %v3709 = vpack.c.b16 %v3093, %v3091
        %v3710 = vpack.c.b16 %v3094, %v3092
        %v3711 = vpack.c.b16 %v3097, %v3095
        %v3712 = vpack.c.b16 %v3098, %v3096
        %v3713 = vpack.c.b16 %v3101, %v3099
        %v3714 = vpack.c.b16 %v3102, %v3100
        %v3715 = vpack.c.b16 %v3105, %v3103
        %v3716 = vpack.c.b16 %v3106, %v3104
        %v3717 = vpack.c.b16 %v3109, %v3107
        %v3718 = vpack.c.b16 %v3110, %v3108
        %v3719 = vpack.c.b16 %v3113, %v3111
        %v3720 = vpack.c.b16 %v3114, %v3112
        %v3721 = vpack.c.b16 %v3117, %v3115
        %v3722 = vpack.c.b16 %v3118, %v3116
        %v3723 = vpack.c.b16 %v3121, %v3119
        %v3724 = vpack.c.b16 %v3122, %v3120
        %v3725 = vpack.c.b16 %v3125, %v3123
        %v3726 = vpack.c.b16 %v3126, %v3124
        %v3727 = vpack.c.b16 %v3129, %v3127
        %v3728 = vpack.c.b16 %v3130, %v3128
        %v3729 = vpack.c.b16 %v3133, %v3131
        %v3730 = vpack.c.b16 %v3134, %v3132
        %v3731 = vpack.c.b16 %v3137, %v3135
        %v3732 = vpack.c.b16 %v3138, %v3136
        %v3733 = vpack.c.b16 %v3141, %v3139
        %v3734 = vpack.c.b16 %v3142, %v3140
        %v3735 = vpack.c.b16 %v3145, %v3143
        %v3736 = vpack.c.b16 %v3146, %v3144
        %v3737 = vpack.c.b16 %v3149, %v3147
        %v3738 = vpack.c.b16 %v3150, %v3148
        %v3739 = vpack.c.b16 %v3153, %v3151
        %v3740 = vpack.c.b16 %v3154, %v3152
        %v3741 = vpack.c.b16 %v3157, %v3155
        %v3742 = vpack.c.b16 %v3158, %v3156
        %v3743 = vpack.c.b16 %v3161, %v3159
        %v3744 = vpack.c.b16 %v3162, %v3160
        %v3745 = vpack.c.b16 %v3165, %v3163
        %v3746 = vpack.c.b16 %v3166, %v3164
        %v3747 = vpack.c.b16 %v3169, %v3167
        %v3748 = vpack.c.b16 %v3170, %v3168
        %v3749 = vpack.c.b16 %v3173, %v3171
        %v3750 = vpack.c.b16 %v3174, %v3172
        %v3751 = vpack.c.b16 %v3177, %v3175
        %v3752 = vpack.c.b16 %v3178, %v3176
        %v3753 = vpack.c.b16 %v3181, %v3179
        %v3754 = vpack.c.b16 %v3182, %v3180
        %v3755 = vpack.c.b16 %v3185, %v3183
        %v3756 = vpack.c.b16 %v3186, %v3184
        %v3757 = vpack.c.b16 %v3189, %v3187
        %v3758 = vpack.c.b16 %v3190, %v3188
        %v3759 = vpack.c.b16 %v3193, %v3191
        %v3760 = vpack.c.b16 %v3194, %v3192
        %v3761 = vpack.c.b16 %v3197, %v3195
        %v3762 = vpack.c.b16 %v3198, %v3196
        %v3763 = vpack.c.b16 %v3201, %v3199
        %v3764 = vpack.c.b16 %v3202, %v3200
        %v3765 = vpack.c.b16 %v3205, %v3203
        %v3766 = vpack.c.b16 %v3206, %v3204
        %v3767 = vpack.c.b16 %v3209, %v3207
        %v3768 = vpack.c.b16 %v3210, %v3208
        %v3769 = vpack.c.b16 %v3213, %v3211
        %v3770 = vpack.c.b16 %v3214, %v3212
        %v3771 = vpack.c.b16 %v3217, %v3215
        %v3772 = vpack.c.b16 %v3218, %v3216
        %v3773 = vpack.c.b16 %v3221, %v3219
        %v3774 = vpack.c.b16 %v3222, %v3220
        %v3775 = vpack.c.b16 %v3225, %v3223
        %v3776 = vpack.c.b16 %v3226, %v3224
        %v3777 = vpack.c.b16 %v3229, %v3227
        %v3778 = vpack.c.b16 %v3230, %v3228
        %v3779 = vpack.c.b16 %v3233, %v3231
        %v3780 = vpack.c.b16 %v3234, %v3232
        %v3781 = vpack.c.b16 %v3237, %v3235
        %v3782 = vpack.c.b16 %v3238, %v3236
        %v3783 = vpack.c.b16 %v3241, %v3239
        %v3784 = vpack.c.b16 %v3242, %v3240
        %v3785 = vpack.c.b16 %v3245, %v3243
        %v3786 = vpack.c.b16 %v3246, %v3244
        %v3787 = vpack.c.b16 %v3249, %v3247
        %v3788 = vpack.c.b16 %v3250, %v3248
        %v3789 = vpack.c.b16 %v3253, %v3251
        %v3790 = vpack.c.b16 %v3254, %v3252
        %v3791 = vpack.c.b16 %v3257, %v3255
        %v3792 = vpack.c.b16 %v3258, %v3256
        %v3793 = vpack.c.b16 %v3261, %v3259
        %v3794 = vpack.c.b16 %v3262, %v3260
        %v3795 = vpack.c.b16 %v3265, %v3263
        %v3796 = vpack.c.b16 %v3266, %v3264
        %v3797 = vpack.c.b16 %v3269, %v3267
        %v3798 = vpack.c.b16 %v3270, %v3268
        %v3799 = vpack.c.b16 %v3273, %v3271
        %v3800 = vpack.c.b16 %v3274, %v3272
        %v3801 = vpack.c.b16 %v3277, %v3275
        %v3802 = vpack.c.b16 %v3278, %v3276
        %v3803 = vpack.c.b16 %v3281, %v3279
        %v3804 = vpack.c.b16 %v3282, %v3280
        %v3805 = vpack.c.b16 %v3285, %v3283
        %v3806 = vpack.c.b16 %v3286, %v3284
        %v3807 = vpack.c.b16 %v3289, %v3287
        %v3808 = vpack.c.b16 %v3290, %v3288
        %v3809 = vpack.c.b16 %v3293, %v3291
        %v3810 = vpack.c.b16 %v3294, %v3292
        %v3811 = vpack.c.b16 %v3297, %v3295
        %v3812 = vpack.c.b16 %v3298, %v3296
        %v3813 = vpack.c.b16 %v3301, %v3299
        %v3814 = vpack.c.b16 %v3302, %v3300
        %v3815 = vpack.c.b16 %v3305, %v3303
        %v3816 = vpack.c.b16 %v3306, %v3304
        %v3817 = vpack.c.b16 %v3309, %v3307
        %v3818 = vpack.c.b16 %v3310, %v3308
        %v3819 = vpack.c.b16 %v3313, %v3311
        %v3820 = vpack.c.b16 %v3314, %v3312
        %v3821 = vpack.c.b16 %v3317, %v3315
        %v3822 = vpack.c.b16 %v3318, %v3316
        %v3823 = vpack.c.b16 %v3321, %v3319
        %v3824 = vpack.c.b16 %v3322, %v3320
        %v3825 = vpack.c.b16 %v3325, %v3323
        %v3826 = vpack.c.b16 %v3326, %v3324
        %v3827 = vpack.c.b16 %v3329, %v3327
        %v3828 = vpack.c.b16 %v3330, %v3328
        %v3829 = vpack.c.b16 %v3333, %v3331
        %v3830 = vpack.c.b16 %v3334, %v3332
        %v3831 = vpack.c.b16 %v3337, %v3335
        %v3832 = vpack.c.b16 %v3338, %v3336
        %v3833 = vpack.c.b16 %v3341, %v3339
        %v3834 = vpack.c.b16 %v3342, %v3340
        %v3835 = vpack.c.b16 %v3345, %v3343
        %v3836 = vpack.c.b16 %v3346, %v3344
        %v3837 = vpack.c.b16 %v3349, %v3347
        %v3838 = vpack.c.b16 %v3350, %v3348
        %v3839 = vpack.c.b16 %v3353, %v3351
        %v3840 = vpack.c.b16 %v3354, %v3352
        %v3841 = vpack.c.b16 %v3357, %v3355
        %v3842 = vpack.c.b16 %v3358, %v3356
        %v3843 = vpack.c.b16 %v3361, %v3359
        %v3844 = vpack.c.b16 %v3362, %v3360
        %v3845 = vpack.c.b16 %v3365, %v3363
        %v3846 = vpack.c.b16 %v3366, %v3364
        %v3847 = vpack.c.b16 %v3369, %v3367
        %v3848 = vpack.c.b16 %v3370, %v3368
        %v3849 = vpack.c.b16 %v3373, %v3371
        %v3850 = vpack.c.b16 %v3374, %v3372
        %v3851 = vpack.c.b16 %v3377, %v3375
        %v3852 = vpack.c.b16 %v3378, %v3376
        %v3853 = vpack.c.b16 %v3381, %v3379
        %v3854 = vpack.c.b16 %v3382, %v3380
        %v3855 = vpack.c.b16 %v3385, %v3383
        %v3856 = vpack.c.b16 %v3386, %v3384
        %v3857 = vpack.c.b16 %v3389, %v3387
        %v3858 = vpack.c.b16 %v3390, %v3388
        %v3859 = vpack.c.b16 %v3393, %v3391
        %v3860 = vpack.c.b16 %v3394, %v3392
        %v3861 = vpack.c.b16 %v3397, %v3395
        %v3862 = vpack.c.b16 %v3398, %v3396
        %v3863 = vpack.c.b16 %v3401, %v3399
        %v3864 = vpack.c.b16 %v3402, %v3400
        %v3865 = vpack.c.b16 %v3405, %v3403
        %v3866 = vpack.c.b16 %v3406, %v3404
        %v3867 = vpack.c.b16 %v3409, %v3407
        %v3868 = vpack.c.b16 %v3410, %v3408
        %v3869 = vpack.c.b16 %v3413, %v3411
        %v3870 = vpack.c.b16 %v3414, %v3412
        %v3871 = vpack.c.b16 %v3417, %v3415
        %v3872 = vpack.c.b16 %v3418, %v3416
        %v3873 = vpack.c.b16 %v3421, %v3419
        %v3874 = vpack.c.b16 %v3422, %v3420
        %v3875 = vpack.c.b16 %v3425, %v3423
        %v3876 = vpack.c.b16 %v3426, %v3424
        %v3877 = vpack.c.b16 %v3429, %v3427
        %v3878 = vpack.c.b16 %v3430, %v3428
        %v3879 = vpack.c.b16 %v3433, %v3431
        %v3880 = vpack.c.b16 %v3434, %v3432
        %v3881 = vpack.c.b16 %v3437, %v3435
        %v3882 = vpack.c.b16 %v3438, %v3436
        %v3883 = vpack.c.b16 %v3441, %v3439
        %v3884 = vpack.c.b16 %v3442, %v3440
        %v3885 = vpack.c.b16 %v3445, %v3443
        %v3886 = vpack.c.b16 %v3446, %v3444
        %v3887 = vpack.c.b16 %v3449, %v3447
        %v3888 = vpack.c.b16 %v3450, %v3448
        %v3889 = vpack.c.b16 %v3453, %v3451
        %v3890 = vpack.c.b16 %v3454, %v3452
        %v3891 = vpack.c.b16 %v3457, %v3455
        %v3892 = vpack.c.b16 %v3458, %v3456
        %v3893 = vpack.c.b16 %v3461, %v3459
        %v3894 = vpack.c.b16 %v3462, %v3460
        %v3895 = vpack.c.b16 %v3465, %v3463
        %v3896 = vpack.c.b16 %v3466, %v3464
        %v3897 = vpack.c.b16 %v3469, %v3467
        %v3898 = vpack.c.b16 %v3470, %v3468
        %v3899 = vpack.c.b16 %v3473, %v3471
        %v3900 = vpack.c.b16 %v3474, %v3472
        %v3901 = vpack.c.b16 %v3477, %v3475
        %v3902 = vpack.c.b16 %v3478, %v3476
        %v3903 = vpack.c.b16 %v3481, %v3479
        %v3904 = vpack.c.b16 %v3482, %v3480
        %v3905 = vpack.c.b16 %v3485, %v3483
        %v3906 = vpack.c.b16 %v3486, %v3484
        %v3907 = vpack.c.b16 %v3489, %v3487
        %v3908 = vpack.c.b16 %v3490, %v3488
        %v3909 = vpack.c.b16 %v3493, %v3491
        %v3910 = vpack.c.b16 %v3494, %v3492
        %v3911 = vpack.c.b16 %v3497, %v3495
        %v3912 = vpack.c.b16 %v3498, %v3496
        %v3913 = vpack.c.b16 %v3501, %v3499
        %v3914 = vpack.c.b16 %v3502, %v3500
        %v3915 = vpack.c.b16 %v3505, %v3503
        %v3916 = vpack.c.b16 %v3506, %v3504
        %v3917 = vpack.c.b16 %v3509, %v3507
        %v3918 = vpack.c.b16 %v3510, %v3508
        %v3919 = vpack.c.b16 %v3513, %v3511
        %v3920 = vpack.c.b16 %v3514, %v3512
        %v3921 = vpack.c.b16 %v3517, %v3515
        %v3922 = vpack.c.b16 %v3518, %v3516
        %v3923 = vpack.c.b16 %v3521, %v3519
        %v3924 = vpack.c.b16 %v3522, %v3520
        %v3925 = vpack.c.b16 %v3525, %v3523
        %v3926 = vpack.c.b16 %v3526, %v3524
        %v3927 = vpack.c.b16 %v3529, %v3527
        %v3928 = vpack.c.b16 %v3530, %v3528
        %v3929 = vpack.c.b16 %v3533, %v3531
        %v3930 = vpack.c.b16 %v3534, %v3532
        %v3931 = vpack.c.b16 %v3537, %v3535
        %v3932 = vpack.c.b16 %v3538, %v3536
        %v3933 = vpack.c.b16 %v3541, %v3539
        %v3934 = vpack.c.b16 %v3542, %v3540
        %vm4327 = vcmask 523264
        %v4329 = vsel %vm4327, %v1962, 0
        %4331 = vmatprep.subr.bf16.mxu0 %v3544
        %4332 = vmatpush1.bf16.msra.mxu0 %v3543
        %4333 = vmatprep.subr.bf16.mxu0 %v3546
        %4334 = vmatpush1.bf16.msra.mxu0 %v3545
        %4335 = vmatprep.subr.bf16.mxu0 %v3548
        %4336 = vmatpush1.bf16.msra.mxu0 %v3547
        %4337 = vmatprep.subr.bf16.mxu0 %v3550
        %4338 = vmatpush1.bf16.msra.mxu0 %v3549
        %4339 = vmatprep.subr.bf16.mxu0 %v3552
        %4340 = vmatpush1.bf16.msra.mxu0 %v3551
        %4341 = vmatprep.subr.bf16.mxu0 %v3554
        %4342 = vmatpush1.bf16.msra.mxu0 %v3553
        %4343 = vmatprep.subr.bf16.mxu0 %v3556
        %4344 = vmatpush1.bf16.msra.mxu0 %v3555
        %4345 = vmatprep.subr.bf16.mxu0 %v3558
        %4346 = vmatpush1.bf16.msra.mxu0 %v3557
        %4347 = vmatprep.subr.bf16.mxu0 %v3560
        %4348 = vmatpush1.bf16.msra.mxu0 %v3559
        %4349 = vmatprep.subr.bf16.mxu0 %v3562
        %4350 = vmatpush1.bf16.msra.mxu0 %v3561
        %4351 = vmatprep.subr.bf16.mxu0 %v3564
        %4352 = vmatpush1.bf16.msra.mxu0 %v3563
        %4353 = vmatprep.subr.bf16.mxu0 %v3566
        %4354 = vmatpush1.bf16.msra.mxu0 %v3565
        %4355 = vmatprep.subr.bf16.mxu0 %v3568
        %4356 = vmatpush1.bf16.msra.mxu0 %v3567
        %4357 = vmatprep.subr.bf16.mxu0 %v3570
        %4358 = vmatpush1.bf16.msra.mxu0 %v3569
        %4359 = vmatprep.subr.bf16.mxu0 %v3572
        %4360 = vmatpush1.bf16.msra.mxu0 %v3571
        %4361 = vmatprep.subr.bf16.mxu0 %v3574
        %4362 = vmatpush1.bf16.msra.mxu0 %v3573
        %4363 = vmatprep.mubr.bf16.mxu0 %v1939
        %4364 = vmatmul.mubr.bf16.gmra.mrb[0].mxu0 %v1938
        %v4365 = vpop.f32.mrb[0].mxu0
        %v4366 = vadd.f32 %v2360, %v4365
        %v4367 = vpop.f32.mrb[0].mxu0
        %v4368 = vadd.f32 %v2364, %v4367
        %v4369 = vpop.f32.mrb[0].mxu0
        %v4370 = vpop.f32.mrb[0].mxu0
        %4371 = vdwg.mxu0
        %4372 = vmatprep.subr.bf16.mxu0 %v3576
        %4373 = vmatpush1.bf16.msra.mxu0 %v3575
        %4374 = vmatprep.subr.bf16.mxu0 %v3578
        %4375 = vmatpush1.bf16.msra.mxu0 %v3577
        %4376 = vmatprep.subr.bf16.mxu0 %v3580
        %4377 = vmatpush1.bf16.msra.mxu0 %v3579
        %4378 = vmatprep.subr.bf16.mxu0 %v3582
        %4379 = vmatpush1.bf16.msra.mxu0 %v3581
        %4380 = vmatprep.subr.bf16.mxu0 %v3584
        %4381 = vmatpush1.bf16.msra.mxu0 %v3583
        %4382 = vmatprep.subr.bf16.mxu0 %v3586
        %4383 = vmatpush1.bf16.msra.mxu0 %v3585
        %4384 = vmatprep.subr.bf16.mxu0 %v3588
        %4385 = vmatpush1.bf16.msra.mxu0 %v3587
        %4386 = vmatprep.subr.bf16.mxu0 %v3590
        %4387 = vmatpush1.bf16.msra.mxu0 %v3589
        %4388 = vmatprep.subr.bf16.mxu0 %v3592
        %4389 = vmatpush1.bf16.msra.mxu0 %v3591
        %4390 = vmatprep.subr.bf16.mxu0 %v3594
        %4391 = vmatpush1.bf16.msra.mxu0 %v3593
        %4392 = vmatprep.subr.bf16.mxu0 %v3596
        %4393 = vmatpush1.bf16.msra.mxu0 %v3595
        %4394 = vmatprep.subr.bf16.mxu0 %v3598
        %4395 = vmatpush1.bf16.msra.mxu0 %v3597
        %4396 = vmatprep.subr.bf16.mxu0 %v3600
        %4397 = vmatpush1.bf16.msra.mxu0 %v3599
        %4398 = vmatprep.subr.bf16.mxu0 %v3602
        %4399 = vmatpush1.bf16.msra.mxu0 %v3601
        %4400 = vmatprep.subr.bf16.mxu0 %v3604
        %4401 = vmatpush1.bf16.msra.mxu0 %v3603
        %4402 = vmatprep.subr.bf16.mxu0 %v3606
        %4403 = vmatpush1.bf16.msra.mxu0 %v3605
        %4404 = vmatprep.mubr.bf16.mxu0 %v1941
        %4405 = vmatmul.mubr.bf16.gmra.mrb[0].mxu0 %v1940
        %v4406 = vpop.f32.mrb[0].mxu0
        %v4407 = vadd.f32 %v4366, %v4406
        %v4408 = vpop.f32.mrb[0].mxu0
        %v4409 = vadd.f32 %v4368, %v4408
        %v4410 = vpop.f32.mrb[0].mxu0
        %v4411 = vpop.f32.mrb[0].mxu0
        %4412 = vdwg.mxu0
        %4413 = vmatprep.subr.bf16.mxu0 %v3608
        %4414 = vmatpush1.bf16.msra.mxu0 %v3607
        %4415 = vmatprep.subr.bf16.mxu0 %v3610
        %4416 = vmatpush1.bf16.msra.mxu0 %v3609
        %4417 = vmatprep.subr.bf16.mxu0 %v3612
        %4418 = vmatpush1.bf16.msra.mxu0 %v3611
        %4419 = vmatprep.subr.bf16.mxu0 %v3614
        %4420 = vmatpush1.bf16.msra.mxu0 %v3613
        %4421 = vmatprep.subr.bf16.mxu0 %v3616
        %4422 = vmatpush1.bf16.msra.mxu0 %v3615
        %4423 = vmatprep.subr.bf16.mxu0 %v3618
        %4424 = vmatpush1.bf16.msra.mxu0 %v3617
        %4425 = vmatprep.subr.bf16.mxu0 %v3620
        %4426 = vmatpush1.bf16.msra.mxu0 %v3619
        %4427 = vmatprep.subr.bf16.mxu0 %v3622
        %4428 = vmatpush1.bf16.msra.mxu0 %v3621
        %4429 = vmatprep.subr.bf16.mxu0 %v3624
        %4430 = vmatpush1.bf16.msra.mxu0 %v3623
        %4431 = vmatprep.subr.bf16.mxu0 %v3626
        %4432 = vmatpush1.bf16.msra.mxu0 %v3625
        %4433 = vmatprep.subr.bf16.mxu0 %v3628
        %4434 = vmatpush1.bf16.msra.mxu0 %v3627
        %4435 = vmatprep.subr.bf16.mxu0 %v3630
        %4436 = vmatpush1.bf16.msra.mxu0 %v3629
        %4437 = vmatprep.subr.bf16.mxu0 %v3632
        %4438 = vmatpush1.bf16.msra.mxu0 %v3631
        %4439 = vmatprep.subr.bf16.mxu0 %v3634
        %4440 = vmatpush1.bf16.msra.mxu0 %v3633
        %4441 = vmatprep.subr.bf16.mxu0 %v3636
        %4442 = vmatpush1.bf16.msra.mxu0 %v3635
        %4443 = vmatprep.subr.bf16.mxu0 %v3638
        %4444 = vmatpush1.bf16.msra.mxu0 %v3637
        %4445 = vmatprep.mubr.bf16.mxu0 %v1943
        %4446 = vmatmul.mubr.bf16.gmra.mrb[0].mxu0 %v1942
        %v4447 = vpop.f32.mrb[0].mxu0
        %v4448 = vadd.f32 %v4407, %v4447
        %v4449 = vpop.f32.mrb[0].mxu0
        %v4450 = vadd.f32 %v4409, %v4449
        %v4451 = vpop.f32.mrb[0].mxu0
        %v4452 = vpop.f32.mrb[0].mxu0
        %4453 = vdwg.mxu0
        %4454 = vmatprep.subr.bf16.mxu0 %v3640
        %4455 = vmatpush1.bf16.msra.mxu0 %v3639
        %4456 = vmatprep.subr.bf16.mxu0 %v3642
        %4457 = vmatpush1.bf16.msra.mxu0 %v3641
        %4458 = vmatprep.subr.bf16.mxu0 %v3644
        %4459 = vmatpush1.bf16.msra.mxu0 %v3643
        %4460 = vmatprep.subr.bf16.mxu0 %v3646
        %4461 = vmatpush1.bf16.msra.mxu0 %v3645
        %4462 = vmatprep.subr.bf16.mxu0 %v3648
        %4463 = vmatpush1.bf16.msra.mxu0 %v3647
        %4464 = vmatprep.subr.bf16.mxu0 %v3650
        %4465 = vmatpush1.bf16.msra.mxu0 %v3649
        %4466 = vmatprep.subr.bf16.mxu0 %v3652
        %4467 = vmatpush1.bf16.msra.mxu0 %v3651
        %4468 = vmatprep.subr.bf16.mxu0 %v3654
        %4469 = vmatpush1.bf16.msra.mxu0 %v3653
        %4470 = vmatprep.subr.bf16.mxu0 %v3656
        %4471 = vmatpush1.bf16.msra.mxu0 %v3655
        %4472 = vmatprep.subr.bf16.mxu0 %v3658
        %4473 = vmatpush1.bf16.msra.mxu0 %v3657
        %4474 = vmatprep.subr.bf16.mxu0 %v3660
        %4475 = vmatpush1.bf16.msra.mxu0 %v3659
        %4476 = vmatprep.subr.bf16.mxu0 %v3662
        %4477 = vmatpush1.bf16.msra.mxu0 %v3661
        %4478 = vmatprep.subr.bf16.mxu0 %v3664
        %4479 = vmatpush1.bf16.msra.mxu0 %v3663
        %4480 = vmatprep.subr.bf16.mxu0 %v3666
        %4481 = vmatpush1.bf16.msra.mxu0 %v3665
        %4482 = vmatprep.subr.bf16.mxu0 %v3668
        %4483 = vmatpush1.bf16.msra.mxu0 %v3667
        %4484 = vmatprep.subr.bf16.mxu0 %v3670
        %4485 = vmatpush1.bf16.msra.mxu0 %v3669
        %4486 = vmatprep.mubr.bf16.mxu0 %v1945
        %4487 = vmatmul.mubr.bf16.gmra.mrb[0].mxu0 %v1944
        %v4488 = vpop.f32.mrb[0].mxu0
        %v4489 = vadd.f32 %v4448, %v4488
        %v4490 = vpop.f32.mrb[0].mxu0
        %v4491 = vadd.f32 %v4450, %v4490
        %v4492 = vpop.f32.mrb[0].mxu0
        %v4493 = vpop.f32.mrb[0].mxu0
        %4494 = vdwg.mxu0
        %4495 = vmatprep.subr.bf16.mxu0 %v3672
        %4496 = vmatpush1.bf16.msra.mxu0 %v3671
        %4497 = vmatprep.subr.bf16.mxu0 %v3674
        %4498 = vmatpush1.bf16.msra.mxu0 %v3673
        %4499 = vmatprep.subr.bf16.mxu0 %v3676
        %4500 = vmatpush1.bf16.msra.mxu0 %v3675
        %4501 = vmatprep.subr.bf16.mxu0 %v3678
        %4502 = vmatpush1.bf16.msra.mxu0 %v3677
        %4503 = vmatprep.subr.bf16.mxu0 %v3680
        %4504 = vmatpush1.bf16.msra.mxu0 %v3679
        %4505 = vmatprep.subr.bf16.mxu0 %v3682
        %4506 = vmatpush1.bf16.msra.mxu0 %v3681
        %4507 = vmatprep.subr.bf16.mxu0 %v3684
        %4508 = vmatpush1.bf16.msra.mxu0 %v3683
        %4509 = vmatprep.subr.bf16.mxu0 %v3686
        %4510 = vmatpush1.bf16.msra.mxu0 %v3685
        %4511 = vmatprep.subr.bf16.mxu0 %v3688
        %4512 = vmatpush1.bf16.msra.mxu0 %v3687
        %4513 = vmatprep.subr.bf16.mxu0 %v3690
        %4514 = vmatpush1.bf16.msra.mxu0 %v3689
        %4515 = vmatprep.subr.bf16.mxu0 %v3692
        %4516 = vmatpush1.bf16.msra.mxu0 %v3691
        %4517 = vmatprep.subr.bf16.mxu0 %v3694
        %4518 = vmatpush1.bf16.msra.mxu0 %v3693
        %4519 = vmatprep.subr.bf16.mxu0 %v3696
        %4520 = vmatpush1.bf16.msra.mxu0 %v3695
        %4521 = vmatprep.subr.bf16.mxu0 %v3698
        %4522 = vmatpush1.bf16.msra.mxu0 %v3697
        %4523 = vmatprep.subr.bf16.mxu0 %v3700
        %4524 = vmatpush1.bf16.msra.mxu0 %v3699
        %4525 = vmatprep.subr.bf16.mxu0 %v3702
        %4526 = vmatpush1.bf16.msra.mxu0 %v3701
        %4527 = vmatprep.mubr.bf16.mxu0 %v1947
        %4528 = vmatmul.mubr.bf16.gmra.mrb[0].mxu0 %v1946
        %v4529 = vpop.f32.mrb[0].mxu0
        %v4530 = vadd.f32 %v4489, %v4529
        %v4531 = vpop.f32.mrb[0].mxu0
        %v4532 = vadd.f32 %v4491, %v4531
        %v4533 = vpop.f32.mrb[0].mxu0
        %v4534 = vpop.f32.mrb[0].mxu0
        %4535 = vdwg.mxu0
        %4536 = vmatprep.subr.bf16.mxu0 %v3704
        %4537 = vmatpush1.bf16.msra.mxu0 %v3703
        %4538 = vmatprep.subr.bf16.mxu0 %v3706
        %4539 = vmatpush1.bf16.msra.mxu0 %v3705
        %4540 = vmatprep.subr.bf16.mxu0 %v3708
        %4541 = vmatpush1.bf16.msra.mxu0 %v3707
        %4542 = vmatprep.subr.bf16.mxu0 %v3710
        %4543 = vmatpush1.bf16.msra.mxu0 %v3709
        %4544 = vmatprep.subr.bf16.mxu0 %v3712
        %4545 = vmatpush1.bf16.msra.mxu0 %v3711
        %4546 = vmatprep.subr.bf16.mxu0 %v3714
        %4547 = vmatpush1.bf16.msra.mxu0 %v3713
        %4548 = vmatprep.subr.bf16.mxu0 %v3716
        %4549 = vmatpush1.bf16.msra.mxu0 %v3715
        %4550 = vmatprep.subr.bf16.mxu0 %v3718
        %4551 = vmatpush1.bf16.msra.mxu0 %v3717
        %4552 = vmatprep.subr.bf16.mxu0 %v3720
        %4553 = vmatpush1.bf16.msra.mxu0 %v3719
        %4554 = vmatprep.subr.bf16.mxu0 %v3722
        %4555 = vmatpush1.bf16.msra.mxu0 %v3721
        %4556 = vmatprep.subr.bf16.mxu0 %v3724
        %4557 = vmatpush1.bf16.msra.mxu0 %v3723
        %4558 = vmatprep.subr.bf16.mxu0 %v3726
        %4559 = vmatpush1.bf16.msra.mxu0 %v3725
        %4560 = vmatprep.subr.bf16.mxu0 %v3728
        %4561 = vmatpush1.bf16.msra.mxu0 %v3727
        %4562 = vmatprep.subr.bf16.mxu0 %v3730
        %4563 = vmatpush1.bf16.msra.mxu0 %v3729
        %4564 = vmatprep.subr.bf16.mxu0 %v3732
        %4565 = vmatpush1.bf16.msra.mxu0 %v3731
        %4566 = vmatprep.subr.bf16.mxu0 %v3734
        %4567 = vmatpush1.bf16.msra.mxu0 %v3733
        %4568 = vmatprep.mubr.bf16.mxu0 %v1949
        %4569 = vmatmul.mubr.bf16.gmra.mrb[0].mxu0 %v1948
        %v4570 = vpop.f32.mrb[0].mxu0
        %v4571 = vadd.f32 %v4530, %v4570
        %v4572 = vpop.f32.mrb[0].mxu0
        %v4573 = vadd.f32 %v4532, %v4572
        %v4574 = vpop.f32.mrb[0].mxu0
        %v4575 = vpop.f32.mrb[0].mxu0
        %4576 = vdwg.mxu0
        %4577 = vmatprep.subr.bf16.mxu0 %v3736
        %4578 = vmatpush1.bf16.msra.mxu0 %v3735
        %4579 = vmatprep.subr.bf16.mxu0 %v3738
        %4580 = vmatpush1.bf16.msra.mxu0 %v3737
        %4581 = vmatprep.subr.bf16.mxu0 %v3740
        %4582 = vmatpush1.bf16.msra.mxu0 %v3739
        %4583 = vmatprep.subr.bf16.mxu0 %v3742
        %4584 = vmatpush1.bf16.msra.mxu0 %v3741
        %4585 = vmatprep.subr.bf16.mxu0 %v3744
        %4586 = vmatpush1.bf16.msra.mxu0 %v3743
        %4587 = vmatprep.subr.bf16.mxu0 %v3746
        %4588 = vmatpush1.bf16.msra.mxu0 %v3745
        %4589 = vmatprep.subr.bf16.mxu0 %v3748
        %4590 = vmatpush1.bf16.msra.mxu0 %v3747
        %4591 = vmatprep.subr.bf16.mxu0 %v3750
        %4592 = vmatpush1.bf16.msra.mxu0 %v3749
        %4593 = vmatprep.subr.bf16.mxu0 %v3752
        %4594 = vmatpush1.bf16.msra.mxu0 %v3751
        %4595 = vmatprep.subr.bf16.mxu0 %v3754
        %4596 = vmatpush1.bf16.msra.mxu0 %v3753
        %4597 = vmatprep.subr.bf16.mxu0 %v3756
        %4598 = vmatpush1.bf16.msra.mxu0 %v3755
        %4599 = vmatprep.subr.bf16.mxu0 %v3758
        %4600 = vmatpush1.bf16.msra.mxu0 %v3757
        %4601 = vmatprep.subr.bf16.mxu0 %v3760
        %4602 = vmatpush1.bf16.msra.mxu0 %v3759
        %4603 = vmatprep.subr.bf16.mxu0 %v3762
        %4604 = vmatpush1.bf16.msra.mxu0 %v3761
        %4605 = vmatprep.subr.bf16.mxu0 %v3764
        %4606 = vmatpush1.bf16.msra.mxu0 %v3763
        %4607 = vmatprep.subr.bf16.mxu0 %v3766
        %4608 = vmatpush1.bf16.msra.mxu0 %v3765
        %4609 = vmatprep.mubr.bf16.mxu0 %v1951
        %4610 = vmatmul.mubr.bf16.gmra.mrb[0].mxu0 %v1950
        %v4611 = vpop.f32.mrb[0].mxu0
        %v4612 = vadd.f32 %v4571, %v4611
        %v4613 = vpop.f32.mrb[0].mxu0
        %v4614 = vadd.f32 %v4573, %v4613
        %v4615 = vpop.f32.mrb[0].mxu0
        %v4616 = vpop.f32.mrb[0].mxu0
        %4617 = vdwg.mxu0
        %4618 = vmatprep.subr.bf16.mxu0 %v3768
        %4619 = vmatpush1.bf16.msra.mxu0 %v3767
        %4620 = vmatprep.subr.bf16.mxu0 %v3770
        %4621 = vmatpush1.bf16.msra.mxu0 %v3769
        %4622 = vmatprep.subr.bf16.mxu0 %v3772
        %4623 = vmatpush1.bf16.msra.mxu0 %v3771
        %4624 = vmatprep.subr.bf16.mxu0 %v3774
        %4625 = vmatpush1.bf16.msra.mxu0 %v3773
        %4626 = vmatprep.subr.bf16.mxu0 %v3776
        %4627 = vmatpush1.bf16.msra.mxu0 %v3775
        %4628 = vmatprep.subr.bf16.mxu0 %v3778
        %4629 = vmatpush1.bf16.msra.mxu0 %v3777
        %4630 = vmatprep.subr.bf16.mxu0 %v3780
        %4631 = vmatpush1.bf16.msra.mxu0 %v3779
        %4632 = vmatprep.subr.bf16.mxu0 %v3782
        %4633 = vmatpush1.bf16.msra.mxu0 %v3781
        %4634 = vmatprep.subr.bf16.mxu0 %v3784
        %4635 = vmatpush1.bf16.msra.mxu0 %v3783
        %4636 = vmatprep.subr.bf16.mxu0 %v3786
        %4637 = vmatpush1.bf16.msra.mxu0 %v3785
        %4638 = vmatprep.subr.bf16.mxu0 %v3788
        %4639 = vmatpush1.bf16.msra.mxu0 %v3787
        %4640 = vmatprep.subr.bf16.mxu0 %v3790
        %4641 = vmatpush1.bf16.msra.mxu0 %v3789
        %4642 = vmatprep.subr.bf16.mxu0 %v3792
        %4643 = vmatpush1.bf16.msra.mxu0 %v3791
        %4644 = vmatprep.subr.bf16.mxu0 %v3794
        %4645 = vmatpush1.bf16.msra.mxu0 %v3793
        %4646 = vmatprep.subr.bf16.mxu0 %v3796
        %4647 = vmatpush1.bf16.msra.mxu0 %v3795
        %4648 = vmatprep.subr.bf16.mxu0 %v3798
        %4649 = vmatpush1.bf16.msra.mxu0 %v3797
        %4650 = vmatprep.mubr.bf16.mxu0 %v1953
        %4651 = vmatmul.mubr.bf16.gmra.mrb[0].mxu0 %v1952
        %v4652 = vpop.f32.mrb[0].mxu0
        %v4653 = vadd.f32 %v4612, %v4652
        %v4654 = vpop.f32.mrb[0].mxu0
        %v4655 = vadd.f32 %v4614, %v4654
        %v4656 = vpop.f32.mrb[0].mxu0
        %v4657 = vpop.f32.mrb[0].mxu0
        %4658 = vdwg.mxu0
        %4659 = vmatprep.subr.bf16.mxu0 %v3800
        %4660 = vmatpush1.bf16.msra.mxu0 %v3799
        %4661 = vmatprep.subr.bf16.mxu0 %v3802
        %4662 = vmatpush1.bf16.msra.mxu0 %v3801
        %4663 = vmatprep.subr.bf16.mxu0 %v3804
        %4664 = vmatpush1.bf16.msra.mxu0 %v3803
        %4665 = vmatprep.subr.bf16.mxu0 %v3806
        %4666 = vmatpush1.bf16.msra.mxu0 %v3805
        %4667 = vmatprep.subr.bf16.mxu0 %v3808
        %4668 = vmatpush1.bf16.msra.mxu0 %v3807
        %4669 = vmatprep.subr.bf16.mxu0 %v3810
        %4670 = vmatpush1.bf16.msra.mxu0 %v3809
        %4671 = vmatprep.subr.bf16.mxu0 %v3812
        %4672 = vmatpush1.bf16.msra.mxu0 %v3811
        %4673 = vmatprep.subr.bf16.mxu0 %v3814
        %4674 = vmatpush1.bf16.msra.mxu0 %v3813
        %4675 = vmatprep.subr.bf16.mxu0 %v3816
        %4676 = vmatpush1.bf16.msra.mxu0 %v3815
        %4677 = vmatprep.subr.bf16.mxu0 %v3818
        %4678 = vmatpush1.bf16.msra.mxu0 %v3817
        %4679 = vmatprep.subr.bf16.mxu0 %v3820
        %4680 = vmatpush1.bf16.msra.mxu0 %v3819
        %4681 = vmatprep.subr.bf16.mxu0 %v3822
        %4682 = vmatpush1.bf16.msra.mxu0 %v3821
        %4683 = vmatprep.subr.bf16.mxu0 %v3824
        %4684 = vmatpush1.bf16.msra.mxu0 %v3823
        %4685 = vmatprep.subr.bf16.mxu0 %v3826
        %4686 = vmatpush1.bf16.msra.mxu0 %v3825
        %4687 = vmatprep.subr.bf16.mxu0 %v3828
        %4688 = vmatpush1.bf16.msra.mxu0 %v3827
        %4689 = vmatprep.subr.bf16.mxu0 %v3830
        %4690 = vmatpush1.bf16.msra.mxu0 %v3829
        %4691 = vmatprep.mubr.bf16.mxu0 %v1955
        %4692 = vmatmul.mubr.bf16.gmra.mrb[0].mxu0 %v1954
        %v4693 = vpop.f32.mrb[0].mxu0
        %v4694 = vadd.f32 %v4653, %v4693
        %v4695 = vpop.f32.mrb[0].mxu0
        %v4696 = vadd.f32 %v4655, %v4695
        %v4697 = vpop.f32.mrb[0].mxu0
        %v4698 = vpop.f32.mrb[0].mxu0
        %4699 = vdwg.mxu0
        %4700 = vmatprep.subr.bf16.mxu0 %v3832
        %4701 = vmatpush1.bf16.msra.mxu0 %v3831
        %4702 = vmatprep.subr.bf16.mxu0 %v3834
        %4703 = vmatpush1.bf16.msra.mxu0 %v3833
        %4704 = vmatprep.subr.bf16.mxu0 %v3836
        %4705 = vmatpush1.bf16.msra.mxu0 %v3835
        %4706 = vmatprep.subr.bf16.mxu0 %v3838
        %4707 = vmatpush1.bf16.msra.mxu0 %v3837
        %4708 = vmatprep.subr.bf16.mxu0 %v3840
        %4709 = vmatpush1.bf16.msra.mxu0 %v3839
        %4710 = vmatprep.subr.bf16.mxu0 %v3842
        %4711 = vmatpush1.bf16.msra.mxu0 %v3841
        %4712 = vmatprep.subr.bf16.mxu0 %v3844
        %4713 = vmatpush1.bf16.msra.mxu0 %v3843
        %4714 = vmatprep.subr.bf16.mxu0 %v3846
        %4715 = vmatpush1.bf16.msra.mxu0 %v3845
        %4716 = vmatprep.subr.bf16.mxu0 %v3848
        %4717 = vmatpush1.bf16.msra.mxu0 %v3847
        %4718 = vmatprep.subr.bf16.mxu0 %v3850
        %4719 = vmatpush1.bf16.msra.mxu0 %v3849
        %4720 = vmatprep.subr.bf16.mxu0 %v3852
        %4721 = vmatpush1.bf16.msra.mxu0 %v3851
        %4722 = vmatprep.subr.bf16.mxu0 %v3854
        %4723 = vmatpush1.bf16.msra.mxu0 %v3853
        %4724 = vmatprep.subr.bf16.mxu0 %v3856
        %4725 = vmatpush1.bf16.msra.mxu0 %v3855
        %4726 = vmatprep.subr.bf16.mxu0 %v3858
        %4727 = vmatpush1.bf16.msra.mxu0 %v3857
        %4728 = vmatprep.subr.bf16.mxu0 %v3860
        %4729 = vmatpush1.bf16.msra.mxu0 %v3859
        %4730 = vmatprep.subr.bf16.mxu0 %v3862
        %4731 = vmatpush1.bf16.msra.mxu0 %v3861
        %4732 = vmatprep.mubr.bf16.mxu0 %v1957
        %4733 = vmatmul.mubr.bf16.gmra.mrb[0].mxu0 %v1956
        %v4734 = vpop.f32.mrb[0].mxu0
        %v4735 = vadd.f32 %v4694, %v4734
        %v4736 = vpop.f32.mrb[0].mxu0
        %v4737 = vadd.f32 %v4696, %v4736
        %v4738 = vpop.f32.mrb[0].mxu0
        %v4739 = vpop.f32.mrb[0].mxu0
        %4740 = vdwg.mxu0
        %4741 = vmatprep.subr.bf16.mxu0 %v3864
        %4742 = vmatpush1.bf16.msra.mxu0 %v3863
        %4743 = vmatprep.subr.bf16.mxu0 %v3866
        %4744 = vmatpush1.bf16.msra.mxu0 %v3865
        %4745 = vmatprep.subr.bf16.mxu0 %v3868
        %4746 = vmatpush1.bf16.msra.mxu0 %v3867
        %4747 = vmatprep.subr.bf16.mxu0 %v3870
        %4748 = vmatpush1.bf16.msra.mxu0 %v3869
        %4749 = vmatprep.subr.bf16.mxu0 %v3872
        %4750 = vmatpush1.bf16.msra.mxu0 %v3871
        %4751 = vmatprep.subr.bf16.mxu0 %v3874
        %4752 = vmatpush1.bf16.msra.mxu0 %v3873
        %4753 = vmatprep.subr.bf16.mxu0 %v3876
        %4754 = vmatpush1.bf16.msra.mxu0 %v3875
        %4755 = vmatprep.subr.bf16.mxu0 %v3878
        %4756 = vmatpush1.bf16.msra.mxu0 %v3877
        %4757 = vmatprep.subr.bf16.mxu0 %v3880
        %4758 = vmatpush1.bf16.msra.mxu0 %v3879
        %4759 = vmatprep.subr.bf16.mxu0 %v3882
        %4760 = vmatpush1.bf16.msra.mxu0 %v3881
        %4761 = vmatprep.subr.bf16.mxu0 %v3884
        %4762 = vmatpush1.bf16.msra.mxu0 %v3883
        %4763 = vmatprep.subr.bf16.mxu0 %v3886
        %4764 = vmatpush1.bf16.msra.mxu0 %v3885
        %4765 = vmatprep.subr.bf16.mxu0 %v3888
        %4766 = vmatpush1.bf16.msra.mxu0 %v3887
        %4767 = vmatprep.subr.bf16.mxu0 %v3890
        %4768 = vmatpush1.bf16.msra.mxu0 %v3889
        %4769 = vmatprep.subr.bf16.mxu0 %v3892
        %4770 = vmatpush1.bf16.msra.mxu0 %v3891
        %4771 = vmatprep.subr.bf16.mxu0 %v3894
        %4772 = vmatpush1.bf16.msra.mxu0 %v3893
        %4773 = vmatprep.mubr.bf16.mxu0 %v1959
        %4774 = vmatmul.mubr.bf16.gmra.mrb[0].mxu0 %v1958
        %v4775 = vpop.f32.mrb[0].mxu0
        %v4776 = vadd.f32 %v4735, %v4775
        %v4777 = vpop.f32.mrb[0].mxu0
        %v4778 = vadd.f32 %v4737, %v4777
        %v4779 = vpop.f32.mrb[0].mxu0
        %v4780 = vpop.f32.mrb[0].mxu0
        %4781 = vdwg.mxu0
        %4782 = vmatprep.subr.bf16.mxu0 %v3896
        %4783 = vmatpush1.bf16.msra.mxu0 %v3895
        %4784 = vmatprep.subr.bf16.mxu0 %v3898
        %4785 = vmatpush1.bf16.msra.mxu0 %v3897
        %4786 = vmatprep.subr.bf16.mxu0 %v3900
        %4787 = vmatpush1.bf16.msra.mxu0 %v3899
        %4788 = vmatprep.subr.bf16.mxu0 %v3902
        %4789 = vmatpush1.bf16.msra.mxu0 %v3901
        %4790 = vmatprep.subr.bf16.mxu0 %v3904
        %4791 = vmatpush1.bf16.msra.mxu0 %v3903
        %4792 = vmatprep.subr.bf16.mxu0 %v3906
        %4793 = vmatpush1.bf16.msra.mxu0 %v3905
        %4794 = vmatprep.subr.bf16.mxu0 %v3908
        %4795 = vmatpush1.bf16.msra.mxu0 %v3907
        %4796 = vmatprep.subr.bf16.mxu0 %v3910
        %4797 = vmatpush1.bf16.msra.mxu0 %v3909
        %4798 = vmatprep.subr.bf16.mxu0 %v3912
        %4799 = vmatpush1.bf16.msra.mxu0 %v3911
        %4800 = vmatprep.subr.bf16.mxu0 %v3914
        %4801 = vmatpush1.bf16.msra.mxu0 %v3913
        %4802 = vmatprep.subr.bf16.mxu0 %v3916
        %4803 = vmatpush1.bf16.msra.mxu0 %v3915
        %4804 = vmatprep.subr.bf16.mxu0 %v3918
        %4805 = vmatpush1.bf16.msra.mxu0 %v3917
        %4806 = vmatprep.subr.bf16.mxu0 %v3920
        %4807 = vmatpush1.bf16.msra.mxu0 %v3919
        %4808 = vmatprep.subr.bf16.mxu0 %v3922
        %4809 = vmatpush1.bf16.msra.mxu0 %v3921
        %4810 = vmatprep.subr.bf16.mxu0 %v3924
        %4811 = vmatpush1.bf16.msra.mxu0 %v3923
        %4812 = vmatprep.subr.bf16.mxu0 %v3926
        %4813 = vmatpush1.bf16.msra.mxu0 %v3925
        %4814 = vmatprep.mubr.bf16.mxu0 %v1961
        %4815 = vmatmul.mubr.bf16.gmra.mrb[0].mxu0 %v1960
        %v4816 = vpop.f32.mrb[0].mxu0
        %v4817 = vadd.f32 %v4776, %v4816
        %v4818 = vpop.f32.mrb[0].mxu0
        %v4819 = vadd.f32 %v4778, %v4818
        %v4820 = vpop.f32.mrb[0].mxu0
        %v4821 = vpop.f32.mrb[0].mxu0
        %4822 = vdwg.mxu0
        %4823 = vmatprep.subr.bf16.mxu0 %v3928
        %4824 = vmatpush1.bf16.msra.mxu0 %v3927
        %4825 = vmatprep.subr.bf16.mxu0 %v3930
        %4826 = vmatpush1.bf16.msra.mxu0 %v3929
        %4827 = vmatprep.subr.bf16.mxu0 %v3932
        %4828 = vmatpush1.bf16.msra.mxu0 %v3931
        %4829 = vmatprep.subr.bf16.mxu0 %v3934
        %4830 = vmatpush1.bf16.msra.mxu0 %v3933
        %4831 = vmatprep.subr.bf16.mxu0 0
        %4832 = vmatpush1.bf16.msra.mxu0 0
        %4833 = vmatprep.subr.bf16.mxu0 0
        %4834 = vmatpush1.bf16.msra.mxu0 0
        %4835 = vmatprep.subr.bf16.mxu0 0
        %4836 = vmatpush1.bf16.msra.mxu0 0
        %4837 = vmatprep.subr.bf16.mxu0 0
        %4838 = vmatpush1.bf16.msra.mxu0 0
        %4839 = vmatprep.subr.bf16.mxu0 0
        %4840 = vmatpush1.bf16.msra.mxu0 0
        %4841 = vmatprep.subr.bf16.mxu0 0
        %4842 = vmatpush1.bf16.msra.mxu0 0
        %4843 = vmatprep.subr.bf16.mxu0 0
        %4844 = vmatpush1.bf16.msra.mxu0 0
        %4845 = vmatprep.subr.bf16.mxu0 0
        %4846 = vmatpush1.bf16.msra.mxu0 0
        %4847 = vmatprep.subr.bf16.mxu0 0
        %4848 = vmatpush1.bf16.msra.mxu0 0
        %4849 = vmatprep.subr.bf16.mxu0 0
        %4850 = vmatpush1.bf16.msra.mxu0 0
        %4851 = vmatprep.subr.bf16.mxu0 0
        %4852 = vmatpush1.bf16.msra.mxu0 0
        %4853 = vmatprep.subr.bf16.mxu0 0
        %4854 = vmatpush1.bf16.msra.mxu0 0
        %4855 = vmatprep.mubr.bf16.mxu0 0
        %4856 = vmatmul.mubr.bf16.gmra.mrb[0].mxu0 %v4329
        %v4857 = vpop.f32.mrb[0].mxu0
        %v4858 = vadd.f32 %v4817, %v4857
        %v4859 = vpop.f32.mrb[0].mxu0
        %v4860 = vadd.f32 %v4819, %v4859
        %v4861 = vpop.f32.mrb[0].mxu0
        %v4862 = vpop.f32.mrb[0].mxu0
        %4863 = vdwg.mxu0
        %v4864 = vmax.f32 %v4858, 0.0
        %v4865 = vmax.f32 %v4860, 0.0
        %v4868 = vcombine.low %v4864, %v4865
        %v4870 = vunpack.c.l.s4 1983009808
        %v4871 = vunpack.c.0.s8 %v4870
        %v4872 = vlaneseq
        %v4873 = vshrl.u32 %v4872, 7
        %v4874 = vsub.s32 %v4871, %v4873
        %v4875 = vrot.slane %v4868, %v4874
        %4877 = vst [vmem:[%s1781] sm:$0xf] %v4875
        %s4878 = sand.u32 %s98, 1
        %s4879 = scalar_lea.sflag [#allocation4], %s4878
        %s4880 = sand.u32 %s98, 1
        %s4881 = smul.addr %s4880, 4
        %s4882 = scalar_lea.vmem [#allocation3], %s4881
        // Predicated region
        $region71: #{atari_backbone.5} parent=65 // pred_check
          %p4883 = pneg %p108
        $region72: #{atari_backbone.5} parent=65 // pred_check_branch
          %4885 = sbr.rel (%p4883) target = $region74
        $region73: #{atari_backbone.5} parent=65 // pred_region
          %s4886 = smul.u32 2, %s17
          %s4888 = ssub.s32 64, 64
          %4889 = vsyncadd %s4879, %s4888
          %s4890 = smul.addr %s4886, 32
          %s4891 = scalar_lea.hbm %s3, %s4890
          %s4893 = sshll.u32 %s4882, 4
          %s4894 = int_to_ptr.vmem [resolvable:$true] %s4893
          %4896 = dma.vmem_to_hbm [thread:$0]  %s4894, 64, %s4891, %s4879
        $region74: #{atari_backbone.5} parent=65 // pred_fallthru
          _
      $region66: #{atari_backbone.5} parent=5 // pred_fallthru
        _
      %p4897 = scmp.le.s32.totalorder 2, %s12
      // Predicated region
      $region75: #{atari_backbone.5} parent=5 // pred_check
        %p4898 = pneg %p4897
      $region76: #{atari_backbone.5} parent=5 // pred_check_branch
        %4900 = sbr.rel (%p4898) target = $region78
      $region77: #{atari_backbone.5} parent=5 // pred_region
        %s4901 = ssub.s32 %s12, 2
        // Predicated region
        $region79: #{atari_backbone.5} parent=77 // pred_check
          %p4902 = pneg %p114
        $region80: #{atari_backbone.5} parent=77 // pred_check_branch
          %4904 = sbr.rel (%p4902) target = $region82
        $region81: #{atari_backbone.5} parent=77 // pred_region
          %s4905 = sand.u32 %s99, 1
          %s4906 = scalar_lea.sflag [#allocation4], %s4905
          %s4907 = sand.u32 %s99, 1
          %s4908 = smul.addr %s4907, 4
          %s4909 = scalar_lea.vmem [#allocation3], %s4908
          %4910 = dma.done %s4906, 64
        $region82: #{atari_backbone.5} parent=77 // pred_fallthru
          _
      $region78: #{atari_backbone.5} parent=5 // pred_fallthru
        _
    $region6: #{atari_backbone.5} parent=1 // loop_footer
      %s16 = sadd.s32 1, %s12
    $region7: #{atari_backbone.5} parent=1 // loop_footer_branch
      %11 = sbr.rel target = $region3
    $region8: #{atari_backbone.5} parent=1 // loop_exit
      _
    %4911 = vsyncpa [#allocation4], 1
    %s4912 = scalar_lea.sflag [#allocation4], 1
    %4913 = vsyncpa %s4912, 1

</llo_original>
